<compile_context>
chip_gen: v6e
topology: v6e:2x2x1
jax: 0.10.0
libtpu: 0.0.40
codegen_flags: <defaults>
</compile_context>

<pallas_src>
import functools
import numpy as np
import jax
import jax.numpy as jnp
from jax.experimental import pallas as pl
from jax.experimental.pallas import tpu as pltpu

ATT_NEG_SLOPE = 0.2      # GATConv internal leaky_relu slope
ACT_NEG_SLOPE = 0.01     # F.leaky_relu default slope
BN_EPS = 1e-5
NEG_INF = -1e30
BLOCK_N = 128            # node rows per grid step (full MXU tile of stacked graphs)
VEC_ROWS = 8             # sublane-aligned rows reserved per layer in the packed vec ref


# ----------------------------- fused Pallas kernel --------------------------

def gatnet_kernel(chans, *refs):
    (x_ref, ae_ref, pool_ref,
     w1, w2, w3, w4, w5, vecs_ref,
     fw2, fw3, fw4, fb_ref, out_ref) = refs

    vecs = vecs_ref[...]            # (5*VEC_ROWS, Cmax) f32 folded per-layer vectors
    fb = fb_ref[...]                # (3, 128) f32 fc biases (lane-padded)

    def gat_layer(x, w_ref, ae, v):
        # v rows: [att_src, att_dst, bias, bn_scale, bn_shift] -> (>=5, C)
        h = jnp.dot(x.astype(jnp.bfloat16), w_ref[...],
                    preferred_element_type=jnp.float32)                   # (Nb, C) f32
        # rank-1 attention projections as f32 VPU reductions.
        # TODO(synk): if XLU binds at larger tiles, fold att_src/att_dst as two extra
        # output columns of W host-side to move these projections onto the MXU.
        a_src = jnp.sum(h * v[0:1, :], axis=-1, keepdims=True)            # (Nb, 1)
        a_dst = jnp.sum(h * v[1:2, :], axis=-1, keepdims=True)            # (Nb, 1)
        # ae already holds NEG_INF on non-edges -> no mask input; masked entries
        # underflow to exactly 0 after the row-max-shifted exp.
        logits = a_dst + jnp.transpose(a_src) + ae                        # (Nb, Nb) f32
        logits = jnp.maximum(logits, ATT_NEG_SLOPE * logits)              # leaky_relu(0.2)
        m = jnp.max(logits, axis=-1, keepdims=True)
        p = jnp.exp(logits - m)
        inv = pl.reciprocal(jnp.sum(p, axis=-1, keepdims=True))           # exact
        alpha = p * inv
        out = jnp.dot(alpha.astype(jnp.bfloat16), h.astype(jnp.bfloat16),
                      preferred_element_type=jnp.float32) + v[2:3, :]     # + conv bias
        out = jnp.maximum(out, ACT_NEG_SLOPE * out)                       # F.leaky_relu
        return out * v[3:4, :] + v[4:5, :]                                # folded eval BN
        # dropout layers are identity in eval-mode forward.

    h = x_ref[...]
    w_refs = (w1, w2, w3, w4, w5)
    for l in range(5):
        v = vecs[VEC_ROWS * l:VEC_ROWS * l + 5, :chans[l]]
        h = gat_layer(h, w_refs[l], ae_ref[l], v)

    # global_add_pool over this block's graphs (one-hot matmul) + MLP head.
    pooled = jnp.dot(pool_ref[...], h.astype(jnp.bfloat16),
                     preferred_element_type=jnp.float32)                  # (GPB, 4H)
    z = jnp.dot(pooled.astype(jnp.bfloat16), fw2[...],
                preferred_element_type=jnp.float32) + fb[0:1, :fw2.shape[1]]
    z = jnp.maximum(z, 0.0)
    z = jnp.dot(z.astype(jnp.bfloat16), fw3[...],
                preferred_element_type=jnp.float32) + fb[1:2, :fw3.shape[1]]
    z = jnp.maximum(z, 0.0)
    # fc4 zero-padded to 128 output lanes -> lane-dense store; column 0 is the result.
    out_ref[...] = jnp.dot(z.astype(jnp.bfloat16), fw4[...],
                           preferred_element_type=jnp.float32) + fb[2:3, :]


# ------------------------------- pallas_call wrapper ------------------------

def gatnet_fused_call(x_pad, ae_stacked, pool, layers, head_p):
    chans = tuple(int(p["w"].shape[1]) for p in layers)
    cmax = max(chans)
    n_nodes, f_in = x_pad.shape
    num_blocks = n_nodes // BLOCK_N
    b_pad = pool.shape[0]
    gpb = b_pad // num_blocks

    # Fold eval-BN + conv bias + attention vectors into one sublane-aligned f32 ref.
    vecs = np.zeros((VEC_ROWS * 5, cmax), np.float32)
    for l, p in enumerate(layers):
        c = chans[l]
        scale = np.asarray(p["gamma"])[0] / np.sqrt(np.asarray(p["rvar"])[0] + BN_EPS)
        shift = np.asarray(p["beta"])[0] - np.asarray(p["rmean"])[0] * scale
        vecs[VEC_ROWS * l + 0, :c] = np.asarray(p["att_src"])[0]
        vecs[VEC_ROWS * l + 1, :c] = np.asarray(p["att_dst"])[0]
        vecs[VEC_ROWS * l + 2, :c] = np.asarray(p["bias"])[0]
        vecs[VEC_ROWS * l + 3, :c] = scale
        vecs[VEC_ROWS * l + 4, :c] = shift
    vecs = jnp.asarray(vecs)

    w_list = [p["w"].astype(jnp.bfloat16) for p in layers]                # bf16 MXU feeds
    fw2 = head_p["w2"].astype(jnp.bfloat16)
    fw3 = head_p["w3"].astype(jnp.bfloat16)
    fw4 = jnp.zeros((head_p["w4"].shape[0], 128), jnp.float32)
    fw4 = fw4.at[:, :1].set(head_p["w4"]).astype(jnp.bfloat16)
    fb = np.zeros((3, 128), np.float32)
    fb[0, :head_p["b2"].shape[1]] = np.asarray(head_p["b2"])[0]
    fb[1, :head_p["b3"].shape[1]] = np.asarray(head_p["b3"])[0]
    fb[2, :1] = np.asarray(head_p["b4"])[0]
    fb = jnp.asarray(fb)

    args = ([x_pad, ae_stacked, pool.astype(jnp.bfloat16)]
            + w_list + [vecs, fw2, fw3, fw4, fb])

    def resident(a):                       # VMEM-resident across the whole grid
        nd = a.ndim
        return pl.BlockSpec(a.shape, lambda i: (0,) * nd)

    in_specs = ([pl.BlockSpec((BLOCK_N, f_in), lambda i: (i, 0)),           # x block
                 pl.BlockSpec((5, BLOCK_N, BLOCK_N), lambda i: (0, i, 0)),  # 5 ae slabs
                 pl.BlockSpec((gpb, BLOCK_N), lambda i: (i, 0))]            # pool block
                + [resident(a) for a in args[3:]])

    out = pl.pallas_call(
        functools.partial(gatnet_kernel, chans),
        out_shape=jax.ShapeDtypeStruct((b_pad, 128), jnp.float32),
        grid=(num_blocks,),
        in_specs=in_specs,
        out_specs=pl.BlockSpec((gpb, 128), lambda i: (i, 0)),
        compiler_params=pltpu.CompilerParams(dimension_semantics=("parallel",)),
    )(*args)
    return out[:, 0]                                                       # (b_pad,)


# ------------------------------- glue (numpy host prep) ---------------------

def build_dense_inputs(edge_index, edge_attr, num_nodes, real_mask, node_graph,
                       gpb, layers):
    """GATConv preprocessing (remove_self_loops + add_self_loops(fill_value='mean')),
    block-diagonal densification of the collapsed per-layer edge-attention logits
    (pre-masked with NEG_INF), and the one-hot global_add_pool selector per block."""
    src, dst = (np.asarray(a) for a in edge_index)
    ea = np.asarray(edge_attr, np.float32)
    keep = src != dst
    src, dst, ea = src[keep], dst[keep], ea[keep]
    de = ea.shape[1]
    sums = np.zeros((num_nodes, de), np.float32)
    cnts = np.zeros((num_nodes,), np.float32)
    np.add.at(sums, dst, ea)
    np.add.at(cnts, dst, 1.0)
    loop_attr = sums / np.maximum(cnts, 1.0)[:, None]        # mean of incoming attrs
    full_src = np.concatenate([src, np.arange(num_nodes)])
    full_dst = np.concatenate([dst, np.arange(num_nodes)])
    full_ea = np.concatenate([ea, loop_attr], axis=0)

    num_blocks = num_nodes // BLOCK_N
    blk = full_dst // BLOCK_N
    assert np.all(blk == full_src // BLOCK_N), "edges must not cross node blocks"
    dl, sl = full_dst % BLOCK_N, full_src % BLOCK_N

    ae_layers = []
    for p in layers:
        # collapsed edge MLP: ae_e = edge_attr_e . (w_edge @ att_edge^T)
        v_edge = np.asarray(p["w_edge"]) @ np.asarray(p["att_edge"])[0]
        vals = full_ea @ v_edge
        dense = np.full((num_blocks, BLOCK_N, BLOCK_N), NEG_INF, np.float32)
        dense[blk, dl, sl] = vals
        ae_layers.append(dense)
    ae_stacked = jnp.asarray(
        np.stack(ae_layers, 0).reshape(5, num_blocks * BLOCK_N, BLOCK_N))

    # global_add_pool selector: block-local one-hot rows, padded nodes excluded.
    pool = np.zeros((num_blocks * gpb, BLOCK_N), np.float32)
    nodes = np.arange(num_nodes)
    rn = nodes[real_mask]
    assert np.all(node_graph[rn] // gpb == rn // BLOCK_N), \
        "each graph's nodes must live inside its node block"
    pool[node_graph[rn], rn % BLOCK_N] = 1.0
    return ae_stacked, jnp.asarray(pool)


def gatnet_forward(x_pad, edge_index, edge_attr, real_mask, node_graph,
                   num_graphs, nodes_per_graph, layers, head_p):
    """Eval-mode GATNet forward. Nodes are laid out as equal-size (zero-padded)
    graphs stacked contiguously so each BLOCK_N-node tile contains whole graphs."""
    n = x_pad.shape[0]
    assert n % BLOCK_N == 0 and BLOCK_N % nodes_per_graph == 0
    gpb = BLOCK_N // nodes_per_graph
    ae_stacked, pool = build_dense_inputs(edge_index, edge_attr, n, real_mask,
                                          node_graph, gpb, layers)
    out = gatnet_fused_call(jnp.asarray(x_pad, jnp.float32), ae_stacked, pool,
                            layers, head_p)
    return out[:num_graphs]                                                # (B,)


def init_params(key, in_dim, hidden_dim, edge_dim):
    dims = [(in_dim, hidden_dim * 4),
            (hidden_dim * 4, hidden_dim * 2),
            (hidden_dim * 2, hidden_dim),
            (hidden_dim, hidden_dim * 2),
            (hidden_dim * 2, hidden_dim * 4)]
    layers = []
    for fin, c in dims:
        key, *ks = jax.random.split(key, 8)
        layers.append(dict(
            w=jax.random.normal(ks[0], (fin, c), jnp.float32) / np.sqrt(fin),
            att_src=jax.random.normal(ks[1], (1, c), jnp.float32) * 0.1,
            att_dst=jax.random.normal(ks[2], (1, c), jnp.float32) * 0.1,
            w_edge=jax.random.normal(ks[3], (edge_dim, c), jnp.float32) / np.sqrt(edge_dim),
            att_edge=jax.random.normal(ks[4], (1, c), jnp.float32) * 0.1,
            bias=jax.random.normal(ks[5], (1, c), jnp.float32) * 0.01,
            gamma=1.0 + 0.05 * jax.random.normal(ks[6], (1, c), jnp.float32),
            beta=jnp.zeros((1, c), jnp.float32),
            rmean=jnp.zeros((1, c), jnp.float32),
            rvar=jnp.ones((1, c), jnp.float32),
        ))
    key, k2, k3, k4 = jax.random.split(key, 4)
    f_in = hidden_dim * 4
    head_p = dict(
        w2=jax.random.normal(k2, (f_in, hidden_dim), jnp.float32) / np.sqrt(f_in),
        b2=jnp.zeros((1, hidden_dim), jnp.float32),
        w3=jax.random.normal(k3, (hidden_dim, 16), jnp.float32) / np.sqrt(hidden_dim),
        b3=jnp.zeros((1, 16), jnp.float32),
        w4=jax.random.normal(k4, (16, 1), jnp.float32) * 0.25,
        b4=jnp.zeros((1, 1), jnp.float32),
    )
    return layers, head_p


# ---------------------------------- main ------------------------------------

if __name__ == "__main__":
    in_dim, hidden_dim, edge_dim = 16, 128, 8   # hidden_dim=128 as in the reference module
    NPG, REAL = 8, 6         # nodes per graph slot (padded) / real nodes per graph (ring)
    B = 32                   # graphs -> 256 node rows -> 2 grid blocks of 128
    N = B * NPG

    key = jax.random.PRNGKey(0)
    kx, ke, kg = jax.random.split(key, 3)

    real_mask = np.zeros((N,), bool)
    for g in range(B):
        real_mask[g * NPG: g * NPG + REAL] = True
    node_graph = (np.arange(N) // NPG).astype(np.int32)

    x = np.zeros((N, in_dim), np.float32)
    x[real_mask] = np.asarray(
        jax.random.normal(kx, (int(real_mask.sum()), in_dim), jnp.float32))

    # deterministic bidirectional ring over the 6 real nodes of every graph (E = 384)
    edges = []
    for g in range(B):
        off = g * NPG
        for i in range(REAL):
            u, v = off + i, off + (i + 1) % REAL
            edges.append((u, v))
            edges.append((v, u))
    edge_index = np.array(edges, dtype=np.int32).T
    E = edge_index.shape[1]
    edge_attr = np.asarray(jax.random.normal(ke, (E, edge_dim), jnp.float32))

    layers, head_p = init_params(kg, in_dim, hidden_dim, edge_dim)
    out = gatnet_forward(x, edge_index, edge_attr, real_mask, node_graph,
                         B, NPG, layers, head_p)
    out = jax.block_until_ready(out)
    assert out.shape == (B,) and bool(jnp.all(jnp.isfinite(out)))
    print("KERNEL_OK")
</pallas_src>

<mosaic_0001>
module attributes {stable_mosaic.version = 11 : i64} {
  func.func @gatnet_kernel(%arg0: i32, %arg1: memref<128x16xf32, #tpu.memory_space<vmem>>, %arg2: memref<5x128x128xf32, #tpu.memory_space<vmem>>, %arg3: memref<16x128xbf16, #tpu.memory_space<vmem>>, %arg4: memref<16x512xbf16, #tpu.memory_space<vmem>>, %arg5: memref<512x256xbf16, #tpu.memory_space<vmem>>, %arg6: memref<256x128xbf16, #tpu.memory_space<vmem>>, %arg7: memref<128x256xbf16, #tpu.memory_space<vmem>>, %arg8: memref<256x512xbf16, #tpu.memory_space<vmem>>, %arg9: memref<40x512xf32, #tpu.memory_space<vmem>>, %arg10: memref<512x128xbf16, #tpu.memory_space<vmem>>, %arg11: memref<128x16xbf16, #tpu.memory_space<vmem>>, %arg12: memref<16x128xbf16, #tpu.memory_space<vmem>>, %arg13: memref<3x128xf32, #tpu.memory_space<vmem>>, %arg14: memref<16x128xf32, #tpu.memory_space<vmem>>) attributes {dimension_semantics = [#tpu.dimension_semantics<parallel>], iteration_bounds = array<i64: 2>, scalar_prefetch = 0 : i64, scratch_operands = 0 : i64, tpu.core_type = #tpu.core_type<tc>, window_params = [{transform_indices = @transform_0, window_bounds = array<i64: 128, 16>}, {transform_indices = @transform_1, window_bounds = array<i64: 5, 128, 128>}, {transform_indices = @transform_2, window_bounds = array<i64: 16, 128>}, {pipeline_mode = #tpu.pipeline_mode<synchronous>, transform_indices = @transform_3, window_bounds = array<i64: 16, 512>}, {pipeline_mode = #tpu.pipeline_mode<synchronous>, transform_indices = @transform_4, window_bounds = array<i64: 512, 256>}, {pipeline_mode = #tpu.pipeline_mode<synchronous>, transform_indices = @transform_5, window_bounds = array<i64: 256, 128>}, {pipeline_mode = #tpu.pipeline_mode<synchronous>, transform_indices = @transform_6, window_bounds = array<i64: 128, 256>}, {pipeline_mode = #tpu.pipeline_mode<synchronous>, transform_indices = @transform_7, window_bounds = array<i64: 256, 512>}, {pipeline_mode = #tpu.pipeline_mode<synchronous>, transform_indices = @transform_8, window_bounds = array<i64: 40, 512>}, {pipeline_mode = #tpu.pipeline_mode<synchronous>, transform_indices = @transform_9, window_bounds = array<i64: 512, 128>}, {pipeline_mode = #tpu.pipeline_mode<synchronous>, transform_indices = @transform_10, window_bounds = array<i64: 128, 16>}, {pipeline_mode = #tpu.pipeline_mode<synchronous>, transform_indices = @transform_11, window_bounds = array<i64: 16, 128>}, {pipeline_mode = #tpu.pipeline_mode<synchronous>, transform_indices = @transform_12, window_bounds = array<i64: 3, 128>}, {transform_indices = @transform_13, window_bounds = array<i64: 16, 128>}]} {
    %c0 = arith.constant 0 : index
    %c0_0 = arith.constant 0 : index
    %0 = vector.load %arg9[%c0, %c0_0] : memref<40x512xf32, #tpu.memory_space<vmem>>, vector<40x512xf32>
    %c0_1 = arith.constant 0 : index
    %c0_2 = arith.constant 0 : index
    %1 = vector.load %arg13[%c0_1, %c0_2] : memref<3x128xf32, #tpu.memory_space<vmem>>, vector<3x128xf32>
    %c0_3 = arith.constant 0 : index
    %c0_4 = arith.constant 0 : index
    %2 = vector.load %arg1[%c0_3, %c0_4] : memref<128x16xf32, #tpu.memory_space<vmem>>, vector<128x16xf32>
    %3 = vector.extract_strided_slice %0 {offsets = [0, 0], sizes = [5, 512], strides = [1, 1]} : vector<40x512xf32> to vector<5x512xf32>
    %c0_5 = arith.constant 0 : index
    %c0_6 = arith.constant 0 : index
    %c0_7 = arith.constant 0 : index
    %4 = vector.load %arg2[%c0_5, %c0_6, %c0_7] : memref<5x128x128xf32, #tpu.memory_space<vmem>>, vector<1x128x128xf32>
    %5 = vector.shape_cast %4 : vector<1x128x128xf32> to vector<128x128xf32>
    %6 = arith.truncf %2 : vector<128x16xf32> to vector<128x16xbf16>
    %c0_8 = arith.constant 0 : index
    %c0_9 = arith.constant 0 : index
    %7 = vector.load %arg4[%c0_8, %c0_9] : memref<16x512xbf16, #tpu.memory_space<vmem>>, vector<16x512xbf16>
    %cst = arith.constant dense<0.000000e+00> : vector<128x512xf32>
    %8 = tpu.matmul %6, %7, %cst {dimension_numbers = #tpu.dot_dimension_numbers<[1], [0], [0], [1], [0, 0, 1, 1], [], []>} : vector<128x16xbf16>, vector<16x512xbf16>, vector<128x512xf32> -> vector<128x512xf32>
    %9 = vector.extract_strided_slice %3 {offsets = [0, 0], sizes = [1, 512], strides = [1, 1]} : vector<5x512xf32> to vector<1x512xf32>
    %10 = vector.broadcast %9 : vector<1x512xf32> to vector<128x512xf32>
    %11 = arith.mulf %8, %10 : vector<128x512xf32>
    %cst_10 = arith.constant dense<0.000000e+00> : vector<128xf32>
    %12 = vector.multi_reduction <add>, %11, %cst_10 [1] : vector<128x512xf32> to vector<128xf32>
    %13 = vector.shape_cast %12 : vector<128xf32> to vector<128x1xf32>
    %14 = vector.extract_strided_slice %3 {offsets = [1, 0], sizes = [1, 512], strides = [1, 1]} : vector<5x512xf32> to vector<1x512xf32>
    %15 = vector.broadcast %14 : vector<1x512xf32> to vector<128x512xf32>
    %16 = arith.mulf %8, %15 : vector<128x512xf32>
    %cst_11 = arith.constant dense<0.000000e+00> : vector<128xf32>
    %17 = vector.multi_reduction <add>, %16, %cst_11 [1] : vector<128x512xf32> to vector<128xf32>
    %18 = vector.shape_cast %17 : vector<128xf32> to vector<128x1xf32>
    %19 = tpu.transpose %13, [1, 0] : vector<128x1xf32> -> vector<1x128xf32>
    %20 = vector.broadcast %18 : vector<128x1xf32> to vector<128x128xf32>
    %21 = vector.broadcast %19 : vector<1x128xf32> to vector<128x128xf32>
    %22 = arith.addf %20, %21 : vector<128x128xf32>
    %23 = arith.addf %22, %5 : vector<128x128xf32>
    %cst_12 = arith.constant 2.000000e-01 : f32
    %24 = vector.broadcast %cst_12 : f32 to vector<128x128xf32>
    %25 = arith.mulf %24, %23 : vector<128x128xf32>
    %26 = arith.maximumf %23, %25 : vector<128x128xf32>
    %cst_13 = arith.constant dense<0xFF800000> : vector<128xf32>
    %27 = vector.multi_reduction <maximumf>, %26, %cst_13 [1] : vector<128x128xf32> to vector<128xf32>
    %28 = vector.shape_cast %27 : vector<128xf32> to vector<128x1xf32>
    %29 = vector.broadcast %28 : vector<128x1xf32> to vector<128x128xf32>
    %30 = arith.subf %26, %29 : vector<128x128xf32>
    %31 = math.exp %30 : vector<128x128xf32>
    %cst_14 = arith.constant dense<0.000000e+00> : vector<128xf32>
    %32 = vector.multi_reduction <add>, %31, %cst_14 [1] : vector<128x128xf32> to vector<128xf32>
    %33 = vector.shape_cast %32 : vector<128xf32> to vector<128x1xf32>
    %34 = tpu.reciprocal %33 : vector<128x1xf32> -> vector<128x1xf32>
    %35 = vector.broadcast %34 : vector<128x1xf32> to vector<128x128xf32>
    %36 = arith.mulf %31, %35 : vector<128x128xf32>
    %37 = arith.truncf %36 : vector<128x128xf32> to vector<128x128xbf16>
    %38 = arith.truncf %8 : vector<128x512xf32> to vector<128x512xbf16>
    %cst_15 = arith.constant dense<0.000000e+00> : vector<128x512xf32>
    %39 = tpu.matmul %37, %38, %cst_15 {dimension_numbers = #tpu.dot_dimension_numbers<[1], [0], [0], [1], [0, 0, 1, 1], [], []>} : vector<128x128xbf16>, vector<128x512xbf16>, vector<128x512xf32> -> vector<128x512xf32>
    %40 = vector.extract_strided_slice %3 {offsets = [2, 0], sizes = [1, 512], strides = [1, 1]} : vector<5x512xf32> to vector<1x512xf32>
    %41 = vector.broadcast %40 : vector<1x512xf32> to vector<128x512xf32>
    %42 = arith.addf %39, %41 : vector<128x512xf32>
    %cst_16 = arith.constant 0.00999999977 : f32
    %43 = vector.broadcast %cst_16 : f32 to vector<128x512xf32>
    %44 = arith.mulf %43, %42 : vector<128x512xf32>
    %45 = arith.maximumf %42, %44 : vector<128x512xf32>
    %46 = vector.extract_strided_slice %3 {offsets = [3, 0], sizes = [1, 512], strides = [1, 1]} : vector<5x512xf32> to vector<1x512xf32>
    %47 = vector.broadcast %46 : vector<1x512xf32> to vector<128x512xf32>
    %48 = arith.mulf %45, %47 : vector<128x512xf32>
    %49 = vector.extract_strided_slice %3 {offsets = [4, 0], sizes = [1, 512], strides = [1, 1]} : vector<5x512xf32> to vector<1x512xf32>
    %50 = vector.broadcast %49 : vector<1x512xf32> to vector<128x512xf32>
    %51 = arith.addf %48, %50 : vector<128x512xf32>
    %52 = vector.extract_strided_slice %0 {offsets = [8, 0], sizes = [5, 256], strides = [1, 1]} : vector<40x512xf32> to vector<5x256xf32>
    %c1 = arith.constant 1 : index
    %c0_17 = arith.constant 0 : index
    %c0_18 = arith.constant 0 : index
    %53 = vector.load %arg2[%c1, %c0_17, %c0_18] : memref<5x128x128xf32, #tpu.memory_space<vmem>>, vector<1x128x128xf32>
    %54 = vector.shape_cast %53 : vector<1x128x128xf32> to vector<128x128xf32>
    %55 = arith.truncf %51 : vector<128x512xf32> to vector<128x512xbf16>
    %c0_19 = arith.constant 0 : index
    %c0_20 = arith.constant 0 : index
    %56 = vector.load %arg5[%c0_19, %c0_20] : memref<512x256xbf16, #tpu.memory_space<vmem>>, vector<512x256xbf16>
    %cst_21 = arith.constant dense<0.000000e+00> : vector<128x256xf32>
    %57 = tpu.matmul %55, %56, %cst_21 {dimension_numbers = #tpu.dot_dimension_numbers<[1], [0], [0], [1], [0, 0, 1, 1], [], []>} : vector<128x512xbf16>, vector<512x256xbf16>, vector<128x256xf32> -> vector<128x256xf32>
    %58 = vector.extract_strided_slice %52 {offsets = [0, 0], sizes = [1, 256], strides = [1, 1]} : vector<5x256xf32> to vector<1x256xf32>
    %59 = vector.broadcast %58 : vector<1x256xf32> to vector<128x256xf32>
    %60 = arith.mulf %57, %59 : vector<128x256xf32>
    %cst_22 = arith.constant dense<0.000000e+00> : vector<128xf32>
    %61 = vector.multi_reduction <add>, %60, %cst_22 [1] : vector<128x256xf32> to vector<128xf32>
    %62 = vector.shape_cast %61 : vector<128xf32> to vector<128x1xf32>
    %63 = vector.extract_strided_slice %52 {offsets = [1, 0], sizes = [1, 256], strides = [1, 1]} : vector<5x256xf32> to vector<1x256xf32>
    %64 = vector.broadcast %63 : vector<1x256xf32> to vector<128x256xf32>
    %65 = arith.mulf %57, %64 : vector<128x256xf32>
    %cst_23 = arith.constant dense<0.000000e+00> : vector<128xf32>
    %66 = vector.multi_reduction <add>, %65, %cst_23 [1] : vector<128x256xf32> to vector<128xf32>
    %67 = vector.shape_cast %66 : vector<128xf32> to vector<128x1xf32>
    %68 = tpu.transpose %62, [1, 0] : vector<128x1xf32> -> vector<1x128xf32>
    %69 = vector.broadcast %67 : vector<128x1xf32> to vector<128x128xf32>
    %70 = vector.broadcast %68 : vector<1x128xf32> to vector<128x128xf32>
    %71 = arith.addf %69, %70 : vector<128x128xf32>
    %72 = arith.addf %71, %54 : vector<128x128xf32>
    %cst_24 = arith.constant 2.000000e-01 : f32
    %73 = vector.broadcast %cst_24 : f32 to vector<128x128xf32>
    %74 = arith.mulf %73, %72 : vector<128x128xf32>
    %75 = arith.maximumf %72, %74 : vector<128x128xf32>
    %cst_25 = arith.constant dense<0xFF800000> : vector<128xf32>
    %76 = vector.multi_reduction <maximumf>, %75, %cst_25 [1] : vector<128x128xf32> to vector<128xf32>
    %77 = vector.shape_cast %76 : vector<128xf32> to vector<128x1xf32>
    %78 = vector.broadcast %77 : vector<128x1xf32> to vector<128x128xf32>
    %79 = arith.subf %75, %78 : vector<128x128xf32>
    %80 = math.exp %79 : vector<128x128xf32>
    %cst_26 = arith.constant dense<0.000000e+00> : vector<128xf32>
    %81 = vector.multi_reduction <add>, %80, %cst_26 [1] : vector<128x128xf32> to vector<128xf32>
    %82 = vector.shape_cast %81 : vector<128xf32> to vector<128x1xf32>
    %83 = tpu.reciprocal %82 : vector<128x1xf32> -> vector<128x1xf32>
    %84 = vector.broadcast %83 : vector<128x1xf32> to vector<128x128xf32>
    %85 = arith.mulf %80, %84 : vector<128x128xf32>
    %86 = arith.truncf %85 : vector<128x128xf32> to vector<128x128xbf16>
    %87 = arith.truncf %57 : vector<128x256xf32> to vector<128x256xbf16>
    %cst_27 = arith.constant dense<0.000000e+00> : vector<128x256xf32>
    %88 = tpu.matmul %86, %87, %cst_27 {dimension_numbers = #tpu.dot_dimension_numbers<[1], [0], [0], [1], [0, 0, 1, 1], [], []>} : vector<128x128xbf16>, vector<128x256xbf16>, vector<128x256xf32> -> vector<128x256xf32>
    %89 = vector.extract_strided_slice %52 {offsets = [2, 0], sizes = [1, 256], strides = [1, 1]} : vector<5x256xf32> to vector<1x256xf32>
    %90 = vector.broadcast %89 : vector<1x256xf32> to vector<128x256xf32>
    %91 = arith.addf %88, %90 : vector<128x256xf32>
    %cst_28 = arith.constant 0.00999999977 : f32
    %92 = vector.broadcast %cst_28 : f32 to vector<128x256xf32>
    %93 = arith.mulf %92, %91 : vector<128x256xf32>
    %94 = arith.maximumf %91, %93 : vector<128x256xf32>
    %95 = vector.extract_strided_slice %52 {offsets = [3, 0], sizes = [1, 256], strides = [1, 1]} : vector<5x256xf32> to vector<1x256xf32>
    %96 = vector.broadcast %95 : vector<1x256xf32> to vector<128x256xf32>
    %97 = arith.mulf %94, %96 : vector<128x256xf32>
    %98 = vector.extract_strided_slice %52 {offsets = [4, 0], sizes = [1, 256], strides = [1, 1]} : vector<5x256xf32> to vector<1x256xf32>
    %99 = vector.broadcast %98 : vector<1x256xf32> to vector<128x256xf32>
    %100 = arith.addf %97, %99 : vector<128x256xf32>
    %101 = vector.extract_strided_slice %0 {offsets = [16, 0], sizes = [5, 128], strides = [1, 1]} : vector<40x512xf32> to vector<5x128xf32>
    %c2 = arith.constant 2 : index
    %c0_29 = arith.constant 0 : index
    %c0_30 = arith.constant 0 : index
    %102 = vector.load %arg2[%c2, %c0_29, %c0_30] : memref<5x128x128xf32, #tpu.memory_space<vmem>>, vector<1x128x128xf32>
    %103 = vector.shape_cast %102 : vector<1x128x128xf32> to vector<128x128xf32>
    %104 = arith.truncf %100 : vector<128x256xf32> to vector<128x256xbf16>
    %c0_31 = arith.constant 0 : index
    %c0_32 = arith.constant 0 : index
    %105 = vector.load %arg6[%c0_31, %c0_32] : memref<256x128xbf16, #tpu.memory_space<vmem>>, vector<256x128xbf16>
    %cst_33 = arith.constant dense<0.000000e+00> : vector<128x128xf32>
    %106 = tpu.matmul %104, %105, %cst_33 {dimension_numbers = #tpu.dot_dimension_numbers<[1], [0], [0], [1], [0, 0, 1, 1], [], []>} : vector<128x256xbf16>, vector<256x128xbf16>, vector<128x128xf32> -> vector<128x128xf32>
    %107 = vector.extract_strided_slice %101 {offsets = [0, 0], sizes = [1, 128], strides = [1, 1]} : vector<5x128xf32> to vector<1x128xf32>
    %108 = vector.broadcast %107 : vector<1x128xf32> to vector<128x128xf32>
    %109 = arith.mulf %106, %108 : vector<128x128xf32>
    %cst_34 = arith.constant dense<0.000000e+00> : vector<128xf32>
    %110 = vector.multi_reduction <add>, %109, %cst_34 [1] : vector<128x128xf32> to vector<128xf32>
    %111 = vector.shape_cast %110 : vector<128xf32> to vector<128x1xf32>
    %112 = vector.extract_strided_slice %101 {offsets = [1, 0], sizes = [1, 128], strides = [1, 1]} : vector<5x128xf32> to vector<1x128xf32>
    %113 = vector.broadcast %112 : vector<1x128xf32> to vector<128x128xf32>
    %114 = arith.mulf %106, %113 : vector<128x128xf32>
    %cst_35 = arith.constant dense<0.000000e+00> : vector<128xf32>
    %115 = vector.multi_reduction <add>, %114, %cst_35 [1] : vector<128x128xf32> to vector<128xf32>
    %116 = vector.shape_cast %115 : vector<128xf32> to vector<128x1xf32>
    %117 = tpu.transpose %111, [1, 0] : vector<128x1xf32> -> vector<1x128xf32>
    %118 = vector.broadcast %116 : vector<128x1xf32> to vector<128x128xf32>
    %119 = vector.broadcast %117 : vector<1x128xf32> to vector<128x128xf32>
    %120 = arith.addf %118, %119 : vector<128x128xf32>
    %121 = arith.addf %120, %103 : vector<128x128xf32>
    %cst_36 = arith.constant 2.000000e-01 : f32
    %122 = vector.broadcast %cst_36 : f32 to vector<128x128xf32>
    %123 = arith.mulf %122, %121 : vector<128x128xf32>
    %124 = arith.maximumf %121, %123 : vector<128x128xf32>
    %cst_37 = arith.constant dense<0xFF800000> : vector<128xf32>
    %125 = vector.multi_reduction <maximumf>, %124, %cst_37 [1] : vector<128x128xf32> to vector<128xf32>
    %126 = vector.shape_cast %125 : vector<128xf32> to vector<128x1xf32>
    %127 = vector.broadcast %126 : vector<128x1xf32> to vector<128x128xf32>
    %128 = arith.subf %124, %127 : vector<128x128xf32>
    %129 = math.exp %128 : vector<128x128xf32>
    %cst_38 = arith.constant dense<0.000000e+00> : vector<128xf32>
    %130 = vector.multi_reduction <add>, %129, %cst_38 [1] : vector<128x128xf32> to vector<128xf32>
    %131 = vector.shape_cast %130 : vector<128xf32> to vector<128x1xf32>
    %132 = tpu.reciprocal %131 : vector<128x1xf32> -> vector<128x1xf32>
    %133 = vector.broadcast %132 : vector<128x1xf32> to vector<128x128xf32>
    %134 = arith.mulf %129, %133 : vector<128x128xf32>
    %135 = arith.truncf %134 : vector<128x128xf32> to vector<128x128xbf16>
    %136 = arith.truncf %106 : vector<128x128xf32> to vector<128x128xbf16>
    %cst_39 = arith.constant dense<0.000000e+00> : vector<128x128xf32>
    %137 = tpu.matmul %135, %136, %cst_39 {dimension_numbers = #tpu.dot_dimension_numbers<[1], [0], [0], [1], [0, 0, 1, 1], [], []>} : vector<128x128xbf16>, vector<128x128xbf16>, vector<128x128xf32> -> vector<128x128xf32>
    %138 = vector.extract_strided_slice %101 {offsets = [2, 0], sizes = [1, 128], strides = [1, 1]} : vector<5x128xf32> to vector<1x128xf32>
    %139 = vector.broadcast %138 : vector<1x128xf32> to vector<128x128xf32>
    %140 = arith.addf %137, %139 : vector<128x128xf32>
    %cst_40 = arith.constant 0.00999999977 : f32
    %141 = vector.broadcast %cst_40 : f32 to vector<128x128xf32>
    %142 = arith.mulf %141, %140 : vector<128x128xf32>
    %143 = arith.maximumf %140, %142 : vector<128x128xf32>
    %144 = vector.extract_strided_slice %101 {offsets = [3, 0], sizes = [1, 128], strides = [1, 1]} : vector<5x128xf32> to vector<1x128xf32>
    %145 = vector.broadcast %144 : vector<1x128xf32> to vector<128x128xf32>
    %146 = arith.mulf %143, %145 : vector<128x128xf32>
    %147 = vector.extract_strided_slice %101 {offsets = [4, 0], sizes = [1, 128], strides = [1, 1]} : vector<5x128xf32> to vector<1x128xf32>
    %148 = vector.broadcast %147 : vector<1x128xf32> to vector<128x128xf32>
    %149 = arith.addf %146, %148 : vector<128x128xf32>
    %150 = vector.extract_strided_slice %0 {offsets = [24, 0], sizes = [5, 256], strides = [1, 1]} : vector<40x512xf32> to vector<5x256xf32>
    %c3 = arith.constant 3 : index
    %c0_41 = arith.constant 0 : index
    %c0_42 = arith.constant 0 : index
    %151 = vector.load %arg2[%c3, %c0_41, %c0_42] : memref<5x128x128xf32, #tpu.memory_space<vmem>>, vector<1x128x128xf32>
    %152 = vector.shape_cast %151 : vector<1x128x128xf32> to vector<128x128xf32>
    %153 = arith.truncf %149 : vector<128x128xf32> to vector<128x128xbf16>
    %c0_43 = arith.constant 0 : index
    %c0_44 = arith.constant 0 : index
    %154 = vector.load %arg7[%c0_43, %c0_44] : memref<128x256xbf16, #tpu.memory_space<vmem>>, vector<128x256xbf16>
    %cst_45 = arith.constant dense<0.000000e+00> : vector<128x256xf32>
    %155 = tpu.matmul %153, %154, %cst_45 {dimension_numbers = #tpu.dot_dimension_numbers<[1], [0], [0], [1], [0, 0, 1, 1], [], []>} : vector<128x128xbf16>, vector<128x256xbf16>, vector<128x256xf32> -> vector<128x256xf32>
    %156 = vector.extract_strided_slice %150 {offsets = [0, 0], sizes = [1, 256], strides = [1, 1]} : vector<5x256xf32> to vector<1x256xf32>
    %157 = vector.broadcast %156 : vector<1x256xf32> to vector<128x256xf32>
    %158 = arith.mulf %155, %157 : vector<128x256xf32>
    %cst_46 = arith.constant dense<0.000000e+00> : vector<128xf32>
    %159 = vector.multi_reduction <add>, %158, %cst_46 [1] : vector<128x256xf32> to vector<128xf32>
    %160 = vector.shape_cast %159 : vector<128xf32> to vector<128x1xf32>
    %161 = vector.extract_strided_slice %150 {offsets = [1, 0], sizes = [1, 256], strides = [1, 1]} : vector<5x256xf32> to vector<1x256xf32>
    %162 = vector.broadcast %161 : vector<1x256xf32> to vector<128x256xf32>
    %163 = arith.mulf %155, %162 : vector<128x256xf32>
    %cst_47 = arith.constant dense<0.000000e+00> : vector<128xf32>
    %164 = vector.multi_reduction <add>, %163, %cst_47 [1] : vector<128x256xf32> to vector<128xf32>
    %165 = vector.shape_cast %164 : vector<128xf32> to vector<128x1xf32>
    %166 = tpu.transpose %160, [1, 0] : vector<128x1xf32> -> vector<1x128xf32>
    %167 = vector.broadcast %165 : vector<128x1xf32> to vector<128x128xf32>
    %168 = vector.broadcast %166 : vector<1x128xf32> to vector<128x128xf32>
    %169 = arith.addf %167, %168 : vector<128x128xf32>
    %170 = arith.addf %169, %152 : vector<128x128xf32>
    %cst_48 = arith.constant 2.000000e-01 : f32
    %171 = vector.broadcast %cst_48 : f32 to vector<128x128xf32>
    %172 = arith.mulf %171, %170 : vector<128x128xf32>
    %173 = arith.maximumf %170, %172 : vector<128x128xf32>
    %cst_49 = arith.constant dense<0xFF800000> : vector<128xf32>
    %174 = vector.multi_reduction <maximumf>, %173, %cst_49 [1] : vector<128x128xf32> to vector<128xf32>
    %175 = vector.shape_cast %174 : vector<128xf32> to vector<128x1xf32>
    %176 = vector.broadcast %175 : vector<128x1xf32> to vector<128x128xf32>
    %177 = arith.subf %173, %176 : vector<128x128xf32>
    %178 = math.exp %177 : vector<128x128xf32>
    %cst_50 = arith.constant dense<0.000000e+00> : vector<128xf32>
    %179 = vector.multi_reduction <add>, %178, %cst_50 [1] : vector<128x128xf32> to vector<128xf32>
    %180 = vector.shape_cast %179 : vector<128xf32> to vector<128x1xf32>
    %181 = tpu.reciprocal %180 : vector<128x1xf32> -> vector<128x1xf32>
    %182 = vector.broadcast %181 : vector<128x1xf32> to vector<128x128xf32>
    %183 = arith.mulf %178, %182 : vector<128x128xf32>
    %184 = arith.truncf %183 : vector<128x128xf32> to vector<128x128xbf16>
    %185 = arith.truncf %155 : vector<128x256xf32> to vector<128x256xbf16>
    %cst_51 = arith.constant dense<0.000000e+00> : vector<128x256xf32>
    %186 = tpu.matmul %184, %185, %cst_51 {dimension_numbers = #tpu.dot_dimension_numbers<[1], [0], [0], [1], [0, 0, 1, 1], [], []>} : vector<128x128xbf16>, vector<128x256xbf16>, vector<128x256xf32> -> vector<128x256xf32>
    %187 = vector.extract_strided_slice %150 {offsets = [2, 0], sizes = [1, 256], strides = [1, 1]} : vector<5x256xf32> to vector<1x256xf32>
    %188 = vector.broadcast %187 : vector<1x256xf32> to vector<128x256xf32>
    %189 = arith.addf %186, %188 : vector<128x256xf32>
    %cst_52 = arith.constant 0.00999999977 : f32
    %190 = vector.broadcast %cst_52 : f32 to vector<128x256xf32>
    %191 = arith.mulf %190, %189 : vector<128x256xf32>
    %192 = arith.maximumf %189, %191 : vector<128x256xf32>
    %193 = vector.extract_strided_slice %150 {offsets = [3, 0], sizes = [1, 256], strides = [1, 1]} : vector<5x256xf32> to vector<1x256xf32>
    %194 = vector.broadcast %193 : vector<1x256xf32> to vector<128x256xf32>
    %195 = arith.mulf %192, %194 : vector<128x256xf32>
    %196 = vector.extract_strided_slice %150 {offsets = [4, 0], sizes = [1, 256], strides = [1, 1]} : vector<5x256xf32> to vector<1x256xf32>
    %197 = vector.broadcast %196 : vector<1x256xf32> to vector<128x256xf32>
    %198 = arith.addf %195, %197 : vector<128x256xf32>
    %199 = vector.extract_strided_slice %0 {offsets = [32, 0], sizes = [5, 512], strides = [1, 1]} : vector<40x512xf32> to vector<5x512xf32>
    %c4 = arith.constant 4 : index
    %c0_53 = arith.constant 0 : index
    %c0_54 = arith.constant 0 : index
    %200 = vector.load %arg2[%c4, %c0_53, %c0_54] : memref<5x128x128xf32, #tpu.memory_space<vmem>>, vector<1x128x128xf32>
    %201 = vector.shape_cast %200 : vector<1x128x128xf32> to vector<128x128xf32>
    %202 = arith.truncf %198 : vector<128x256xf32> to vector<128x256xbf16>
    %c0_55 = arith.constant 0 : index
    %c0_56 = arith.constant 0 : index
    %203 = vector.load %arg8[%c0_55, %c0_56] : memref<256x512xbf16, #tpu.memory_space<vmem>>, vector<256x512xbf16>
    %cst_57 = arith.constant dense<0.000000e+00> : vector<128x512xf32>
    %204 = tpu.matmul %202, %203, %cst_57 {dimension_numbers = #tpu.dot_dimension_numbers<[1], [0], [0], [1], [0, 0, 1, 1], [], []>} : vector<128x256xbf16>, vector<256x512xbf16>, vector<128x512xf32> -> vector<128x512xf32>
    %205 = vector.extract_strided_slice %199 {offsets = [0, 0], sizes = [1, 512], strides = [1, 1]} : vector<5x512xf32> to vector<1x512xf32>
    %206 = vector.broadcast %205 : vector<1x512xf32> to vector<128x512xf32>
    %207 = arith.mulf %204, %206 : vector<128x512xf32>
    %cst_58 = arith.constant dense<0.000000e+00> : vector<128xf32>
    %208 = vector.multi_reduction <add>, %207, %cst_58 [1] : vector<128x512xf32> to vector<128xf32>
    %209 = vector.shape_cast %208 : vector<128xf32> to vector<128x1xf32>
    %210 = vector.extract_strided_slice %199 {offsets = [1, 0], sizes = [1, 512], strides = [1, 1]} : vector<5x512xf32> to vector<1x512xf32>
    %211 = vector.broadcast %210 : vector<1x512xf32> to vector<128x512xf32>
    %212 = arith.mulf %204, %211 : vector<128x512xf32>
    %cst_59 = arith.constant dense<0.000000e+00> : vector<128xf32>
    %213 = vector.multi_reduction <add>, %212, %cst_59 [1] : vector<128x512xf32> to vector<128xf32>
    %214 = vector.shape_cast %213 : vector<128xf32> to vector<128x1xf32>
    %215 = tpu.transpose %209, [1, 0] : vector<128x1xf32> -> vector<1x128xf32>
    %216 = vector.broadcast %214 : vector<128x1xf32> to vector<128x128xf32>
    %217 = vector.broadcast %215 : vector<1x128xf32> to vector<128x128xf32>
    %218 = arith.addf %216, %217 : vector<128x128xf32>
    %219 = arith.addf %218, %201 : vector<128x128xf32>
    %cst_60 = arith.constant 2.000000e-01 : f32
    %220 = vector.broadcast %cst_60 : f32 to vector<128x128xf32>
    %221 = arith.mulf %220, %219 : vector<128x128xf32>
    %222 = arith.maximumf %219, %221 : vector<128x128xf32>
    %cst_61 = arith.constant dense<0xFF800000> : vector<128xf32>
    %223 = vector.multi_reduction <maximumf>, %222, %cst_61 [1] : vector<128x128xf32> to vector<128xf32>
    %224 = vector.shape_cast %223 : vector<128xf32> to vector<128x1xf32>
    %225 = vector.broadcast %224 : vector<128x1xf32> to vector<128x128xf32>
    %226 = arith.subf %222, %225 : vector<128x128xf32>
    %227 = math.exp %226 : vector<128x128xf32>
    %cst_62 = arith.constant dense<0.000000e+00> : vector<128xf32>
    %228 = vector.multi_reduction <add>, %227, %cst_62 [1] : vector<128x128xf32> to vector<128xf32>
    %229 = vector.shape_cast %228 : vector<128xf32> to vector<128x1xf32>
    %230 = tpu.reciprocal %229 : vector<128x1xf32> -> vector<128x1xf32>
    %231 = vector.broadcast %230 : vector<128x1xf32> to vector<128x128xf32>
    %232 = arith.mulf %227, %231 : vector<128x128xf32>
    %233 = arith.truncf %232 : vector<128x128xf32> to vector<128x128xbf16>
    %234 = arith.truncf %204 : vector<128x512xf32> to vector<128x512xbf16>
    %cst_63 = arith.constant dense<0.000000e+00> : vector<128x512xf32>
    %235 = tpu.matmul %233, %234, %cst_63 {dimension_numbers = #tpu.dot_dimension_numbers<[1], [0], [0], [1], [0, 0, 1, 1], [], []>} : vector<128x128xbf16>, vector<128x512xbf16>, vector<128x512xf32> -> vector<128x512xf32>
    %236 = vector.extract_strided_slice %199 {offsets = [2, 0], sizes = [1, 512], strides = [1, 1]} : vector<5x512xf32> to vector<1x512xf32>
    %237 = vector.broadcast %236 : vector<1x512xf32> to vector<128x512xf32>
    %238 = arith.addf %235, %237 : vector<128x512xf32>
    %cst_64 = arith.constant 0.00999999977 : f32
    %239 = vector.broadcast %cst_64 : f32 to vector<128x512xf32>
    %240 = arith.mulf %239, %238 : vector<128x512xf32>
    %241 = arith.maximumf %238, %240 : vector<128x512xf32>
    %242 = vector.extract_strided_slice %199 {offsets = [3, 0], sizes = [1, 512], strides = [1, 1]} : vector<5x512xf32> to vector<1x512xf32>
    %243 = vector.broadcast %242 : vector<1x512xf32> to vector<128x512xf32>
    %244 = arith.mulf %241, %243 : vector<128x512xf32>
    %245 = vector.extract_strided_slice %199 {offsets = [4, 0], sizes = [1, 512], strides = [1, 1]} : vector<5x512xf32> to vector<1x512xf32>
    %246 = vector.broadcast %245 : vector<1x512xf32> to vector<128x512xf32>
    %247 = arith.addf %244, %246 : vector<128x512xf32>
    %c0_65 = arith.constant 0 : index
    %c0_66 = arith.constant 0 : index
    %248 = vector.load %arg3[%c0_65, %c0_66] : memref<16x128xbf16, #tpu.memory_space<vmem>>, vector<16x128xbf16>
    %249 = arith.truncf %247 : vector<128x512xf32> to vector<128x512xbf16>
    %cst_67 = arith.constant dense<0.000000e+00> : vector<16x512xf32>
    %250 = tpu.matmul %248, %249, %cst_67 {dimension_numbers = #tpu.dot_dimension_numbers<[1], [0], [0], [1], [0, 0, 1, 1], [], []>} : vector<16x128xbf16>, vector<128x512xbf16>, vector<16x512xf32> -> vector<16x512xf32>
    %251 = arith.truncf %250 : vector<16x512xf32> to vector<16x512xbf16>
    %c0_68 = arith.constant 0 : index
    %c0_69 = arith.constant 0 : index
    %252 = vector.load %arg10[%c0_68, %c0_69] : memref<512x128xbf16, #tpu.memory_space<vmem>>, vector<512x128xbf16>
    %cst_70 = arith.constant dense<0.000000e+00> : vector<16x128xf32>
    %253 = tpu.matmul %251, %252, %cst_70 {dimension_numbers = #tpu.dot_dimension_numbers<[1], [0], [0], [1], [0, 0, 1, 1], [], []>} : vector<16x512xbf16>, vector<512x128xbf16>, vector<16x128xf32> -> vector<16x128xf32>
    %254 = vector.extract_strided_slice %1 {offsets = [0, 0], sizes = [1, 128], strides = [1, 1]} : vector<3x128xf32> to vector<1x128xf32>
    %255 = vector.broadcast %254 : vector<1x128xf32> to vector<16x128xf32>
    %256 = arith.addf %253, %255 : vector<16x128xf32>
    %cst_71 = arith.constant 0.000000e+00 : f32
    %257 = vector.broadcast %cst_71 : f32 to vector<16x128xf32>
    %258 = arith.maximumf %256, %257 : vector<16x128xf32>
    %259 = arith.truncf %258 : vector<16x128xf32> to vector<16x128xbf16>
    %c0_72 = arith.constant 0 : index
    %c0_73 = arith.constant 0 : index
    %260 = vector.load %arg11[%c0_72, %c0_73] : memref<128x16xbf16, #tpu.memory_space<vmem>>, vector<128x16xbf16>
    %cst_74 = arith.constant dense<0.000000e+00> : vector<16x16xf32>
    %261 = tpu.matmul %259, %260, %cst_74 {dimension_numbers = #tpu.dot_dimension_numbers<[1], [0], [0], [1], [0, 0, 1, 1], [], []>} : vector<16x128xbf16>, vector<128x16xbf16>, vector<16x16xf32> -> vector<16x16xf32>
    %262 = vector.extract_strided_slice %1 {offsets = [1, 0], sizes = [1, 16], strides = [1, 1]} : vector<3x128xf32> to vector<1x16xf32>
    %263 = vector.broadcast %262 : vector<1x16xf32> to vector<16x16xf32>
    %264 = arith.addf %261, %263 : vector<16x16xf32>
    %cst_75 = arith.constant 0.000000e+00 : f32
    %265 = vector.broadcast %cst_75 : f32 to vector<16x16xf32>
    %266 = arith.maximumf %264, %265 : vector<16x16xf32>
    %267 = arith.truncf %266 : vector<16x16xf32> to vector<16x16xbf16>
    %c0_76 = arith.constant 0 : index
    %c0_77 = arith.constant 0 : index
    %268 = vector.load %arg12[%c0_76, %c0_77] : memref<16x128xbf16, #tpu.memory_space<vmem>>, vector<16x128xbf16>
    %cst_78 = arith.constant dense<0.000000e+00> : vector<16x128xf32>
    %269 = tpu.matmul %267, %268, %cst_78 {dimension_numbers = #tpu.dot_dimension_numbers<[1], [0], [0], [1], [0, 0, 1, 1], [], []>} : vector<16x16xbf16>, vector<16x128xbf16>, vector<16x128xf32> -> vector<16x128xf32>
    %270 = vector.extract_strided_slice %1 {offsets = [2, 0], sizes = [1, 128], strides = [1, 1]} : vector<3x128xf32> to vector<1x128xf32>
    %271 = vector.broadcast %270 : vector<1x128xf32> to vector<16x128xf32>
    %272 = arith.addf %269, %271 : vector<16x128xf32>
    %c0_79 = arith.constant 0 : index
    %c0_80 = arith.constant 0 : index
    %273 = vector.load %arg14[%c0_79, %c0_80] : memref<16x128xf32, #tpu.memory_space<vmem>>, vector<16x128xf32>
    tpu.vector_store %arg14[%c0_79, %c0_80], %272 {strides = array<i32>} : memref<16x128xf32, #tpu.memory_space<vmem>>, vector<16x128xf32>,
    return
  }
  func.func @transform_0(%arg0: i32) -> (i32, i32) {
    %c0_i32 = arith.constant 0 : i32
    %c0_i32_0 = arith.constant 0 : i32
    return %arg0, %c0_i32 : i32, i32
  }
  func.func @transform_1(%arg0: i32) -> (i32, i32, i32) {
    %c0_i32 = arith.constant 0 : i32
    %c0_i32_0 = arith.constant 0 : i32
    %c0_i32_1 = arith.constant 0 : i32
    return %c0_i32, %arg0, %c0_i32_0 : i32, i32, i32
  }
  func.func @transform_2(%arg0: i32) -> (i32, i32) {
    %c0_i32 = arith.constant 0 : i32
    %c0_i32_0 = arith.constant 0 : i32
    return %arg0, %c0_i32 : i32, i32
  }
  func.func @transform_3(%arg0: i32) -> (i32, i32) {
    %c0_i32 = arith.constant 0 : i32
    %c0_i32_0 = arith.constant 0 : i32
    %c0_i32_1 = arith.constant 0 : i32
    return %c0_i32, %c0_i32_0 : i32, i32
  }
  func.func @transform_4(%arg0: i32) -> (i32, i32) {
    %c0_i32 = arith.constant 0 : i32
    %c0_i32_0 = arith.constant 0 : i32
    %c0_i32_1 = arith.constant 0 : i32
    return %c0_i32, %c0_i32_0 : i32, i32
  }
  func.func @transform_5(%arg0: i32) -> (i32, i32) {
    %c0_i32 = arith.constant 0 : i32
    %c0_i32_0 = arith.constant 0 : i32
    %c0_i32_1 = arith.constant 0 : i32
    return %c0_i32, %c0_i32_0 : i32, i32
  }
  func.func @transform_6(%arg0: i32) -> (i32, i32) {
    %c0_i32 = arith.constant 0 : i32
    %c0_i32_0 = arith.constant 0 : i32
    %c0_i32_1 = arith.constant 0 : i32
    return %c0_i32, %c0_i32_0 : i32, i32
  }
  func.func @transform_7(%arg0: i32) -> (i32, i32) {
    %c0_i32 = arith.constant 0 : i32
    %c0_i32_0 = arith.constant 0 : i32
    %c0_i32_1 = arith.constant 0 : i32
    return %c0_i32, %c0_i32_0 : i32, i32
  }
  func.func @transform_8(%arg0: i32) -> (i32, i32) {
    %c0_i32 = arith.constant 0 : i32
    %c0_i32_0 = arith.constant 0 : i32
    %c0_i32_1 = arith.constant 0 : i32
    return %c0_i32, %c0_i32_0 : i32, i32
  }
  func.func @transform_9(%arg0: i32) -> (i32, i32) {
    %c0_i32 = arith.constant 0 : i32
    %c0_i32_0 = arith.constant 0 : i32
    %c0_i32_1 = arith.constant 0 : i32
    return %c0_i32, %c0_i32_0 : i32, i32
  }
  func.func @transform_10(%arg0: i32) -> (i32, i32) {
    %c0_i32 = arith.constant 0 : i32
    %c0_i32_0 = arith.constant 0 : i32
    %c0_i32_1 = arith.constant 0 : i32
    return %c0_i32, %c0_i32_0 : i32, i32
  }
  func.func @transform_11(%arg0: i32) -> (i32, i32) {
    %c0_i32 = arith.constant 0 : i32
    %c0_i32_0 = arith.constant 0 : i32
    %c0_i32_1 = arith.constant 0 : i32
    return %c0_i32, %c0_i32_0 : i32, i32
  }
  func.func @transform_12(%arg0: i32) -> (i32, i32) {
    %c0_i32 = arith.constant 0 : i32
    %c0_i32_0 = arith.constant 0 : i32
    %c0_i32_1 = arith.constant 0 : i32
    return %c0_i32, %c0_i32_0 : i32, i32
  }
  func.func @transform_13(%arg0: i32) -> (i32, i32) {
    %c0_i32 = arith.constant 0 : i32
    %c0_i32_0 = arith.constant 0 : i32
    return %arg0, %c0_i32 : i32, i32
  }
}

</mosaic_0001>

<llo_original>
// kernel: tpu_custom_call.1
$region0: #{tpu_custom_call.1}
  #allocation0 [shape = 'u32[]', space=smem, size = 0x4, offset = 0x4, fixed_abs, tag = 'smem constant byte address 0x4 - core index']
  #allocation1 [shape = 'u32[144,128]{1,0:T(1,128)}', space=vmem, size = 0x12000, scoped, tag = 'internal scratch']
  #allocation14 [shape = 's32[]', space=sflag, size = 0x4, offset = 0, fixed_abs, tag = 'sflag constant byte address 0x0 - dummy sync flag']
  %s0 = inlined_call_operand.vmem [shape: f32[256,16], index: 0, kind: input, shape index: {}]
  %s1 = inlined_call_operand.hbm [shape: f32[5,256,128], index: 1, kind: input, shape index: {}]
  %s2 = inlined_call_operand.vmem [shape: bf16[32,128], index: 2, kind: input, shape index: {}]
  %s3 = inlined_call_operand.vmem [shape: bf16[16,512], index: 3, kind: input, shape index: {}]
  %s4 = inlined_call_operand.hbm [shape: bf16[512,256], index: 4, kind: input, shape index: {}]
  %s5 = inlined_call_operand.hbm [shape: bf16[256,128], index: 5, kind: input, shape index: {}]
  %s6 = inlined_call_operand.hbm [shape: bf16[128,256], index: 6, kind: input, shape index: {}]
  %s7 = inlined_call_operand.hbm [shape: bf16[256,512], index: 7, kind: input, shape index: {}]
  %s8 = inlined_call_operand.hbm [shape: f32[40,512], index: 8, kind: input, shape index: {}]
  %s9 = inlined_call_operand.vmem [shape: bf16[512,128], index: 9, kind: input, shape index: {}]
  %s10 = inlined_call_operand.vmem [shape: bf16[128,16], index: 10, kind: input, shape index: {}]
  %s11 = inlined_call_operand.vmem [shape: bf16[16,128], index: 11, kind: input, shape index: {}]
  %s12 = inlined_call_operand.vmem [shape: f32[3,128], index: 12, kind: input, shape index: {}]
  %s13 = inlined_call_operand.hbm [shape: f32[32,128], index: 13, kind: output, shape index: {}]
  %s14 = sld [smem:[#allocation0]]
  $region109: #{tpu_custom_call.1} parent=0
    _
  %s16 = ssub.s32 1, %s14
  %s17 = scalar_select 0, %s16, %s14
  $region1: #{tpu_custom_call.1} parent=0
    #allocation2 [shape = 'u8[655360]{0}', space=vmem, size = 0xa0000, scoped, tag = 'input window, operand 1']
    #allocation3 [shape = 's32[2]{0}', space=sflag, size = 0x8, scoped, tag = 'scoped memory for tpu_custom_call.1']
    #allocation4 [shape = 's32[2]{0}', space=sflag, size = 0x8, scoped, tag = 'scoped memory for tpu_custom_call.1']
    #allocation5 [shape = 'u8[262144]{0}', space=vmem, size = 0x40000, scoped, tag = 'input window, operand 4, single buffered']
    #allocation6 [shape = 's32[1]{0}', space=sflag, size = 0x4, scoped, tag = 'scoped memory for tpu_custom_call.1']
    #allocation7 [shape = 'u8[65536]{0}', space=vmem, size = 0x10000, scoped, tag = 'input window, operand 5, single buffered']
    #allocation8 [shape = 'u8[65536]{0}', space=vmem, size = 0x10000, scoped, tag = 'input window, operand 6, single buffered']
    #allocation9 [shape = 's32[1]{0}', space=sflag, size = 0x4, scoped, tag = 'scoped memory for tpu_custom_call.1']
    #allocation10 [shape = 'u8[262144]{0}', space=vmem, size = 0x40000, scoped, tag = 'input window, operand 7, single buffered']
    #allocation11 [shape = 'u8[81920]{0}', space=vmem, size = 0x14000, scoped, tag = 'input window, operand 8, single buffered']
    #allocation12 [shape = 's32[1]{0}', space=sflag, size = 0x4, scoped, tag = 'scoped memory for tpu_custom_call.1']
    #allocation13 [shape = 'u8[16384]{0}', space=vmem, size = 0x4000, scoped, tag = 'output window, operand 0']
    %18 = vsyncpa [#allocation3], 0
    %s19 = scalar_lea.sflag [#allocation3], 1
    %20 = vsyncpa %s19, 0
    %21 = vsyncpa [#allocation6], 0
    %22 = vsyncpa [#allocation9], 0
    %23 = vsyncpa [#allocation12], 0
    %24 = vsyncpa [#allocation4], 0
    %s25 = scalar_lea.sflag [#allocation4], 1
    %26 = vsyncpa %s25, 0
    loop: start=0, step=1, limit=4
    $region2: #{tpu_custom_call.1} parent=1 // loop_pre_header
      _
    $region3: #{tpu_custom_call.1} parent=1 // loop_header
      %s28 = sphi 0, %s32
      %p29 = scmp.ge.s32.totalorder %s28, 4
      %s38 = sphi 0, %s40
      %s41 = sphi 0, %s38
      %s42 = sphi 0, %s41
      %s58 = sphi 0, %s42
      %s64 = sphi 0, %s66
      %s67 = sphi 0, %s64
      %s68 = sphi 0, %s67
      %s84 = sphi 0, %s68
      %s90 = sphi 0, %s92
      %s93 = sphi 0, %s90
      %s94 = sphi 0, %s93
      %s110 = sphi 0, %s94
      %s114 = sphi 0, %s114
      %s116 = sphi 0, %s114
      %s117 = sphi 0, %s116
      %s131 = sphi 0, %s117
      %s135 = sphi 0, %s135
      %s137 = sphi 0, %s135
      %s138 = sphi 0, %s137
      %s152 = sphi 0, %s138
      %s156 = sphi 0, %s156
      %s158 = sphi 0, %s156
      %s159 = sphi 0, %s158
      %s173 = sphi 0, %s159
      %s177 = sphi 0, %s177
      %s179 = sphi 0, %s177
      %s180 = sphi 0, %s179
      %s194 = sphi 0, %s180
      %s198 = sphi 0, %s198
      %s200 = sphi 0, %s198
      %s201 = sphi 0, %s200
      %s215 = sphi 0, %s201
      %s219 = sphi 0, %s219
      %s221 = sphi 0, %s219
      %s222 = sphi 0, %s221
      %s236 = sphi 0, %s222
      %s240 = sphi 0, %s240
      %s242 = sphi 0, %s240
      %s243 = sphi 0, %s242
      %s257 = sphi 0, %s243
      %s261 = sphi 0, %s261
      %s263 = sphi 0, %s261
      %s264 = sphi 0, %s263
      %s278 = sphi 0, %s264
      %s282 = sphi 0, %s282
      %s284 = sphi 0, %s282
      %s285 = sphi 0, %s284
      %s299 = sphi 0, %s285
      %s303 = sphi 0, %s303
      %s305 = sphi 0, %s303
      %s306 = sphi 0, %s305
      %s320 = sphi 0, %s306
      %s326 = sphi 0, %s328
      %s329 = sphi 0, %s326
      %s330 = sphi 0, %s329
      %s346 = sphi 0, %s330
    $region4: #{tpu_custom_call.1} parent=1 // loop_header_branch
      %31 = sbr.rel (%p29) target = $region8
    $region5: #{tpu_custom_call.1} parent=1 // loop_body
      %s33 = ssub.s32 %s28, 1
      %s34 = ssub.s32 %s28, 2
      %s35 = sadd.s32 %s28, 1
      %s36 = ssub.s32 %s28, %s35
      %p37 = scmp.eq.s32.totalorder %s36, 0
      %s39 = sadd.s32 %s38, 1
      %s40 = scalar_select %p37, %s38, %s39
      %p43 = pneg %p37
      %p44 = scmp.eq.s32.totalorder %s28, 1
      %p45 = por %p43, %p44
      %p46 = scmp.ne.s32.totalorder %s38, %s41
      %p47 = scmp.eq.s32.totalorder %s28, 0
      %p48 = por %p46, %p47
      %p49 = scmp.ne.s32.totalorder %s38, %s41
      %p50 = scmp.eq.s32.totalorder %s33, 1
      %p51 = por %p49, %p50
      %p52 = scmp.ne.s32.totalorder %s41, %s42
      %p53 = scmp.eq.s32.totalorder %s33, 0
      %p54 = por %p52, %p53
      %p55 = scmp.ne.s32.totalorder %s41, %s42
      %p56 = scmp.eq.s32.totalorder %s34, 1
      %p57 = por %p55, %p56
      %p59 = scmp.ne.s32.totalorder %s42, %s58
      %p60 = scmp.eq.s32.totalorder %s34, 0
      %p61 = por %p59, %p60
      %s62 = ssub.s32 %s28, %s35
      %p63 = scmp.eq.s32.totalorder %s62, 0
      %s65 = sadd.s32 %s64, 1
      %s66 = scalar_select %p63, %s64, %s65
      %p69 = pneg %p63
      %p70 = scmp.eq.s32.totalorder %s28, 1
      %p71 = por %p69, %p70
      %p72 = scmp.ne.s32.totalorder %s64, %s67
      %p73 = scmp.eq.s32.totalorder %s28, 0
      %p74 = por %p72, %p73
      %p75 = scmp.ne.s32.totalorder %s64, %s67
      %p76 = scmp.eq.s32.totalorder %s33, 1
      %p77 = por %p75, %p76
      %p78 = scmp.ne.s32.totalorder %s67, %s68
      %p79 = scmp.eq.s32.totalorder %s33, 0
      %p80 = por %p78, %p79
      %p81 = scmp.ne.s32.totalorder %s67, %s68
      %p82 = scmp.eq.s32.totalorder %s34, 1
      %p83 = por %p81, %p82
      %p85 = scmp.ne.s32.totalorder %s68, %s84
      %p86 = scmp.eq.s32.totalorder %s34, 0
      %p87 = por %p85, %p86
      %s88 = ssub.s32 %s28, %s35
      %p89 = scmp.eq.s32.totalorder %s88, 0
      %s91 = sadd.s32 %s90, 1
      %s92 = scalar_select %p89, %s90, %s91
      %p95 = pneg %p89
      %p96 = scmp.eq.s32.totalorder %s28, 1
      %p97 = por %p95, %p96
      %p98 = scmp.ne.s32.totalorder %s90, %s93
      %p99 = scmp.eq.s32.totalorder %s28, 0
      %p100 = por %p98, %p99
      %p101 = scmp.ne.s32.totalorder %s90, %s93
      %p102 = scmp.eq.s32.totalorder %s33, 1
      %p103 = por %p101, %p102
      %p104 = scmp.ne.s32.totalorder %s93, %s94
      %p105 = scmp.eq.s32.totalorder %s33, 0
      %p106 = por %p104, %p105
      %p107 = scmp.ne.s32.totalorder %s93, %s94
      %p108 = scmp.eq.s32.totalorder %s34, 1
      %p109 = por %p107, %p108
      %p111 = scmp.ne.s32.totalorder %s94, %s110
      %p112 = scmp.eq.s32.totalorder %s34, 0
      %p113 = por %p111, %p112
      %s115 = sadd.s32 %s114, 1
      %p118 = scmp.eq.s32.totalorder %s28, 1
      %p119 = scmp.ne.s32.totalorder %s114, %s116
      %p120 = scmp.eq.s32.totalorder %s28, 0
      %p121 = por %p119, %p120
      %p122 = scmp.ne.s32.totalorder %s114, %s116
      %p123 = scmp.eq.s32.totalorder %s33, 1
      %p124 = por %p122, %p123
      %p125 = scmp.ne.s32.totalorder %s116, %s117
      %p126 = scmp.eq.s32.totalorder %s33, 0
      %p127 = por %p125, %p126
      %p128 = scmp.ne.s32.totalorder %s116, %s117
      %p129 = scmp.eq.s32.totalorder %s34, 1
      %p130 = por %p128, %p129
      %p132 = scmp.ne.s32.totalorder %s117, %s131
      %p133 = scmp.eq.s32.totalorder %s34, 0
      %p134 = por %p132, %p133
      %s136 = sadd.s32 %s135, 1
      %p139 = scmp.eq.s32.totalorder %s28, 1
      %p140 = scmp.ne.s32.totalorder %s135, %s137
      %p141 = scmp.eq.s32.totalorder %s28, 0
      %p142 = por %p140, %p141
      %p143 = scmp.ne.s32.totalorder %s135, %s137
      %p144 = scmp.eq.s32.totalorder %s33, 1
      %p145 = por %p143, %p144
      %p146 = scmp.ne.s32.totalorder %s137, %s138
      %p147 = scmp.eq.s32.totalorder %s33, 0
      %p148 = por %p146, %p147
      %p149 = scmp.ne.s32.totalorder %s137, %s138
      %p150 = scmp.eq.s32.totalorder %s34, 1
      %p151 = por %p149, %p150
      %p153 = scmp.ne.s32.totalorder %s138, %s152
      %p154 = scmp.eq.s32.totalorder %s34, 0
      %p155 = por %p153, %p154
      %s157 = sadd.s32 %s156, 1
      %p160 = scmp.eq.s32.totalorder %s28, 1
      %p161 = scmp.ne.s32.totalorder %s156, %s158
      %p162 = scmp.eq.s32.totalorder %s28, 0
      %p163 = por %p161, %p162
      %p164 = scmp.ne.s32.totalorder %s156, %s158
      %p165 = scmp.eq.s32.totalorder %s33, 1
      %p166 = por %p164, %p165
      %p167 = scmp.ne.s32.totalorder %s158, %s159
      %p168 = scmp.eq.s32.totalorder %s33, 0
      %p169 = por %p167, %p168
      %p170 = scmp.ne.s32.totalorder %s158, %s159
      %p171 = scmp.eq.s32.totalorder %s34, 1
      %p172 = por %p170, %p171
      %p174 = scmp.ne.s32.totalorder %s159, %s173
      %p175 = scmp.eq.s32.totalorder %s34, 0
      %p176 = por %p174, %p175
      %s178 = sadd.s32 %s177, 1
      %p181 = scmp.eq.s32.totalorder %s28, 1
      %p182 = scmp.ne.s32.totalorder %s177, %s179
      %p183 = scmp.eq.s32.totalorder %s28, 0
      %p184 = por %p182, %p183
      %p185 = scmp.ne.s32.totalorder %s177, %s179
      %p186 = scmp.eq.s32.totalorder %s33, 1
      %p187 = por %p185, %p186
      %p188 = scmp.ne.s32.totalorder %s179, %s180
      %p189 = scmp.eq.s32.totalorder %s33, 0
      %p190 = por %p188, %p189
      %p191 = scmp.ne.s32.totalorder %s179, %s180
      %p192 = scmp.eq.s32.totalorder %s34, 1
      %p193 = por %p191, %p192
      %p195 = scmp.ne.s32.totalorder %s180, %s194
      %p196 = scmp.eq.s32.totalorder %s34, 0
      %p197 = por %p195, %p196
      %s199 = sadd.s32 %s198, 1
      %p202 = scmp.eq.s32.totalorder %s28, 1
      %p203 = scmp.ne.s32.totalorder %s198, %s200
      %p204 = scmp.eq.s32.totalorder %s28, 0
      %p205 = por %p203, %p204
      %p206 = scmp.ne.s32.totalorder %s198, %s200
      %p207 = scmp.eq.s32.totalorder %s33, 1
      %p208 = por %p206, %p207
      %p209 = scmp.ne.s32.totalorder %s200, %s201
      %p210 = scmp.eq.s32.totalorder %s33, 0
      %p211 = por %p209, %p210
      %p212 = scmp.ne.s32.totalorder %s200, %s201
      %p213 = scmp.eq.s32.totalorder %s34, 1
      %p214 = por %p212, %p213
      %p216 = scmp.ne.s32.totalorder %s201, %s215
      %p217 = scmp.eq.s32.totalorder %s34, 0
      %p218 = por %p216, %p217
      %s220 = sadd.s32 %s219, 1
      %p223 = scmp.eq.s32.totalorder %s28, 1
      %p224 = scmp.ne.s32.totalorder %s219, %s221
      %p225 = scmp.eq.s32.totalorder %s28, 0
      %p226 = por %p224, %p225
      %p227 = scmp.ne.s32.totalorder %s219, %s221
      %p228 = scmp.eq.s32.totalorder %s33, 1
      %p229 = por %p227, %p228
      %p230 = scmp.ne.s32.totalorder %s221, %s222
      %p231 = scmp.eq.s32.totalorder %s33, 0
      %p232 = por %p230, %p231
      %p233 = scmp.ne.s32.totalorder %s221, %s222
      %p234 = scmp.eq.s32.totalorder %s34, 1
      %p235 = por %p233, %p234
      %p237 = scmp.ne.s32.totalorder %s222, %s236
      %p238 = scmp.eq.s32.totalorder %s34, 0
      %p239 = por %p237, %p238
      %s241 = sadd.s32 %s240, 1
      %p244 = scmp.eq.s32.totalorder %s28, 1
      %p245 = scmp.ne.s32.totalorder %s240, %s242
      %p246 = scmp.eq.s32.totalorder %s28, 0
      %p247 = por %p245, %p246
      %p248 = scmp.ne.s32.totalorder %s240, %s242
      %p249 = scmp.eq.s32.totalorder %s33, 1
      %p250 = por %p248, %p249
      %p251 = scmp.ne.s32.totalorder %s242, %s243
      %p252 = scmp.eq.s32.totalorder %s33, 0
      %p253 = por %p251, %p252
      %p254 = scmp.ne.s32.totalorder %s242, %s243
      %p255 = scmp.eq.s32.totalorder %s34, 1
      %p256 = por %p254, %p255
      %p258 = scmp.ne.s32.totalorder %s243, %s257
      %p259 = scmp.eq.s32.totalorder %s34, 0
      %p260 = por %p258, %p259
      %s262 = sadd.s32 %s261, 1
      %p265 = scmp.eq.s32.totalorder %s28, 1
      %p266 = scmp.ne.s32.totalorder %s261, %s263
      %p267 = scmp.eq.s32.totalorder %s28, 0
      %p268 = por %p266, %p267
      %p269 = scmp.ne.s32.totalorder %s261, %s263
      %p270 = scmp.eq.s32.totalorder %s33, 1
      %p271 = por %p269, %p270
      %p272 = scmp.ne.s32.totalorder %s263, %s264
      %p273 = scmp.eq.s32.totalorder %s33, 0
      %p274 = por %p272, %p273
      %p275 = scmp.ne.s32.totalorder %s263, %s264
      %p276 = scmp.eq.s32.totalorder %s34, 1
      %p277 = por %p275, %p276
      %p279 = scmp.ne.s32.totalorder %s264, %s278
      %p280 = scmp.eq.s32.totalorder %s34, 0
      %p281 = por %p279, %p280
      %s283 = sadd.s32 %s282, 1
      %p286 = scmp.eq.s32.totalorder %s28, 1
      %p287 = scmp.ne.s32.totalorder %s282, %s284
      %p288 = scmp.eq.s32.totalorder %s28, 0
      %p289 = por %p287, %p288
      %p290 = scmp.ne.s32.totalorder %s282, %s284
      %p291 = scmp.eq.s32.totalorder %s33, 1
      %p292 = por %p290, %p291
      %p293 = scmp.ne.s32.totalorder %s284, %s285
      %p294 = scmp.eq.s32.totalorder %s33, 0
      %p295 = por %p293, %p294
      %p296 = scmp.ne.s32.totalorder %s284, %s285
      %p297 = scmp.eq.s32.totalorder %s34, 1
      %p298 = por %p296, %p297
      %p300 = scmp.ne.s32.totalorder %s285, %s299
      %p301 = scmp.eq.s32.totalorder %s34, 0
      %p302 = por %p300, %p301
      %s304 = sadd.s32 %s303, 1
      %p307 = scmp.eq.s32.totalorder %s28, 1
      %p308 = scmp.ne.s32.totalorder %s303, %s305
      %p309 = scmp.eq.s32.totalorder %s28, 0
      %p310 = por %p308, %p309
      %p311 = scmp.ne.s32.totalorder %s303, %s305
      %p312 = scmp.eq.s32.totalorder %s33, 1
      %p313 = por %p311, %p312
      %p314 = scmp.ne.s32.totalorder %s305, %s306
      %p315 = scmp.eq.s32.totalorder %s33, 0
      %p316 = por %p314, %p315
      %p317 = scmp.ne.s32.totalorder %s305, %s306
      %p318 = scmp.eq.s32.totalorder %s34, 1
      %p319 = por %p317, %p318
      %p321 = scmp.ne.s32.totalorder %s306, %s320
      %p322 = scmp.eq.s32.totalorder %s34, 0
      %p323 = por %p321, %p322
      %s324 = ssub.s32 %s28, %s35
      %p325 = scmp.eq.s32.totalorder %s324, 0
      %s327 = sadd.s32 %s326, 1
      %s328 = scalar_select %p325, %s326, %s327
      %p331 = pneg %p325
      %p332 = scmp.eq.s32.totalorder %s28, 1
      %p333 = por %p331, %p332
      %p334 = scmp.ne.s32.totalorder %s326, %s329
      %p335 = scmp.eq.s32.totalorder %s28, 0
      %p336 = por %p334, %p335
      %p337 = scmp.ne.s32.totalorder %s326, %s329
      %p338 = scmp.eq.s32.totalorder %s33, 1
      %p339 = por %p337, %p338
      %p340 = scmp.ne.s32.totalorder %s329, %s330
      %p341 = scmp.eq.s32.totalorder %s33, 0
      %p342 = por %p340, %p341
      %p343 = scmp.ne.s32.totalorder %s329, %s330
      %p344 = scmp.eq.s32.totalorder %s34, 1
      %p345 = por %p343, %p344
      %p347 = scmp.ne.s32.totalorder %s330, %s346
      %p348 = scmp.eq.s32.totalorder %s34, 0
      %p349 = por %p347, %p348
      %p350 = scmp.le.s32.totalorder 1, %s28
      %p351 = scmp.lt.s32.totalorder %s28, 3
      %p352 = pnand %p350, %p351
      %p353 = pneg %p352
      // Predicated region
      $region9: #{tpu_custom_call.1} parent=5 // pred_check
        _
      $region10: #{tpu_custom_call.1} parent=5 // pred_check_branch
        %355 = sbr.rel (%p352) target = $region12
      $region11: #{tpu_custom_call.1} parent=5 // pred_region
        %s356 = ssub.s32 %s28, 1
        // Predicated region
        $region13: #{tpu_custom_call.1} parent=11 // pred_check
          %p357 = pneg %p127
        $region14: #{tpu_custom_call.1} parent=11 // pred_check_branch
          %359 = sbr.rel (%p357) target = $region16
        $region15: #{tpu_custom_call.1} parent=11 // pred_region
          _
        $region16: #{tpu_custom_call.1} parent=11 // pred_fallthru
          _
        // Predicated region
        $region17: #{tpu_custom_call.1} parent=11 // pred_check
          %p360 = pneg %p148
        $region18: #{tpu_custom_call.1} parent=11 // pred_check_branch
          %362 = sbr.rel (%p360) target = $region20
        $region19: #{tpu_custom_call.1} parent=11 // pred_region
          %s364 = ssub.s32 8192, 8192
          %365 = vsyncadd [#allocation6], %s364
          %s366 = sshll.u32 [#allocation5], 4
          %s367 = int_to_ptr.vmem [resolvable:$true] %s366
          %372 = dma.hbm_to_vmem [thread:$0]  %s4, 8192, %s367, [#allocation6], 128, 128, 8
        $region20: #{tpu_custom_call.1} parent=11 // pred_fallthru
          _
        // Predicated region
        $region21: #{tpu_custom_call.1} parent=11 // pred_check
          %p373 = pneg %p169
        $region22: #{tpu_custom_call.1} parent=11 // pred_check_branch
          %375 = sbr.rel (%p373) target = $region24
        $region23: #{tpu_custom_call.1} parent=11 // pred_region
          %s377 = ssub.s32 2048, 2048
          %378 = vsyncadd [#allocation6], %s377
          %s379 = sshll.u32 [#allocation7], 4
          %s380 = int_to_ptr.vmem [resolvable:$true] %s379
          %385 = dma.hbm_to_vmem [thread:$0]  %s5, 2048, %s380, [#allocation6], 64, 64, 4
        $region24: #{tpu_custom_call.1} parent=11 // pred_fallthru
          _
        // Predicated region
        $region25: #{tpu_custom_call.1} parent=11 // pred_check
          %p386 = pneg %p190
        $region26: #{tpu_custom_call.1} parent=11 // pred_check_branch
          %388 = sbr.rel (%p386) target = $region28
        $region27: #{tpu_custom_call.1} parent=11 // pred_region
          %s390 = ssub.s32 2048, 2048
          %391 = vsyncadd [#allocation9], %s390
          %s392 = sshll.u32 [#allocation8], 4
          %s393 = int_to_ptr.vmem [resolvable:$true] %s392
          %398 = dma.hbm_to_vmem [thread:$0]  %s6, 2048, %s393, [#allocation9], 128, 128, 8
        $region28: #{tpu_custom_call.1} parent=11 // pred_fallthru
          _
        // Predicated region
        $region29: #{tpu_custom_call.1} parent=11 // pred_check
          %p399 = pneg %p211
        $region30: #{tpu_custom_call.1} parent=11 // pred_check_branch
          %401 = sbr.rel (%p399) target = $region32
        $region31: #{tpu_custom_call.1} parent=11 // pred_region
          %s403 = ssub.s32 8192, 8192
          %404 = vsyncadd [#allocation9], %s403
          %s405 = sshll.u32 [#allocation10], 4
          %s406 = int_to_ptr.vmem [resolvable:$true] %s405
          %411 = dma.hbm_to_vmem [thread:$0]  %s7, 8192, %s406, [#allocation9], 256, 256, 16
        $region32: #{tpu_custom_call.1} parent=11 // pred_fallthru
          _
        // Predicated region
        $region33: #{tpu_custom_call.1} parent=11 // pred_check
          %p412 = pneg %p232
        $region34: #{tpu_custom_call.1} parent=11 // pred_check_branch
          %414 = sbr.rel (%p412) target = $region36
        $region35: #{tpu_custom_call.1} parent=11 // pred_region
          %s416 = ssub.s32 2560, 2560
          %417 = vsyncadd [#allocation12], %s416
          %s418 = sshll.u32 [#allocation11], 4
          %s419 = int_to_ptr.vmem [resolvable:$true] %s418
          %424 = dma.hbm_to_vmem [thread:$0]  %s8, 2560, %s419, [#allocation12], 512, 512, 32
        $region36: #{tpu_custom_call.1} parent=11 // pred_fallthru
          _
        // Predicated region
        $region37: #{tpu_custom_call.1} parent=11 // pred_check
          %p425 = pneg %p253
        $region38: #{tpu_custom_call.1} parent=11 // pred_check_branch
          %427 = sbr.rel (%p425) target = $region40
        $region39: #{tpu_custom_call.1} parent=11 // pred_region
          _
        $region40: #{tpu_custom_call.1} parent=11 // pred_fallthru
          _
        // Predicated region
        $region41: #{tpu_custom_call.1} parent=11 // pred_check
          %p428 = pneg %p274
        $region42: #{tpu_custom_call.1} parent=11 // pred_check_branch
          %430 = sbr.rel (%p428) target = $region44
        $region43: #{tpu_custom_call.1} parent=11 // pred_region
          _
        $region44: #{tpu_custom_call.1} parent=11 // pred_fallthru
          _
        // Predicated region
        $region45: #{tpu_custom_call.1} parent=11 // pred_check
          %p431 = pneg %p295
        $region46: #{tpu_custom_call.1} parent=11 // pred_check_branch
          %433 = sbr.rel (%p431) target = $region48
        $region47: #{tpu_custom_call.1} parent=11 // pred_region
          _
        $region48: #{tpu_custom_call.1} parent=11 // pred_fallthru
          _
        // Predicated region
        $region49: #{tpu_custom_call.1} parent=11 // pred_check
          %p434 = pneg %p316
        $region50: #{tpu_custom_call.1} parent=11 // pred_check_branch
          %436 = sbr.rel (%p434) target = $region52
        $region51: #{tpu_custom_call.1} parent=11 // pred_region
          _
        $region52: #{tpu_custom_call.1} parent=11 // pred_fallthru
          _
      $region12: #{tpu_custom_call.1} parent=5 // pred_fallthru
        _
      %p437 = scmp.lt.s32.totalorder %s28, 2
      // Predicated region
      $region53: #{tpu_custom_call.1} parent=5 // pred_check
        %p438 = pneg %p437
      $region54: #{tpu_custom_call.1} parent=5 // pred_check_branch
        %440 = sbr.rel (%p438) target = $region56
      $region55: #{tpu_custom_call.1} parent=5 // pred_region
        // Predicated region
        $region57: #{tpu_custom_call.1} parent=55 // pred_check
          %p441 = pneg %p48
        $region58: #{tpu_custom_call.1} parent=55 // pred_check_branch
          %443 = sbr.rel (%p441) target = $region60
        $region59: #{tpu_custom_call.1} parent=55 // pred_region
          %s444 = smul.u32 16, %s28
          %p445 = scmp.lt.s32.totalorder %s444, 31
          %s446 = scalar_select %p445, %s444, 31
          %s447 = smul.addr %s446, 8
          %s448 = scalar_lea.vmem %s0, %s447
          %s449 = smul.u32 16, %s28
        $region60: #{tpu_custom_call.1} parent=55 // pred_fallthru
          _
        // Predicated region
        $region61: #{tpu_custom_call.1} parent=55 // pred_check
          %p450 = pneg %p74
        $region62: #{tpu_custom_call.1} parent=55 // pred_check_branch
          %452 = sbr.rel (%p450) target = $region64
        $region63: #{tpu_custom_call.1} parent=55 // pred_region
          #allocation15 [shape = 'u32[6]{0}', space=smem, size = 0x18, scoped, tag = 'DMA stride descriptor']
          %s453 = sand.u32 %s64, 1
          %s454 = scalar_lea.sflag [#allocation3], %s453
          %s455 = sand.u32 %s64, 1
          %s456 = smul.addr %s455, 640
          %s457 = scalar_lea.vmem [#allocation2], %s456
          %s458 = smul.u32 16, %s28
          %s460 = ssub.s32 10240, 10240
          %461 = vsyncadd %s454, %s460
          %s462 = smul.addr %s458, 128
          %s463 = scalar_lea.hbm %s1, %s462
          %s465 = sshll.u32 1, 14
          %s466 = sxor.u32 4294967295, %s465
          %s468 = sld [smem:[#allocation0]]
          %s469 = sadd.s32 2, %s468
          %s471 = sshll.u32 7, 26
          %s472 = sxor.u32 4294967295, %s471
          %s473 = sand.u32 0, %s472
          %s474 = sshll.u32 %s469, 26
          %s475 = sor.u32 %s473, %s474
          %s476 = sshll.u32 %s457, 4
          %s477 = int_to_ptr.vmem [resolvable:$true] %s476
          %483 = sst [smem:[#allocation15]] 4096
          %s484 = scalar_lea.smem [#allocation15], 1
          %485 = sst [smem:[%s484]] 2048
          %s486 = scalar_lea.smem [#allocation15], 2
          %487 = sst [smem:[%s486]] 16
          %s488 = scalar_lea.smem [#allocation15], 3
          %489 = sst [smem:[%s488]] 128
          %s490 = scalar_lea.smem [#allocation15], 4
          %491 = sst [smem:[%s490]] 128
          %s492 = scalar_lea.smem [#allocation15], 5
          %493 = sst [smem:[%s492]] 8
          %495 = dma.general %s463, 10240, %s477, %s454, 131072, [#allocation15], %s475, 0
        $region64: #{tpu_custom_call.1} parent=55 // pred_fallthru
          _
        // Predicated region
        $region65: #{tpu_custom_call.1} parent=55 // pred_check
          %p496 = pneg %p100
        $region66: #{tpu_custom_call.1} parent=55 // pred_check_branch
          %498 = sbr.rel (%p496) target = $region68
        $region67: #{tpu_custom_call.1} parent=55 // pred_region
          %s499 = smul.u32 2, %s28
          %p500 = scmp.lt.s32.totalorder %s499, 3
          %s501 = scalar_select %p500, %s499, 3
          %s502 = smul.addr %s501, 4
          %s503 = scalar_lea.vmem %s2, %s502
          %s504 = smul.u32 2, %s28
        $region68: #{tpu_custom_call.1} parent=55 // pred_fallthru
          _
      $region56: #{tpu_custom_call.1} parent=5 // pred_fallthru
        _
      %p505 = scmp.le.s32.totalorder 1, %s28
      %p506 = scmp.lt.s32.totalorder %s28, 3
      %p507 = pnand %p505, %p506
      %p508 = pneg %p507
      // Predicated region
      $region69: #{tpu_custom_call.1} parent=5 // pred_check
        _
      $region70: #{tpu_custom_call.1} parent=5 // pred_check_branch
        %510 = sbr.rel (%p507) target = $region72
      $region71: #{tpu_custom_call.1} parent=5 // pred_region
        %s511 = ssub.s32 %s28, 1
        %s512 = sand.u32 %s67, 1
        %s513 = scalar_lea.sflag [#allocation3], %s512
        %s514 = sand.u32 %s67, 1
        %s515 = smul.addr %s514, 640
        %s516 = scalar_lea.vmem [#allocation2], %s515
        // Predicated region
        $region73: #{tpu_custom_call.1} parent=71 // pred_check
          %p517 = pneg %p80
        $region74: #{tpu_custom_call.1} parent=71 // pred_check_branch
          %519 = sbr.rel (%p517) target = $region76
        $region75: #{tpu_custom_call.1} parent=71 // pred_region
          %520 = dma.done %s513, 10240
        $region76: #{tpu_custom_call.1} parent=71 // pred_fallthru
          _
        // Predicated region
        $region77: #{tpu_custom_call.1} parent=71 // pred_check
          %p521 = pneg %p148
        $region78: #{tpu_custom_call.1} parent=71 // pred_check_branch
          %523 = sbr.rel (%p521) target = $region80
        $region79: #{tpu_custom_call.1} parent=71 // pred_region
          %524 = dma.done [#allocation6], 8192
        $region80: #{tpu_custom_call.1} parent=71 // pred_fallthru
          _
        // Predicated region
        $region81: #{tpu_custom_call.1} parent=71 // pred_check
          %p525 = pneg %p169
        $region82: #{tpu_custom_call.1} parent=71 // pred_check_branch
          %527 = sbr.rel (%p525) target = $region84
        $region83: #{tpu_custom_call.1} parent=71 // pred_region
          %528 = dma.done [#allocation6], 2048
        $region84: #{tpu_custom_call.1} parent=71 // pred_fallthru
          _
        // Predicated region
        $region85: #{tpu_custom_call.1} parent=71 // pred_check
          %p529 = pneg %p190
        $region86: #{tpu_custom_call.1} parent=71 // pred_check_branch
          %531 = sbr.rel (%p529) target = $region88
        $region87: #{tpu_custom_call.1} parent=71 // pred_region
          %532 = dma.done [#allocation9], 2048
        $region88: #{tpu_custom_call.1} parent=71 // pred_fallthru
          _
        // Predicated region
        $region89: #{tpu_custom_call.1} parent=71 // pred_check
          %p533 = pneg %p211
        $region90: #{tpu_custom_call.1} parent=71 // pred_check_branch
          %535 = sbr.rel (%p533) target = $region92
        $region91: #{tpu_custom_call.1} parent=71 // pred_region
          %536 = dma.done [#allocation9], 8192
        $region92: #{tpu_custom_call.1} parent=71 // pred_fallthru
          _
        // Predicated region
        $region93: #{tpu_custom_call.1} parent=71 // pred_check
          %p537 = pneg %p232
        $region94: #{tpu_custom_call.1} parent=71 // pred_check_branch
          %539 = sbr.rel (%p537) target = $region96
        $region95: #{tpu_custom_call.1} parent=71 // pred_region
          %540 = dma.done [#allocation12], 2560
        $region96: #{tpu_custom_call.1} parent=71 // pred_fallthru
          _
        %s541 = smul.u32 16, %s33
        %p542 = scmp.lt.s32.totalorder %s541, 31
        %s543 = scalar_select %p542, %s541, 31
        %s544 = smul.addr %s543, 8
        %s545 = scalar_lea.vmem %s0, %s544
        %p546 = pneg %p54
        %p547 = pneg %p51
        %s548 = sand.u32 %s67, 1
        %s549 = scalar_lea.sflag [#allocation3], %s548
        %s550 = sand.u32 %s67, 1
        %s551 = smul.addr %s550, 640
        %s552 = scalar_lea.vmem [#allocation2], %s551
        %p553 = pneg %p80
        %p554 = pneg %p77
        %s555 = smul.u32 2, %s33
        %p556 = scmp.lt.s32.totalorder %s555, 3
        %s557 = scalar_select %p556, %s555, 3
        %s558 = smul.addr %s557, 4
        %s559 = scalar_lea.vmem %s2, %s558
        %p560 = pneg %p106
        %p561 = pneg %p103
        %p562 = pneg %p127
        %p563 = pneg %p124
        %p564 = pneg %p148
        %p565 = pneg %p145
        %p566 = pneg %p169
        %p567 = pneg %p166
        %p568 = pneg %p190
        %p569 = pneg %p187
        %p570 = pneg %p211
        %p571 = pneg %p208
        %p572 = pneg %p232
        %p573 = pneg %p229
        %p574 = pneg %p253
        %p575 = pneg %p250
        %p576 = pneg %p274
        %p577 = pneg %p271
        %p578 = pneg %p295
        %p579 = pneg %p292
        %p580 = pneg %p316
        %p581 = pneg %p313
        %p582 = pneg %p342
        %p583 = pneg %p339
        %s584 = sand.u32 %s329, 1
        %s585 = scalar_lea.sflag [#allocation4], %s584
        %s586 = sand.u32 %s329, 1
        %s587 = smul.addr %s586, 16
        %s588 = scalar_lea.vmem [#allocation13], %s587
        %s589 = smul.u32 16, %s33
        %p590 = scmp.lt.s32.totalorder %s589, 31
        %s591 = scalar_select %p590, %s589, 31
        %s592 = smul.addr %s591, 8
        %s593 = scalar_lea.vmem %s0, %s592
        %s594 = smul.u32 16, %s33
        %s595 = smul.u32 16, %s33
        %s596 = smul.u32 2, %s33
        %p597 = scmp.lt.s32.totalorder %s596, 3
        %s598 = scalar_select %p597, %s596, 3
        %s599 = smul.addr %s598, 4
        %s600 = scalar_lea.vmem %s2, %s599
        %s601 = smul.u32 2, %s33
        %s602 = smul.u32 2, %s33
        %v604 = vld [vmem:[#allocation11] sm:$0xff]
        %v605 = vld [vmem:[#allocation11 + $0x8] sm:$0xff]
        %v606 = vld [vmem:[#allocation11 + $0x10] sm:$0xff]
        %v607 = vld [vmem:[#allocation11 + $0x18] sm:$0xff]
        %v608 = vld [vmem:[#allocation11 + $0x20] sm:$0xff]
        %v609 = vld [vmem:[#allocation11 + $0x28] sm:$0xff]
        %v610 = vld [vmem:[#allocation11 + $0x40] sm:$0xff]
        %v611 = vld [vmem:[#allocation11 + $0x60] sm:$0xff]
        %v612 = vld [vmem:[#allocation11 + $0x68] sm:$0xff]
        %v613 = vld [vmem:[#allocation11 + $0x80] sm:$0xff]
        %v614 = vld [vmem:[#allocation11 + $0x88] sm:$0xff]
        %v615 = vld [vmem:[#allocation11 + $0x90] sm:$0xff]
        %v616 = vld [vmem:[#allocation11 + $0x98] sm:$0xff]
        %v617 = vld [vmem:[%s12] sm:$0x7]
        %v618 = vld [vmem:[%s593] sm:$0xff]
        %v619 = vld [vmem:[%s593 + $0x8] sm:$0xff]
        %v620 = vld [vmem:[%s593 + $0x10] sm:$0xff]
        %v621 = vld [vmem:[%s593 + $0x18] sm:$0xff]
        %v622 = vld [vmem:[%s593 + $0x20] sm:$0xff]
        %v623 = vld [vmem:[%s593 + $0x28] sm:$0xff]
        %v624 = vld [vmem:[%s593 + $0x30] sm:$0xff]
        %v625 = vld [vmem:[%s593 + $0x38] sm:$0xff]
        %v626 = vld [vmem:[%s593 + $0x40] sm:$0xff]
        %v627 = vld [vmem:[%s593 + $0x48] sm:$0xff]
        %v628 = vld [vmem:[%s593 + $0x50] sm:$0xff]
        %v629 = vld [vmem:[%s593 + $0x58] sm:$0xff]
        %v630 = vld [vmem:[%s593 + $0x60] sm:$0xff]
        %v631 = vld [vmem:[%s593 + $0x68] sm:$0xff]
        %v632 = vld [vmem:[%s593 + $0x70] sm:$0xff]
        %v633 = vld [vmem:[%s593 + $0x78] sm:$0xff]
        %v634 = vld [vmem:[%s516] sm:$0xff]
        %v635 = vld [vmem:[%s516 + $0x8] sm:$0xff]
        %v636 = vld [vmem:[%s516 + $0x10] sm:$0xff]
        %v637 = vld [vmem:[%s516 + $0x18] sm:$0xff]
        %v638 = vld [vmem:[%s516 + $0x20] sm:$0xff]
        %v639 = vld [vmem:[%s516 + $0x28] sm:$0xff]
        %v640 = vld [vmem:[%s516 + $0x30] sm:$0xff]
        %v641 = vld [vmem:[%s516 + $0x38] sm:$0xff]
        %v642 = vld [vmem:[%s516 + $0x40] sm:$0xff]
        %v643 = vld [vmem:[%s516 + $0x48] sm:$0xff]
        %v644 = vld [vmem:[%s516 + $0x50] sm:$0xff]
        %v645 = vld [vmem:[%s516 + $0x58] sm:$0xff]
        %v646 = vld [vmem:[%s516 + $0x60] sm:$0xff]
        %v647 = vld [vmem:[%s516 + $0x68] sm:$0xff]
        %v648 = vld [vmem:[%s516 + $0x70] sm:$0xff]
        %v649 = vld [vmem:[%s516 + $0x78] sm:$0xff]
        %v650 = vpack.c.bf16 %v619, %v618
        %v651 = vpack.c.bf16 %v621, %v620
        %v652 = vpack.c.bf16 %v623, %v622
        %v653 = vpack.c.bf16 %v625, %v624
        %v654 = vpack.c.bf16 %v627, %v626
        %v655 = vpack.c.bf16 %v629, %v628
        %v656 = vpack.c.bf16 %v631, %v630
        %v657 = vpack.c.bf16 %v633, %v632
        %v658 = vld [vmem:[%s3] sm:$0xff]
        %v659 = vld [vmem:[%s3 + $0x8] sm:$0xff]
        %v660 = vld [vmem:[%s3 + $0x10] sm:$0xff]
        %v661 = vld [vmem:[%s3 + $0x18] sm:$0xff]
        %v666 = vunpack.c.l.b16 %v658
        %v667 = vunpack.c.h.b16 %v658
        %v668 = vunpack.c.l.b16 %v659
        %v669 = vunpack.c.h.b16 %v659
        %v670 = vunpack.c.l.b16 %v660
        %v671 = vunpack.c.h.b16 %v660
        %v672 = vunpack.c.l.b16 %v661
        %v673 = vunpack.c.h.b16 %v661
        %v674 = vpack.c.b16 %v670, %v666
        %v675 = vpack.c.b16 %v671, %v667
        %v676 = vpack.c.b16 %v672, %v668
        %v677 = vpack.c.b16 %v673, %v669
        %vm682 = vcmask 130048
        %v684 = vsel %vm682, %v650, 0
        %v687 = vsel %vm682, %v651, 0
        %v690 = vsel %vm682, %v652, 0
        %v693 = vsel %vm682, %v653, 0
        %v696 = vsel %vm682, %v654, 0
        %v699 = vsel %vm682, %v655, 0
        %v702 = vsel %vm682, %v656, 0
        %v705 = vsel %vm682, %v657, 0
        %707 = vmatprep.subr.bf16.mxu0 0
        %708 = vmatpush1.bf16.msra.mxu0 0
        %709 = vmatprep.subr.bf16.mxu0 0
        %710 = vmatpush1.bf16.msra.mxu0 0
        %711 = vmatprep.subr.bf16.mxu0 0
        %712 = vmatpush1.bf16.msra.mxu0 0
        %713 = vmatprep.subr.bf16.mxu0 0
        %714 = vmatpush1.bf16.msra.mxu0 0
        %715 = vmatprep.subr.bf16.mxu0 0
        %716 = vmatpush1.bf16.msra.mxu0 0
        %717 = vmatprep.subr.bf16.mxu0 0
        %718 = vmatpush1.bf16.msra.mxu0 0
        %719 = vmatprep.subr.bf16.mxu0 0
        %720 = vmatpush1.bf16.msra.mxu0 0
        %721 = vmatprep.subr.bf16.mxu0 %v675
        %722 = vmatpush1.bf16.msra.mxu0 %v674
        %723 = vmatprep.subr.bf16.mxu0 0
        %724 = vmatpush2.bf16.msra.mxu0 0
        %725 = vmatprep.subr.bf16.mxu0 0
        %726 = vmatpush2.bf16.msra.mxu0 0
        %727 = vmatprep.subr.bf16.mxu0 0
        %728 = vmatpush2.bf16.msra.mxu0 0
        %729 = vmatprep.subr.bf16.mxu0 0
        %730 = vmatpush2.bf16.msra.mxu0 0
        %731 = vmatprep.subr.bf16.mxu0 0
        %732 = vmatpush2.bf16.msra.mxu0 0
        %733 = vmatprep.subr.bf16.mxu0 0
        %734 = vmatpush2.bf16.msra.mxu0 0
        %735 = vmatprep.subr.bf16.mxu0 0
        %736 = vmatpush2.bf16.msra.mxu0 0
        %737 = vmatprep.subr.bf16.mxu0 0
        %738 = vmatpush2.bf16.msra.mxu0 0
        %739 = vmatprep.mubr.bf16.mxu0 0
        %740 = vmatmul.mubr.bf16.gmra.mxu0 %v684
        %v741 = vpop.f32.mrf.mxu0
        %v742 = vadd.f32 0.0, %v741
        %v743 = vpop.f32.mrf.mxu0
        %v744 = vadd.f32 0.0, %v743
        %v745 = vpop.f32.mrf.mxu0
        %v746 = vadd.f32 0.0, %v745
        %v747 = vpop.f32.mrf.mxu0
        %v748 = vadd.f32 0.0, %v747
        %749 = vmatprep.mubr.bf16.mxu0 0
        %750 = vmatmul.mubr.bf16.gmra.mxu0 %v687
        %v751 = vpop.f32.mrf.mxu0
        %v752 = vadd.f32 0.0, %v751
        %v753 = vpop.f32.mrf.mxu0
        %v754 = vadd.f32 0.0, %v753
        %v755 = vpop.f32.mrf.mxu0
        %v756 = vadd.f32 0.0, %v755
        %v757 = vpop.f32.mrf.mxu0
        %v758 = vadd.f32 0.0, %v757
        %759 = vmatprep.mubr.bf16.mxu0 0
        %760 = vmatmul.mubr.bf16.gmra.mxu0 %v690
        %v761 = vpop.f32.mrf.mxu0
        %v762 = vadd.f32 0.0, %v761
        %v763 = vpop.f32.mrf.mxu0
        %v764 = vadd.f32 0.0, %v763
        %v765 = vpop.f32.mrf.mxu0
        %v766 = vadd.f32 0.0, %v765
        %v767 = vpop.f32.mrf.mxu0
        %v768 = vadd.f32 0.0, %v767
        %769 = vmatprep.mubr.bf16.mxu0 0
        %770 = vmatmul.mubr.bf16.gmra.mxu0 %v693
        %v771 = vpop.f32.mrf.mxu0
        %v772 = vadd.f32 0.0, %v771
        %v773 = vpop.f32.mrf.mxu0
        %v774 = vadd.f32 0.0, %v773
        %v775 = vpop.f32.mrf.mxu0
        %v776 = vadd.f32 0.0, %v775
        %v777 = vpop.f32.mrf.mxu0
        %v778 = vadd.f32 0.0, %v777
        %779 = vmatprep.mubr.bf16.mxu0 0
        %780 = vmatmul.mubr.bf16.gmra.mxu0 %v696
        %v781 = vpop.f32.mrf.mxu0
        %v782 = vadd.f32 0.0, %v781
        %v783 = vpop.f32.mrf.mxu0
        %v784 = vadd.f32 0.0, %v783
        %v785 = vpop.f32.mrf.mxu0
        %v786 = vadd.f32 0.0, %v785
        %v787 = vpop.f32.mrf.mxu0
        %v788 = vadd.f32 0.0, %v787
        %789 = vmatprep.mubr.bf16.mxu0 0
        %790 = vmatmul.mubr.bf16.gmra.mxu0 %v699
        %v791 = vpop.f32.mrf.mxu0
        %v792 = vadd.f32 0.0, %v791
        %v793 = vpop.f32.mrf.mxu0
        %v794 = vadd.f32 0.0, %v793
        %v795 = vpop.f32.mrf.mxu0
        %v796 = vadd.f32 0.0, %v795
        %v797 = vpop.f32.mrf.mxu0
        %v798 = vadd.f32 0.0, %v797
        %799 = vmatprep.mubr.bf16.mxu0 0
        %800 = vmatmul.mubr.bf16.gmra.mxu0 %v702
        %v801 = vpop.f32.mrf.mxu0
        %v802 = vadd.f32 0.0, %v801
        %v803 = vpop.f32.mrf.mxu0
        %v804 = vadd.f32 0.0, %v803
        %v805 = vpop.f32.mrf.mxu0
        %v806 = vadd.f32 0.0, %v805
        %v807 = vpop.f32.mrf.mxu0
        %v808 = vadd.f32 0.0, %v807
        %809 = vmatprep.mubr.bf16.mxu0 0
        %810 = vmatmul.mubr.bf16.gmra.mxu0 %v705
        %v811 = vpop.f32.mrf.mxu0
        %v812 = vadd.f32 0.0, %v811
        %v813 = vpop.f32.mrf.mxu0
        %v814 = vadd.f32 0.0, %v813
        %v815 = vpop.f32.mrf.mxu0
        %v816 = vadd.f32 0.0, %v815
        %v817 = vpop.f32.mrf.mxu0
        %v818 = vadd.f32 0.0, %v817
        %819 = vdwg.mxu0
        %820 = vmatprep.subr.bf16.mxu0 0
        %821 = vmatpush1.bf16.msra.mxu0 0
        %822 = vmatprep.subr.bf16.mxu0 0
        %823 = vmatpush1.bf16.msra.mxu0 0
        %824 = vmatprep.subr.bf16.mxu0 0
        %825 = vmatpush1.bf16.msra.mxu0 0
        %826 = vmatprep.subr.bf16.mxu0 0
        %827 = vmatpush1.bf16.msra.mxu0 0
        %828 = vmatprep.subr.bf16.mxu0 0
        %829 = vmatpush1.bf16.msra.mxu0 0
        %830 = vmatprep.subr.bf16.mxu0 0
        %831 = vmatpush1.bf16.msra.mxu0 0
        %832 = vmatprep.subr.bf16.mxu0 0
        %833 = vmatpush1.bf16.msra.mxu0 0
        %834 = vmatprep.subr.bf16.mxu0 %v677
        %835 = vmatpush1.bf16.msra.mxu0 %v676
        %836 = vmatprep.subr.bf16.mxu0 0
        %837 = vmatpush2.bf16.msra.mxu0 0
        %838 = vmatprep.subr.bf16.mxu0 0
        %839 = vmatpush2.bf16.msra.mxu0 0
        %840 = vmatprep.subr.bf16.mxu0 0
        %841 = vmatpush2.bf16.msra.mxu0 0
        %842 = vmatprep.subr.bf16.mxu0 0
        %843 = vmatpush2.bf16.msra.mxu0 0
        %844 = vmatprep.subr.bf16.mxu0 0
        %845 = vmatpush2.bf16.msra.mxu0 0
        %846 = vmatprep.subr.bf16.mxu0 0
        %847 = vmatpush2.bf16.msra.mxu0 0
        %848 = vmatprep.subr.bf16.mxu0 0
        %849 = vmatpush2.bf16.msra.mxu0 0
        %850 = vmatprep.subr.bf16.mxu0 0
        %851 = vmatpush2.bf16.msra.mxu0 0
        %852 = vmatprep.mubr.bf16.mxu0 0
        %853 = vmatmul.mubr.bf16.gmra.mxu0 %v684
        %v854 = vpop.f32.mrf.mxu0
        %v855 = vadd.f32 0.0, %v854
        %v856 = vpop.f32.mrf.mxu0
        %v857 = vadd.f32 0.0, %v856
        %v858 = vpop.f32.mrf.mxu0
        %v859 = vadd.f32 0.0, %v858
        %v860 = vpop.f32.mrf.mxu0
        %v861 = vadd.f32 0.0, %v860
        %862 = vmatprep.mubr.bf16.mxu0 0
        %863 = vmatmul.mubr.bf16.gmra.mxu0 %v687
        %v864 = vpop.f32.mrf.mxu0
        %v865 = vadd.f32 0.0, %v864
        %v866 = vpop.f32.mrf.mxu0
        %v867 = vadd.f32 0.0, %v866
        %v868 = vpop.f32.mrf.mxu0
        %v869 = vadd.f32 0.0, %v868
        %v870 = vpop.f32.mrf.mxu0
        %v871 = vadd.f32 0.0, %v870
        %872 = vmatprep.mubr.bf16.mxu0 0
        %873 = vmatmul.mubr.bf16.gmra.mxu0 %v690
        %v874 = vpop.f32.mrf.mxu0
        %v875 = vadd.f32 0.0, %v874
        %v876 = vpop.f32.mrf.mxu0
        %v877 = vadd.f32 0.0, %v876
        %v878 = vpop.f32.mrf.mxu0
        %v879 = vadd.f32 0.0, %v878
        %v880 = vpop.f32.mrf.mxu0
        %v881 = vadd.f32 0.0, %v880
        %882 = vmatprep.mubr.bf16.mxu0 0
        %883 = vmatmul.mubr.bf16.gmra.mxu0 %v693
        %v884 = vpop.f32.mrf.mxu0
        %v885 = vadd.f32 0.0, %v884
        %v886 = vpop.f32.mrf.mxu0
        %v887 = vadd.f32 0.0, %v886
        %v888 = vpop.f32.mrf.mxu0
        %v889 = vadd.f32 0.0, %v888
        %v890 = vpop.f32.mrf.mxu0
        %v891 = vadd.f32 0.0, %v890
        %892 = vmatprep.mubr.bf16.mxu0 0
        %893 = vmatmul.mubr.bf16.gmra.mxu0 %v696
        %v894 = vpop.f32.mrf.mxu0
        %v895 = vadd.f32 0.0, %v894
        %v896 = vpop.f32.mrf.mxu0
        %v897 = vadd.f32 0.0, %v896
        %v898 = vpop.f32.mrf.mxu0
        %v899 = vadd.f32 0.0, %v898
        %v900 = vpop.f32.mrf.mxu0
        %v901 = vadd.f32 0.0, %v900
        %902 = vmatprep.mubr.bf16.mxu0 0
        %903 = vmatmul.mubr.bf16.gmra.mxu0 %v699
        %v904 = vpop.f32.mrf.mxu0
        %v905 = vadd.f32 0.0, %v904
        %v906 = vpop.f32.mrf.mxu0
        %v907 = vadd.f32 0.0, %v906
        %v908 = vpop.f32.mrf.mxu0
        %v909 = vadd.f32 0.0, %v908
        %v910 = vpop.f32.mrf.mxu0
        %v911 = vadd.f32 0.0, %v910
        %912 = vmatprep.mubr.bf16.mxu0 0
        %913 = vmatmul.mubr.bf16.gmra.mxu0 %v702
        %v914 = vpop.f32.mrf.mxu0
        %v915 = vadd.f32 0.0, %v914
        %v916 = vpop.f32.mrf.mxu0
        %v917 = vadd.f32 0.0, %v916
        %v918 = vpop.f32.mrf.mxu0
        %v919 = vadd.f32 0.0, %v918
        %v920 = vpop.f32.mrf.mxu0
        %v921 = vadd.f32 0.0, %v920
        %922 = vmatprep.mubr.bf16.mxu0 0
        %923 = vmatmul.mubr.bf16.gmra.mxu0 %v705
        %v924 = vpop.f32.mrf.mxu0
        %v925 = vadd.f32 0.0, %v924
        %v926 = vpop.f32.mrf.mxu0
        %v927 = vadd.f32 0.0, %v926
        %v928 = vpop.f32.mrf.mxu0
        %v929 = vadd.f32 0.0, %v928
        %v930 = vpop.f32.mrf.mxu0
        %v931 = vadd.f32 0.0, %v930
        %932 = vdwg.mxu0
        %v933 = vlaneseq
        %v934 = vshrl.u32 %v933, 7
        %v935 = vsub.s32 0, %v934
        %v936 = vrot.slane %v604, %v935
        %v937 = vlaneseq
        %v938 = vshrl.u32 %v937, 7
        %v939 = vsub.s32 0, %v938
        %v940 = vrot.slane %v605, %v939
        %v941 = vlaneseq
        %v942 = vshrl.u32 %v941, 7
        %v943 = vsub.s32 0, %v942
        %v944 = vrot.slane %v606, %v943
        %v945 = vlaneseq
        %v946 = vshrl.u32 %v945, 7
        %v947 = vsub.s32 0, %v946
        %v948 = vrot.slane %v607, %v947
        %v949 = vmul.f32 %v742, %v936
        %v950 = vmul.f32 %v744, %v940
        %v951 = vmul.f32 %v855, %v944
        %v952 = vmul.f32 %v857, %v948
        %v953 = vmul.f32 %v746, %v936
        %v954 = vmul.f32 %v748, %v940
        %v955 = vmul.f32 %v859, %v944
        %v956 = vmul.f32 %v861, %v948
        %v957 = vmul.f32 %v752, %v936
        %v958 = vmul.f32 %v754, %v940
        %v959 = vmul.f32 %v865, %v944
        %v960 = vmul.f32 %v867, %v948
        %v961 = vmul.f32 %v756, %v936
        %v962 = vmul.f32 %v758, %v940
        %v963 = vmul.f32 %v869, %v944
        %v964 = vmul.f32 %v871, %v948
        %v965 = vmul.f32 %v762, %v936
        %v966 = vmul.f32 %v764, %v940
        %v967 = vmul.f32 %v875, %v944
        %v968 = vmul.f32 %v877, %v948
        %v969 = vmul.f32 %v766, %v936
        %v970 = vmul.f32 %v768, %v940
        %v971 = vmul.f32 %v879, %v944
        %v972 = vmul.f32 %v881, %v948
        %v973 = vmul.f32 %v772, %v936
        %v974 = vmul.f32 %v774, %v940
        %v975 = vmul.f32 %v885, %v944
        %v976 = vmul.f32 %v887, %v948
        %v977 = vmul.f32 %v776, %v936
        %v978 = vmul.f32 %v778, %v940
        %v979 = vmul.f32 %v889, %v944
        %v980 = vmul.f32 %v891, %v948
        %v981 = vmul.f32 %v782, %v936
        %v982 = vmul.f32 %v784, %v940
        %v983 = vmul.f32 %v895, %v944
        %v984 = vmul.f32 %v897, %v948
        %v985 = vmul.f32 %v786, %v936
        %v986 = vmul.f32 %v788, %v940
        %v987 = vmul.f32 %v899, %v944
        %v988 = vmul.f32 %v901, %v948
        %v989 = vmul.f32 %v792, %v936
        %v990 = vmul.f32 %v794, %v940
        %v991 = vmul.f32 %v905, %v944
        %v992 = vmul.f32 %v907, %v948
        %v993 = vmul.f32 %v796, %v936
        %v994 = vmul.f32 %v798, %v940
        %v995 = vmul.f32 %v909, %v944
        %v996 = vmul.f32 %v911, %v948
        %v997 = vmul.f32 %v802, %v936
        %v998 = vmul.f32 %v804, %v940
        %v999 = vmul.f32 %v915, %v944
        %v1000 = vmul.f32 %v917, %v948
        %v1001 = vmul.f32 %v806, %v936
        %v1002 = vmul.f32 %v808, %v940
        %v1003 = vmul.f32 %v919, %v944
        %v1004 = vmul.f32 %v921, %v948
        %v1005 = vmul.f32 %v812, %v936
        %v1006 = vmul.f32 %v814, %v940
        %v1007 = vmul.f32 %v925, %v944
        %v1008 = vmul.f32 %v927, %v948
        %v1009 = vmul.f32 %v816, %v936
        %v1010 = vmul.f32 %v818, %v940
        %v1011 = vmul.f32 %v929, %v944
        %v1012 = vmul.f32 %v931, %v948
        %v1013 = vadd.f32 %v949, %v950
        %v1014 = vadd.f32 %v1013, %v951
        %v1015 = vadd.f32 %v1014, %v952
        %1016 = vadd.xlane.f32.xlu0 %v1015
        %v1017 = vpop.xlane.xlu0 %1016
        %v1018 = vadd.f32 %v953, %v954
        %v1019 = vadd.f32 %v1018, %v955
        %v1020 = vadd.f32 %v1019, %v956
        %1021 = vadd.xlane.f32.xlu0 %v1020
        %v1022 = vpop.xlane.xlu0 %1021
        %v1023 = vadd.f32 %v957, %v958
        %v1024 = vadd.f32 %v1023, %v959
        %v1025 = vadd.f32 %v1024, %v960
        %1026 = vadd.xlane.f32.xlu0 %v1025
        %v1027 = vpop.xlane.xlu0 %1026
        %v1028 = vadd.f32 %v961, %v962
        %v1029 = vadd.f32 %v1028, %v963
        %v1030 = vadd.f32 %v1029, %v964
        %1031 = vadd.xlane.f32.xlu0 %v1030
        %v1032 = vpop.xlane.xlu0 %1031
        %v1033 = vadd.f32 %v965, %v966
        %v1034 = vadd.f32 %v1033, %v967
        %v1035 = vadd.f32 %v1034, %v968
        %1036 = vadd.xlane.f32.xlu0 %v1035
        %v1037 = vpop.xlane.xlu0 %1036
        %v1038 = vadd.f32 %v969, %v970
        %v1039 = vadd.f32 %v1038, %v971
        %v1040 = vadd.f32 %v1039, %v972
        %1041 = vadd.xlane.f32.xlu0 %v1040
        %v1042 = vpop.xlane.xlu0 %1041
        %v1043 = vadd.f32 %v973, %v974
        %v1044 = vadd.f32 %v1043, %v975
        %v1045 = vadd.f32 %v1044, %v976
        %1046 = vadd.xlane.f32.xlu0 %v1045
        %v1047 = vpop.xlane.xlu0 %1046
        %v1048 = vadd.f32 %v977, %v978
        %v1049 = vadd.f32 %v1048, %v979
        %v1050 = vadd.f32 %v1049, %v980
        %1051 = vadd.xlane.f32.xlu0 %v1050
        %v1052 = vpop.xlane.xlu0 %1051
        %v1053 = vadd.f32 %v981, %v982
        %v1054 = vadd.f32 %v1053, %v983
        %v1055 = vadd.f32 %v1054, %v984
        %1056 = vadd.xlane.f32.xlu0 %v1055
        %v1057 = vpop.xlane.xlu0 %1056
        %v1058 = vadd.f32 %v985, %v986
        %v1059 = vadd.f32 %v1058, %v987
        %v1060 = vadd.f32 %v1059, %v988
        %1061 = vadd.xlane.f32.xlu0 %v1060
        %v1062 = vpop.xlane.xlu0 %1061
        %v1063 = vadd.f32 %v989, %v990
        %v1064 = vadd.f32 %v1063, %v991
        %v1065 = vadd.f32 %v1064, %v992
        %1066 = vadd.xlane.f32.xlu0 %v1065
        %v1067 = vpop.xlane.xlu0 %1066
        %v1068 = vadd.f32 %v993, %v994
        %v1069 = vadd.f32 %v1068, %v995
        %v1070 = vadd.f32 %v1069, %v996
        %1071 = vadd.xlane.f32.xlu0 %v1070
        %v1072 = vpop.xlane.xlu0 %1071
        %v1073 = vadd.f32 %v997, %v998
        %v1074 = vadd.f32 %v1073, %v999
        %v1075 = vadd.f32 %v1074, %v1000
        %1076 = vadd.xlane.f32.xlu0 %v1075
        %v1077 = vpop.xlane.xlu0 %1076
        %v1078 = vadd.f32 %v1001, %v1002
        %v1079 = vadd.f32 %v1078, %v1003
        %v1080 = vadd.f32 %v1079, %v1004
        %1081 = vadd.xlane.f32.xlu0 %v1080
        %v1082 = vpop.xlane.xlu0 %1081
        %v1083 = vadd.f32 %v1005, %v1006
        %v1084 = vadd.f32 %v1083, %v1007
        %v1085 = vadd.f32 %v1084, %v1008
        %1086 = vadd.xlane.f32.xlu0 %v1085
        %v1087 = vpop.xlane.xlu0 %1086
        %v1088 = vadd.f32 %v1009, %v1010
        %v1089 = vadd.f32 %v1088, %v1011
        %v1090 = vadd.f32 %v1089, %v1012
        %1091 = vadd.xlane.f32.xlu0 %v1090
        %v1092 = vpop.xlane.xlu0 %1091
        %v1093 = vlaneseq
        %v1094 = vshrl.u32 %v1093, 7
        %v1095 = vsub.s32 1, %v1094
        %v1096 = vrot.slane %v604, %v1095
        %v1097 = vlaneseq
        %v1098 = vshrl.u32 %v1097, 7
        %v1099 = vsub.s32 1, %v1098
        %v1100 = vrot.slane %v605, %v1099
        %v1101 = vlaneseq
        %v1102 = vshrl.u32 %v1101, 7
        %v1103 = vsub.s32 1, %v1102
        %v1104 = vrot.slane %v606, %v1103
        %v1105 = vlaneseq
        %v1106 = vshrl.u32 %v1105, 7
        %v1107 = vsub.s32 1, %v1106
        %v1108 = vrot.slane %v607, %v1107
        %v1109 = vmul.f32 %v742, %v1096
        %v1110 = vmul.f32 %v744, %v1100
        %v1111 = vmul.f32 %v855, %v1104
        %v1112 = vmul.f32 %v857, %v1108
        %v1113 = vmul.f32 %v746, %v1096
        %v1114 = vmul.f32 %v748, %v1100
        %v1115 = vmul.f32 %v859, %v1104
        %v1116 = vmul.f32 %v861, %v1108
        %v1117 = vmul.f32 %v752, %v1096
        %v1118 = vmul.f32 %v754, %v1100
        %v1119 = vmul.f32 %v865, %v1104
        %v1120 = vmul.f32 %v867, %v1108
        %v1121 = vmul.f32 %v756, %v1096
        %v1122 = vmul.f32 %v758, %v1100
        %v1123 = vmul.f32 %v869, %v1104
        %v1124 = vmul.f32 %v871, %v1108
        %v1125 = vmul.f32 %v762, %v1096
        %v1126 = vmul.f32 %v764, %v1100
        %v1127 = vmul.f32 %v875, %v1104
        %v1128 = vmul.f32 %v877, %v1108
        %v1129 = vmul.f32 %v766, %v1096
        %v1130 = vmul.f32 %v768, %v1100
        %v1131 = vmul.f32 %v879, %v1104
        %v1132 = vmul.f32 %v881, %v1108
        %v1133 = vmul.f32 %v772, %v1096
        %v1134 = vmul.f32 %v774, %v1100
        %v1135 = vmul.f32 %v885, %v1104
        %v1136 = vmul.f32 %v887, %v1108
        %v1137 = vmul.f32 %v776, %v1096
        %v1138 = vmul.f32 %v778, %v1100
        %v1139 = vmul.f32 %v889, %v1104
        %v1140 = vmul.f32 %v891, %v1108
        %v1141 = vmul.f32 %v782, %v1096
        %v1142 = vmul.f32 %v784, %v1100
        %v1143 = vmul.f32 %v895, %v1104
        %v1144 = vmul.f32 %v897, %v1108
        %v1145 = vmul.f32 %v786, %v1096
        %v1146 = vmul.f32 %v788, %v1100
        %v1147 = vmul.f32 %v899, %v1104
        %v1148 = vmul.f32 %v901, %v1108
        %v1149 = vmul.f32 %v792, %v1096
        %v1150 = vmul.f32 %v794, %v1100
        %v1151 = vmul.f32 %v905, %v1104
        %v1152 = vmul.f32 %v907, %v1108
        %v1153 = vmul.f32 %v796, %v1096
        %v1154 = vmul.f32 %v798, %v1100
        %v1155 = vmul.f32 %v909, %v1104
        %v1156 = vmul.f32 %v911, %v1108
        %v1157 = vmul.f32 %v802, %v1096
        %v1158 = vmul.f32 %v804, %v1100
        %v1159 = vmul.f32 %v915, %v1104
        %v1160 = vmul.f32 %v917, %v1108
        %v1161 = vmul.f32 %v806, %v1096
        %v1162 = vmul.f32 %v808, %v1100
        %v1163 = vmul.f32 %v919, %v1104
        %v1164 = vmul.f32 %v921, %v1108
        %v1165 = vmul.f32 %v812, %v1096
        %v1166 = vmul.f32 %v814, %v1100
        %v1167 = vmul.f32 %v925, %v1104
        %v1168 = vmul.f32 %v927, %v1108
        %v1169 = vmul.f32 %v816, %v1096
        %v1170 = vmul.f32 %v818, %v1100
        %v1171 = vmul.f32 %v929, %v1104
        %v1172 = vmul.f32 %v931, %v1108
        %v1173 = vadd.f32 %v1109, %v1110
        %v1174 = vadd.f32 %v1173, %v1111
        %v1175 = vadd.f32 %v1174, %v1112
        %1176 = vadd.xlane.f32.xlu0 %v1175
        %v1177 = vpop.xlane.xlu0 %1176
        %v1178 = vadd.f32 %v1113, %v1114
        %v1179 = vadd.f32 %v1178, %v1115
        %v1180 = vadd.f32 %v1179, %v1116
        %1181 = vadd.xlane.f32.xlu0 %v1180
        %v1182 = vpop.xlane.xlu0 %1181
        %v1183 = vadd.f32 %v1117, %v1118
        %v1184 = vadd.f32 %v1183, %v1119
        %v1185 = vadd.f32 %v1184, %v1120
        %1186 = vadd.xlane.f32.xlu0 %v1185
        %v1187 = vpop.xlane.xlu0 %1186
        %v1188 = vadd.f32 %v1121, %v1122
        %v1189 = vadd.f32 %v1188, %v1123
        %v1190 = vadd.f32 %v1189, %v1124
        %1191 = vadd.xlane.f32.xlu0 %v1190
        %v1192 = vpop.xlane.xlu0 %1191
        %v1193 = vadd.f32 %v1125, %v1126
        %v1194 = vadd.f32 %v1193, %v1127
        %v1195 = vadd.f32 %v1194, %v1128
        %1196 = vadd.xlane.f32.xlu0 %v1195
        %v1197 = vpop.xlane.xlu0 %1196
        %v1198 = vadd.f32 %v1129, %v1130
        %v1199 = vadd.f32 %v1198, %v1131
        %v1200 = vadd.f32 %v1199, %v1132
        %1201 = vadd.xlane.f32.xlu0 %v1200
        %v1202 = vpop.xlane.xlu0 %1201
        %v1203 = vadd.f32 %v1133, %v1134
        %v1204 = vadd.f32 %v1203, %v1135
        %v1205 = vadd.f32 %v1204, %v1136
        %1206 = vadd.xlane.f32.xlu0 %v1205
        %v1207 = vpop.xlane.xlu0 %1206
        %v1208 = vadd.f32 %v1137, %v1138
        %v1209 = vadd.f32 %v1208, %v1139
        %v1210 = vadd.f32 %v1209, %v1140
        %1211 = vadd.xlane.f32.xlu0 %v1210
        %v1212 = vpop.xlane.xlu0 %1211
        %v1213 = vadd.f32 %v1141, %v1142
        %v1214 = vadd.f32 %v1213, %v1143
        %v1215 = vadd.f32 %v1214, %v1144
        %1216 = vadd.xlane.f32.xlu0 %v1215
        %v1217 = vpop.xlane.xlu0 %1216
        %v1218 = vadd.f32 %v1145, %v1146
        %v1219 = vadd.f32 %v1218, %v1147
        %v1220 = vadd.f32 %v1219, %v1148
        %1221 = vadd.xlane.f32.xlu0 %v1220
        %v1222 = vpop.xlane.xlu0 %1221
        %v1223 = vadd.f32 %v1149, %v1150
        %v1224 = vadd.f32 %v1223, %v1151
        %v1225 = vadd.f32 %v1224, %v1152
        %1226 = vadd.xlane.f32.xlu0 %v1225
        %v1227 = vpop.xlane.xlu0 %1226
        %v1228 = vadd.f32 %v1153, %v1154
        %v1229 = vadd.f32 %v1228, %v1155
        %v1230 = vadd.f32 %v1229, %v1156
        %1231 = vadd.xlane.f32.xlu0 %v1230
        %v1232 = vpop.xlane.xlu0 %1231
        %v1233 = vadd.f32 %v1157, %v1158
        %v1234 = vadd.f32 %v1233, %v1159
        %v1235 = vadd.f32 %v1234, %v1160
        %1236 = vadd.xlane.f32.xlu0 %v1235
        %v1237 = vpop.xlane.xlu0 %1236
        %v1238 = vadd.f32 %v1161, %v1162
        %v1239 = vadd.f32 %v1238, %v1163
        %v1240 = vadd.f32 %v1239, %v1164
        %1241 = vadd.xlane.f32.xlu0 %v1240
        %v1242 = vpop.xlane.xlu0 %1241
        %v1243 = vadd.f32 %v1165, %v1166
        %v1244 = vadd.f32 %v1243, %v1167
        %v1245 = vadd.f32 %v1244, %v1168
        %1246 = vadd.xlane.f32.xlu0 %v1245
        %v1247 = vpop.xlane.xlu0 %1246
        %v1248 = vadd.f32 %v1169, %v1170
        %v1249 = vadd.f32 %v1248, %v1171
        %v1250 = vadd.f32 %v1249, %v1172
        %1251 = vadd.xlane.f32.xlu0 %v1250
        %v1252 = vpop.xlane.xlu0 %1251
        %1253 = vxpose.xlu0.b32.start [1/16] %v1017, 128
        %1254 = vxpose.xlu0.b32.cont [2/16] %v1022, 128
        %1255 = vxpose.xlu0.b32.cont [3/16] %v1027, 128
        %1256 = vxpose.xlu0.b32.cont [4/16] %v1032, 128
        %1257 = vxpose.xlu0.b32.cont [5/16] %v1037, 128
        %1258 = vxpose.xlu0.b32.cont [6/16] %v1042, 128
        %1259 = vxpose.xlu0.b32.cont [7/16] %v1047, 128
        %1260 = vxpose.xlu0.b32.cont [8/16] %v1052, 128
        %1261 = vxpose.xlu0.b32.cont [9/16] %v1057, 128
        %1262 = vxpose.xlu0.b32.cont [10/16] %v1062, 128
        %1263 = vxpose.xlu0.b32.cont [11/16] %v1067, 128
        %1264 = vxpose.xlu0.b32.cont [12/16] %v1072, 128
        %1265 = vxpose.xlu0.b32.cont [13/16] %v1077, 128
        %1266 = vxpose.xlu0.b32.cont [14/16] %v1082, 128
        %1267 = vxpose.xlu0.b32.cont [15/16] %v1087, 128
        %1268 = vxpose.xlu0.b32.end [16/16] %v1092, 128
        %v1269 = vpop.trf.xlu0
        %v1270 = vpop.trf.xlu0
        %v1271 = vpop.trf.xlu0
        %v1272 = vpop.trf.xlu0
        %v1273 = vpop.trf.xlu0
        %v1274 = vpop.trf.xlu0
        %v1275 = vpop.trf.xlu0
        %v1276 = vpop.trf.xlu0
        %v1277 = vpop.trf.xlu0
        %v1278 = vpop.trf.xlu0
        %v1279 = vpop.trf.xlu0
        %v1280 = vpop.trf.xlu0
        %v1281 = vpop.trf.xlu0
        %v1282 = vpop.trf.xlu0
        %v1283 = vpop.trf.xlu0
        %v1284 = vpop.trf.xlu0
        %v1285 = vlaneseq
        %v1286 = vshrl.u32 %v1285, 7
        %v1287 = vsub.s32 0, %v1286
        %v1288 = vrot.slane %v1269, %v1287
        %v1289 = vadd.f32 %v1177, %v1288
        %v1290 = vadd.f32 %v1182, %v1288
        %v1291 = vadd.f32 %v1187, %v1288
        %v1292 = vadd.f32 %v1192, %v1288
        %v1293 = vadd.f32 %v1197, %v1288
        %v1294 = vadd.f32 %v1202, %v1288
        %v1295 = vadd.f32 %v1207, %v1288
        %v1296 = vadd.f32 %v1212, %v1288
        %v1297 = vadd.f32 %v1217, %v1288
        %v1298 = vadd.f32 %v1222, %v1288
        %v1299 = vadd.f32 %v1227, %v1288
        %v1300 = vadd.f32 %v1232, %v1288
        %v1301 = vadd.f32 %v1237, %v1288
        %v1302 = vadd.f32 %v1242, %v1288
        %v1303 = vadd.f32 %v1247, %v1288
        %v1304 = vadd.f32 %v1252, %v1288
        %v1305 = vadd.f32 %v1289, %v634
        %v1306 = vadd.f32 %v1290, %v635
        %v1307 = vadd.f32 %v1291, %v636
        %v1308 = vadd.f32 %v1292, %v637
        %v1309 = vadd.f32 %v1293, %v638
        %v1310 = vadd.f32 %v1294, %v639
        %v1311 = vadd.f32 %v1295, %v640
        %v1312 = vadd.f32 %v1296, %v641
        %v1313 = vadd.f32 %v1297, %v642
        %v1314 = vadd.f32 %v1298, %v643
        %v1315 = vadd.f32 %v1299, %v644
        %v1316 = vadd.f32 %v1300, %v645
        %v1317 = vadd.f32 %v1301, %v646
        %v1318 = vadd.f32 %v1302, %v647
        %v1319 = vadd.f32 %v1303, %v648
        %v1320 = vadd.f32 %v1304, %v649
        %v1321 = vmul.f32 %v1305, 0.2
        %v1322 = vmul.f32 %v1306, 0.2
        %v1323 = vmul.f32 %v1307, 0.2
        %v1324 = vmul.f32 %v1308, 0.2
        %v1325 = vmul.f32 %v1309, 0.2
        %v1326 = vmul.f32 %v1310, 0.2
        %v1327 = vmul.f32 %v1311, 0.2
        %v1328 = vmul.f32 %v1312, 0.2
        %v1329 = vmul.f32 %v1313, 0.2
        %v1330 = vmul.f32 %v1314, 0.2
        %v1331 = vmul.f32 %v1315, 0.2
        %v1332 = vmul.f32 %v1316, 0.2
        %v1333 = vmul.f32 %v1317, 0.2
        %v1334 = vmul.f32 %v1318, 0.2
        %v1335 = vmul.f32 %v1319, 0.2
        %v1336 = vmul.f32 %v1320, 0.2
        %v1337 = vmax.f32 %v1305, %v1321
        %v1338 = vmax.f32 %v1306, %v1322
        %v1339 = vmax.f32 %v1307, %v1323
        %v1340 = vmax.f32 %v1308, %v1324
        %v1341 = vmax.f32 %v1309, %v1325
        %v1342 = vmax.f32 %v1310, %v1326
        %v1343 = vmax.f32 %v1311, %v1327
        %v1344 = vmax.f32 %v1312, %v1328
        %v1345 = vmax.f32 %v1313, %v1329
        %v1346 = vmax.f32 %v1314, %v1330
        %v1347 = vmax.f32 %v1315, %v1331
        %v1348 = vmax.f32 %v1316, %v1332
        %v1349 = vmax.f32 %v1317, %v1333
        %v1350 = vmax.f32 %v1318, %v1334
        %v1351 = vmax.f32 %v1319, %v1335
        %v1352 = vmax.f32 %v1320, %v1336
        %1353 = vmax.xlane.f32.xlu0 %v1337
        %v1354 = vpop.xlane.xlu0 %1353
        %1355 = vmax.xlane.f32.xlu0 %v1338
        %v1356 = vpop.xlane.xlu0 %1355
        %1357 = vmax.xlane.f32.xlu0 %v1339
        %v1358 = vpop.xlane.xlu0 %1357
        %1359 = vmax.xlane.f32.xlu0 %v1340
        %v1360 = vpop.xlane.xlu0 %1359
        %1361 = vmax.xlane.f32.xlu0 %v1341
        %v1362 = vpop.xlane.xlu0 %1361
        %1363 = vmax.xlane.f32.xlu0 %v1342
        %v1364 = vpop.xlane.xlu0 %1363
        %1365 = vmax.xlane.f32.xlu0 %v1343
        %v1366 = vpop.xlane.xlu0 %1365
        %1367 = vmax.xlane.f32.xlu0 %v1344
        %v1368 = vpop.xlane.xlu0 %1367
        %1369 = vmax.xlane.f32.xlu0 %v1345
        %v1370 = vpop.xlane.xlu0 %1369
        %1371 = vmax.xlane.f32.xlu0 %v1346
        %v1372 = vpop.xlane.xlu0 %1371
        %1373 = vmax.xlane.f32.xlu0 %v1347
        %v1374 = vpop.xlane.xlu0 %1373
        %1375 = vmax.xlane.f32.xlu0 %v1348
        %v1376 = vpop.xlane.xlu0 %1375
        %1377 = vmax.xlane.f32.xlu0 %v1349
        %v1378 = vpop.xlane.xlu0 %1377
        %1379 = vmax.xlane.f32.xlu0 %v1350
        %v1380 = vpop.xlane.xlu0 %1379
        %1381 = vmax.xlane.f32.xlu0 %v1351
        %v1382 = vpop.xlane.xlu0 %1381
        %1383 = vmax.xlane.f32.xlu0 %v1352
        %v1384 = vpop.xlane.xlu0 %1383
        %v1385 = vsub.f32 %v1337, %v1354
        %v1386 = vsub.f32 %v1338, %v1356
        %v1387 = vsub.f32 %v1339, %v1358
        %v1388 = vsub.f32 %v1340, %v1360
        %v1389 = vsub.f32 %v1341, %v1362
        %v1390 = vsub.f32 %v1342, %v1364
        %v1391 = vsub.f32 %v1343, %v1366
        %v1392 = vsub.f32 %v1344, %v1368
        %v1393 = vsub.f32 %v1345, %v1370
        %v1394 = vsub.f32 %v1346, %v1372
        %v1395 = vsub.f32 %v1347, %v1374
        %v1396 = vsub.f32 %v1348, %v1376
        %v1397 = vsub.f32 %v1349, %v1378
        %v1398 = vsub.f32 %v1350, %v1380
        %v1399 = vsub.f32 %v1351, %v1382
        %v1400 = vsub.f32 %v1352, %v1384
        %v1401 = vmul.f32 %v1385, 1.442695
        %v1402 = vpow.pop %v1401
        %v1403 = vmul.f32 %v1386, 1.442695
        %v1404 = vpow.pop %v1403
        %v1405 = vmul.f32 %v1387, 1.442695
        %v1406 = vpow.pop %v1405
        %v1407 = vmul.f32 %v1388, 1.442695
        %v1408 = vpow.pop %v1407
        %v1409 = vmul.f32 %v1389, 1.442695
        %v1410 = vpow.pop %v1409
        %v1411 = vmul.f32 %v1390, 1.442695
        %v1412 = vpow.pop %v1411
        %v1413 = vmul.f32 %v1391, 1.442695
        %v1414 = vpow.pop %v1413
        %v1415 = vmul.f32 %v1392, 1.442695
        %v1416 = vpow.pop %v1415
        %v1417 = vmul.f32 %v1393, 1.442695
        %v1418 = vpow.pop %v1417
        %v1419 = vmul.f32 %v1394, 1.442695
        %v1420 = vpow.pop %v1419
        %v1421 = vmul.f32 %v1395, 1.442695
        %v1422 = vpow.pop %v1421
        %v1423 = vmul.f32 %v1396, 1.442695
        %v1424 = vpow.pop %v1423
        %v1425 = vmul.f32 %v1397, 1.442695
        %v1426 = vpow.pop %v1425
        %v1427 = vmul.f32 %v1398, 1.442695
        %v1428 = vpow.pop %v1427
        %v1429 = vmul.f32 %v1399, 1.442695
        %v1430 = vpow.pop %v1429
        %v1431 = vmul.f32 %v1400, 1.442695
        %v1432 = vpow.pop %v1431
        %1433 = vadd.xlane.f32.xlu0 %v1402
        %v1434 = vpop.xlane.xlu0 %1433
        %1435 = vadd.xlane.f32.xlu0 %v1404
        %v1436 = vpop.xlane.xlu0 %1435
        %1437 = vadd.xlane.f32.xlu0 %v1406
        %v1438 = vpop.xlane.xlu0 %1437
        %1439 = vadd.xlane.f32.xlu0 %v1408
        %v1440 = vpop.xlane.xlu0 %1439
        %1441 = vadd.xlane.f32.xlu0 %v1410
        %v1442 = vpop.xlane.xlu0 %1441
        %1443 = vadd.xlane.f32.xlu0 %v1412
        %v1444 = vpop.xlane.xlu0 %1443
        %1445 = vadd.xlane.f32.xlu0 %v1414
        %v1446 = vpop.xlane.xlu0 %1445
        %1447 = vadd.xlane.f32.xlu0 %v1416
        %v1448 = vpop.xlane.xlu0 %1447
        %1449 = vadd.xlane.f32.xlu0 %v1418
        %v1450 = vpop.xlane.xlu0 %1449
        %1451 = vadd.xlane.f32.xlu0 %v1420
        %v1452 = vpop.xlane.xlu0 %1451
        %1453 = vadd.xlane.f32.xlu0 %v1422
        %v1454 = vpop.xlane.xlu0 %1453
        %1455 = vadd.xlane.f32.xlu0 %v1424
        %v1456 = vpop.xlane.xlu0 %1455
        %1457 = vadd.xlane.f32.xlu0 %v1426
        %v1458 = vpop.xlane.xlu0 %1457
        %1459 = vadd.xlane.f32.xlu0 %v1428
        %v1460 = vpop.xlane.xlu0 %1459
        %1461 = vadd.xlane.f32.xlu0 %v1430
        %v1462 = vpop.xlane.xlu0 %1461
        %1463 = vadd.xlane.f32.xlu0 %v1432
        %v1464 = vpop.xlane.xlu0 %1463
        %v1465 = vrcp.pop %v1434
        %v1466 = vrcp.pop %v1436
        %v1467 = vrcp.pop %v1438
        %v1468 = vrcp.pop %v1440
        %v1469 = vrcp.pop %v1442
        %v1470 = vrcp.pop %v1444
        %v1471 = vrcp.pop %v1446
        %v1472 = vrcp.pop %v1448
        %v1473 = vrcp.pop %v1450
        %v1474 = vrcp.pop %v1452
        %v1475 = vrcp.pop %v1454
        %v1476 = vrcp.pop %v1456
        %v1477 = vrcp.pop %v1458
        %v1478 = vrcp.pop %v1460
        %v1479 = vrcp.pop %v1462
        %v1480 = vrcp.pop %v1464
        %v1481 = vmul.f32 %v1402, %v1465
        %v1482 = vmul.f32 %v1404, %v1466
        %v1483 = vmul.f32 %v1406, %v1467
        %v1484 = vmul.f32 %v1408, %v1468
        %v1485 = vmul.f32 %v1410, %v1469
        %v1486 = vmul.f32 %v1412, %v1470
        %v1487 = vmul.f32 %v1414, %v1471
        %v1488 = vmul.f32 %v1416, %v1472
        %v1489 = vmul.f32 %v1418, %v1473
        %v1490 = vmul.f32 %v1420, %v1474
        %v1491 = vmul.f32 %v1422, %v1475
        %v1492 = vmul.f32 %v1424, %v1476
        %v1493 = vmul.f32 %v1426, %v1477
        %v1494 = vmul.f32 %v1428, %v1478
        %v1495 = vmul.f32 %v1430, %v1479
        %v1496 = vmul.f32 %v1432, %v1480
        %v1497 = vpack.c.bf16 %v1482, %v1481
        %v1498 = vpack.c.bf16 %v1484, %v1483
        %v1499 = vpack.c.bf16 %v1486, %v1485
        %v1500 = vpack.c.bf16 %v1488, %v1487
        %v1501 = vpack.c.bf16 %v1490, %v1489
        %v1502 = vpack.c.bf16 %v1492, %v1491
        %v1503 = vpack.c.bf16 %v1494, %v1493
        %v1504 = vpack.c.bf16 %v1496, %v1495
        %v1505 = vpack.c.bf16 %v746, %v742
        %v1506 = vpack.c.bf16 %v748, %v744
        %v1507 = vpack.c.bf16 %v859, %v855
        %v1508 = vpack.c.bf16 %v861, %v857
        %v1509 = vpack.c.bf16 %v756, %v752
        %v1510 = vpack.c.bf16 %v758, %v754
        %v1511 = vpack.c.bf16 %v869, %v865
        %v1512 = vpack.c.bf16 %v871, %v867
        %v1513 = vpack.c.bf16 %v766, %v762
        %v1514 = vpack.c.bf16 %v768, %v764
        %v1515 = vpack.c.bf16 %v879, %v875
        %v1516 = vpack.c.bf16 %v881, %v877
        %v1517 = vpack.c.bf16 %v776, %v772
        %v1518 = vpack.c.bf16 %v778, %v774
        %v1519 = vpack.c.bf16 %v889, %v885
        %v1520 = vpack.c.bf16 %v891, %v887
        %v1521 = vpack.c.bf16 %v786, %v782
        %v1522 = vpack.c.bf16 %v788, %v784
        %v1523 = vpack.c.bf16 %v899, %v895
        %v1524 = vpack.c.bf16 %v901, %v897
        %v1525 = vpack.c.bf16 %v796, %v792
        %v1526 = vpack.c.bf16 %v798, %v794
        %v1527 = vpack.c.bf16 %v909, %v905
        %v1528 = vpack.c.bf16 %v911, %v907
        %v1529 = vpack.c.bf16 %v806, %v802
        %v1530 = vpack.c.bf16 %v808, %v804
        %v1531 = vpack.c.bf16 %v919, %v915
        %v1532 = vpack.c.bf16 %v921, %v917
        %v1533 = vpack.c.bf16 %v816, %v812
        %v1534 = vpack.c.bf16 %v818, %v814
        %v1535 = vpack.c.bf16 %v929, %v925
        %v1536 = vpack.c.bf16 %v931, %v927
        %v1537 = vlaneseq
        %v1538 = vshrl.u32 %v1537, 7
        %v1539 = vsub.s32 2, %v1538
        %v1540 = vrot.slane %v604, %v1539
        %v1541 = vlaneseq
        %v1542 = vshrl.u32 %v1541, 7
        %v1543 = vsub.s32 2, %v1542
        %v1544 = vrot.slane %v605, %v1543
        %v1545 = vlaneseq
        %v1546 = vshrl.u32 %v1545, 7
        %v1547 = vsub.s32 2, %v1546
        %v1548 = vrot.slane %v606, %v1547
        %v1549 = vlaneseq
        %v1550 = vshrl.u32 %v1549, 7
        %v1551 = vsub.s32 2, %v1550
        %v1552 = vrot.slane %v607, %v1551
        %1553 = vmatprep.subr.bf16.mxu0 %v1534
        %1554 = vmatpush1.bf16.msra.mxu0 %v1533
        %1555 = vmatprep.subr.bf16.mxu0 %v1530
        %1556 = vmatpush1.bf16.msra.mxu0 %v1529
        %1557 = vmatprep.subr.bf16.mxu0 %v1526
        %1558 = vmatpush1.bf16.msra.mxu0 %v1525
        %1559 = vmatprep.subr.bf16.mxu0 %v1522
        %1560 = vmatpush1.bf16.msra.mxu0 %v1521
        %1561 = vmatprep.subr.bf16.mxu0 %v1518
        %1562 = vmatpush1.bf16.msra.mxu0 %v1517
        %1563 = vmatprep.subr.bf16.mxu0 %v1514
        %1564 = vmatpush1.bf16.msra.mxu0 %v1513
        %1565 = vmatprep.subr.bf16.mxu0 %v1510
        %1566 = vmatpush1.bf16.msra.mxu0 %v1509
        %1567 = vmatprep.subr.bf16.mxu0 %v1506
        %1568 = vmatpush1.bf16.msra.mxu0 %v1505
        %1569 = vmatprep.subr.bf16.mxu0 0
        %1570 = vmatpush2.bf16.msra.mxu0 0
        %1571 = vmatprep.subr.bf16.mxu0 0
        %1572 = vmatpush2.bf16.msra.mxu0 0
        %1573 = vmatprep.subr.bf16.mxu0 0
        %1574 = vmatpush2.bf16.msra.mxu0 0
        %1575 = vmatprep.subr.bf16.mxu0 0
        %1576 = vmatpush2.bf16.msra.mxu0 0
        %1577 = vmatprep.subr.bf16.mxu0 0
        %1578 = vmatpush2.bf16.msra.mxu0 0
        %1579 = vmatprep.subr.bf16.mxu0 0
        %1580 = vmatpush2.bf16.msra.mxu0 0
        %1581 = vmatprep.subr.bf16.mxu0 0
        %1582 = vmatpush2.bf16.msra.mxu0 0
        %1583 = vmatprep.subr.bf16.mxu0 0
        %1584 = vmatpush2.bf16.msra.mxu0 0
        %1585 = vmatprep.mubr.bf16.mxu0 0
        %1586 = vmatmul.mubr.bf16.gmra.mxu0 %v1497
        %v1587 = vpop.f32.mrf.mxu0
        %v1588 = vadd.f32 %v1540, %v1587
        %v1589 = vpop.f32.mrf.mxu0
        %v1590 = vadd.f32 %v1544, %v1589
        %v1591 = vpop.f32.mrf.mxu0
        %v1592 = vadd.f32 %v1540, %v1591
        %v1593 = vpop.f32.mrf.mxu0
        %v1594 = vadd.f32 %v1544, %v1593
        %1595 = vmatprep.mubr.bf16.mxu0 0
        %1596 = vmatmul.mubr.bf16.gmra.mxu0 %v1498
        %v1597 = vpop.f32.mrf.mxu0
        %v1598 = vadd.f32 %v1540, %v1597
        %v1599 = vpop.f32.mrf.mxu0
        %v1600 = vadd.f32 %v1544, %v1599
        %v1601 = vpop.f32.mrf.mxu0
        %v1602 = vadd.f32 %v1540, %v1601
        %v1603 = vpop.f32.mrf.mxu0
        %v1604 = vadd.f32 %v1544, %v1603
        %1605 = vmatprep.mubr.bf16.mxu0 0
        %1606 = vmatmul.mubr.bf16.gmra.mxu0 %v1499
        %v1607 = vpop.f32.mrf.mxu0
        %v1608 = vadd.f32 %v1540, %v1607
        %v1609 = vpop.f32.mrf.mxu0
        %v1610 = vadd.f32 %v1544, %v1609
        %v1611 = vpop.f32.mrf.mxu0
        %v1612 = vadd.f32 %v1540, %v1611
        %v1613 = vpop.f32.mrf.mxu0
        %v1614 = vadd.f32 %v1544, %v1613
        %1615 = vmatprep.mubr.bf16.mxu0 0
        %1616 = vmatmul.mubr.bf16.gmra.mxu0 %v1500
        %v1617 = vpop.f32.mrf.mxu0
        %v1618 = vadd.f32 %v1540, %v1617
        %v1619 = vpop.f32.mrf.mxu0
        %v1620 = vadd.f32 %v1544, %v1619
        %v1621 = vpop.f32.mrf.mxu0
        %v1622 = vadd.f32 %v1540, %v1621
        %v1623 = vpop.f32.mrf.mxu0
        %v1624 = vadd.f32 %v1544, %v1623
        %1625 = vmatprep.mubr.bf16.mxu0 0
        %1626 = vmatmul.mubr.bf16.gmra.mxu0 %v1501
        %v1627 = vpop.f32.mrf.mxu0
        %v1628 = vadd.f32 %v1540, %v1627
        %v1629 = vpop.f32.mrf.mxu0
        %v1630 = vadd.f32 %v1544, %v1629
        %v1631 = vpop.f32.mrf.mxu0
        %v1632 = vadd.f32 %v1540, %v1631
        %v1633 = vpop.f32.mrf.mxu0
        %v1634 = vadd.f32 %v1544, %v1633
        %1635 = vmatprep.mubr.bf16.mxu0 0
        %1636 = vmatmul.mubr.bf16.gmra.mxu0 %v1502
        %v1637 = vpop.f32.mrf.mxu0
        %v1638 = vadd.f32 %v1540, %v1637
        %v1639 = vpop.f32.mrf.mxu0
        %v1640 = vadd.f32 %v1544, %v1639
        %v1641 = vpop.f32.mrf.mxu0
        %v1642 = vadd.f32 %v1540, %v1641
        %v1643 = vpop.f32.mrf.mxu0
        %v1644 = vadd.f32 %v1544, %v1643
        %1645 = vmatprep.mubr.bf16.mxu0 0
        %1646 = vmatmul.mubr.bf16.gmra.mxu0 %v1503
        %v1647 = vpop.f32.mrf.mxu0
        %v1648 = vadd.f32 %v1540, %v1647
        %v1649 = vpop.f32.mrf.mxu0
        %v1650 = vadd.f32 %v1544, %v1649
        %v1651 = vpop.f32.mrf.mxu0
        %v1652 = vadd.f32 %v1540, %v1651
        %v1653 = vpop.f32.mrf.mxu0
        %v1654 = vadd.f32 %v1544, %v1653
        %1655 = vmatprep.mubr.bf16.mxu0 0
        %1656 = vmatmul.mubr.bf16.gmra.mxu0 %v1504
        %v1657 = vpop.f32.mrf.mxu0
        %v1658 = vadd.f32 %v1540, %v1657
        %v1659 = vpop.f32.mrf.mxu0
        %v1660 = vadd.f32 %v1544, %v1659
        %v1661 = vpop.f32.mrf.mxu0
        %v1662 = vadd.f32 %v1540, %v1661
        %v1663 = vpop.f32.mrf.mxu0
        %v1664 = vadd.f32 %v1544, %v1663
        %1665 = vdwg.mxu0
        %1666 = vmatprep.subr.bf16.mxu0 %v1536
        %1667 = vmatpush1.bf16.msra.mxu0 %v1535
        %1668 = vmatprep.subr.bf16.mxu0 %v1532
        %1669 = vmatpush1.bf16.msra.mxu0 %v1531
        %1670 = vmatprep.subr.bf16.mxu0 %v1528
        %1671 = vmatpush1.bf16.msra.mxu0 %v1527
        %1672 = vmatprep.subr.bf16.mxu0 %v1524
        %1673 = vmatpush1.bf16.msra.mxu0 %v1523
        %1674 = vmatprep.subr.bf16.mxu0 %v1520
        %1675 = vmatpush1.bf16.msra.mxu0 %v1519
        %1676 = vmatprep.subr.bf16.mxu0 %v1516
        %1677 = vmatpush1.bf16.msra.mxu0 %v1515
        %1678 = vmatprep.subr.bf16.mxu0 %v1512
        %1679 = vmatpush1.bf16.msra.mxu0 %v1511
        %1680 = vmatprep.subr.bf16.mxu0 %v1508
        %1681 = vmatpush1.bf16.msra.mxu0 %v1507
        %1682 = vmatprep.subr.bf16.mxu0 0
        %1683 = vmatpush2.bf16.msra.mxu0 0
        %1684 = vmatprep.subr.bf16.mxu0 0
        %1685 = vmatpush2.bf16.msra.mxu0 0
        %1686 = vmatprep.subr.bf16.mxu0 0
        %1687 = vmatpush2.bf16.msra.mxu0 0
        %1688 = vmatprep.subr.bf16.mxu0 0
        %1689 = vmatpush2.bf16.msra.mxu0 0
        %1690 = vmatprep.subr.bf16.mxu0 0
        %1691 = vmatpush2.bf16.msra.mxu0 0
        %1692 = vmatprep.subr.bf16.mxu0 0
        %1693 = vmatpush2.bf16.msra.mxu0 0
        %1694 = vmatprep.subr.bf16.mxu0 0
        %1695 = vmatpush2.bf16.msra.mxu0 0
        %1696 = vmatprep.subr.bf16.mxu0 0
        %1697 = vmatpush2.bf16.msra.mxu0 0
        %1698 = vmatprep.mubr.bf16.mxu0 0
        %1699 = vmatmul.mubr.bf16.gmra.mxu0 %v1497
        %v1700 = vpop.f32.mrf.mxu0
        %v1701 = vadd.f32 %v1548, %v1700
        %v1702 = vpop.f32.mrf.mxu0
        %v1703 = vadd.f32 %v1552, %v1702
        %v1704 = vpop.f32.mrf.mxu0
        %v1705 = vadd.f32 %v1548, %v1704
        %v1706 = vpop.f32.mrf.mxu0
        %v1707 = vadd.f32 %v1552, %v1706
        %1708 = vmatprep.mubr.bf16.mxu0 0
        %1709 = vmatmul.mubr.bf16.gmra.mxu0 %v1498
        %v1710 = vpop.f32.mrf.mxu0
        %v1711 = vadd.f32 %v1548, %v1710
        %v1712 = vpop.f32.mrf.mxu0
        %v1713 = vadd.f32 %v1552, %v1712
        %v1714 = vpop.f32.mrf.mxu0
        %v1715 = vadd.f32 %v1548, %v1714
        %v1716 = vpop.f32.mrf.mxu0
        %v1717 = vadd.f32 %v1552, %v1716
        %1718 = vmatprep.mubr.bf16.mxu0 0
        %1719 = vmatmul.mubr.bf16.gmra.mxu0 %v1499
        %v1720 = vpop.f32.mrf.mxu0
        %v1721 = vadd.f32 %v1548, %v1720
        %v1722 = vpop.f32.mrf.mxu0
        %v1723 = vadd.f32 %v1552, %v1722
        %v1724 = vpop.f32.mrf.mxu0
        %v1725 = vadd.f32 %v1548, %v1724
        %v1726 = vpop.f32.mrf.mxu0
        %v1727 = vadd.f32 %v1552, %v1726
        %1728 = vmatprep.mubr.bf16.mxu0 0
        %1729 = vmatmul.mubr.bf16.gmra.mxu0 %v1500
        %v1730 = vpop.f32.mrf.mxu0
        %v1731 = vadd.f32 %v1548, %v1730
        %v1732 = vpop.f32.mrf.mxu0
        %v1733 = vadd.f32 %v1552, %v1732
        %v1734 = vpop.f32.mrf.mxu0
        %v1735 = vadd.f32 %v1548, %v1734
        %v1736 = vpop.f32.mrf.mxu0
        %v1737 = vadd.f32 %v1552, %v1736
        %1738 = vmatprep.mubr.bf16.mxu0 0
        %1739 = vmatmul.mubr.bf16.gmra.mxu0 %v1501
        %v1740 = vpop.f32.mrf.mxu0
        %v1741 = vadd.f32 %v1548, %v1740
        %v1742 = vpop.f32.mrf.mxu0
        %v1743 = vadd.f32 %v1552, %v1742
        %v1744 = vpop.f32.mrf.mxu0
        %v1745 = vadd.f32 %v1548, %v1744
        %v1746 = vpop.f32.mrf.mxu0
        %v1747 = vadd.f32 %v1552, %v1746
        %1748 = vmatprep.mubr.bf16.mxu0 0
        %1749 = vmatmul.mubr.bf16.gmra.mxu0 %v1502
        %v1750 = vpop.f32.mrf.mxu0
        %v1751 = vadd.f32 %v1548, %v1750
        %v1752 = vpop.f32.mrf.mxu0
        %v1753 = vadd.f32 %v1552, %v1752
        %v1754 = vpop.f32.mrf.mxu0
        %v1755 = vadd.f32 %v1548, %v1754
        %v1756 = vpop.f32.mrf.mxu0
        %v1757 = vadd.f32 %v1552, %v1756
        %1758 = vmatprep.mubr.bf16.mxu0 0
        %1759 = vmatmul.mubr.bf16.gmra.mxu0 %v1503
        %v1760 = vpop.f32.mrf.mxu0
        %v1761 = vadd.f32 %v1548, %v1760
        %v1762 = vpop.f32.mrf.mxu0
        %v1763 = vadd.f32 %v1552, %v1762
        %v1764 = vpop.f32.mrf.mxu0
        %v1765 = vadd.f32 %v1548, %v1764
        %v1766 = vpop.f32.mrf.mxu0
        %v1767 = vadd.f32 %v1552, %v1766
        %1768 = vmatprep.mubr.bf16.mxu0 0
        %1769 = vmatmul.mubr.bf16.gmra.mxu0 %v1504
        %v1770 = vpop.f32.mrf.mxu0
        %v1771 = vadd.f32 %v1548, %v1770
        %v1772 = vpop.f32.mrf.mxu0
        %v1773 = vadd.f32 %v1552, %v1772
        %v1774 = vpop.f32.mrf.mxu0
        %v1775 = vadd.f32 %v1548, %v1774
        %v1776 = vpop.f32.mrf.mxu0
        %v1777 = vadd.f32 %v1552, %v1776
        %1778 = vdwg.mxu0
        %v1779 = vmul.f32 %v1588, 0.01
        %v1780 = vmul.f32 %v1590, 0.01
        %v1781 = vmul.f32 %v1701, 0.01
        %v1782 = vmul.f32 %v1703, 0.01
        %v1783 = vmul.f32 %v1592, 0.01
        %v1784 = vmul.f32 %v1594, 0.01
        %v1785 = vmul.f32 %v1705, 0.01
        %v1786 = vmul.f32 %v1707, 0.01
        %v1787 = vmul.f32 %v1598, 0.01
        %v1788 = vmul.f32 %v1600, 0.01
        %v1789 = vmul.f32 %v1711, 0.01
        %v1790 = vmul.f32 %v1713, 0.01
        %v1791 = vmul.f32 %v1602, 0.01
        %v1792 = vmul.f32 %v1604, 0.01
        %v1793 = vmul.f32 %v1715, 0.01
        %v1794 = vmul.f32 %v1717, 0.01
        %v1795 = vmul.f32 %v1608, 0.01
        %v1796 = vmul.f32 %v1610, 0.01
        %v1797 = vmul.f32 %v1721, 0.01
        %v1798 = vmul.f32 %v1723, 0.01
        %v1799 = vmul.f32 %v1612, 0.01
        %v1800 = vmul.f32 %v1614, 0.01
        %v1801 = vmul.f32 %v1725, 0.01
        %v1802 = vmul.f32 %v1727, 0.01
        %v1803 = vmul.f32 %v1618, 0.01
        %v1804 = vmul.f32 %v1620, 0.01
        %v1805 = vmul.f32 %v1731, 0.01
        %v1806 = vmul.f32 %v1733, 0.01
        %v1807 = vmul.f32 %v1622, 0.01
        %v1808 = vmul.f32 %v1624, 0.01
        %v1809 = vmul.f32 %v1735, 0.01
        %v1810 = vmul.f32 %v1737, 0.01
        %v1811 = vmul.f32 %v1628, 0.01
        %v1812 = vmul.f32 %v1630, 0.01
        %v1813 = vmul.f32 %v1741, 0.01
        %v1814 = vmul.f32 %v1743, 0.01
        %v1815 = vmul.f32 %v1632, 0.01
        %v1816 = vmul.f32 %v1634, 0.01
        %v1817 = vmul.f32 %v1745, 0.01
        %v1818 = vmul.f32 %v1747, 0.01
        %v1819 = vmul.f32 %v1638, 0.01
        %v1820 = vmul.f32 %v1640, 0.01
        %v1821 = vmul.f32 %v1751, 0.01
        %v1822 = vmul.f32 %v1753, 0.01
        %v1823 = vmul.f32 %v1642, 0.01
        %v1824 = vmul.f32 %v1644, 0.01
        %v1825 = vmul.f32 %v1755, 0.01
        %v1826 = vmul.f32 %v1757, 0.01
        %v1827 = vmul.f32 %v1648, 0.01
        %v1828 = vmul.f32 %v1650, 0.01
        %v1829 = vmul.f32 %v1761, 0.01
        %v1830 = vmul.f32 %v1763, 0.01
        %v1831 = vmul.f32 %v1652, 0.01
        %v1832 = vmul.f32 %v1654, 0.01
        %v1833 = vmul.f32 %v1765, 0.01
        %v1834 = vmul.f32 %v1767, 0.01
        %v1835 = vmul.f32 %v1658, 0.01
        %v1836 = vmul.f32 %v1660, 0.01
        %v1837 = vmul.f32 %v1771, 0.01
        %v1838 = vmul.f32 %v1773, 0.01
        %v1839 = vmul.f32 %v1662, 0.01
        %v1840 = vmul.f32 %v1664, 0.01
        %v1841 = vmul.f32 %v1775, 0.01
        %v1842 = vmul.f32 %v1777, 0.01
        %v1843 = vmax.f32 %v1588, %v1779
        %v1844 = vmax.f32 %v1590, %v1780
        %v1845 = vmax.f32 %v1701, %v1781
        %v1846 = vmax.f32 %v1703, %v1782
        %v1847 = vmax.f32 %v1592, %v1783
        %v1848 = vmax.f32 %v1594, %v1784
        %v1849 = vmax.f32 %v1705, %v1785
        %v1850 = vmax.f32 %v1707, %v1786
        %v1851 = vmax.f32 %v1598, %v1787
        %v1852 = vmax.f32 %v1600, %v1788
        %v1853 = vmax.f32 %v1711, %v1789
        %v1854 = vmax.f32 %v1713, %v1790
        %v1855 = vmax.f32 %v1602, %v1791
        %v1856 = vmax.f32 %v1604, %v1792
        %v1857 = vmax.f32 %v1715, %v1793
        %v1858 = vmax.f32 %v1717, %v1794
        %v1859 = vmax.f32 %v1608, %v1795
        %v1860 = vmax.f32 %v1610, %v1796
        %v1861 = vmax.f32 %v1721, %v1797
        %v1862 = vmax.f32 %v1723, %v1798
        %v1863 = vmax.f32 %v1612, %v1799
        %v1864 = vmax.f32 %v1614, %v1800
        %v1865 = vmax.f32 %v1725, %v1801
        %v1866 = vmax.f32 %v1727, %v1802
        %v1867 = vmax.f32 %v1618, %v1803
        %v1868 = vmax.f32 %v1620, %v1804
        %v1869 = vmax.f32 %v1731, %v1805
        %v1870 = vmax.f32 %v1733, %v1806
        %v1871 = vmax.f32 %v1622, %v1807
        %v1872 = vmax.f32 %v1624, %v1808
        %v1873 = vmax.f32 %v1735, %v1809
        %v1874 = vmax.f32 %v1737, %v1810
        %v1875 = vmax.f32 %v1628, %v1811
        %v1876 = vmax.f32 %v1630, %v1812
        %v1877 = vmax.f32 %v1741, %v1813
        %v1878 = vmax.f32 %v1743, %v1814
        %v1879 = vmax.f32 %v1632, %v1815
        %v1880 = vmax.f32 %v1634, %v1816
        %v1881 = vmax.f32 %v1745, %v1817
        %v1882 = vmax.f32 %v1747, %v1818
        %v1883 = vmax.f32 %v1638, %v1819
        %v1884 = vmax.f32 %v1640, %v1820
        %v1885 = vmax.f32 %v1751, %v1821
        %v1886 = vmax.f32 %v1753, %v1822
        %v1887 = vmax.f32 %v1642, %v1823
        %v1888 = vmax.f32 %v1644, %v1824
        %v1889 = vmax.f32 %v1755, %v1825
        %v1890 = vmax.f32 %v1757, %v1826
        %v1891 = vmax.f32 %v1648, %v1827
        %v1892 = vmax.f32 %v1650, %v1828
        %v1893 = vmax.f32 %v1761, %v1829
        %v1894 = vmax.f32 %v1763, %v1830
        %v1895 = vmax.f32 %v1652, %v1831
        %v1896 = vmax.f32 %v1654, %v1832
        %v1897 = vmax.f32 %v1765, %v1833
        %v1898 = vmax.f32 %v1767, %v1834
        %v1899 = vmax.f32 %v1658, %v1835
        %v1900 = vmax.f32 %v1660, %v1836
        %v1901 = vmax.f32 %v1771, %v1837
        %v1902 = vmax.f32 %v1773, %v1838
        %v1903 = vmax.f32 %v1662, %v1839
        %v1904 = vmax.f32 %v1664, %v1840
        %v1905 = vmax.f32 %v1775, %v1841
        %v1906 = vmax.f32 %v1777, %v1842
        %v1907 = vlaneseq
        %v1908 = vshrl.u32 %v1907, 7
        %v1909 = vsub.s32 3, %v1908
        %v1910 = vrot.slane %v604, %v1909
        %v1911 = vlaneseq
        %v1912 = vshrl.u32 %v1911, 7
        %v1913 = vsub.s32 3, %v1912
        %v1914 = vrot.slane %v605, %v1913
        %v1915 = vlaneseq
        %v1916 = vshrl.u32 %v1915, 7
        %v1917 = vsub.s32 3, %v1916
        %v1918 = vrot.slane %v606, %v1917
        %v1919 = vlaneseq
        %v1920 = vshrl.u32 %v1919, 7
        %v1921 = vsub.s32 3, %v1920
        %v1922 = vrot.slane %v607, %v1921
        %v1923 = vmul.f32 %v1843, %v1910
        %v1924 = vmul.f32 %v1844, %v1914
        %v1925 = vmul.f32 %v1845, %v1918
        %v1926 = vmul.f32 %v1846, %v1922
        %v1927 = vmul.f32 %v1847, %v1910
        %v1928 = vmul.f32 %v1848, %v1914
        %v1929 = vmul.f32 %v1849, %v1918
        %v1930 = vmul.f32 %v1850, %v1922
        %v1931 = vmul.f32 %v1851, %v1910
        %v1932 = vmul.f32 %v1852, %v1914
        %v1933 = vmul.f32 %v1853, %v1918
        %v1934 = vmul.f32 %v1854, %v1922
        %v1935 = vmul.f32 %v1855, %v1910
        %v1936 = vmul.f32 %v1856, %v1914
        %v1937 = vmul.f32 %v1857, %v1918
        %v1938 = vmul.f32 %v1858, %v1922
        %v1939 = vmul.f32 %v1859, %v1910
        %v1940 = vmul.f32 %v1860, %v1914
        %v1941 = vmul.f32 %v1861, %v1918
        %v1942 = vmul.f32 %v1862, %v1922
        %v1943 = vmul.f32 %v1863, %v1910
        %v1944 = vmul.f32 %v1864, %v1914
        %v1945 = vmul.f32 %v1865, %v1918
        %v1946 = vmul.f32 %v1866, %v1922
        %v1947 = vmul.f32 %v1867, %v1910
        %v1948 = vmul.f32 %v1868, %v1914
        %v1949 = vmul.f32 %v1869, %v1918
        %v1950 = vmul.f32 %v1870, %v1922
        %v1951 = vmul.f32 %v1871, %v1910
        %v1952 = vmul.f32 %v1872, %v1914
        %v1953 = vmul.f32 %v1873, %v1918
        %v1954 = vmul.f32 %v1874, %v1922
        %v1955 = vmul.f32 %v1875, %v1910
        %v1956 = vmul.f32 %v1876, %v1914
        %v1957 = vmul.f32 %v1877, %v1918
        %v1958 = vmul.f32 %v1878, %v1922
        %v1959 = vmul.f32 %v1879, %v1910
        %v1960 = vmul.f32 %v1880, %v1914
        %v1961 = vmul.f32 %v1881, %v1918
        %v1962 = vmul.f32 %v1882, %v1922
        %v1963 = vmul.f32 %v1883, %v1910
        %v1964 = vmul.f32 %v1884, %v1914
        %v1965 = vmul.f32 %v1885, %v1918
        %v1966 = vmul.f32 %v1886, %v1922
        %v1967 = vmul.f32 %v1887, %v1910
        %v1968 = vmul.f32 %v1888, %v1914
        %v1969 = vmul.f32 %v1889, %v1918
        %v1970 = vmul.f32 %v1890, %v1922
        %v1971 = vmul.f32 %v1891, %v1910
        %v1972 = vmul.f32 %v1892, %v1914
        %v1973 = vmul.f32 %v1893, %v1918
        %v1974 = vmul.f32 %v1894, %v1922
        %v1975 = vmul.f32 %v1895, %v1910
        %v1976 = vmul.f32 %v1896, %v1914
        %v1977 = vmul.f32 %v1897, %v1918
        %v1978 = vmul.f32 %v1898, %v1922
        %v1979 = vmul.f32 %v1899, %v1910
        %v1980 = vmul.f32 %v1900, %v1914
        %v1981 = vmul.f32 %v1901, %v1918
        %v1982 = vmul.f32 %v1902, %v1922
        %v1983 = vmul.f32 %v1903, %v1910
        %v1984 = vmul.f32 %v1904, %v1914
        %v1985 = vmul.f32 %v1905, %v1918
        %v1986 = vmul.f32 %v1906, %v1922
        %v1987 = vlaneseq
        %v1988 = vshrl.u32 %v1987, 7
        %v1989 = vsub.s32 4, %v1988
        %v1990 = vrot.slane %v604, %v1989
        %v1991 = vlaneseq
        %v1992 = vshrl.u32 %v1991, 7
        %v1993 = vsub.s32 4, %v1992
        %v1994 = vrot.slane %v605, %v1993
        %v1995 = vlaneseq
        %v1996 = vshrl.u32 %v1995, 7
        %v1997 = vsub.s32 4, %v1996
        %v1998 = vrot.slane %v606, %v1997
        %v1999 = vlaneseq
        %v2000 = vshrl.u32 %v1999, 7
        %v2001 = vsub.s32 4, %v2000
        %v2002 = vrot.slane %v607, %v2001
        %v2003 = vadd.f32 %v1923, %v1990
        %v2004 = vadd.f32 %v1924, %v1994
        %v2005 = vadd.f32 %v1925, %v1998
        %v2006 = vadd.f32 %v1926, %v2002
        %v2007 = vadd.f32 %v1927, %v1990
        %v2008 = vadd.f32 %v1928, %v1994
        %v2009 = vadd.f32 %v1929, %v1998
        %v2010 = vadd.f32 %v1930, %v2002
        %v2011 = vadd.f32 %v1931, %v1990
        %v2012 = vadd.f32 %v1932, %v1994
        %v2013 = vadd.f32 %v1933, %v1998
        %v2014 = vadd.f32 %v1934, %v2002
        %v2015 = vadd.f32 %v1935, %v1990
        %v2016 = vadd.f32 %v1936, %v1994
        %v2017 = vadd.f32 %v1937, %v1998
        %v2018 = vadd.f32 %v1938, %v2002
        %v2019 = vadd.f32 %v1939, %v1990
        %v2020 = vadd.f32 %v1940, %v1994
        %v2021 = vadd.f32 %v1941, %v1998
        %v2022 = vadd.f32 %v1942, %v2002
        %v2023 = vadd.f32 %v1943, %v1990
        %v2024 = vadd.f32 %v1944, %v1994
        %v2025 = vadd.f32 %v1945, %v1998
        %v2026 = vadd.f32 %v1946, %v2002
        %v2027 = vadd.f32 %v1947, %v1990
        %v2028 = vadd.f32 %v1948, %v1994
        %v2029 = vadd.f32 %v1949, %v1998
        %v2030 = vadd.f32 %v1950, %v2002
        %v2031 = vadd.f32 %v1951, %v1990
        %v2032 = vadd.f32 %v1952, %v1994
        %v2033 = vadd.f32 %v1953, %v1998
        %v2034 = vadd.f32 %v1954, %v2002
        %v2035 = vadd.f32 %v1955, %v1990
        %v2036 = vadd.f32 %v1956, %v1994
        %v2037 = vadd.f32 %v1957, %v1998
        %v2038 = vadd.f32 %v1958, %v2002
        %v2039 = vadd.f32 %v1959, %v1990
        %v2040 = vadd.f32 %v1960, %v1994
        %v2041 = vadd.f32 %v1961, %v1998
        %v2042 = vadd.f32 %v1962, %v2002
        %v2043 = vadd.f32 %v1963, %v1990
        %v2044 = vadd.f32 %v1964, %v1994
        %v2045 = vadd.f32 %v1965, %v1998
        %v2046 = vadd.f32 %v1966, %v2002
        %v2047 = vadd.f32 %v1967, %v1990
        %v2048 = vadd.f32 %v1968, %v1994
        %v2049 = vadd.f32 %v1969, %v1998
        %v2050 = vadd.f32 %v1970, %v2002
        %v2051 = vadd.f32 %v1971, %v1990
        %v2052 = vadd.f32 %v1972, %v1994
        %v2053 = vadd.f32 %v1973, %v1998
        %v2054 = vadd.f32 %v1974, %v2002
        %v2055 = vadd.f32 %v1975, %v1990
        %v2056 = vadd.f32 %v1976, %v1994
        %v2057 = vadd.f32 %v1977, %v1998
        %v2058 = vadd.f32 %v1978, %v2002
        %v2059 = vadd.f32 %v1979, %v1990
        %v2060 = vadd.f32 %v1980, %v1994
        %v2061 = vadd.f32 %v1981, %v1998
        %v2062 = vadd.f32 %v1982, %v2002
        %v2063 = vadd.f32 %v1983, %v1990
        %v2064 = vadd.f32 %v1984, %v1994
        %v2065 = vadd.f32 %v1985, %v1998
        %v2066 = vadd.f32 %v1986, %v2002
        %s2067 = scalar_lea.vmem %s516, 128 [#allocation2]
        %v2068 = vld [vmem:[%s2067] sm:$0xff]
        %v2069 = vld [vmem:[%s2067 + $0x8] sm:$0xff]
        %v2070 = vld [vmem:[%s2067 + $0x10] sm:$0xff]
        %v2071 = vld [vmem:[%s2067 + $0x18] sm:$0xff]
        %v2072 = vld [vmem:[%s2067 + $0x20] sm:$0xff]
        %v2073 = vld [vmem:[%s2067 + $0x28] sm:$0xff]
        %v2074 = vld [vmem:[%s2067 + $0x30] sm:$0xff]
        %v2075 = vld [vmem:[%s2067 + $0x38] sm:$0xff]
        %v2076 = vld [vmem:[%s2067 + $0x40] sm:$0xff]
        %v2077 = vld [vmem:[%s2067 + $0x48] sm:$0xff]
        %v2078 = vld [vmem:[%s2067 + $0x50] sm:$0xff]
        %v2079 = vld [vmem:[%s2067 + $0x58] sm:$0xff]
        %v2080 = vld [vmem:[%s2067 + $0x60] sm:$0xff]
        %v2081 = vld [vmem:[%s2067 + $0x68] sm:$0xff]
        %v2082 = vld [vmem:[%s2067 + $0x70] sm:$0xff]
        %v2083 = vld [vmem:[%s2067 + $0x78] sm:$0xff]
        %v2084 = vpack.c.bf16 %v2007, %v2003
        %v2085 = vpack.c.bf16 %v2008, %v2004
        %v2086 = vpack.c.bf16 %v2009, %v2005
        %v2087 = vpack.c.bf16 %v2010, %v2006
        %v2088 = vpack.c.bf16 %v2015, %v2011
        %v2089 = vpack.c.bf16 %v2016, %v2012
        %v2090 = vpack.c.bf16 %v2017, %v2013
        %v2091 = vpack.c.bf16 %v2018, %v2014
        %v2092 = vpack.c.bf16 %v2023, %v2019
        %v2093 = vpack.c.bf16 %v2024, %v2020
        %v2094 = vpack.c.bf16 %v2025, %v2021
        %v2095 = vpack.c.bf16 %v2026, %v2022
        %v2096 = vpack.c.bf16 %v2031, %v2027
        %v2097 = vpack.c.bf16 %v2032, %v2028
        %v2098 = vpack.c.bf16 %v2033, %v2029
        %v2099 = vpack.c.bf16 %v2034, %v2030
        %v2100 = vpack.c.bf16 %v2039, %v2035
        %v2101 = vpack.c.bf16 %v2040, %v2036
        %v2102 = vpack.c.bf16 %v2041, %v2037
        %v2103 = vpack.c.bf16 %v2042, %v2038
        %v2104 = vpack.c.bf16 %v2047, %v2043
        %v2105 = vpack.c.bf16 %v2048, %v2044
        %v2106 = vpack.c.bf16 %v2049, %v2045
        %v2107 = vpack.c.bf16 %v2050, %v2046
        %v2108 = vpack.c.bf16 %v2055, %v2051
        %v2109 = vpack.c.bf16 %v2056, %v2052
        %v2110 = vpack.c.bf16 %v2057, %v2053
        %v2111 = vpack.c.bf16 %v2058, %v2054
        %v2112 = vpack.c.bf16 %v2063, %v2059
        %v2113 = vpack.c.bf16 %v2064, %v2060
        %v2114 = vpack.c.bf16 %v2065, %v2061
        %v2115 = vpack.c.bf16 %v2066, %v2062
        %v2116 = vld [vmem:[#allocation5] sm:$0xff]
        %v2117 = vld [vmem:[#allocation5 + $0x8] sm:$0xff]
        %v2118 = vld [vmem:[#allocation5 + $0x10] sm:$0xff]
        %v2119 = vld [vmem:[#allocation5 + $0x18] sm:$0xff]
        %v2120 = vld [vmem:[#allocation5 + $0x20] sm:$0xff]
        %v2121 = vld [vmem:[#allocation5 + $0x28] sm:$0xff]
        %v2122 = vld [vmem:[#allocation5 + $0x30] sm:$0xff]
        %v2123 = vld [vmem:[#allocation5 + $0x38] sm:$0xff]
        %v2124 = vld [vmem:[#allocation5 + $0x40] sm:$0xff]
        %v2125 = vld [vmem:[#allocation5 + $0x48] sm:$0xff]
        %v2126 = vld [vmem:[#allocation5 + $0x50] sm:$0xff]
        %v2127 = vld [vmem:[#allocation5 + $0x58] sm:$0xff]
        %v2128 = vld [vmem:[#allocation5 + $0x60] sm:$0xff]
        %v2129 = vld [vmem:[#allocation5 + $0x68] sm:$0xff]
        %v2130 = vld [vmem:[#allocation5 + $0x70] sm:$0xff]
        %v2131 = vld [vmem:[#allocation5 + $0x78] sm:$0xff]
        %v2132 = vld [vmem:[#allocation5 + $0x80] sm:$0xff]
        %v2133 = vld [vmem:[#allocation5 + $0x88] sm:$0xff]
        %v2134 = vld [vmem:[#allocation5 + $0x90] sm:$0xff]
        %v2135 = vld [vmem:[#allocation5 + $0x98] sm:$0xff]
        %v2136 = vld [vmem:[#allocation5 + $0xa0] sm:$0xff]
        %v2137 = vld [vmem:[#allocation5 + $0xa8] sm:$0xff]
        %v2138 = vld [vmem:[#allocation5 + $0xb0] sm:$0xff]
        %v2139 = vld [vmem:[#allocation5 + $0xb8] sm:$0xff]
        %v2140 = vld [vmem:[#allocation5 + $0xc0] sm:$0xff]
        %v2141 = vld [vmem:[#allocation5 + $0xc8] sm:$0xff]
        %v2142 = vld [vmem:[#allocation5 + $0xd0] sm:$0xff]
        %v2143 = vld [vmem:[#allocation5 + $0xd8] sm:$0xff]
        %v2144 = vld [vmem:[#allocation5 + $0xe0] sm:$0xff]
        %v2145 = vld [vmem:[#allocation5 + $0xe8] sm:$0xff]
        %v2146 = vld [vmem:[#allocation5 + $0xf0] sm:$0xff]
        %v2147 = vld [vmem:[#allocation5 + $0xf8] sm:$0xff]
        %v2148 = vld [vmem:[#allocation5 + $0x100] sm:$0xff]
        %v2149 = vld [vmem:[#allocation5 + $0x108] sm:$0xff]
        %v2150 = vld [vmem:[#allocation5 + $0x110] sm:$0xff]
        %v2151 = vld [vmem:[#allocation5 + $0x118] sm:$0xff]
        %v2152 = vld [vmem:[#allocation5 + $0x120] sm:$0xff]
        %v2153 = vld [vmem:[#allocation5 + $0x128] sm:$0xff]
        %v2154 = vld [vmem:[#allocation5 + $0x130] sm:$0xff]
        %v2155 = vld [vmem:[#allocation5 + $0x138] sm:$0xff]
        %v2156 = vld [vmem:[#allocation5 + $0x140] sm:$0xff]
        %v2157 = vld [vmem:[#allocation5 + $0x148] sm:$0xff]
        %v2158 = vld [vmem:[#allocation5 + $0x150] sm:$0xff]
        %v2159 = vld [vmem:[#allocation5 + $0x158] sm:$0xff]
        %v2160 = vld [vmem:[#allocation5 + $0x160] sm:$0xff]
        %v2161 = vld [vmem:[#allocation5 + $0x168] sm:$0xff]
        %v2162 = vld [vmem:[#allocation5 + $0x170] sm:$0xff]
        %v2163 = vld [vmem:[#allocation5 + $0x178] sm:$0xff]
        %v2164 = vld [vmem:[#allocation5 + $0x180] sm:$0xff]
        %v2165 = vld [vmem:[#allocation5 + $0x188] sm:$0xff]
        %v2166 = vld [vmem:[#allocation5 + $0x190] sm:$0xff]
        %v2167 = vld [vmem:[#allocation5 + $0x198] sm:$0xff]
        %v2168 = vld [vmem:[#allocation5 + $0x1a0] sm:$0xff]
        %v2169 = vld [vmem:[#allocation5 + $0x1a8] sm:$0xff]
        %v2170 = vld [vmem:[#allocation5 + $0x1b0] sm:$0xff]
        %v2171 = vld [vmem:[#allocation5 + $0x1b8] sm:$0xff]
        %v2172 = vld [vmem:[#allocation5 + $0x1c0] sm:$0xff]
        %v2173 = vld [vmem:[#allocation5 + $0x1c8] sm:$0xff]
        %v2174 = vld [vmem:[#allocation5 + $0x1d0] sm:$0xff]
        %v2175 = vld [vmem:[#allocation5 + $0x1d8] sm:$0xff]
        %v2176 = vld [vmem:[#allocation5 + $0x1e0] sm:$0xff]
        %v2177 = vld [vmem:[#allocation5 + $0x1e8] sm:$0xff]
        %v2178 = vld [vmem:[#allocation5 + $0x1f0] sm:$0xff]
        %v2179 = vld [vmem:[#allocation5 + $0x1f8] sm:$0xff]
        %v2244 = vunpack.c.l.b16 %v2116
        %v2245 = vunpack.c.h.b16 %v2116
        %v2246 = vunpack.c.l.b16 %v2117
        %v2247 = vunpack.c.h.b16 %v2117
        %v2248 = vunpack.c.l.b16 %v2118
        %v2249 = vunpack.c.h.b16 %v2118
        %v2250 = vunpack.c.l.b16 %v2119
        %v2251 = vunpack.c.h.b16 %v2119
        %v2252 = vunpack.c.l.b16 %v2120
        %v2253 = vunpack.c.h.b16 %v2120
        %v2254 = vunpack.c.l.b16 %v2121
        %v2255 = vunpack.c.h.b16 %v2121
        %v2256 = vunpack.c.l.b16 %v2122
        %v2257 = vunpack.c.h.b16 %v2122
        %v2258 = vunpack.c.l.b16 %v2123
        %v2259 = vunpack.c.h.b16 %v2123
        %v2260 = vunpack.c.l.b16 %v2124
        %v2261 = vunpack.c.h.b16 %v2124
        %v2262 = vunpack.c.l.b16 %v2125
        %v2263 = vunpack.c.h.b16 %v2125
        %v2264 = vunpack.c.l.b16 %v2126
        %v2265 = vunpack.c.h.b16 %v2126
        %v2266 = vunpack.c.l.b16 %v2127
        %v2267 = vunpack.c.h.b16 %v2127
        %v2268 = vunpack.c.l.b16 %v2128
        %v2269 = vunpack.c.h.b16 %v2128
        %v2270 = vunpack.c.l.b16 %v2129
        %v2271 = vunpack.c.h.b16 %v2129
        %v2272 = vunpack.c.l.b16 %v2130
        %v2273 = vunpack.c.h.b16 %v2130
        %v2274 = vunpack.c.l.b16 %v2131
        %v2275 = vunpack.c.h.b16 %v2131
        %v2276 = vunpack.c.l.b16 %v2132
        %v2277 = vunpack.c.h.b16 %v2132
        %v2278 = vunpack.c.l.b16 %v2133
        %v2279 = vunpack.c.h.b16 %v2133
        %v2280 = vunpack.c.l.b16 %v2134
        %v2281 = vunpack.c.h.b16 %v2134
        %v2282 = vunpack.c.l.b16 %v2135
        %v2283 = vunpack.c.h.b16 %v2135
        %v2284 = vunpack.c.l.b16 %v2136
        %v2285 = vunpack.c.h.b16 %v2136
        %v2286 = vunpack.c.l.b16 %v2137
        %v2287 = vunpack.c.h.b16 %v2137
        %v2288 = vunpack.c.l.b16 %v2138
        %v2289 = vunpack.c.h.b16 %v2138
        %v2290 = vunpack.c.l.b16 %v2139
        %v2291 = vunpack.c.h.b16 %v2139
        %v2292 = vunpack.c.l.b16 %v2140
        %v2293 = vunpack.c.h.b16 %v2140
        %v2294 = vunpack.c.l.b16 %v2141
        %v2295 = vunpack.c.h.b16 %v2141
        %v2296 = vunpack.c.l.b16 %v2142
        %v2297 = vunpack.c.h.b16 %v2142
        %v2298 = vunpack.c.l.b16 %v2143
        %v2299 = vunpack.c.h.b16 %v2143
        %v2300 = vunpack.c.l.b16 %v2144
        %v2301 = vunpack.c.h.b16 %v2144
        %v2302 = vunpack.c.l.b16 %v2145
        %v2303 = vunpack.c.h.b16 %v2145
        %v2304 = vunpack.c.l.b16 %v2146
        %v2305 = vunpack.c.h.b16 %v2146
        %v2306 = vunpack.c.l.b16 %v2147
        %v2307 = vunpack.c.h.b16 %v2147
        %v2308 = vunpack.c.l.b16 %v2148
        %v2309 = vunpack.c.h.b16 %v2148
        %v2310 = vunpack.c.l.b16 %v2149
        %v2311 = vunpack.c.h.b16 %v2149
        %v2312 = vunpack.c.l.b16 %v2150
        %v2313 = vunpack.c.h.b16 %v2150
        %v2314 = vunpack.c.l.b16 %v2151
        %v2315 = vunpack.c.h.b16 %v2151
        %v2316 = vunpack.c.l.b16 %v2152
        %v2317 = vunpack.c.h.b16 %v2152
        %v2318 = vunpack.c.l.b16 %v2153
        %v2319 = vunpack.c.h.b16 %v2153
        %v2320 = vunpack.c.l.b16 %v2154
        %v2321 = vunpack.c.h.b16 %v2154
        %v2322 = vunpack.c.l.b16 %v2155
        %v2323 = vunpack.c.h.b16 %v2155
        %v2324 = vunpack.c.l.b16 %v2156
        %v2325 = vunpack.c.h.b16 %v2156
        %v2326 = vunpack.c.l.b16 %v2157
        %v2327 = vunpack.c.h.b16 %v2157
        %v2328 = vunpack.c.l.b16 %v2158
        %v2329 = vunpack.c.h.b16 %v2158
        %v2330 = vunpack.c.l.b16 %v2159
        %v2331 = vunpack.c.h.b16 %v2159
        %v2332 = vunpack.c.l.b16 %v2160
        %v2333 = vunpack.c.h.b16 %v2160
        %v2334 = vunpack.c.l.b16 %v2161
        %v2335 = vunpack.c.h.b16 %v2161
        %v2336 = vunpack.c.l.b16 %v2162
        %v2337 = vunpack.c.h.b16 %v2162
        %v2338 = vunpack.c.l.b16 %v2163
        %v2339 = vunpack.c.h.b16 %v2163
        %v2340 = vunpack.c.l.b16 %v2164
        %v2341 = vunpack.c.h.b16 %v2164
        %v2342 = vunpack.c.l.b16 %v2165
        %v2343 = vunpack.c.h.b16 %v2165
        %v2344 = vunpack.c.l.b16 %v2166
        %v2345 = vunpack.c.h.b16 %v2166
        %v2346 = vunpack.c.l.b16 %v2167
        %v2347 = vunpack.c.h.b16 %v2167
        %v2348 = vunpack.c.l.b16 %v2168
        %v2349 = vunpack.c.h.b16 %v2168
        %v2350 = vunpack.c.l.b16 %v2169
        %v2351 = vunpack.c.h.b16 %v2169
        %v2352 = vunpack.c.l.b16 %v2170
        %v2353 = vunpack.c.h.b16 %v2170
        %v2354 = vunpack.c.l.b16 %v2171
        %v2355 = vunpack.c.h.b16 %v2171
        %v2356 = vunpack.c.l.b16 %v2172
        %v2357 = vunpack.c.h.b16 %v2172
        %v2358 = vunpack.c.l.b16 %v2173
        %v2359 = vunpack.c.h.b16 %v2173
        %v2360 = vunpack.c.l.b16 %v2174
        %v2361 = vunpack.c.h.b16 %v2174
        %v2362 = vunpack.c.l.b16 %v2175
        %v2363 = vunpack.c.h.b16 %v2175
        %v2364 = vunpack.c.l.b16 %v2176
        %v2365 = vunpack.c.h.b16 %v2176
        %v2366 = vunpack.c.l.b16 %v2177
        %v2367 = vunpack.c.h.b16 %v2177
        %v2368 = vunpack.c.l.b16 %v2178
        %v2369 = vunpack.c.h.b16 %v2178
        %v2370 = vunpack.c.l.b16 %v2179
        %v2371 = vunpack.c.h.b16 %v2179
        %v2372 = vpack.c.b16 %v2246, %v2244
        %v2373 = vpack.c.b16 %v2247, %v2245
        %v2374 = vpack.c.b16 %v2250, %v2248
        %v2375 = vpack.c.b16 %v2251, %v2249
        %v2376 = vpack.c.b16 %v2254, %v2252
        %v2377 = vpack.c.b16 %v2255, %v2253
        %v2378 = vpack.c.b16 %v2258, %v2256
        %v2379 = vpack.c.b16 %v2259, %v2257
        %v2380 = vpack.c.b16 %v2262, %v2260
        %v2381 = vpack.c.b16 %v2263, %v2261
        %v2382 = vpack.c.b16 %v2266, %v2264
        %v2383 = vpack.c.b16 %v2267, %v2265
        %v2384 = vpack.c.b16 %v2270, %v2268
        %v2385 = vpack.c.b16 %v2271, %v2269
        %v2386 = vpack.c.b16 %v2274, %v2272
        %v2387 = vpack.c.b16 %v2275, %v2273
        %v2388 = vpack.c.b16 %v2278, %v2276
        %v2389 = vpack.c.b16 %v2279, %v2277
        %v2390 = vpack.c.b16 %v2282, %v2280
        %v2391 = vpack.c.b16 %v2283, %v2281
        %v2392 = vpack.c.b16 %v2286, %v2284
        %v2393 = vpack.c.b16 %v2287, %v2285
        %v2394 = vpack.c.b16 %v2290, %v2288
        %v2395 = vpack.c.b16 %v2291, %v2289
        %v2396 = vpack.c.b16 %v2294, %v2292
        %v2397 = vpack.c.b16 %v2295, %v2293
        %v2398 = vpack.c.b16 %v2298, %v2296
        %v2399 = vpack.c.b16 %v2299, %v2297
        %v2400 = vpack.c.b16 %v2302, %v2300
        %v2401 = vpack.c.b16 %v2303, %v2301
        %v2402 = vpack.c.b16 %v2306, %v2304
        %v2403 = vpack.c.b16 %v2307, %v2305
        %v2404 = vpack.c.b16 %v2310, %v2308
        %v2405 = vpack.c.b16 %v2311, %v2309
        %v2406 = vpack.c.b16 %v2314, %v2312
        %v2407 = vpack.c.b16 %v2315, %v2313
        %v2408 = vpack.c.b16 %v2318, %v2316
        %v2409 = vpack.c.b16 %v2319, %v2317
        %v2410 = vpack.c.b16 %v2322, %v2320
        %v2411 = vpack.c.b16 %v2323, %v2321
        %v2412 = vpack.c.b16 %v2326, %v2324
        %v2413 = vpack.c.b16 %v2327, %v2325
        %v2414 = vpack.c.b16 %v2330, %v2328
        %v2415 = vpack.c.b16 %v2331, %v2329
        %v2416 = vpack.c.b16 %v2334, %v2332
        %v2417 = vpack.c.b16 %v2335, %v2333
        %v2418 = vpack.c.b16 %v2338, %v2336
        %v2419 = vpack.c.b16 %v2339, %v2337
        %v2420 = vpack.c.b16 %v2342, %v2340
        %v2421 = vpack.c.b16 %v2343, %v2341
        %v2422 = vpack.c.b16 %v2346, %v2344
        %v2423 = vpack.c.b16 %v2347, %v2345
        %v2424 = vpack.c.b16 %v2350, %v2348
        %v2425 = vpack.c.b16 %v2351, %v2349
        %v2426 = vpack.c.b16 %v2354, %v2352
        %v2427 = vpack.c.b16 %v2355, %v2353
        %v2428 = vpack.c.b16 %v2358, %v2356
        %v2429 = vpack.c.b16 %v2359, %v2357
        %v2430 = vpack.c.b16 %v2362, %v2360
        %v2431 = vpack.c.b16 %v2363, %v2361
        %v2432 = vpack.c.b16 %v2366, %v2364
        %v2433 = vpack.c.b16 %v2367, %v2365
        %v2434 = vpack.c.b16 %v2370, %v2368
        %v2435 = vpack.c.b16 %v2371, %v2369
        %2500 = vmatprep.subr.bf16.mxu0 %v2387
        %2501 = vmatpush1.bf16.msra.mxu0 %v2386
        %2502 = vmatprep.subr.bf16.mxu0 %v2385
        %2503 = vmatpush1.bf16.msra.mxu0 %v2384
        %2504 = vmatprep.subr.bf16.mxu0 %v2383
        %2505 = vmatpush1.bf16.msra.mxu0 %v2382
        %2506 = vmatprep.subr.bf16.mxu0 %v2381
        %2507 = vmatpush1.bf16.msra.mxu0 %v2380
        %2508 = vmatprep.subr.bf16.mxu0 %v2379
        %2509 = vmatpush1.bf16.msra.mxu0 %v2378
        %2510 = vmatprep.subr.bf16.mxu0 %v2377
        %2511 = vmatpush1.bf16.msra.mxu0 %v2376
        %2512 = vmatprep.subr.bf16.mxu0 %v2375
        %2513 = vmatpush1.bf16.msra.mxu0 %v2374
        %2514 = vmatprep.subr.bf16.mxu0 %v2373
        %2515 = vmatpush1.bf16.msra.mxu0 %v2372
        %2516 = vmatprep.subr.bf16.mxu0 %v2403
        %2517 = vmatpush2.bf16.msra.mxu0 %v2402
        %2518 = vmatprep.subr.bf16.mxu0 %v2401
        %2519 = vmatpush2.bf16.msra.mxu0 %v2400
        %2520 = vmatprep.subr.bf16.mxu0 %v2399
        %2521 = vmatpush2.bf16.msra.mxu0 %v2398
        %2522 = vmatprep.subr.bf16.mxu0 %v2397
        %2523 = vmatpush2.bf16.msra.mxu0 %v2396
        %2524 = vmatprep.subr.bf16.mxu0 %v2395
        %2525 = vmatpush2.bf16.msra.mxu0 %v2394
        %2526 = vmatprep.subr.bf16.mxu0 %v2393
        %2527 = vmatpush2.bf16.msra.mxu0 %v2392
        %2528 = vmatprep.subr.bf16.mxu0 %v2391
        %2529 = vmatpush2.bf16.msra.mxu0 %v2390
        %2530 = vmatprep.subr.bf16.mxu0 %v2389
        %2531 = vmatpush2.bf16.msra.mxu0 %v2388
        %2532 = vmatprep.mubr.bf16.mxu0 %v2085
        %2533 = vmatmul.mubr.bf16.gmra.mxu0 %v2084
        %v2534 = vpop.f32.mrf.mxu0
        %v2535 = vadd.f32 0.0, %v2534
        %v2536 = vpop.f32.mrf.mxu0
        %v2537 = vadd.f32 0.0, %v2536
        %v2538 = vpop.f32.mrf.mxu0
        %v2539 = vadd.f32 0.0, %v2538
        %v2540 = vpop.f32.mrf.mxu0
        %v2541 = vadd.f32 0.0, %v2540
        %2542 = vmatprep.mubr.bf16.mxu0 %v2089
        %2543 = vmatmul.mubr.bf16.gmra.mxu0 %v2088
        %v2544 = vpop.f32.mrf.mxu0
        %v2545 = vadd.f32 0.0, %v2544
        %v2546 = vpop.f32.mrf.mxu0
        %v2547 = vadd.f32 0.0, %v2546
        %v2548 = vpop.f32.mrf.mxu0
        %v2549 = vadd.f32 0.0, %v2548
        %v2550 = vpop.f32.mrf.mxu0
        %v2551 = vadd.f32 0.0, %v2550
        %2552 = vmatprep.mubr.bf16.mxu0 %v2093
        %2553 = vmatmul.mubr.bf16.gmra.mxu0 %v2092
        %v2554 = vpop.f32.mrf.mxu0
        %v2555 = vadd.f32 0.0, %v2554
        %v2556 = vpop.f32.mrf.mxu0
        %v2557 = vadd.f32 0.0, %v2556
        %v2558 = vpop.f32.mrf.mxu0
        %v2559 = vadd.f32 0.0, %v2558
        %v2560 = vpop.f32.mrf.mxu0
        %v2561 = vadd.f32 0.0, %v2560
        %2562 = vmatprep.mubr.bf16.mxu0 %v2097
        %2563 = vmatmul.mubr.bf16.gmra.mxu0 %v2096
        %v2564 = vpop.f32.mrf.mxu0
        %v2565 = vadd.f32 0.0, %v2564
        %v2566 = vpop.f32.mrf.mxu0
        %v2567 = vadd.f32 0.0, %v2566
        %v2568 = vpop.f32.mrf.mxu0
        %v2569 = vadd.f32 0.0, %v2568
        %v2570 = vpop.f32.mrf.mxu0
        %v2571 = vadd.f32 0.0, %v2570
        %2572 = vmatprep.mubr.bf16.mxu0 %v2101
        %2573 = vmatmul.mubr.bf16.gmra.mxu0 %v2100
        %v2574 = vpop.f32.mrf.mxu0
        %v2575 = vadd.f32 0.0, %v2574
        %v2576 = vpop.f32.mrf.mxu0
        %v2577 = vadd.f32 0.0, %v2576
        %v2578 = vpop.f32.mrf.mxu0
        %v2579 = vadd.f32 0.0, %v2578
        %v2580 = vpop.f32.mrf.mxu0
        %v2581 = vadd.f32 0.0, %v2580
        %2582 = vmatprep.mubr.bf16.mxu0 %v2105
        %2583 = vmatmul.mubr.bf16.gmra.mxu0 %v2104
        %v2584 = vpop.f32.mrf.mxu0
        %v2585 = vadd.f32 0.0, %v2584
        %v2586 = vpop.f32.mrf.mxu0
        %v2587 = vadd.f32 0.0, %v2586
        %v2588 = vpop.f32.mrf.mxu0
        %v2589 = vadd.f32 0.0, %v2588
        %v2590 = vpop.f32.mrf.mxu0
        %v2591 = vadd.f32 0.0, %v2590
        %2592 = vmatprep.mubr.bf16.mxu0 %v2109
        %2593 = vmatmul.mubr.bf16.gmra.mxu0 %v2108
        %v2594 = vpop.f32.mrf.mxu0
        %v2595 = vadd.f32 0.0, %v2594
        %v2596 = vpop.f32.mrf.mxu0
        %v2597 = vadd.f32 0.0, %v2596
        %v2598 = vpop.f32.mrf.mxu0
        %v2599 = vadd.f32 0.0, %v2598
        %v2600 = vpop.f32.mrf.mxu0
        %v2601 = vadd.f32 0.0, %v2600
        %2602 = vmatprep.mubr.bf16.mxu0 %v2113
        %2603 = vmatmul.mubr.bf16.gmra.mxu0 %v2112
        %v2604 = vpop.f32.mrf.mxu0
        %v2605 = vadd.f32 0.0, %v2604
        %v2606 = vpop.f32.mrf.mxu0
        %v2607 = vadd.f32 0.0, %v2606
        %v2608 = vpop.f32.mrf.mxu0
        %v2609 = vadd.f32 0.0, %v2608
        %v2610 = vpop.f32.mrf.mxu0
        %v2611 = vadd.f32 0.0, %v2610
        %2612 = vdwg.mxu0
        %2613 = vmatprep.subr.bf16.mxu0 %v2419
        %2614 = vmatpush1.bf16.msra.mxu0 %v2418
        %2615 = vmatprep.subr.bf16.mxu0 %v2417
        %2616 = vmatpush1.bf16.msra.mxu0 %v2416
        %2617 = vmatprep.subr.bf16.mxu0 %v2415
        %2618 = vmatpush1.bf16.msra.mxu0 %v2414
        %2619 = vmatprep.subr.bf16.mxu0 %v2413
        %2620 = vmatpush1.bf16.msra.mxu0 %v2412
        %2621 = vmatprep.subr.bf16.mxu0 %v2411
        %2622 = vmatpush1.bf16.msra.mxu0 %v2410
        %2623 = vmatprep.subr.bf16.mxu0 %v2409
        %2624 = vmatpush1.bf16.msra.mxu0 %v2408
        %2625 = vmatprep.subr.bf16.mxu0 %v2407
        %2626 = vmatpush1.bf16.msra.mxu0 %v2406
        %2627 = vmatprep.subr.bf16.mxu0 %v2405
        %2628 = vmatpush1.bf16.msra.mxu0 %v2404
        %2629 = vmatprep.subr.bf16.mxu0 %v2435
        %2630 = vmatpush2.bf16.msra.mxu0 %v2434
        %2631 = vmatprep.subr.bf16.mxu0 %v2433
        %2632 = vmatpush2.bf16.msra.mxu0 %v2432
        %2633 = vmatprep.subr.bf16.mxu0 %v2431
        %2634 = vmatpush2.bf16.msra.mxu0 %v2430
        %2635 = vmatprep.subr.bf16.mxu0 %v2429
        %2636 = vmatpush2.bf16.msra.mxu0 %v2428
        %2637 = vmatprep.subr.bf16.mxu0 %v2427
        %2638 = vmatpush2.bf16.msra.mxu0 %v2426
        %2639 = vmatprep.subr.bf16.mxu0 %v2425
        %2640 = vmatpush2.bf16.msra.mxu0 %v2424
        %2641 = vmatprep.subr.bf16.mxu0 %v2423
        %2642 = vmatpush2.bf16.msra.mxu0 %v2422
        %2643 = vmatprep.subr.bf16.mxu0 %v2421
        %2644 = vmatpush2.bf16.msra.mxu0 %v2420
        %2645 = vmatprep.mubr.bf16.mxu0 %v2087
        %2646 = vmatmul.mubr.bf16.gmra.mxu0 %v2086
        %v2647 = vpop.f32.mrf.mxu0
        %v2648 = vadd.f32 %v2535, %v2647
        %v2649 = vpop.f32.mrf.mxu0
        %v2650 = vadd.f32 %v2537, %v2649
        %v2651 = vpop.f32.mrf.mxu0
        %v2652 = vadd.f32 %v2539, %v2651
        %v2653 = vpop.f32.mrf.mxu0
        %v2654 = vadd.f32 %v2541, %v2653
        %2655 = vmatprep.mubr.bf16.mxu0 %v2091
        %2656 = vmatmul.mubr.bf16.gmra.mxu0 %v2090
        %v2657 = vpop.f32.mrf.mxu0
        %v2658 = vadd.f32 %v2545, %v2657
        %v2659 = vpop.f32.mrf.mxu0
        %v2660 = vadd.f32 %v2547, %v2659
        %v2661 = vpop.f32.mrf.mxu0
        %v2662 = vadd.f32 %v2549, %v2661
        %v2663 = vpop.f32.mrf.mxu0
        %v2664 = vadd.f32 %v2551, %v2663
        %2665 = vmatprep.mubr.bf16.mxu0 %v2095
        %2666 = vmatmul.mubr.bf16.gmra.mxu0 %v2094
        %v2667 = vpop.f32.mrf.mxu0
        %v2668 = vadd.f32 %v2555, %v2667
        %v2669 = vpop.f32.mrf.mxu0
        %v2670 = vadd.f32 %v2557, %v2669
        %v2671 = vpop.f32.mrf.mxu0
        %v2672 = vadd.f32 %v2559, %v2671
        %v2673 = vpop.f32.mrf.mxu0
        %v2674 = vadd.f32 %v2561, %v2673
        %2675 = vmatprep.mubr.bf16.mxu0 %v2099
        %2676 = vmatmul.mubr.bf16.gmra.mxu0 %v2098
        %v2677 = vpop.f32.mrf.mxu0
        %v2678 = vadd.f32 %v2565, %v2677
        %v2679 = vpop.f32.mrf.mxu0
        %v2680 = vadd.f32 %v2567, %v2679
        %v2681 = vpop.f32.mrf.mxu0
        %v2682 = vadd.f32 %v2569, %v2681
        %v2683 = vpop.f32.mrf.mxu0
        %v2684 = vadd.f32 %v2571, %v2683
        %2685 = vmatprep.mubr.bf16.mxu0 %v2103
        %2686 = vmatmul.mubr.bf16.gmra.mxu0 %v2102
        %v2687 = vpop.f32.mrf.mxu0
        %v2688 = vadd.f32 %v2575, %v2687
        %v2689 = vpop.f32.mrf.mxu0
        %v2690 = vadd.f32 %v2577, %v2689
        %v2691 = vpop.f32.mrf.mxu0
        %v2692 = vadd.f32 %v2579, %v2691
        %v2693 = vpop.f32.mrf.mxu0
        %v2694 = vadd.f32 %v2581, %v2693
        %2695 = vmatprep.mubr.bf16.mxu0 %v2107
        %2696 = vmatmul.mubr.bf16.gmra.mxu0 %v2106
        %v2697 = vpop.f32.mrf.mxu0
        %v2698 = vadd.f32 %v2585, %v2697
        %v2699 = vpop.f32.mrf.mxu0
        %v2700 = vadd.f32 %v2587, %v2699
        %v2701 = vpop.f32.mrf.mxu0
        %v2702 = vadd.f32 %v2589, %v2701
        %v2703 = vpop.f32.mrf.mxu0
        %v2704 = vadd.f32 %v2591, %v2703
        %2705 = vmatprep.mubr.bf16.mxu0 %v2111
        %2706 = vmatmul.mubr.bf16.gmra.mxu0 %v2110
        %v2707 = vpop.f32.mrf.mxu0
        %v2708 = vadd.f32 %v2595, %v2707
        %v2709 = vpop.f32.mrf.mxu0
        %v2710 = vadd.f32 %v2597, %v2709
        %v2711 = vpop.f32.mrf.mxu0
        %v2712 = vadd.f32 %v2599, %v2711
        %v2713 = vpop.f32.mrf.mxu0
        %v2714 = vadd.f32 %v2601, %v2713
        %2715 = vmatprep.mubr.bf16.mxu0 %v2115
        %2716 = vmatmul.mubr.bf16.gmra.mxu0 %v2114
        %v2717 = vpop.f32.mrf.mxu0
        %v2718 = vadd.f32 %v2605, %v2717
        %v2719 = vpop.f32.mrf.mxu0
        %v2720 = vadd.f32 %v2607, %v2719
        %v2721 = vpop.f32.mrf.mxu0
        %v2722 = vadd.f32 %v2609, %v2721
        %v2723 = vpop.f32.mrf.mxu0
        %v2724 = vadd.f32 %v2611, %v2723
        %2725 = vdwg.mxu0
        %v2726 = vlaneseq
        %v2727 = vshrl.u32 %v2726, 7
        %v2728 = vsub.s32 0, %v2727
        %v2729 = vrot.slane %v608, %v2728
        %v2730 = vlaneseq
        %v2731 = vshrl.u32 %v2730, 7
        %v2732 = vsub.s32 0, %v2731
        %v2733 = vrot.slane %v609, %v2732
        %v2734 = vmul.f32 %v2648, %v2729
        %v2735 = vmul.f32 %v2650, %v2733
        %v2736 = vmul.f32 %v2652, %v2729
        %v2737 = vmul.f32 %v2654, %v2733
        %v2738 = vmul.f32 %v2658, %v2729
        %v2739 = vmul.f32 %v2660, %v2733
        %v2740 = vmul.f32 %v2662, %v2729
        %v2741 = vmul.f32 %v2664, %v2733
        %v2742 = vmul.f32 %v2668, %v2729
        %v2743 = vmul.f32 %v2670, %v2733
        %v2744 = vmul.f32 %v2672, %v2729
        %v2745 = vmul.f32 %v2674, %v2733
        %v2746 = vmul.f32 %v2678, %v2729
        %v2747 = vmul.f32 %v2680, %v2733
        %v2748 = vmul.f32 %v2682, %v2729
        %v2749 = vmul.f32 %v2684, %v2733
        %v2750 = vmul.f32 %v2688, %v2729
        %v2751 = vmul.f32 %v2690, %v2733
        %v2752 = vmul.f32 %v2692, %v2729
        %v2753 = vmul.f32 %v2694, %v2733
        %v2754 = vmul.f32 %v2698, %v2729
        %v2755 = vmul.f32 %v2700, %v2733
        %v2756 = vmul.f32 %v2702, %v2729
        %v2757 = vmul.f32 %v2704, %v2733
        %v2758 = vmul.f32 %v2708, %v2729
        %v2759 = vmul.f32 %v2710, %v2733
        %v2760 = vmul.f32 %v2712, %v2729
        %v2761 = vmul.f32 %v2714, %v2733
        %v2762 = vmul.f32 %v2718, %v2729
        %v2763 = vmul.f32 %v2720, %v2733
        %v2764 = vmul.f32 %v2722, %v2729
        %v2765 = vmul.f32 %v2724, %v2733
        %v2766 = vadd.f32 %v2734, %v2735
        %2767 = vadd.xlane.f32.xlu0 %v2766
        %v2768 = vpop.xlane.xlu0 %2767
        %v2769 = vadd.f32 %v2736, %v2737
        %2770 = vadd.xlane.f32.xlu0 %v2769
        %v2771 = vpop.xlane.xlu0 %2770
        %v2772 = vadd.f32 %v2738, %v2739
        %2773 = vadd.xlane.f32.xlu0 %v2772
        %v2774 = vpop.xlane.xlu0 %2773
        %v2775 = vadd.f32 %v2740, %v2741
        %2776 = vadd.xlane.f32.xlu0 %v2775
        %v2777 = vpop.xlane.xlu0 %2776
        %v2778 = vadd.f32 %v2742, %v2743
        %2779 = vadd.xlane.f32.xlu0 %v2778
        %v2780 = vpop.xlane.xlu0 %2779
        %v2781 = vadd.f32 %v2744, %v2745
        %2782 = vadd.xlane.f32.xlu0 %v2781
        %v2783 = vpop.xlane.xlu0 %2782
        %v2784 = vadd.f32 %v2746, %v2747
        %2785 = vadd.xlane.f32.xlu0 %v2784
        %v2786 = vpop.xlane.xlu0 %2785
        %v2787 = vadd.f32 %v2748, %v2749
        %2788 = vadd.xlane.f32.xlu0 %v2787
        %v2789 = vpop.xlane.xlu0 %2788
        %v2790 = vadd.f32 %v2750, %v2751
        %2791 = vadd.xlane.f32.xlu0 %v2790
        %v2792 = vpop.xlane.xlu0 %2791
        %v2793 = vadd.f32 %v2752, %v2753
        %2794 = vadd.xlane.f32.xlu0 %v2793
        %v2795 = vpop.xlane.xlu0 %2794
        %v2796 = vadd.f32 %v2754, %v2755
        %2797 = vadd.xlane.f32.xlu0 %v2796
        %v2798 = vpop.xlane.xlu0 %2797
        %v2799 = vadd.f32 %v2756, %v2757
        %2800 = vadd.xlane.f32.xlu0 %v2799
        %v2801 = vpop.xlane.xlu0 %2800
        %v2802 = vadd.f32 %v2758, %v2759
        %2803 = vadd.xlane.f32.xlu0 %v2802
        %v2804 = vpop.xlane.xlu0 %2803
        %v2805 = vadd.f32 %v2760, %v2761
        %2806 = vadd.xlane.f32.xlu0 %v2805
        %v2807 = vpop.xlane.xlu0 %2806
        %v2808 = vadd.f32 %v2762, %v2763
        %2809 = vadd.xlane.f32.xlu0 %v2808
        %v2810 = vpop.xlane.xlu0 %2809
        %v2811 = vadd.f32 %v2764, %v2765
        %2812 = vadd.xlane.f32.xlu0 %v2811
        %v2813 = vpop.xlane.xlu0 %2812
        %v2814 = vlaneseq
        %v2815 = vshrl.u32 %v2814, 7
        %v2816 = vsub.s32 1, %v2815
        %v2817 = vrot.slane %v608, %v2816
        %v2818 = vlaneseq
        %v2819 = vshrl.u32 %v2818, 7
        %v2820 = vsub.s32 1, %v2819
        %v2821 = vrot.slane %v609, %v2820
        %v2822 = vmul.f32 %v2648, %v2817
        %v2823 = vmul.f32 %v2650, %v2821
        %v2824 = vmul.f32 %v2652, %v2817
        %v2825 = vmul.f32 %v2654, %v2821
        %v2826 = vmul.f32 %v2658, %v2817
        %v2827 = vmul.f32 %v2660, %v2821
        %v2828 = vmul.f32 %v2662, %v2817
        %v2829 = vmul.f32 %v2664, %v2821
        %v2830 = vmul.f32 %v2668, %v2817
        %v2831 = vmul.f32 %v2670, %v2821
        %v2832 = vmul.f32 %v2672, %v2817
        %v2833 = vmul.f32 %v2674, %v2821
        %v2834 = vmul.f32 %v2678, %v2817
        %v2835 = vmul.f32 %v2680, %v2821
        %v2836 = vmul.f32 %v2682, %v2817
        %v2837 = vmul.f32 %v2684, %v2821
        %v2838 = vmul.f32 %v2688, %v2817
        %v2839 = vmul.f32 %v2690, %v2821
        %v2840 = vmul.f32 %v2692, %v2817
        %v2841 = vmul.f32 %v2694, %v2821
        %v2842 = vmul.f32 %v2698, %v2817
        %v2843 = vmul.f32 %v2700, %v2821
        %v2844 = vmul.f32 %v2702, %v2817
        %v2845 = vmul.f32 %v2704, %v2821
        %v2846 = vmul.f32 %v2708, %v2817
        %v2847 = vmul.f32 %v2710, %v2821
        %v2848 = vmul.f32 %v2712, %v2817
        %v2849 = vmul.f32 %v2714, %v2821
        %v2850 = vmul.f32 %v2718, %v2817
        %v2851 = vmul.f32 %v2720, %v2821
        %v2852 = vmul.f32 %v2722, %v2817
        %v2853 = vmul.f32 %v2724, %v2821
        %v2854 = vadd.f32 %v2822, %v2823
        %2855 = vadd.xlane.f32.xlu0 %v2854
        %v2856 = vpop.xlane.xlu0 %2855
        %v2857 = vadd.f32 %v2824, %v2825
        %2858 = vadd.xlane.f32.xlu0 %v2857
        %v2859 = vpop.xlane.xlu0 %2858
        %v2860 = vadd.f32 %v2826, %v2827
        %2861 = vadd.xlane.f32.xlu0 %v2860
        %v2862 = vpop.xlane.xlu0 %2861
        %v2863 = vadd.f32 %v2828, %v2829
        %2864 = vadd.xlane.f32.xlu0 %v2863
        %v2865 = vpop.xlane.xlu0 %2864
        %v2866 = vadd.f32 %v2830, %v2831
        %2867 = vadd.xlane.f32.xlu0 %v2866
        %v2868 = vpop.xlane.xlu0 %2867
        %v2869 = vadd.f32 %v2832, %v2833
        %2870 = vadd.xlane.f32.xlu0 %v2869
        %v2871 = vpop.xlane.xlu0 %2870
        %v2872 = vadd.f32 %v2834, %v2835
        %2873 = vadd.xlane.f32.xlu0 %v2872
        %v2874 = vpop.xlane.xlu0 %2873
        %v2875 = vadd.f32 %v2836, %v2837
        %2876 = vadd.xlane.f32.xlu0 %v2875
        %v2877 = vpop.xlane.xlu0 %2876
        %v2878 = vadd.f32 %v2838, %v2839
        %2879 = vadd.xlane.f32.xlu0 %v2878
        %v2880 = vpop.xlane.xlu0 %2879
        %v2881 = vadd.f32 %v2840, %v2841
        %2882 = vadd.xlane.f32.xlu0 %v2881
        %v2883 = vpop.xlane.xlu0 %2882
        %v2884 = vadd.f32 %v2842, %v2843
        %2885 = vadd.xlane.f32.xlu0 %v2884
        %v2886 = vpop.xlane.xlu0 %2885
        %v2887 = vadd.f32 %v2844, %v2845
        %2888 = vadd.xlane.f32.xlu0 %v2887
        %v2889 = vpop.xlane.xlu0 %2888
        %v2890 = vadd.f32 %v2846, %v2847
        %2891 = vadd.xlane.f32.xlu0 %v2890
        %v2892 = vpop.xlane.xlu0 %2891
        %v2893 = vadd.f32 %v2848, %v2849
        %2894 = vadd.xlane.f32.xlu0 %v2893
        %v2895 = vpop.xlane.xlu0 %2894
        %v2896 = vadd.f32 %v2850, %v2851
        %2897 = vadd.xlane.f32.xlu0 %v2896
        %v2898 = vpop.xlane.xlu0 %2897
        %v2899 = vadd.f32 %v2852, %v2853
        %2900 = vadd.xlane.f32.xlu0 %v2899
        %v2901 = vpop.xlane.xlu0 %2900
        %2902 = vxpose.xlu0.b32.start [1/16] %v2768, 128
        %2903 = vxpose.xlu0.b32.cont [2/16] %v2771, 128
        %2904 = vxpose.xlu0.b32.cont [3/16] %v2774, 128
        %2905 = vxpose.xlu0.b32.cont [4/16] %v2777, 128
        %2906 = vxpose.xlu0.b32.cont [5/16] %v2780, 128
        %2907 = vxpose.xlu0.b32.cont [6/16] %v2783, 128
        %2908 = vxpose.xlu0.b32.cont [7/16] %v2786, 128
        %2909 = vxpose.xlu0.b32.cont [8/16] %v2789, 128
        %2910 = vxpose.xlu0.b32.cont [9/16] %v2792, 128
        %2911 = vxpose.xlu0.b32.cont [10/16] %v2795, 128
        %2912 = vxpose.xlu0.b32.cont [11/16] %v2798, 128
        %2913 = vxpose.xlu0.b32.cont [12/16] %v2801, 128
        %2914 = vxpose.xlu0.b32.cont [13/16] %v2804, 128
        %2915 = vxpose.xlu0.b32.cont [14/16] %v2807, 128
        %2916 = vxpose.xlu0.b32.cont [15/16] %v2810, 128
        %2917 = vxpose.xlu0.b32.end [16/16] %v2813, 128
        %v2918 = vpop.trf.xlu0
        %v2919 = vpop.trf.xlu0
        %v2920 = vpop.trf.xlu0
        %v2921 = vpop.trf.xlu0
        %v2922 = vpop.trf.xlu0
        %v2923 = vpop.trf.xlu0
        %v2924 = vpop.trf.xlu0
        %v2925 = vpop.trf.xlu0
        %v2926 = vpop.trf.xlu0
        %v2927 = vpop.trf.xlu0
        %v2928 = vpop.trf.xlu0
        %v2929 = vpop.trf.xlu0
        %v2930 = vpop.trf.xlu0
        %v2931 = vpop.trf.xlu0
        %v2932 = vpop.trf.xlu0
        %v2933 = vpop.trf.xlu0
        %v2934 = vlaneseq
        %v2935 = vshrl.u32 %v2934, 7
        %v2936 = vsub.s32 0, %v2935
        %v2937 = vrot.slane %v2918, %v2936
        %v2938 = vadd.f32 %v2856, %v2937
        %v2939 = vadd.f32 %v2859, %v2937
        %v2940 = vadd.f32 %v2862, %v2937
        %v2941 = vadd.f32 %v2865, %v2937
        %v2942 = vadd.f32 %v2868, %v2937
        %v2943 = vadd.f32 %v2871, %v2937
        %v2944 = vadd.f32 %v2874, %v2937
        %v2945 = vadd.f32 %v2877, %v2937
        %v2946 = vadd.f32 %v2880, %v2937
        %v2947 = vadd.f32 %v2883, %v2937
        %v2948 = vadd.f32 %v2886, %v2937
        %v2949 = vadd.f32 %v2889, %v2937
        %v2950 = vadd.f32 %v2892, %v2937
        %v2951 = vadd.f32 %v2895, %v2937
        %v2952 = vadd.f32 %v2898, %v2937
        %v2953 = vadd.f32 %v2901, %v2937
        %v2954 = vadd.f32 %v2938, %v2068
        %v2955 = vadd.f32 %v2939, %v2069
        %v2956 = vadd.f32 %v2940, %v2070
        %v2957 = vadd.f32 %v2941, %v2071
        %v2958 = vadd.f32 %v2942, %v2072
        %v2959 = vadd.f32 %v2943, %v2073
        %v2960 = vadd.f32 %v2944, %v2074
        %v2961 = vadd.f32 %v2945, %v2075
        %v2962 = vadd.f32 %v2946, %v2076
        %v2963 = vadd.f32 %v2947, %v2077
        %v2964 = vadd.f32 %v2948, %v2078
        %v2965 = vadd.f32 %v2949, %v2079
        %v2966 = vadd.f32 %v2950, %v2080
        %v2967 = vadd.f32 %v2951, %v2081
        %v2968 = vadd.f32 %v2952, %v2082
        %v2969 = vadd.f32 %v2953, %v2083
        %v2970 = vmul.f32 %v2954, 0.2
        %v2971 = vmul.f32 %v2955, 0.2
        %v2972 = vmul.f32 %v2956, 0.2
        %v2973 = vmul.f32 %v2957, 0.2
        %v2974 = vmul.f32 %v2958, 0.2
        %v2975 = vmul.f32 %v2959, 0.2
        %v2976 = vmul.f32 %v2960, 0.2
        %v2977 = vmul.f32 %v2961, 0.2
        %v2978 = vmul.f32 %v2962, 0.2
        %v2979 = vmul.f32 %v2963, 0.2
        %v2980 = vmul.f32 %v2964, 0.2
        %v2981 = vmul.f32 %v2965, 0.2
        %v2982 = vmul.f32 %v2966, 0.2
        %v2983 = vmul.f32 %v2967, 0.2
        %v2984 = vmul.f32 %v2968, 0.2
        %v2985 = vmul.f32 %v2969, 0.2
        %v2986 = vmax.f32 %v2954, %v2970
        %v2987 = vmax.f32 %v2955, %v2971
        %v2988 = vmax.f32 %v2956, %v2972
        %v2989 = vmax.f32 %v2957, %v2973
        %v2990 = vmax.f32 %v2958, %v2974
        %v2991 = vmax.f32 %v2959, %v2975
        %v2992 = vmax.f32 %v2960, %v2976
        %v2993 = vmax.f32 %v2961, %v2977
        %v2994 = vmax.f32 %v2962, %v2978
        %v2995 = vmax.f32 %v2963, %v2979
        %v2996 = vmax.f32 %v2964, %v2980
        %v2997 = vmax.f32 %v2965, %v2981
        %v2998 = vmax.f32 %v2966, %v2982
        %v2999 = vmax.f32 %v2967, %v2983
        %v3000 = vmax.f32 %v2968, %v2984
        %v3001 = vmax.f32 %v2969, %v2985
        %3002 = vmax.xlane.f32.xlu0 %v2986
        %v3003 = vpop.xlane.xlu0 %3002
        %3004 = vmax.xlane.f32.xlu0 %v2987
        %v3005 = vpop.xlane.xlu0 %3004
        %3006 = vmax.xlane.f32.xlu0 %v2988
        %v3007 = vpop.xlane.xlu0 %3006
        %3008 = vmax.xlane.f32.xlu0 %v2989
        %v3009 = vpop.xlane.xlu0 %3008
        %3010 = vmax.xlane.f32.xlu0 %v2990
        %v3011 = vpop.xlane.xlu0 %3010
        %3012 = vmax.xlane.f32.xlu0 %v2991
        %v3013 = vpop.xlane.xlu0 %3012
        %3014 = vmax.xlane.f32.xlu0 %v2992
        %v3015 = vpop.xlane.xlu0 %3014
        %3016 = vmax.xlane.f32.xlu0 %v2993
        %v3017 = vpop.xlane.xlu0 %3016
        %3018 = vmax.xlane.f32.xlu0 %v2994
        %v3019 = vpop.xlane.xlu0 %3018
        %3020 = vmax.xlane.f32.xlu0 %v2995
        %v3021 = vpop.xlane.xlu0 %3020
        %3022 = vmax.xlane.f32.xlu0 %v2996
        %v3023 = vpop.xlane.xlu0 %3022
        %3024 = vmax.xlane.f32.xlu0 %v2997
        %v3025 = vpop.xlane.xlu0 %3024
        %3026 = vmax.xlane.f32.xlu0 %v2998
        %v3027 = vpop.xlane.xlu0 %3026
        %3028 = vmax.xlane.f32.xlu0 %v2999
        %v3029 = vpop.xlane.xlu0 %3028
        %3030 = vmax.xlane.f32.xlu0 %v3000
        %v3031 = vpop.xlane.xlu0 %3030
        %3032 = vmax.xlane.f32.xlu0 %v3001
        %v3033 = vpop.xlane.xlu0 %3032
        %v3034 = vsub.f32 %v2986, %v3003
        %v3035 = vsub.f32 %v2987, %v3005
        %v3036 = vsub.f32 %v2988, %v3007
        %v3037 = vsub.f32 %v2989, %v3009
        %v3038 = vsub.f32 %v2990, %v3011
        %v3039 = vsub.f32 %v2991, %v3013
        %v3040 = vsub.f32 %v2992, %v3015
        %v3041 = vsub.f32 %v2993, %v3017
        %v3042 = vsub.f32 %v2994, %v3019
        %v3043 = vsub.f32 %v2995, %v3021
        %v3044 = vsub.f32 %v2996, %v3023
        %v3045 = vsub.f32 %v2997, %v3025
        %v3046 = vsub.f32 %v2998, %v3027
        %v3047 = vsub.f32 %v2999, %v3029
        %v3048 = vsub.f32 %v3000, %v3031
        %v3049 = vsub.f32 %v3001, %v3033
        %v3050 = vmul.f32 %v3034, 1.442695
        %v3051 = vpow.pop %v3050
        %v3052 = vmul.f32 %v3035, 1.442695
        %v3053 = vpow.pop %v3052
        %v3054 = vmul.f32 %v3036, 1.442695
        %v3055 = vpow.pop %v3054
        %v3056 = vmul.f32 %v3037, 1.442695
        %v3057 = vpow.pop %v3056
        %v3058 = vmul.f32 %v3038, 1.442695
        %v3059 = vpow.pop %v3058
        %v3060 = vmul.f32 %v3039, 1.442695
        %v3061 = vpow.pop %v3060
        %v3062 = vmul.f32 %v3040, 1.442695
        %v3063 = vpow.pop %v3062
        %v3064 = vmul.f32 %v3041, 1.442695
        %v3065 = vpow.pop %v3064
        %v3066 = vmul.f32 %v3042, 1.442695
        %v3067 = vpow.pop %v3066
        %v3068 = vmul.f32 %v3043, 1.442695
        %v3069 = vpow.pop %v3068
        %v3070 = vmul.f32 %v3044, 1.442695
        %v3071 = vpow.pop %v3070
        %v3072 = vmul.f32 %v3045, 1.442695
        %v3073 = vpow.pop %v3072
        %v3074 = vmul.f32 %v3046, 1.442695
        %v3075 = vpow.pop %v3074
        %v3076 = vmul.f32 %v3047, 1.442695
        %v3077 = vpow.pop %v3076
        %v3078 = vmul.f32 %v3048, 1.442695
        %v3079 = vpow.pop %v3078
        %v3080 = vmul.f32 %v3049, 1.442695
        %v3081 = vpow.pop %v3080
        %3082 = vadd.xlane.f32.xlu0 %v3051
        %v3083 = vpop.xlane.xlu0 %3082
        %3084 = vadd.xlane.f32.xlu0 %v3053
        %v3085 = vpop.xlane.xlu0 %3084
        %3086 = vadd.xlane.f32.xlu0 %v3055
        %v3087 = vpop.xlane.xlu0 %3086
        %3088 = vadd.xlane.f32.xlu0 %v3057
        %v3089 = vpop.xlane.xlu0 %3088
        %3090 = vadd.xlane.f32.xlu0 %v3059
        %v3091 = vpop.xlane.xlu0 %3090
        %3092 = vadd.xlane.f32.xlu0 %v3061
        %v3093 = vpop.xlane.xlu0 %3092
        %3094 = vadd.xlane.f32.xlu0 %v3063
        %v3095 = vpop.xlane.xlu0 %3094
        %3096 = vadd.xlane.f32.xlu0 %v3065
        %v3097 = vpop.xlane.xlu0 %3096
        %3098 = vadd.xlane.f32.xlu0 %v3067
        %v3099 = vpop.xlane.xlu0 %3098
        %3100 = vadd.xlane.f32.xlu0 %v3069
        %v3101 = vpop.xlane.xlu0 %3100
        %3102 = vadd.xlane.f32.xlu0 %v3071
        %v3103 = vpop.xlane.xlu0 %3102
        %3104 = vadd.xlane.f32.xlu0 %v3073
        %v3105 = vpop.xlane.xlu0 %3104
        %3106 = vadd.xlane.f32.xlu0 %v3075
        %v3107 = vpop.xlane.xlu0 %3106
        %3108 = vadd.xlane.f32.xlu0 %v3077
        %v3109 = vpop.xlane.xlu0 %3108
        %3110 = vadd.xlane.f32.xlu0 %v3079
        %v3111 = vpop.xlane.xlu0 %3110
        %3112 = vadd.xlane.f32.xlu0 %v3081
        %v3113 = vpop.xlane.xlu0 %3112
        %v3114 = vrcp.pop %v3083
        %v3115 = vrcp.pop %v3085
        %v3116 = vrcp.pop %v3087
        %v3117 = vrcp.pop %v3089
        %v3118 = vrcp.pop %v3091
        %v3119 = vrcp.pop %v3093
        %v3120 = vrcp.pop %v3095
        %v3121 = vrcp.pop %v3097
        %v3122 = vrcp.pop %v3099
        %v3123 = vrcp.pop %v3101
        %v3124 = vrcp.pop %v3103
        %v3125 = vrcp.pop %v3105
        %v3126 = vrcp.pop %v3107
        %v3127 = vrcp.pop %v3109
        %v3128 = vrcp.pop %v3111
        %v3129 = vrcp.pop %v3113
        %v3130 = vmul.f32 %v3051, %v3114
        %v3131 = vmul.f32 %v3053, %v3115
        %v3132 = vmul.f32 %v3055, %v3116
        %v3133 = vmul.f32 %v3057, %v3117
        %v3134 = vmul.f32 %v3059, %v3118
        %v3135 = vmul.f32 %v3061, %v3119
        %v3136 = vmul.f32 %v3063, %v3120
        %v3137 = vmul.f32 %v3065, %v3121
        %v3138 = vmul.f32 %v3067, %v3122
        %v3139 = vmul.f32 %v3069, %v3123
        %v3140 = vmul.f32 %v3071, %v3124
        %v3141 = vmul.f32 %v3073, %v3125
        %v3142 = vmul.f32 %v3075, %v3126
        %v3143 = vmul.f32 %v3077, %v3127
        %v3144 = vmul.f32 %v3079, %v3128
        %v3145 = vmul.f32 %v3081, %v3129
        %v3146 = vpack.c.bf16 %v3131, %v3130
        %v3147 = vpack.c.bf16 %v3133, %v3132
        %v3148 = vpack.c.bf16 %v3135, %v3134
        %v3149 = vpack.c.bf16 %v3137, %v3136
        %v3150 = vpack.c.bf16 %v3139, %v3138
        %v3151 = vpack.c.bf16 %v3141, %v3140
        %v3152 = vpack.c.bf16 %v3143, %v3142
        %v3153 = vpack.c.bf16 %v3145, %v3144
        %v3154 = vpack.c.bf16 %v2652, %v2648
        %v3155 = vpack.c.bf16 %v2654, %v2650
        %v3156 = vpack.c.bf16 %v2662, %v2658
        %v3157 = vpack.c.bf16 %v2664, %v2660
        %v3158 = vpack.c.bf16 %v2672, %v2668
        %v3159 = vpack.c.bf16 %v2674, %v2670
        %v3160 = vpack.c.bf16 %v2682, %v2678
        %v3161 = vpack.c.bf16 %v2684, %v2680
        %v3162 = vpack.c.bf16 %v2692, %v2688
        %v3163 = vpack.c.bf16 %v2694, %v2690
        %v3164 = vpack.c.bf16 %v2702, %v2698
        %v3165 = vpack.c.bf16 %v2704, %v2700
        %v3166 = vpack.c.bf16 %v2712, %v2708
        %v3167 = vpack.c.bf16 %v2714, %v2710
        %v3168 = vpack.c.bf16 %v2722, %v2718
        %v3169 = vpack.c.bf16 %v2724, %v2720
        %v3170 = vlaneseq
        %v3171 = vshrl.u32 %v3170, 7
        %v3172 = vsub.s32 2, %v3171
        %v3173 = vrot.slane %v608, %v3172
        %v3174 = vlaneseq
        %v3175 = vshrl.u32 %v3174, 7
        %v3176 = vsub.s32 2, %v3175
        %v3177 = vrot.slane %v609, %v3176
        %3178 = vmatprep.subr.bf16.mxu0 %v3169
        %3179 = vmatpush1.bf16.msra.mxu0 %v3168
        %3180 = vmatprep.subr.bf16.mxu0 %v3167
        %3181 = vmatpush1.bf16.msra.mxu0 %v3166
        %3182 = vmatprep.subr.bf16.mxu0 %v3165
        %3183 = vmatpush1.bf16.msra.mxu0 %v3164
        %3184 = vmatprep.subr.bf16.mxu0 %v3163
        %3185 = vmatpush1.bf16.msra.mxu0 %v3162
        %3186 = vmatprep.subr.bf16.mxu0 %v3161
        %3187 = vmatpush1.bf16.msra.mxu0 %v3160
        %3188 = vmatprep.subr.bf16.mxu0 %v3159
        %3189 = vmatpush1.bf16.msra.mxu0 %v3158
        %3190 = vmatprep.subr.bf16.mxu0 %v3157
        %3191 = vmatpush1.bf16.msra.mxu0 %v3156
        %3192 = vmatprep.subr.bf16.mxu0 %v3155
        %3193 = vmatpush1.bf16.msra.mxu0 %v3154
        %3194 = vmatprep.subr.bf16.mxu0 0
        %3195 = vmatpush2.bf16.msra.mxu0 0
        %3196 = vmatprep.subr.bf16.mxu0 0
        %3197 = vmatpush2.bf16.msra.mxu0 0
        %3198 = vmatprep.subr.bf16.mxu0 0
        %3199 = vmatpush2.bf16.msra.mxu0 0
        %3200 = vmatprep.subr.bf16.mxu0 0
        %3201 = vmatpush2.bf16.msra.mxu0 0
        %3202 = vmatprep.subr.bf16.mxu0 0
        %3203 = vmatpush2.bf16.msra.mxu0 0
        %3204 = vmatprep.subr.bf16.mxu0 0
        %3205 = vmatpush2.bf16.msra.mxu0 0
        %3206 = vmatprep.subr.bf16.mxu0 0
        %3207 = vmatpush2.bf16.msra.mxu0 0
        %3208 = vmatprep.subr.bf16.mxu0 0
        %3209 = vmatpush2.bf16.msra.mxu0 0
        %3210 = vmatprep.mubr.bf16.mxu0 0
        %3211 = vmatmul.mubr.bf16.gmra.mxu0 %v3146
        %v3212 = vpop.f32.mrf.mxu0
        %v3213 = vadd.f32 %v3173, %v3212
        %v3214 = vpop.f32.mrf.mxu0
        %v3215 = vadd.f32 %v3177, %v3214
        %v3216 = vpop.f32.mrf.mxu0
        %v3217 = vadd.f32 %v3173, %v3216
        %v3218 = vpop.f32.mrf.mxu0
        %v3219 = vadd.f32 %v3177, %v3218
        %3220 = vmatprep.mubr.bf16.mxu0 0
        %3221 = vmatmul.mubr.bf16.gmra.mxu0 %v3147
        %v3222 = vpop.f32.mrf.mxu0
        %v3223 = vadd.f32 %v3173, %v3222
        %v3224 = vpop.f32.mrf.mxu0
        %v3225 = vadd.f32 %v3177, %v3224
        %v3226 = vpop.f32.mrf.mxu0
        %v3227 = vadd.f32 %v3173, %v3226
        %v3228 = vpop.f32.mrf.mxu0
        %v3229 = vadd.f32 %v3177, %v3228
        %3230 = vmatprep.mubr.bf16.mxu0 0
        %3231 = vmatmul.mubr.bf16.gmra.mxu0 %v3148
        %v3232 = vpop.f32.mrf.mxu0
        %v3233 = vadd.f32 %v3173, %v3232
        %v3234 = vpop.f32.mrf.mxu0
        %v3235 = vadd.f32 %v3177, %v3234
        %v3236 = vpop.f32.mrf.mxu0
        %v3237 = vadd.f32 %v3173, %v3236
        %v3238 = vpop.f32.mrf.mxu0
        %v3239 = vadd.f32 %v3177, %v3238
        %3240 = vmatprep.mubr.bf16.mxu0 0
        %3241 = vmatmul.mubr.bf16.gmra.mxu0 %v3149
        %v3242 = vpop.f32.mrf.mxu0
        %v3243 = vadd.f32 %v3173, %v3242
        %v3244 = vpop.f32.mrf.mxu0
        %v3245 = vadd.f32 %v3177, %v3244
        %v3246 = vpop.f32.mrf.mxu0
        %v3247 = vadd.f32 %v3173, %v3246
        %v3248 = vpop.f32.mrf.mxu0
        %v3249 = vadd.f32 %v3177, %v3248
        %3250 = vmatprep.mubr.bf16.mxu0 0
        %3251 = vmatmul.mubr.bf16.gmra.mxu0 %v3150
        %v3252 = vpop.f32.mrf.mxu0
        %v3253 = vadd.f32 %v3173, %v3252
        %v3254 = vpop.f32.mrf.mxu0
        %v3255 = vadd.f32 %v3177, %v3254
        %v3256 = vpop.f32.mrf.mxu0
        %v3257 = vadd.f32 %v3173, %v3256
        %v3258 = vpop.f32.mrf.mxu0
        %v3259 = vadd.f32 %v3177, %v3258
        %3260 = vmatprep.mubr.bf16.mxu0 0
        %3261 = vmatmul.mubr.bf16.gmra.mxu0 %v3151
        %v3262 = vpop.f32.mrf.mxu0
        %v3263 = vadd.f32 %v3173, %v3262
        %v3264 = vpop.f32.mrf.mxu0
        %v3265 = vadd.f32 %v3177, %v3264
        %v3266 = vpop.f32.mrf.mxu0
        %v3267 = vadd.f32 %v3173, %v3266
        %v3268 = vpop.f32.mrf.mxu0
        %v3269 = vadd.f32 %v3177, %v3268
        %3270 = vmatprep.mubr.bf16.mxu0 0
        %3271 = vmatmul.mubr.bf16.gmra.mxu0 %v3152
        %v3272 = vpop.f32.mrf.mxu0
        %v3273 = vadd.f32 %v3173, %v3272
        %v3274 = vpop.f32.mrf.mxu0
        %v3275 = vadd.f32 %v3177, %v3274
        %v3276 = vpop.f32.mrf.mxu0
        %v3277 = vadd.f32 %v3173, %v3276
        %v3278 = vpop.f32.mrf.mxu0
        %v3279 = vadd.f32 %v3177, %v3278
        %3280 = vmatprep.mubr.bf16.mxu0 0
        %3281 = vmatmul.mubr.bf16.gmra.mxu0 %v3153
        %v3282 = vpop.f32.mrf.mxu0
        %v3283 = vadd.f32 %v3173, %v3282
        %v3284 = vpop.f32.mrf.mxu0
        %v3285 = vadd.f32 %v3177, %v3284
        %v3286 = vpop.f32.mrf.mxu0
        %v3287 = vadd.f32 %v3173, %v3286
        %v3288 = vpop.f32.mrf.mxu0
        %v3289 = vadd.f32 %v3177, %v3288
        %3290 = vdwg.mxu0
        %v3291 = vmul.f32 %v3213, 0.01
        %v3292 = vmul.f32 %v3215, 0.01
        %v3293 = vmul.f32 %v3217, 0.01
        %v3294 = vmul.f32 %v3219, 0.01
        %v3295 = vmul.f32 %v3223, 0.01
        %v3296 = vmul.f32 %v3225, 0.01
        %v3297 = vmul.f32 %v3227, 0.01
        %v3298 = vmul.f32 %v3229, 0.01
        %v3299 = vmul.f32 %v3233, 0.01
        %v3300 = vmul.f32 %v3235, 0.01
        %v3301 = vmul.f32 %v3237, 0.01
        %v3302 = vmul.f32 %v3239, 0.01
        %v3303 = vmul.f32 %v3243, 0.01
        %v3304 = vmul.f32 %v3245, 0.01
        %v3305 = vmul.f32 %v3247, 0.01
        %v3306 = vmul.f32 %v3249, 0.01
        %v3307 = vmul.f32 %v3253, 0.01
        %v3308 = vmul.f32 %v3255, 0.01
        %v3309 = vmul.f32 %v3257, 0.01
        %v3310 = vmul.f32 %v3259, 0.01
        %v3311 = vmul.f32 %v3263, 0.01
        %v3312 = vmul.f32 %v3265, 0.01
        %v3313 = vmul.f32 %v3267, 0.01
        %v3314 = vmul.f32 %v3269, 0.01
        %v3315 = vmul.f32 %v3273, 0.01
        %v3316 = vmul.f32 %v3275, 0.01
        %v3317 = vmul.f32 %v3277, 0.01
        %v3318 = vmul.f32 %v3279, 0.01
        %v3319 = vmul.f32 %v3283, 0.01
        %v3320 = vmul.f32 %v3285, 0.01
        %v3321 = vmul.f32 %v3287, 0.01
        %v3322 = vmul.f32 %v3289, 0.01
        %v3323 = vmax.f32 %v3213, %v3291
        %v3324 = vmax.f32 %v3215, %v3292
        %v3325 = vmax.f32 %v3217, %v3293
        %v3326 = vmax.f32 %v3219, %v3294
        %v3327 = vmax.f32 %v3223, %v3295
        %v3328 = vmax.f32 %v3225, %v3296
        %v3329 = vmax.f32 %v3227, %v3297
        %v3330 = vmax.f32 %v3229, %v3298
        %v3331 = vmax.f32 %v3233, %v3299
        %v3332 = vmax.f32 %v3235, %v3300
        %v3333 = vmax.f32 %v3237, %v3301
        %v3334 = vmax.f32 %v3239, %v3302
        %v3335 = vmax.f32 %v3243, %v3303
        %v3336 = vmax.f32 %v3245, %v3304
        %v3337 = vmax.f32 %v3247, %v3305
        %v3338 = vmax.f32 %v3249, %v3306
        %v3339 = vmax.f32 %v3253, %v3307
        %v3340 = vmax.f32 %v3255, %v3308
        %v3341 = vmax.f32 %v3257, %v3309
        %v3342 = vmax.f32 %v3259, %v3310
        %v3343 = vmax.f32 %v3263, %v3311
        %v3344 = vmax.f32 %v3265, %v3312
        %v3345 = vmax.f32 %v3267, %v3313
        %v3346 = vmax.f32 %v3269, %v3314
        %v3347 = vmax.f32 %v3273, %v3315
        %v3348 = vmax.f32 %v3275, %v3316
        %v3349 = vmax.f32 %v3277, %v3317
        %v3350 = vmax.f32 %v3279, %v3318
        %v3351 = vmax.f32 %v3283, %v3319
        %v3352 = vmax.f32 %v3285, %v3320
        %v3353 = vmax.f32 %v3287, %v3321
        %v3354 = vmax.f32 %v3289, %v3322
        %v3355 = vlaneseq
        %v3356 = vshrl.u32 %v3355, 7
        %v3357 = vsub.s32 3, %v3356
        %v3358 = vrot.slane %v608, %v3357
        %v3359 = vlaneseq
        %v3360 = vshrl.u32 %v3359, 7
        %v3361 = vsub.s32 3, %v3360
        %v3362 = vrot.slane %v609, %v3361
        %v3363 = vmul.f32 %v3323, %v3358
        %v3364 = vmul.f32 %v3324, %v3362
        %v3365 = vmul.f32 %v3325, %v3358
        %v3366 = vmul.f32 %v3326, %v3362
        %v3367 = vmul.f32 %v3327, %v3358
        %v3368 = vmul.f32 %v3328, %v3362
        %v3369 = vmul.f32 %v3329, %v3358
        %v3370 = vmul.f32 %v3330, %v3362
        %v3371 = vmul.f32 %v3331, %v3358
        %v3372 = vmul.f32 %v3332, %v3362
        %v3373 = vmul.f32 %v3333, %v3358
        %v3374 = vmul.f32 %v3334, %v3362
        %v3375 = vmul.f32 %v3335, %v3358
        %v3376 = vmul.f32 %v3336, %v3362
        %v3377 = vmul.f32 %v3337, %v3358
        %v3378 = vmul.f32 %v3338, %v3362
        %v3379 = vmul.f32 %v3339, %v3358
        %v3380 = vmul.f32 %v3340, %v3362
        %v3381 = vmul.f32 %v3341, %v3358
        %v3382 = vmul.f32 %v3342, %v3362
        %v3383 = vmul.f32 %v3343, %v3358
        %v3384 = vmul.f32 %v3344, %v3362
        %v3385 = vmul.f32 %v3345, %v3358
        %v3386 = vmul.f32 %v3346, %v3362
        %v3387 = vmul.f32 %v3347, %v3358
        %v3388 = vmul.f32 %v3348, %v3362
        %v3389 = vmul.f32 %v3349, %v3358
        %v3390 = vmul.f32 %v3350, %v3362
        %v3391 = vmul.f32 %v3351, %v3358
        %v3392 = vmul.f32 %v3352, %v3362
        %v3393 = vmul.f32 %v3353, %v3358
        %v3394 = vmul.f32 %v3354, %v3362
        %v3395 = vlaneseq
        %v3396 = vshrl.u32 %v3395, 7
        %v3397 = vsub.s32 4, %v3396
        %v3398 = vrot.slane %v608, %v3397
        %v3399 = vlaneseq
        %v3400 = vshrl.u32 %v3399, 7
        %v3401 = vsub.s32 4, %v3400
        %v3402 = vrot.slane %v609, %v3401
        %v3403 = vadd.f32 %v3363, %v3398
        %v3404 = vadd.f32 %v3364, %v3402
        %v3405 = vadd.f32 %v3365, %v3398
        %v3406 = vadd.f32 %v3366, %v3402
        %v3407 = vadd.f32 %v3367, %v3398
        %v3408 = vadd.f32 %v3368, %v3402
        %v3409 = vadd.f32 %v3369, %v3398
        %v3410 = vadd.f32 %v3370, %v3402
        %v3411 = vadd.f32 %v3371, %v3398
        %v3412 = vadd.f32 %v3372, %v3402
        %v3413 = vadd.f32 %v3373, %v3398
        %v3414 = vadd.f32 %v3374, %v3402
        %v3415 = vadd.f32 %v3375, %v3398
        %v3416 = vadd.f32 %v3376, %v3402
        %v3417 = vadd.f32 %v3377, %v3398
        %v3418 = vadd.f32 %v3378, %v3402
        %v3419 = vadd.f32 %v3379, %v3398
        %v3420 = vadd.f32 %v3380, %v3402
        %v3421 = vadd.f32 %v3381, %v3398
        %v3422 = vadd.f32 %v3382, %v3402
        %v3423 = vadd.f32 %v3383, %v3398
        %v3424 = vadd.f32 %v3384, %v3402
        %v3425 = vadd.f32 %v3385, %v3398
        %v3426 = vadd.f32 %v3386, %v3402
        %v3427 = vadd.f32 %v3387, %v3398
        %v3428 = vadd.f32 %v3388, %v3402
        %v3429 = vadd.f32 %v3389, %v3398
        %v3430 = vadd.f32 %v3390, %v3402
        %v3431 = vadd.f32 %v3391, %v3398
        %v3432 = vadd.f32 %v3392, %v3402
        %v3433 = vadd.f32 %v3393, %v3398
        %v3434 = vadd.f32 %v3394, %v3402
        %s3435 = scalar_lea.vmem %s516, 256 [#allocation2]
        %v3436 = vld [vmem:[%s3435] sm:$0xff]
        %v3437 = vld [vmem:[%s3435 + $0x8] sm:$0xff]
        %v3438 = vld [vmem:[%s3435 + $0x10] sm:$0xff]
        %v3439 = vld [vmem:[%s3435 + $0x18] sm:$0xff]
        %v3440 = vld [vmem:[%s3435 + $0x20] sm:$0xff]
        %v3441 = vld [vmem:[%s3435 + $0x28] sm:$0xff]
        %v3442 = vld [vmem:[%s3435 + $0x30] sm:$0xff]
        %v3443 = vld [vmem:[%s3435 + $0x38] sm:$0xff]
        %v3444 = vld [vmem:[%s3435 + $0x40] sm:$0xff]
        %v3445 = vld [vmem:[%s3435 + $0x48] sm:$0xff]
        %v3446 = vld [vmem:[%s3435 + $0x50] sm:$0xff]
        %v3447 = vld [vmem:[%s3435 + $0x58] sm:$0xff]
        %v3448 = vld [vmem:[%s3435 + $0x60] sm:$0xff]
        %v3449 = vld [vmem:[%s3435 + $0x68] sm:$0xff]
        %v3450 = vld [vmem:[%s3435 + $0x70] sm:$0xff]
        %v3451 = vld [vmem:[%s3435 + $0x78] sm:$0xff]
        %v3452 = vpack.c.bf16 %v3405, %v3403
        %v3453 = vpack.c.bf16 %v3406, %v3404
        %v3454 = vpack.c.bf16 %v3409, %v3407
        %v3455 = vpack.c.bf16 %v3410, %v3408
        %v3456 = vpack.c.bf16 %v3413, %v3411
        %v3457 = vpack.c.bf16 %v3414, %v3412
        %v3458 = vpack.c.bf16 %v3417, %v3415
        %v3459 = vpack.c.bf16 %v3418, %v3416
        %v3460 = vpack.c.bf16 %v3421, %v3419
        %v3461 = vpack.c.bf16 %v3422, %v3420
        %v3462 = vpack.c.bf16 %v3425, %v3423
        %v3463 = vpack.c.bf16 %v3426, %v3424
        %v3464 = vpack.c.bf16 %v3429, %v3427
        %v3465 = vpack.c.bf16 %v3430, %v3428
        %v3466 = vpack.c.bf16 %v3433, %v3431
        %v3467 = vpack.c.bf16 %v3434, %v3432
        %v3468 = vld [vmem:[#allocation7] sm:$0xf]
        %v3469 = vld [vmem:[#allocation7 + $0x4] sm:$0xf]
        %v3470 = vld [vmem:[#allocation7 + $0x8] sm:$0xf]
        %v3471 = vld [vmem:[#allocation7 + $0xc] sm:$0xf]
        %v3472 = vld [vmem:[#allocation7 + $0x10] sm:$0xf]
        %v3473 = vld [vmem:[#allocation7 + $0x14] sm:$0xf]
        %v3474 = vld [vmem:[#allocation7 + $0x18] sm:$0xf]
        %v3475 = vld [vmem:[#allocation7 + $0x1c] sm:$0xf]
        %v3476 = vld [vmem:[#allocation7 + $0x20] sm:$0xf]
        %v3477 = vld [vmem:[#allocation7 + $0x24] sm:$0xf]
        %v3478 = vld [vmem:[#allocation7 + $0x28] sm:$0xf]
        %v3479 = vld [vmem:[#allocation7 + $0x2c] sm:$0xf]
        %v3480 = vld [vmem:[#allocation7 + $0x30] sm:$0xf]
        %v3481 = vld [vmem:[#allocation7 + $0x34] sm:$0xf]
        %v3482 = vld [vmem:[#allocation7 + $0x38] sm:$0xf]
        %v3483 = vld [vmem:[#allocation7 + $0x3c] sm:$0xf]
        %v3484 = vld [vmem:[#allocation7 + $0x40] sm:$0xf]
        %v3485 = vld [vmem:[#allocation7 + $0x44] sm:$0xf]
        %v3486 = vld [vmem:[#allocation7 + $0x48] sm:$0xf]
        %v3487 = vld [vmem:[#allocation7 + $0x4c] sm:$0xf]
        %v3488 = vld [vmem:[#allocation7 + $0x50] sm:$0xf]
        %v3489 = vld [vmem:[#allocation7 + $0x54] sm:$0xf]
        %v3490 = vld [vmem:[#allocation7 + $0x58] sm:$0xf]
        %v3491 = vld [vmem:[#allocation7 + $0x5c] sm:$0xf]
        %v3492 = vld [vmem:[#allocation7 + $0x60] sm:$0xf]
        %v3493 = vld [vmem:[#allocation7 + $0x64] sm:$0xf]
        %v3494 = vld [vmem:[#allocation7 + $0x68] sm:$0xf]
        %v3495 = vld [vmem:[#allocation7 + $0x6c] sm:$0xf]
        %v3496 = vld [vmem:[#allocation7 + $0x70] sm:$0xf]
        %v3497 = vld [vmem:[#allocation7 + $0x74] sm:$0xf]
        %v3498 = vld [vmem:[#allocation7 + $0x78] sm:$0xf]
        %v3499 = vld [vmem:[#allocation7 + $0x7c] sm:$0xf]
        %v3532 = vunpack.c.l.b16 %v3468
        %v3533 = vunpack.c.l.b16 %v3469
        %v3534 = vunpack.c.l.b16 %v3470
        %v3535 = vunpack.c.l.b16 %v3471
        %v3536 = vunpack.c.l.b16 %v3472
        %v3537 = vunpack.c.l.b16 %v3473
        %v3538 = vunpack.c.l.b16 %v3474
        %v3539 = vunpack.c.l.b16 %v3475
        %v3540 = vunpack.c.l.b16 %v3476
        %v3541 = vunpack.c.l.b16 %v3477
        %v3542 = vunpack.c.l.b16 %v3478
        %v3543 = vunpack.c.l.b16 %v3479
        %v3544 = vunpack.c.l.b16 %v3480
        %v3545 = vunpack.c.l.b16 %v3481
        %v3546 = vunpack.c.l.b16 %v3482
        %v3547 = vunpack.c.l.b16 %v3483
        %v3548 = vunpack.c.l.b16 %v3484
        %v3549 = vunpack.c.l.b16 %v3485
        %v3550 = vunpack.c.l.b16 %v3486
        %v3551 = vunpack.c.l.b16 %v3487
        %v3552 = vunpack.c.l.b16 %v3488
        %v3553 = vunpack.c.l.b16 %v3489
        %v3554 = vunpack.c.l.b16 %v3490
        %v3555 = vunpack.c.l.b16 %v3491
        %v3556 = vunpack.c.l.b16 %v3492
        %v3557 = vunpack.c.l.b16 %v3493
        %v3558 = vunpack.c.l.b16 %v3494
        %v3559 = vunpack.c.l.b16 %v3495
        %v3560 = vunpack.c.l.b16 %v3496
        %v3561 = vunpack.c.l.b16 %v3497
        %v3562 = vunpack.c.l.b16 %v3498
        %v3563 = vunpack.c.l.b16 %v3499
        %v3564 = vpack.c.b16 %v3533, %v3532
        %v3565 = vpack.c.b16 %v3535, %v3534
        %v3566 = vpack.c.b16 %v3537, %v3536
        %v3567 = vpack.c.b16 %v3539, %v3538
        %v3568 = vpack.c.b16 %v3541, %v3540
        %v3569 = vpack.c.b16 %v3543, %v3542
        %v3570 = vpack.c.b16 %v3545, %v3544
        %v3571 = vpack.c.b16 %v3547, %v3546
        %v3572 = vpack.c.b16 %v3549, %v3548
        %v3573 = vpack.c.b16 %v3551, %v3550
        %v3574 = vpack.c.b16 %v3553, %v3552
        %v3575 = vpack.c.b16 %v3555, %v3554
        %v3576 = vpack.c.b16 %v3557, %v3556
        %v3577 = vpack.c.b16 %v3559, %v3558
        %v3578 = vpack.c.b16 %v3561, %v3560
        %v3579 = vpack.c.b16 %v3563, %v3562
        %3596 = vmatprep.subr.bf16.mxu0 0
        %3597 = vmatpush1.bf16.msra.mxu0 %v3571
        %3598 = vmatprep.subr.bf16.mxu0 0
        %3599 = vmatpush1.bf16.msra.mxu0 %v3570
        %3600 = vmatprep.subr.bf16.mxu0 0
        %3601 = vmatpush1.bf16.msra.mxu0 %v3569
        %3602 = vmatprep.subr.bf16.mxu0 0
        %3603 = vmatpush1.bf16.msra.mxu0 %v3568
        %3604 = vmatprep.subr.bf16.mxu0 0
        %3605 = vmatpush1.bf16.msra.mxu0 %v3567
        %3606 = vmatprep.subr.bf16.mxu0 0
        %3607 = vmatpush1.bf16.msra.mxu0 %v3566
        %3608 = vmatprep.subr.bf16.mxu0 0
        %3609 = vmatpush1.bf16.msra.mxu0 %v3565
        %3610 = vmatprep.subr.bf16.mxu0 0
        %3611 = vmatpush1.bf16.msra.mxu0 %v3564
        %3612 = vmatprep.subr.bf16.mxu0 0
        %3613 = vmatpush2.bf16.msra.mxu0 %v3579
        %3614 = vmatprep.subr.bf16.mxu0 0
        %3615 = vmatpush2.bf16.msra.mxu0 %v3578
        %3616 = vmatprep.subr.bf16.mxu0 0
        %3617 = vmatpush2.bf16.msra.mxu0 %v3577
        %3618 = vmatprep.subr.bf16.mxu0 0
        %3619 = vmatpush2.bf16.msra.mxu0 %v3576
        %3620 = vmatprep.subr.bf16.mxu0 0
        %3621 = vmatpush2.bf16.msra.mxu0 %v3575
        %3622 = vmatprep.subr.bf16.mxu0 0
        %3623 = vmatpush2.bf16.msra.mxu0 %v3574
        %3624 = vmatprep.subr.bf16.mxu0 0
        %3625 = vmatpush2.bf16.msra.mxu0 %v3573
        %3626 = vmatprep.subr.bf16.mxu0 0
        %3627 = vmatpush2.bf16.msra.mxu0 %v3572
        %3628 = vmatprep.mubr.bf16.mxu0 %v3453
        %3629 = vmatmul.mubr.bf16.gmra.mxu0 %v3452
        %v3630 = vpop.f32.mrf.mxu0
        %v3631 = vadd.f32 0.0, %v3630
        %v3632 = vpop.f32.mrf.mxu0
        %v3633 = vpop.f32.mrf.mxu0
        %v3634 = vadd.f32 0.0, %v3633
        %v3635 = vpop.f32.mrf.mxu0
        %3636 = vmatprep.mubr.bf16.mxu0 %v3455
        %3637 = vmatmul.mubr.bf16.gmra.mxu0 %v3454
        %v3638 = vpop.f32.mrf.mxu0
        %v3639 = vadd.f32 0.0, %v3638
        %v3640 = vpop.f32.mrf.mxu0
        %v3641 = vpop.f32.mrf.mxu0
        %v3642 = vadd.f32 0.0, %v3641
        %v3643 = vpop.f32.mrf.mxu0
        %3644 = vmatprep.mubr.bf16.mxu0 %v3457
        %3645 = vmatmul.mubr.bf16.gmra.mxu0 %v3456
        %v3646 = vpop.f32.mrf.mxu0
        %v3647 = vadd.f32 0.0, %v3646
        %v3648 = vpop.f32.mrf.mxu0
        %v3649 = vpop.f32.mrf.mxu0
        %v3650 = vadd.f32 0.0, %v3649
        %v3651 = vpop.f32.mrf.mxu0
        %3652 = vmatprep.mubr.bf16.mxu0 %v3459
        %3653 = vmatmul.mubr.bf16.gmra.mxu0 %v3458
        %v3654 = vpop.f32.mrf.mxu0
        %v3655 = vadd.f32 0.0, %v3654
        %v3656 = vpop.f32.mrf.mxu0
        %v3657 = vpop.f32.mrf.mxu0
        %v3658 = vadd.f32 0.0, %v3657
        %v3659 = vpop.f32.mrf.mxu0
        %3660 = vmatprep.mubr.bf16.mxu0 %v3461
        %3661 = vmatmul.mubr.bf16.gmra.mxu0 %v3460
        %v3662 = vpop.f32.mrf.mxu0
        %v3663 = vadd.f32 0.0, %v3662
        %v3664 = vpop.f32.mrf.mxu0
        %v3665 = vpop.f32.mrf.mxu0
        %v3666 = vadd.f32 0.0, %v3665
        %v3667 = vpop.f32.mrf.mxu0
        %3668 = vmatprep.mubr.bf16.mxu0 %v3463
        %3669 = vmatmul.mubr.bf16.gmra.mxu0 %v3462
        %v3670 = vpop.f32.mrf.mxu0
        %v3671 = vadd.f32 0.0, %v3670
        %v3672 = vpop.f32.mrf.mxu0
        %v3673 = vpop.f32.mrf.mxu0
        %v3674 = vadd.f32 0.0, %v3673
        %v3675 = vpop.f32.mrf.mxu0
        %3676 = vmatprep.mubr.bf16.mxu0 %v3465
        %3677 = vmatmul.mubr.bf16.gmra.mxu0 %v3464
        %v3678 = vpop.f32.mrf.mxu0
        %v3679 = vadd.f32 0.0, %v3678
        %v3680 = vpop.f32.mrf.mxu0
        %v3681 = vpop.f32.mrf.mxu0
        %v3682 = vadd.f32 0.0, %v3681
        %v3683 = vpop.f32.mrf.mxu0
        %3684 = vmatprep.mubr.bf16.mxu0 %v3467
        %3685 = vmatmul.mubr.bf16.gmra.mxu0 %v3466
        %v3686 = vpop.f32.mrf.mxu0
        %v3687 = vadd.f32 0.0, %v3686
        %v3688 = vpop.f32.mrf.mxu0
        %v3689 = vpop.f32.mrf.mxu0
        %v3690 = vadd.f32 0.0, %v3689
        %v3691 = vpop.f32.mrf.mxu0
        %3692 = vdwg.mxu0
        %v3693 = vlaneseq
        %v3694 = vshrl.u32 %v3693, 7
        %v3695 = vsub.s32 0, %v3694
        %v3696 = vrot.slane %v610, %v3695
        %v3697 = vmul.f32 %v3631, %v3696
        %v3698 = vmul.f32 %v3634, %v3696
        %v3699 = vmul.f32 %v3639, %v3696
        %v3700 = vmul.f32 %v3642, %v3696
        %v3701 = vmul.f32 %v3647, %v3696
        %v3702 = vmul.f32 %v3650, %v3696
        %v3703 = vmul.f32 %v3655, %v3696
        %v3704 = vmul.f32 %v3658, %v3696
        %v3705 = vmul.f32 %v3663, %v3696
        %v3706 = vmul.f32 %v3666, %v3696
        %v3707 = vmul.f32 %v3671, %v3696
        %v3708 = vmul.f32 %v3674, %v3696
        %v3709 = vmul.f32 %v3679, %v3696
        %v3710 = vmul.f32 %v3682, %v3696
        %v3711 = vmul.f32 %v3687, %v3696
        %v3712 = vmul.f32 %v3690, %v3696
        %3713 = vadd.xlane.f32.xlu0 %v3697
        %v3714 = vpop.xlane.xlu0 %3713
        %3715 = vadd.xlane.f32.xlu0 %v3698
        %v3716 = vpop.xlane.xlu0 %3715
        %3717 = vadd.xlane.f32.xlu0 %v3699
        %v3718 = vpop.xlane.xlu0 %3717
        %3719 = vadd.xlane.f32.xlu0 %v3700
        %v3720 = vpop.xlane.xlu0 %3719
        %3721 = vadd.xlane.f32.xlu0 %v3701
        %v3722 = vpop.xlane.xlu0 %3721
        %3723 = vadd.xlane.f32.xlu0 %v3702
        %v3724 = vpop.xlane.xlu0 %3723
        %3725 = vadd.xlane.f32.xlu0 %v3703
        %v3726 = vpop.xlane.xlu0 %3725
        %3727 = vadd.xlane.f32.xlu0 %v3704
        %v3728 = vpop.xlane.xlu0 %3727
        %3729 = vadd.xlane.f32.xlu0 %v3705
        %v3730 = vpop.xlane.xlu0 %3729
        %3731 = vadd.xlane.f32.xlu0 %v3706
        %v3732 = vpop.xlane.xlu0 %3731
        %3733 = vadd.xlane.f32.xlu0 %v3707
        %v3734 = vpop.xlane.xlu0 %3733
        %3735 = vadd.xlane.f32.xlu0 %v3708
        %v3736 = vpop.xlane.xlu0 %3735
        %3737 = vadd.xlane.f32.xlu0 %v3709
        %v3738 = vpop.xlane.xlu0 %3737
        %3739 = vadd.xlane.f32.xlu0 %v3710
        %v3740 = vpop.xlane.xlu0 %3739
        %3741 = vadd.xlane.f32.xlu0 %v3711
        %v3742 = vpop.xlane.xlu0 %3741
        %3743 = vadd.xlane.f32.xlu0 %v3712
        %v3744 = vpop.xlane.xlu0 %3743
        %v3745 = vlaneseq
        %v3746 = vshrl.u32 %v3745, 7
        %v3747 = vsub.s32 1, %v3746
        %v3748 = vrot.slane %v610, %v3747
        %v3749 = vmul.f32 %v3631, %v3748
        %v3750 = vmul.f32 %v3634, %v3748
        %v3751 = vmul.f32 %v3639, %v3748
        %v3752 = vmul.f32 %v3642, %v3748
        %v3753 = vmul.f32 %v3647, %v3748
        %v3754 = vmul.f32 %v3650, %v3748
        %v3755 = vmul.f32 %v3655, %v3748
        %v3756 = vmul.f32 %v3658, %v3748
        %v3757 = vmul.f32 %v3663, %v3748
        %v3758 = vmul.f32 %v3666, %v3748
        %v3759 = vmul.f32 %v3671, %v3748
        %v3760 = vmul.f32 %v3674, %v3748
        %v3761 = vmul.f32 %v3679, %v3748
        %v3762 = vmul.f32 %v3682, %v3748
        %v3763 = vmul.f32 %v3687, %v3748
        %v3764 = vmul.f32 %v3690, %v3748
        %3765 = vadd.xlane.f32.xlu0 %v3749
        %v3766 = vpop.xlane.xlu0 %3765
        %3767 = vadd.xlane.f32.xlu0 %v3750
        %v3768 = vpop.xlane.xlu0 %3767
        %3769 = vadd.xlane.f32.xlu0 %v3751
        %v3770 = vpop.xlane.xlu0 %3769
        %3771 = vadd.xlane.f32.xlu0 %v3752
        %v3772 = vpop.xlane.xlu0 %3771
        %3773 = vadd.xlane.f32.xlu0 %v3753
        %v3774 = vpop.xlane.xlu0 %3773
        %3775 = vadd.xlane.f32.xlu0 %v3754
        %v3776 = vpop.xlane.xlu0 %3775
        %3777 = vadd.xlane.f32.xlu0 %v3755
        %v3778 = vpop.xlane.xlu0 %3777
        %3779 = vadd.xlane.f32.xlu0 %v3756
        %v3780 = vpop.xlane.xlu0 %3779
        %3781 = vadd.xlane.f32.xlu0 %v3757
        %v3782 = vpop.xlane.xlu0 %3781
        %3783 = vadd.xlane.f32.xlu0 %v3758
        %v3784 = vpop.xlane.xlu0 %3783
        %3785 = vadd.xlane.f32.xlu0 %v3759
        %v3786 = vpop.xlane.xlu0 %3785
        %3787 = vadd.xlane.f32.xlu0 %v3760
        %v3788 = vpop.xlane.xlu0 %3787
        %3789 = vadd.xlane.f32.xlu0 %v3761
        %v3790 = vpop.xlane.xlu0 %3789
        %3791 = vadd.xlane.f32.xlu0 %v3762
        %v3792 = vpop.xlane.xlu0 %3791
        %3793 = vadd.xlane.f32.xlu0 %v3763
        %v3794 = vpop.xlane.xlu0 %3793
        %3795 = vadd.xlane.f32.xlu0 %v3764
        %v3796 = vpop.xlane.xlu0 %3795
        %3797 = vxpose.xlu0.b32.start [1/16] %v3714, 128
        %3798 = vxpose.xlu0.b32.cont [2/16] %v3716, 128
        %3799 = vxpose.xlu0.b32.cont [3/16] %v3718, 128
        %3800 = vxpose.xlu0.b32.cont [4/16] %v3720, 128
        %3801 = vxpose.xlu0.b32.cont [5/16] %v3722, 128
        %3802 = vxpose.xlu0.b32.cont [6/16] %v3724, 128
        %3803 = vxpose.xlu0.b32.cont [7/16] %v3726, 128
        %3804 = vxpose.xlu0.b32.cont [8/16] %v3728, 128
        %3805 = vxpose.xlu0.b32.cont [9/16] %v3730, 128
        %3806 = vxpose.xlu0.b32.cont [10/16] %v3732, 128
        %3807 = vxpose.xlu0.b32.cont [11/16] %v3734, 128
        %3808 = vxpose.xlu0.b32.cont [12/16] %v3736, 128
        %3809 = vxpose.xlu0.b32.cont [13/16] %v3738, 128
        %3810 = vxpose.xlu0.b32.cont [14/16] %v3740, 128
        %3811 = vxpose.xlu0.b32.cont [15/16] %v3742, 128
        %3812 = vxpose.xlu0.b32.end [16/16] %v3744, 128
        %v3813 = vpop.trf.xlu0
        %v3814 = vpop.trf.xlu0
        %v3815 = vpop.trf.xlu0
        %v3816 = vpop.trf.xlu0
        %v3817 = vpop.trf.xlu0
        %v3818 = vpop.trf.xlu0
        %v3819 = vpop.trf.xlu0
        %v3820 = vpop.trf.xlu0
        %v3821 = vpop.trf.xlu0
        %v3822 = vpop.trf.xlu0
        %v3823 = vpop.trf.xlu0
        %v3824 = vpop.trf.xlu0
        %v3825 = vpop.trf.xlu0
        %v3826 = vpop.trf.xlu0
        %v3827 = vpop.trf.xlu0
        %v3828 = vpop.trf.xlu0
        %v3829 = vlaneseq
        %v3830 = vshrl.u32 %v3829, 7
        %v3831 = vsub.s32 0, %v3830
        %v3832 = vrot.slane %v3813, %v3831
        %v3833 = vadd.f32 %v3766, %v3832
        %v3834 = vadd.f32 %v3768, %v3832
        %v3835 = vadd.f32 %v3770, %v3832
        %v3836 = vadd.f32 %v3772, %v3832
        %v3837 = vadd.f32 %v3774, %v3832
        %v3838 = vadd.f32 %v3776, %v3832
        %v3839 = vadd.f32 %v3778, %v3832
        %v3840 = vadd.f32 %v3780, %v3832
        %v3841 = vadd.f32 %v3782, %v3832
        %v3842 = vadd.f32 %v3784, %v3832
        %v3843 = vadd.f32 %v3786, %v3832
        %v3844 = vadd.f32 %v3788, %v3832
        %v3845 = vadd.f32 %v3790, %v3832
        %v3846 = vadd.f32 %v3792, %v3832
        %v3847 = vadd.f32 %v3794, %v3832
        %v3848 = vadd.f32 %v3796, %v3832
        %v3849 = vadd.f32 %v3833, %v3436
        %v3850 = vadd.f32 %v3834, %v3437
        %v3851 = vadd.f32 %v3835, %v3438
        %v3852 = vadd.f32 %v3836, %v3439
        %v3853 = vadd.f32 %v3837, %v3440
        %v3854 = vadd.f32 %v3838, %v3441
        %v3855 = vadd.f32 %v3839, %v3442
        %v3856 = vadd.f32 %v3840, %v3443
        %v3857 = vadd.f32 %v3841, %v3444
        %v3858 = vadd.f32 %v3842, %v3445
        %v3859 = vadd.f32 %v3843, %v3446
        %v3860 = vadd.f32 %v3844, %v3447
        %v3861 = vadd.f32 %v3845, %v3448
        %v3862 = vadd.f32 %v3846, %v3449
        %v3863 = vadd.f32 %v3847, %v3450
        %v3864 = vadd.f32 %v3848, %v3451
        %v3865 = vmul.f32 %v3849, 0.2
        %v3866 = vmul.f32 %v3850, 0.2
        %v3867 = vmul.f32 %v3851, 0.2
        %v3868 = vmul.f32 %v3852, 0.2
        %v3869 = vmul.f32 %v3853, 0.2
        %v3870 = vmul.f32 %v3854, 0.2
        %v3871 = vmul.f32 %v3855, 0.2
        %v3872 = vmul.f32 %v3856, 0.2
        %v3873 = vmul.f32 %v3857, 0.2
        %v3874 = vmul.f32 %v3858, 0.2
        %v3875 = vmul.f32 %v3859, 0.2
        %v3876 = vmul.f32 %v3860, 0.2
        %v3877 = vmul.f32 %v3861, 0.2
        %v3878 = vmul.f32 %v3862, 0.2
        %v3879 = vmul.f32 %v3863, 0.2
        %v3880 = vmul.f32 %v3864, 0.2
        %v3881 = vmax.f32 %v3849, %v3865
        %v3882 = vmax.f32 %v3850, %v3866
        %v3883 = vmax.f32 %v3851, %v3867
        %v3884 = vmax.f32 %v3852, %v3868
        %v3885 = vmax.f32 %v3853, %v3869
        %v3886 = vmax.f32 %v3854, %v3870
        %v3887 = vmax.f32 %v3855, %v3871
        %v3888 = vmax.f32 %v3856, %v3872
        %v3889 = vmax.f32 %v3857, %v3873
        %v3890 = vmax.f32 %v3858, %v3874
        %v3891 = vmax.f32 %v3859, %v3875
        %v3892 = vmax.f32 %v3860, %v3876
        %v3893 = vmax.f32 %v3861, %v3877
        %v3894 = vmax.f32 %v3862, %v3878
        %v3895 = vmax.f32 %v3863, %v3879
        %v3896 = vmax.f32 %v3864, %v3880
        %3897 = vmax.xlane.f32.xlu0 %v3881
        %v3898 = vpop.xlane.xlu0 %3897
        %3899 = vmax.xlane.f32.xlu0 %v3882
        %v3900 = vpop.xlane.xlu0 %3899
        %3901 = vmax.xlane.f32.xlu0 %v3883
        %v3902 = vpop.xlane.xlu0 %3901
        %3903 = vmax.xlane.f32.xlu0 %v3884
        %v3904 = vpop.xlane.xlu0 %3903
        %3905 = vmax.xlane.f32.xlu0 %v3885
        %v3906 = vpop.xlane.xlu0 %3905
        %3907 = vmax.xlane.f32.xlu0 %v3886
        %v3908 = vpop.xlane.xlu0 %3907
        %3909 = vmax.xlane.f32.xlu0 %v3887
        %v3910 = vpop.xlane.xlu0 %3909
        %3911 = vmax.xlane.f32.xlu0 %v3888
        %v3912 = vpop.xlane.xlu0 %3911
        %3913 = vmax.xlane.f32.xlu0 %v3889
        %v3914 = vpop.xlane.xlu0 %3913
        %3915 = vmax.xlane.f32.xlu0 %v3890
        %v3916 = vpop.xlane.xlu0 %3915
        %3917 = vmax.xlane.f32.xlu0 %v3891
        %v3918 = vpop.xlane.xlu0 %3917
        %3919 = vmax.xlane.f32.xlu0 %v3892
        %v3920 = vpop.xlane.xlu0 %3919
        %3921 = vmax.xlane.f32.xlu0 %v3893
        %v3922 = vpop.xlane.xlu0 %3921
        %3923 = vmax.xlane.f32.xlu0 %v3894
        %v3924 = vpop.xlane.xlu0 %3923
        %3925 = vmax.xlane.f32.xlu0 %v3895
        %v3926 = vpop.xlane.xlu0 %3925
        %3927 = vmax.xlane.f32.xlu0 %v3896
        %v3928 = vpop.xlane.xlu0 %3927
        %v3929 = vsub.f32 %v3881, %v3898
        %v3930 = vsub.f32 %v3882, %v3900
        %v3931 = vsub.f32 %v3883, %v3902
        %v3932 = vsub.f32 %v3884, %v3904
        %v3933 = vsub.f32 %v3885, %v3906
        %v3934 = vsub.f32 %v3886, %v3908
        %v3935 = vsub.f32 %v3887, %v3910
        %v3936 = vsub.f32 %v3888, %v3912
        %v3937 = vsub.f32 %v3889, %v3914
        %v3938 = vsub.f32 %v3890, %v3916
        %v3939 = vsub.f32 %v3891, %v3918
        %v3940 = vsub.f32 %v3892, %v3920
        %v3941 = vsub.f32 %v3893, %v3922
        %v3942 = vsub.f32 %v3894, %v3924
        %v3943 = vsub.f32 %v3895, %v3926
        %v3944 = vsub.f32 %v3896, %v3928
        %v3945 = vmul.f32 %v3929, 1.442695
        %v3946 = vpow.pop %v3945
        %v3947 = vmul.f32 %v3930, 1.442695
        %v3948 = vpow.pop %v3947
        %v3949 = vmul.f32 %v3931, 1.442695
        %v3950 = vpow.pop %v3949
        %v3951 = vmul.f32 %v3932, 1.442695
        %v3952 = vpow.pop %v3951
        %v3953 = vmul.f32 %v3933, 1.442695
        %v3954 = vpow.pop %v3953
        %v3955 = vmul.f32 %v3934, 1.442695
        %v3956 = vpow.pop %v3955
        %v3957 = vmul.f32 %v3935, 1.442695
        %v3958 = vpow.pop %v3957
        %v3959 = vmul.f32 %v3936, 1.442695
        %v3960 = vpow.pop %v3959
        %v3961 = vmul.f32 %v3937, 1.442695
        %v3962 = vpow.pop %v3961
        %v3963 = vmul.f32 %v3938, 1.442695
        %v3964 = vpow.pop %v3963
        %v3965 = vmul.f32 %v3939, 1.442695
        %v3966 = vpow.pop %v3965
        %v3967 = vmul.f32 %v3940, 1.442695
        %v3968 = vpow.pop %v3967
        %v3969 = vmul.f32 %v3941, 1.442695
        %v3970 = vpow.pop %v3969
        %v3971 = vmul.f32 %v3942, 1.442695
        %v3972 = vpow.pop %v3971
        %v3973 = vmul.f32 %v3943, 1.442695
        %v3974 = vpow.pop %v3973
        %v3975 = vmul.f32 %v3944, 1.442695
        %v3976 = vpow.pop %v3975
        %3977 = vadd.xlane.f32.xlu0 %v3946
        %v3978 = vpop.xlane.xlu0 %3977
        %3979 = vadd.xlane.f32.xlu0 %v3948
        %v3980 = vpop.xlane.xlu0 %3979
        %3981 = vadd.xlane.f32.xlu0 %v3950
        %v3982 = vpop.xlane.xlu0 %3981
        %3983 = vadd.xlane.f32.xlu0 %v3952
        %v3984 = vpop.xlane.xlu0 %3983
        %3985 = vadd.xlane.f32.xlu0 %v3954
        %v3986 = vpop.xlane.xlu0 %3985
        %3987 = vadd.xlane.f32.xlu0 %v3956
        %v3988 = vpop.xlane.xlu0 %3987
        %3989 = vadd.xlane.f32.xlu0 %v3958
        %v3990 = vpop.xlane.xlu0 %3989
        %3991 = vadd.xlane.f32.xlu0 %v3960
        %v3992 = vpop.xlane.xlu0 %3991
        %3993 = vadd.xlane.f32.xlu0 %v3962
        %v3994 = vpop.xlane.xlu0 %3993
        %3995 = vadd.xlane.f32.xlu0 %v3964
        %v3996 = vpop.xlane.xlu0 %3995
        %3997 = vadd.xlane.f32.xlu0 %v3966
        %v3998 = vpop.xlane.xlu0 %3997
        %3999 = vadd.xlane.f32.xlu0 %v3968
        %v4000 = vpop.xlane.xlu0 %3999
        %4001 = vadd.xlane.f32.xlu0 %v3970
        %v4002 = vpop.xlane.xlu0 %4001
        %4003 = vadd.xlane.f32.xlu0 %v3972
        %v4004 = vpop.xlane.xlu0 %4003
        %4005 = vadd.xlane.f32.xlu0 %v3974
        %v4006 = vpop.xlane.xlu0 %4005
        %4007 = vadd.xlane.f32.xlu0 %v3976
        %v4008 = vpop.xlane.xlu0 %4007
        %v4009 = vrcp.pop %v3978
        %v4010 = vrcp.pop %v3980
        %v4011 = vrcp.pop %v3982
        %v4012 = vrcp.pop %v3984
        %v4013 = vrcp.pop %v3986
        %v4014 = vrcp.pop %v3988
        %v4015 = vrcp.pop %v3990
        %v4016 = vrcp.pop %v3992
        %v4017 = vrcp.pop %v3994
        %v4018 = vrcp.pop %v3996
        %v4019 = vrcp.pop %v3998
        %v4020 = vrcp.pop %v4000
        %v4021 = vrcp.pop %v4002
        %v4022 = vrcp.pop %v4004
        %v4023 = vrcp.pop %v4006
        %v4024 = vrcp.pop %v4008
        %v4025 = vmul.f32 %v3946, %v4009
        %v4026 = vmul.f32 %v3948, %v4010
        %v4027 = vmul.f32 %v3950, %v4011
        %v4028 = vmul.f32 %v3952, %v4012
        %v4029 = vmul.f32 %v3954, %v4013
        %v4030 = vmul.f32 %v3956, %v4014
        %v4031 = vmul.f32 %v3958, %v4015
        %v4032 = vmul.f32 %v3960, %v4016
        %v4033 = vmul.f32 %v3962, %v4017
        %v4034 = vmul.f32 %v3964, %v4018
        %v4035 = vmul.f32 %v3966, %v4019
        %v4036 = vmul.f32 %v3968, %v4020
        %v4037 = vmul.f32 %v3970, %v4021
        %v4038 = vmul.f32 %v3972, %v4022
        %v4039 = vmul.f32 %v3974, %v4023
        %v4040 = vmul.f32 %v3976, %v4024
        %v4041 = vpack.c.bf16 %v4026, %v4025
        %v4042 = vpack.c.bf16 %v4028, %v4027
        %v4043 = vpack.c.bf16 %v4030, %v4029
        %v4044 = vpack.c.bf16 %v4032, %v4031
        %v4045 = vpack.c.bf16 %v4034, %v4033
        %v4046 = vpack.c.bf16 %v4036, %v4035
        %v4047 = vpack.c.bf16 %v4038, %v4037
        %v4048 = vpack.c.bf16 %v4040, %v4039
        %v4049 = vpack.c.bf16 %v3634, %v3631
        %v4050 = vpack.c.bf16 %v3642, %v3639
        %v4051 = vpack.c.bf16 %v3650, %v3647
        %v4052 = vpack.c.bf16 %v3658, %v3655
        %v4053 = vpack.c.bf16 %v3666, %v3663
        %v4054 = vpack.c.bf16 %v3674, %v3671
        %v4055 = vpack.c.bf16 %v3682, %v3679
        %v4056 = vpack.c.bf16 %v3690, %v3687
        %v4057 = vlaneseq
        %v4058 = vshrl.u32 %v4057, 7
        %v4059 = vsub.s32 2, %v4058
        %v4060 = vrot.slane %v610, %v4059
        %4061 = vmatprep.subr.bf16.mxu0 0
        %4062 = vmatpush1.bf16.msra.mxu0 %v4056
        %4063 = vmatprep.subr.bf16.mxu0 0
        %4064 = vmatpush1.bf16.msra.mxu0 %v4055
        %4065 = vmatprep.subr.bf16.mxu0 0
        %4066 = vmatpush1.bf16.msra.mxu0 %v4054
        %4067 = vmatprep.subr.bf16.mxu0 0
        %4068 = vmatpush1.bf16.msra.mxu0 %v4053
        %4069 = vmatprep.subr.bf16.mxu0 0
        %4070 = vmatpush1.bf16.msra.mxu0 %v4052
        %4071 = vmatprep.subr.bf16.mxu0 0
        %4072 = vmatpush1.bf16.msra.mxu0 %v4051
        %4073 = vmatprep.subr.bf16.mxu0 0
        %4074 = vmatpush1.bf16.msra.mxu0 %v4050
        %4075 = vmatprep.subr.bf16.mxu0 0
        %4076 = vmatpush1.bf16.msra.mxu0 %v4049
        %4077 = vmatprep.subr.bf16.mxu0 0
        %4078 = vmatpush2.bf16.msra.mxu0 0
        %4079 = vmatprep.subr.bf16.mxu0 0
        %4080 = vmatpush2.bf16.msra.mxu0 0
        %4081 = vmatprep.subr.bf16.mxu0 0
        %4082 = vmatpush2.bf16.msra.mxu0 0
        %4083 = vmatprep.subr.bf16.mxu0 0
        %4084 = vmatpush2.bf16.msra.mxu0 0
        %4085 = vmatprep.subr.bf16.mxu0 0
        %4086 = vmatpush2.bf16.msra.mxu0 0
        %4087 = vmatprep.subr.bf16.mxu0 0
        %4088 = vmatpush2.bf16.msra.mxu0 0
        %4089 = vmatprep.subr.bf16.mxu0 0
        %4090 = vmatpush2.bf16.msra.mxu0 0
        %4091 = vmatprep.subr.bf16.mxu0 0
        %4092 = vmatpush2.bf16.msra.mxu0 0
        %4093 = vmatprep.mubr.bf16.mxu0 0
        %4094 = vmatmul.mubr.bf16.gmra.mxu0 %v4041
        %v4095 = vpop.f32.mrf.mxu0
        %v4096 = vadd.f32 %v4060, %v4095
        %v4097 = vpop.f32.mrf.mxu0
        %v4098 = vpop.f32.mrf.mxu0
        %v4099 = vadd.f32 %v4060, %v4098
        %v4100 = vpop.f32.mrf.mxu0
        %4101 = vmatprep.mubr.bf16.mxu0 0
        %4102 = vmatmul.mubr.bf16.gmra.mxu0 %v4042
        %v4103 = vpop.f32.mrf.mxu0
        %v4104 = vadd.f32 %v4060, %v4103
        %v4105 = vpop.f32.mrf.mxu0
        %v4106 = vpop.f32.mrf.mxu0
        %v4107 = vadd.f32 %v4060, %v4106
        %v4108 = vpop.f32.mrf.mxu0
        %4109 = vmatprep.mubr.bf16.mxu0 0
        %4110 = vmatmul.mubr.bf16.gmra.mxu0 %v4043
        %v4111 = vpop.f32.mrf.mxu0
        %v4112 = vadd.f32 %v4060, %v4111
        %v4113 = vpop.f32.mrf.mxu0
        %v4114 = vpop.f32.mrf.mxu0
        %v4115 = vadd.f32 %v4060, %v4114
        %v4116 = vpop.f32.mrf.mxu0
        %4117 = vmatprep.mubr.bf16.mxu0 0
        %4118 = vmatmul.mubr.bf16.gmra.mxu0 %v4044
        %v4119 = vpop.f32.mrf.mxu0
        %v4120 = vadd.f32 %v4060, %v4119
        %v4121 = vpop.f32.mrf.mxu0
        %v4122 = vpop.f32.mrf.mxu0
        %v4123 = vadd.f32 %v4060, %v4122
        %v4124 = vpop.f32.mrf.mxu0
        %4125 = vmatprep.mubr.bf16.mxu0 0
        %4126 = vmatmul.mubr.bf16.gmra.mxu0 %v4045
        %v4127 = vpop.f32.mrf.mxu0
        %v4128 = vadd.f32 %v4060, %v4127
        %v4129 = vpop.f32.mrf.mxu0
        %v4130 = vpop.f32.mrf.mxu0
        %v4131 = vadd.f32 %v4060, %v4130
        %v4132 = vpop.f32.mrf.mxu0
        %4133 = vmatprep.mubr.bf16.mxu0 0
        %4134 = vmatmul.mubr.bf16.gmra.mxu0 %v4046
        %v4135 = vpop.f32.mrf.mxu0
        %v4136 = vadd.f32 %v4060, %v4135
        %v4137 = vpop.f32.mrf.mxu0
        %v4138 = vpop.f32.mrf.mxu0
        %v4139 = vadd.f32 %v4060, %v4138
        %v4140 = vpop.f32.mrf.mxu0
        %4141 = vmatprep.mubr.bf16.mxu0 0
        %4142 = vmatmul.mubr.bf16.gmra.mxu0 %v4047
        %v4143 = vpop.f32.mrf.mxu0
        %v4144 = vadd.f32 %v4060, %v4143
        %v4145 = vpop.f32.mrf.mxu0
        %v4146 = vpop.f32.mrf.mxu0
        %v4147 = vadd.f32 %v4060, %v4146
        %v4148 = vpop.f32.mrf.mxu0
        %4149 = vmatprep.mubr.bf16.mxu0 0
        %4150 = vmatmul.mubr.bf16.gmra.mxu0 %v4048
        %v4151 = vpop.f32.mrf.mxu0
        %v4152 = vadd.f32 %v4060, %v4151
        %v4153 = vpop.f32.mrf.mxu0
        %v4154 = vpop.f32.mrf.mxu0
        %v4155 = vadd.f32 %v4060, %v4154
        %v4156 = vpop.f32.mrf.mxu0
        %4157 = vdwg.mxu0
        %v4158 = vmul.f32 %v4096, 0.01
        %v4159 = vmul.f32 %v4099, 0.01
        %v4160 = vmul.f32 %v4104, 0.01
        %v4161 = vmul.f32 %v4107, 0.01
        %v4162 = vmul.f32 %v4112, 0.01
        %v4163 = vmul.f32 %v4115, 0.01
        %v4164 = vmul.f32 %v4120, 0.01
        %v4165 = vmul.f32 %v4123, 0.01
        %v4166 = vmul.f32 %v4128, 0.01
        %v4167 = vmul.f32 %v4131, 0.01
        %v4168 = vmul.f32 %v4136, 0.01
        %v4169 = vmul.f32 %v4139, 0.01
        %v4170 = vmul.f32 %v4144, 0.01
        %v4171 = vmul.f32 %v4147, 0.01
        %v4172 = vmul.f32 %v4152, 0.01
        %v4173 = vmul.f32 %v4155, 0.01
        %v4174 = vmax.f32 %v4096, %v4158
        %v4175 = vmax.f32 %v4099, %v4159
        %v4176 = vmax.f32 %v4104, %v4160
        %v4177 = vmax.f32 %v4107, %v4161
        %v4178 = vmax.f32 %v4112, %v4162
        %v4179 = vmax.f32 %v4115, %v4163
        %v4180 = vmax.f32 %v4120, %v4164
        %v4181 = vmax.f32 %v4123, %v4165
        %v4182 = vmax.f32 %v4128, %v4166
        %v4183 = vmax.f32 %v4131, %v4167
        %v4184 = vmax.f32 %v4136, %v4168
        %v4185 = vmax.f32 %v4139, %v4169
        %v4186 = vmax.f32 %v4144, %v4170
        %v4187 = vmax.f32 %v4147, %v4171
        %v4188 = vmax.f32 %v4152, %v4172
        %v4189 = vmax.f32 %v4155, %v4173
        %v4190 = vlaneseq
        %v4191 = vshrl.u32 %v4190, 7
        %v4192 = vsub.s32 3, %v4191
        %v4193 = vrot.slane %v610, %v4192
        %v4194 = vmul.f32 %v4174, %v4193
        %v4195 = vmul.f32 %v4175, %v4193
        %v4196 = vmul.f32 %v4176, %v4193
        %v4197 = vmul.f32 %v4177, %v4193
        %v4198 = vmul.f32 %v4178, %v4193
        %v4199 = vmul.f32 %v4179, %v4193
        %v4200 = vmul.f32 %v4180, %v4193
        %v4201 = vmul.f32 %v4181, %v4193
        %v4202 = vmul.f32 %v4182, %v4193
        %v4203 = vmul.f32 %v4183, %v4193
        %v4204 = vmul.f32 %v4184, %v4193
        %v4205 = vmul.f32 %v4185, %v4193
        %v4206 = vmul.f32 %v4186, %v4193
        %v4207 = vmul.f32 %v4187, %v4193
        %v4208 = vmul.f32 %v4188, %v4193
        %v4209 = vmul.f32 %v4189, %v4193
        %v4210 = vlaneseq
        %v4211 = vshrl.u32 %v4210, 7
        %v4212 = vsub.s32 4, %v4211
        %v4213 = vrot.slane %v610, %v4212
        %v4214 = vadd.f32 %v4194, %v4213
        %v4215 = vadd.f32 %v4195, %v4213
        %v4216 = vadd.f32 %v4196, %v4213
        %v4217 = vadd.f32 %v4197, %v4213
        %v4218 = vadd.f32 %v4198, %v4213
        %v4219 = vadd.f32 %v4199, %v4213
        %v4220 = vadd.f32 %v4200, %v4213
        %v4221 = vadd.f32 %v4201, %v4213
        %v4222 = vadd.f32 %v4202, %v4213
        %v4223 = vadd.f32 %v4203, %v4213
        %v4224 = vadd.f32 %v4204, %v4213
        %v4225 = vadd.f32 %v4205, %v4213
        %v4226 = vadd.f32 %v4206, %v4213
        %v4227 = vadd.f32 %v4207, %v4213
        %v4228 = vadd.f32 %v4208, %v4213
        %v4229 = vadd.f32 %v4209, %v4213
        %s4230 = scalar_lea.vmem %s516, 384 [#allocation2]
        %v4231 = vld [vmem:[%s4230] sm:$0xff]
        %v4232 = vld [vmem:[%s4230 + $0x8] sm:$0xff]
        %v4233 = vld [vmem:[%s4230 + $0x10] sm:$0xff]
        %v4234 = vld [vmem:[%s4230 + $0x18] sm:$0xff]
        %v4235 = vld [vmem:[%s4230 + $0x20] sm:$0xff]
        %v4236 = vld [vmem:[%s4230 + $0x28] sm:$0xff]
        %v4237 = vld [vmem:[%s4230 + $0x30] sm:$0xff]
        %v4238 = vld [vmem:[%s4230 + $0x38] sm:$0xff]
        %v4239 = vld [vmem:[%s4230 + $0x40] sm:$0xff]
        %v4240 = vld [vmem:[%s4230 + $0x48] sm:$0xff]
        %v4241 = vld [vmem:[%s4230 + $0x50] sm:$0xff]
        %v4242 = vld [vmem:[%s4230 + $0x58] sm:$0xff]
        %v4243 = vld [vmem:[%s4230 + $0x60] sm:$0xff]
        %v4244 = vld [vmem:[%s4230 + $0x68] sm:$0xff]
        %v4245 = vld [vmem:[%s4230 + $0x70] sm:$0xff]
        %v4246 = vld [vmem:[%s4230 + $0x78] sm:$0xff]
        %v4247 = vpack.c.bf16 %v4215, %v4214
        %v4248 = vpack.c.bf16 %v4217, %v4216
        %v4249 = vpack.c.bf16 %v4219, %v4218
        %v4250 = vpack.c.bf16 %v4221, %v4220
        %v4251 = vpack.c.bf16 %v4223, %v4222
        %v4252 = vpack.c.bf16 %v4225, %v4224
        %v4253 = vpack.c.bf16 %v4227, %v4226
        %v4254 = vpack.c.bf16 %v4229, %v4228
        %v4255 = vld [vmem:[#allocation8] sm:$0xff]
        %v4256 = vld [vmem:[#allocation8 + $0x8] sm:$0xff]
        %v4257 = vld [vmem:[#allocation8 + $0x10] sm:$0xff]
        %v4258 = vld [vmem:[#allocation8 + $0x18] sm:$0xff]
        %v4259 = vld [vmem:[#allocation8 + $0x20] sm:$0xff]
        %v4260 = vld [vmem:[#allocation8 + $0x28] sm:$0xff]
        %v4261 = vld [vmem:[#allocation8 + $0x30] sm:$0xff]
        %v4262 = vld [vmem:[#allocation8 + $0x38] sm:$0xff]
        %v4263 = vld [vmem:[#allocation8 + $0x40] sm:$0xff]
        %v4264 = vld [vmem:[#allocation8 + $0x48] sm:$0xff]
        %v4265 = vld [vmem:[#allocation8 + $0x50] sm:$0xff]
        %v4266 = vld [vmem:[#allocation8 + $0x58] sm:$0xff]
        %v4267 = vld [vmem:[#allocation8 + $0x60] sm:$0xff]
        %v4268 = vld [vmem:[#allocation8 + $0x68] sm:$0xff]
        %v4269 = vld [vmem:[#allocation8 + $0x70] sm:$0xff]
        %v4270 = vld [vmem:[#allocation8 + $0x78] sm:$0xff]
        %v4287 = vunpack.c.l.b16 %v4255
        %v4288 = vunpack.c.h.b16 %v4255
        %v4289 = vunpack.c.l.b16 %v4256
        %v4290 = vunpack.c.h.b16 %v4256
        %v4291 = vunpack.c.l.b16 %v4257
        %v4292 = vunpack.c.h.b16 %v4257
        %v4293 = vunpack.c.l.b16 %v4258
        %v4294 = vunpack.c.h.b16 %v4258
        %v4295 = vunpack.c.l.b16 %v4259
        %v4296 = vunpack.c.h.b16 %v4259
        %v4297 = vunpack.c.l.b16 %v4260
        %v4298 = vunpack.c.h.b16 %v4260
        %v4299 = vunpack.c.l.b16 %v4261
        %v4300 = vunpack.c.h.b16 %v4261
        %v4301 = vunpack.c.l.b16 %v4262
        %v4302 = vunpack.c.h.b16 %v4262
        %v4303 = vunpack.c.l.b16 %v4263
        %v4304 = vunpack.c.h.b16 %v4263
        %v4305 = vunpack.c.l.b16 %v4264
        %v4306 = vunpack.c.h.b16 %v4264
        %v4307 = vunpack.c.l.b16 %v4265
        %v4308 = vunpack.c.h.b16 %v4265
        %v4309 = vunpack.c.l.b16 %v4266
        %v4310 = vunpack.c.h.b16 %v4266
        %v4311 = vunpack.c.l.b16 %v4267
        %v4312 = vunpack.c.h.b16 %v4267
        %v4313 = vunpack.c.l.b16 %v4268
        %v4314 = vunpack.c.h.b16 %v4268
        %v4315 = vunpack.c.l.b16 %v4269
        %v4316 = vunpack.c.h.b16 %v4269
        %v4317 = vunpack.c.l.b16 %v4270
        %v4318 = vunpack.c.h.b16 %v4270
        %v4319 = vpack.c.b16 %v4289, %v4287
        %v4320 = vpack.c.b16 %v4290, %v4288
        %v4321 = vpack.c.b16 %v4293, %v4291
        %v4322 = vpack.c.b16 %v4294, %v4292
        %v4323 = vpack.c.b16 %v4297, %v4295
        %v4324 = vpack.c.b16 %v4298, %v4296
        %v4325 = vpack.c.b16 %v4301, %v4299
        %v4326 = vpack.c.b16 %v4302, %v4300
        %v4327 = vpack.c.b16 %v4305, %v4303
        %v4328 = vpack.c.b16 %v4306, %v4304
        %v4329 = vpack.c.b16 %v4309, %v4307
        %v4330 = vpack.c.b16 %v4310, %v4308
        %v4331 = vpack.c.b16 %v4313, %v4311
        %v4332 = vpack.c.b16 %v4314, %v4312
        %v4333 = vpack.c.b16 %v4317, %v4315
        %v4334 = vpack.c.b16 %v4318, %v4316
        %4351 = vmatprep.subr.bf16.mxu0 %v4334
        %4352 = vmatpush1.bf16.msra.mxu0 %v4333
        %4353 = vmatprep.subr.bf16.mxu0 %v4332
        %4354 = vmatpush1.bf16.msra.mxu0 %v4331
        %4355 = vmatprep.subr.bf16.mxu0 %v4330
        %4356 = vmatpush1.bf16.msra.mxu0 %v4329
        %4357 = vmatprep.subr.bf16.mxu0 %v4328
        %4358 = vmatpush1.bf16.msra.mxu0 %v4327
        %4359 = vmatprep.subr.bf16.mxu0 %v4326
        %4360 = vmatpush1.bf16.msra.mxu0 %v4325
        %4361 = vmatprep.subr.bf16.mxu0 %v4324
        %4362 = vmatpush1.bf16.msra.mxu0 %v4323
        %4363 = vmatprep.subr.bf16.mxu0 %v4322
        %4364 = vmatpush1.bf16.msra.mxu0 %v4321
        %4365 = vmatprep.subr.bf16.mxu0 %v4320
        %4366 = vmatpush1.bf16.msra.mxu0 %v4319
        %4367 = vmatprep.subr.bf16.mxu0 0
        %4368 = vmatpush2.bf16.msra.mxu0 0
        %4369 = vmatprep.subr.bf16.mxu0 0
        %4370 = vmatpush2.bf16.msra.mxu0 0
        %4371 = vmatprep.subr.bf16.mxu0 0
        %4372 = vmatpush2.bf16.msra.mxu0 0
        %4373 = vmatprep.subr.bf16.mxu0 0
        %4374 = vmatpush2.bf16.msra.mxu0 0
        %4375 = vmatprep.subr.bf16.mxu0 0
        %4376 = vmatpush2.bf16.msra.mxu0 0
        %4377 = vmatprep.subr.bf16.mxu0 0
        %4378 = vmatpush2.bf16.msra.mxu0 0
        %4379 = vmatprep.subr.bf16.mxu0 0
        %4380 = vmatpush2.bf16.msra.mxu0 0
        %4381 = vmatprep.subr.bf16.mxu0 0
        %4382 = vmatpush2.bf16.msra.mxu0 0
        %4383 = vmatprep.mubr.bf16.mxu0 0
        %4384 = vmatmul.mubr.bf16.gmra.mxu0 %v4247
        %v4385 = vpop.f32.mrf.mxu0
        %v4386 = vadd.f32 0.0, %v4385
        %v4387 = vpop.f32.mrf.mxu0
        %v4388 = vadd.f32 0.0, %v4387
        %v4389 = vpop.f32.mrf.mxu0
        %v4390 = vadd.f32 0.0, %v4389
        %v4391 = vpop.f32.mrf.mxu0
        %v4392 = vadd.f32 0.0, %v4391
        %4393 = vmatprep.mubr.bf16.mxu0 0
        %4394 = vmatmul.mubr.bf16.gmra.mxu0 %v4248
        %v4395 = vpop.f32.mrf.mxu0
        %v4396 = vadd.f32 0.0, %v4395
        %v4397 = vpop.f32.mrf.mxu0
        %v4398 = vadd.f32 0.0, %v4397
        %v4399 = vpop.f32.mrf.mxu0
        %v4400 = vadd.f32 0.0, %v4399
        %v4401 = vpop.f32.mrf.mxu0
        %v4402 = vadd.f32 0.0, %v4401
        %4403 = vmatprep.mubr.bf16.mxu0 0
        %4404 = vmatmul.mubr.bf16.gmra.mxu0 %v4249
        %v4405 = vpop.f32.mrf.mxu0
        %v4406 = vadd.f32 0.0, %v4405
        %v4407 = vpop.f32.mrf.mxu0
        %v4408 = vadd.f32 0.0, %v4407
        %v4409 = vpop.f32.mrf.mxu0
        %v4410 = vadd.f32 0.0, %v4409
        %v4411 = vpop.f32.mrf.mxu0
        %v4412 = vadd.f32 0.0, %v4411
        %4413 = vmatprep.mubr.bf16.mxu0 0
        %4414 = vmatmul.mubr.bf16.gmra.mxu0 %v4250
        %v4415 = vpop.f32.mrf.mxu0
        %v4416 = vadd.f32 0.0, %v4415
        %v4417 = vpop.f32.mrf.mxu0
        %v4418 = vadd.f32 0.0, %v4417
        %v4419 = vpop.f32.mrf.mxu0
        %v4420 = vadd.f32 0.0, %v4419
        %v4421 = vpop.f32.mrf.mxu0
        %v4422 = vadd.f32 0.0, %v4421
        %4423 = vmatprep.mubr.bf16.mxu0 0
        %4424 = vmatmul.mubr.bf16.gmra.mxu0 %v4251
        %v4425 = vpop.f32.mrf.mxu0
        %v4426 = vadd.f32 0.0, %v4425
        %v4427 = vpop.f32.mrf.mxu0
        %v4428 = vadd.f32 0.0, %v4427
        %v4429 = vpop.f32.mrf.mxu0
        %v4430 = vadd.f32 0.0, %v4429
        %v4431 = vpop.f32.mrf.mxu0
        %v4432 = vadd.f32 0.0, %v4431
        %4433 = vmatprep.mubr.bf16.mxu0 0
        %4434 = vmatmul.mubr.bf16.gmra.mxu0 %v4252
        %v4435 = vpop.f32.mrf.mxu0
        %v4436 = vadd.f32 0.0, %v4435
        %v4437 = vpop.f32.mrf.mxu0
        %v4438 = vadd.f32 0.0, %v4437
        %v4439 = vpop.f32.mrf.mxu0
        %v4440 = vadd.f32 0.0, %v4439
        %v4441 = vpop.f32.mrf.mxu0
        %v4442 = vadd.f32 0.0, %v4441
        %4443 = vmatprep.mubr.bf16.mxu0 0
        %4444 = vmatmul.mubr.bf16.gmra.mxu0 %v4253
        %v4445 = vpop.f32.mrf.mxu0
        %v4446 = vadd.f32 0.0, %v4445
        %v4447 = vpop.f32.mrf.mxu0
        %v4448 = vadd.f32 0.0, %v4447
        %v4449 = vpop.f32.mrf.mxu0
        %v4450 = vadd.f32 0.0, %v4449
        %v4451 = vpop.f32.mrf.mxu0
        %v4452 = vadd.f32 0.0, %v4451
        %4453 = vmatprep.mubr.bf16.mxu0 0
        %4454 = vmatmul.mubr.bf16.gmra.mxu0 %v4254
        %v4455 = vpop.f32.mrf.mxu0
        %v4456 = vadd.f32 0.0, %v4455
        %v4457 = vpop.f32.mrf.mxu0
        %v4458 = vadd.f32 0.0, %v4457
        %v4459 = vpop.f32.mrf.mxu0
        %v4460 = vadd.f32 0.0, %v4459
        %v4461 = vpop.f32.mrf.mxu0
        %v4462 = vadd.f32 0.0, %v4461
        %4463 = vdwg.mxu0
        %v4464 = vlaneseq
        %v4465 = vshrl.u32 %v4464, 7
        %v4466 = vsub.s32 0, %v4465
        %v4467 = vrot.slane %v611, %v4466
        %v4468 = vlaneseq
        %v4469 = vshrl.u32 %v4468, 7
        %v4470 = vsub.s32 0, %v4469
        %v4471 = vrot.slane %v612, %v4470
        %v4472 = vmul.f32 %v4386, %v4467
        %v4473 = vmul.f32 %v4388, %v4471
        %v4474 = vmul.f32 %v4390, %v4467
        %v4475 = vmul.f32 %v4392, %v4471
        %v4476 = vmul.f32 %v4396, %v4467
        %v4477 = vmul.f32 %v4398, %v4471
        %v4478 = vmul.f32 %v4400, %v4467
        %v4479 = vmul.f32 %v4402, %v4471
        %v4480 = vmul.f32 %v4406, %v4467
        %v4481 = vmul.f32 %v4408, %v4471
        %v4482 = vmul.f32 %v4410, %v4467
        %v4483 = vmul.f32 %v4412, %v4471
        %v4484 = vmul.f32 %v4416, %v4467
        %v4485 = vmul.f32 %v4418, %v4471
        %v4486 = vmul.f32 %v4420, %v4467
        %v4487 = vmul.f32 %v4422, %v4471
        %v4488 = vmul.f32 %v4426, %v4467
        %v4489 = vmul.f32 %v4428, %v4471
        %v4490 = vmul.f32 %v4430, %v4467
        %v4491 = vmul.f32 %v4432, %v4471
        %v4492 = vmul.f32 %v4436, %v4467
        %v4493 = vmul.f32 %v4438, %v4471
        %v4494 = vmul.f32 %v4440, %v4467
        %v4495 = vmul.f32 %v4442, %v4471
        %v4496 = vmul.f32 %v4446, %v4467
        %v4497 = vmul.f32 %v4448, %v4471
        %v4498 = vmul.f32 %v4450, %v4467
        %v4499 = vmul.f32 %v4452, %v4471
        %v4500 = vmul.f32 %v4456, %v4467
        %v4501 = vmul.f32 %v4458, %v4471
        %v4502 = vmul.f32 %v4460, %v4467
        %v4503 = vmul.f32 %v4462, %v4471
        %v4504 = vadd.f32 %v4472, %v4473
        %4505 = vadd.xlane.f32.xlu0 %v4504
        %v4506 = vpop.xlane.xlu0 %4505
        %v4507 = vadd.f32 %v4474, %v4475
        %4508 = vadd.xlane.f32.xlu0 %v4507
        %v4509 = vpop.xlane.xlu0 %4508
        %v4510 = vadd.f32 %v4476, %v4477
        %4511 = vadd.xlane.f32.xlu0 %v4510
        %v4512 = vpop.xlane.xlu0 %4511
        %v4513 = vadd.f32 %v4478, %v4479
        %4514 = vadd.xlane.f32.xlu0 %v4513
        %v4515 = vpop.xlane.xlu0 %4514
        %v4516 = vadd.f32 %v4480, %v4481
        %4517 = vadd.xlane.f32.xlu0 %v4516
        %v4518 = vpop.xlane.xlu0 %4517
        %v4519 = vadd.f32 %v4482, %v4483
        %4520 = vadd.xlane.f32.xlu0 %v4519
        %v4521 = vpop.xlane.xlu0 %4520
        %v4522 = vadd.f32 %v4484, %v4485
        %4523 = vadd.xlane.f32.xlu0 %v4522
        %v4524 = vpop.xlane.xlu0 %4523
        %v4525 = vadd.f32 %v4486, %v4487
        %4526 = vadd.xlane.f32.xlu0 %v4525
        %v4527 = vpop.xlane.xlu0 %4526
        %v4528 = vadd.f32 %v4488, %v4489
        %4529 = vadd.xlane.f32.xlu0 %v4528
        %v4530 = vpop.xlane.xlu0 %4529
        %v4531 = vadd.f32 %v4490, %v4491
        %4532 = vadd.xlane.f32.xlu0 %v4531
        %v4533 = vpop.xlane.xlu0 %4532
        %v4534 = vadd.f32 %v4492, %v4493
        %4535 = vadd.xlane.f32.xlu0 %v4534
        %v4536 = vpop.xlane.xlu0 %4535
        %v4537 = vadd.f32 %v4494, %v4495
        %4538 = vadd.xlane.f32.xlu0 %v4537
        %v4539 = vpop.xlane.xlu0 %4538
        %v4540 = vadd.f32 %v4496, %v4497
        %4541 = vadd.xlane.f32.xlu0 %v4540
        %v4542 = vpop.xlane.xlu0 %4541
        %v4543 = vadd.f32 %v4498, %v4499
        %4544 = vadd.xlane.f32.xlu0 %v4543
        %v4545 = vpop.xlane.xlu0 %4544
        %v4546 = vadd.f32 %v4500, %v4501
        %4547 = vadd.xlane.f32.xlu0 %v4546
        %v4548 = vpop.xlane.xlu0 %4547
        %v4549 = vadd.f32 %v4502, %v4503
        %4550 = vadd.xlane.f32.xlu0 %v4549
        %v4551 = vpop.xlane.xlu0 %4550
        %v4552 = vlaneseq
        %v4553 = vshrl.u32 %v4552, 7
        %v4554 = vsub.s32 1, %v4553
        %v4555 = vrot.slane %v611, %v4554
        %v4556 = vlaneseq
        %v4557 = vshrl.u32 %v4556, 7
        %v4558 = vsub.s32 1, %v4557
        %v4559 = vrot.slane %v612, %v4558
        %v4560 = vmul.f32 %v4386, %v4555
        %v4561 = vmul.f32 %v4388, %v4559
        %v4562 = vmul.f32 %v4390, %v4555
        %v4563 = vmul.f32 %v4392, %v4559
        %v4564 = vmul.f32 %v4396, %v4555
        %v4565 = vmul.f32 %v4398, %v4559
        %v4566 = vmul.f32 %v4400, %v4555
        %v4567 = vmul.f32 %v4402, %v4559
        %v4568 = vmul.f32 %v4406, %v4555
        %v4569 = vmul.f32 %v4408, %v4559
        %v4570 = vmul.f32 %v4410, %v4555
        %v4571 = vmul.f32 %v4412, %v4559
        %v4572 = vmul.f32 %v4416, %v4555
        %v4573 = vmul.f32 %v4418, %v4559
        %v4574 = vmul.f32 %v4420, %v4555
        %v4575 = vmul.f32 %v4422, %v4559
        %v4576 = vmul.f32 %v4426, %v4555
        %v4577 = vmul.f32 %v4428, %v4559
        %v4578 = vmul.f32 %v4430, %v4555
        %v4579 = vmul.f32 %v4432, %v4559
        %v4580 = vmul.f32 %v4436, %v4555
        %v4581 = vmul.f32 %v4438, %v4559
        %v4582 = vmul.f32 %v4440, %v4555
        %v4583 = vmul.f32 %v4442, %v4559
        %v4584 = vmul.f32 %v4446, %v4555
        %v4585 = vmul.f32 %v4448, %v4559
        %v4586 = vmul.f32 %v4450, %v4555
        %v4587 = vmul.f32 %v4452, %v4559
        %v4588 = vmul.f32 %v4456, %v4555
        %v4589 = vmul.f32 %v4458, %v4559
        %v4590 = vmul.f32 %v4460, %v4555
        %v4591 = vmul.f32 %v4462, %v4559
        %v4592 = vadd.f32 %v4560, %v4561
        %4593 = vadd.xlane.f32.xlu0 %v4592
        %v4594 = vpop.xlane.xlu0 %4593
        %v4595 = vadd.f32 %v4562, %v4563
        %4596 = vadd.xlane.f32.xlu0 %v4595
        %v4597 = vpop.xlane.xlu0 %4596
        %v4598 = vadd.f32 %v4564, %v4565
        %4599 = vadd.xlane.f32.xlu0 %v4598
        %v4600 = vpop.xlane.xlu0 %4599
        %v4601 = vadd.f32 %v4566, %v4567
        %4602 = vadd.xlane.f32.xlu0 %v4601
        %v4603 = vpop.xlane.xlu0 %4602
        %v4604 = vadd.f32 %v4568, %v4569
        %4605 = vadd.xlane.f32.xlu0 %v4604
        %v4606 = vpop.xlane.xlu0 %4605
        %v4607 = vadd.f32 %v4570, %v4571
        %4608 = vadd.xlane.f32.xlu0 %v4607
        %v4609 = vpop.xlane.xlu0 %4608
        %v4610 = vadd.f32 %v4572, %v4573
        %4611 = vadd.xlane.f32.xlu0 %v4610
        %v4612 = vpop.xlane.xlu0 %4611
        %v4613 = vadd.f32 %v4574, %v4575
        %4614 = vadd.xlane.f32.xlu0 %v4613
        %v4615 = vpop.xlane.xlu0 %4614
        %v4616 = vadd.f32 %v4576, %v4577
        %4617 = vadd.xlane.f32.xlu0 %v4616
        %v4618 = vpop.xlane.xlu0 %4617
        %v4619 = vadd.f32 %v4578, %v4579
        %4620 = vadd.xlane.f32.xlu0 %v4619
        %v4621 = vpop.xlane.xlu0 %4620
        %v4622 = vadd.f32 %v4580, %v4581
        %4623 = vadd.xlane.f32.xlu0 %v4622
        %v4624 = vpop.xlane.xlu0 %4623
        %v4625 = vadd.f32 %v4582, %v4583
        %4626 = vadd.xlane.f32.xlu0 %v4625
        %v4627 = vpop.xlane.xlu0 %4626
        %v4628 = vadd.f32 %v4584, %v4585
        %4629 = vadd.xlane.f32.xlu0 %v4628
        %v4630 = vpop.xlane.xlu0 %4629
        %v4631 = vadd.f32 %v4586, %v4587
        %4632 = vadd.xlane.f32.xlu0 %v4631
        %v4633 = vpop.xlane.xlu0 %4632
        %v4634 = vadd.f32 %v4588, %v4589
        %4635 = vadd.xlane.f32.xlu0 %v4634
        %v4636 = vpop.xlane.xlu0 %4635
        %v4637 = vadd.f32 %v4590, %v4591
        %4638 = vadd.xlane.f32.xlu0 %v4637
        %v4639 = vpop.xlane.xlu0 %4638
        %4640 = vxpose.xlu0.b32.start [1/16] %v4506, 128
        %4641 = vxpose.xlu0.b32.cont [2/16] %v4509, 128
        %4642 = vxpose.xlu0.b32.cont [3/16] %v4512, 128
        %4643 = vxpose.xlu0.b32.cont [4/16] %v4515, 128
        %4644 = vxpose.xlu0.b32.cont [5/16] %v4518, 128
        %4645 = vxpose.xlu0.b32.cont [6/16] %v4521, 128
        %4646 = vxpose.xlu0.b32.cont [7/16] %v4524, 128
        %4647 = vxpose.xlu0.b32.cont [8/16] %v4527, 128
        %4648 = vxpose.xlu0.b32.cont [9/16] %v4530, 128
        %4649 = vxpose.xlu0.b32.cont [10/16] %v4533, 128
        %4650 = vxpose.xlu0.b32.cont [11/16] %v4536, 128
        %4651 = vxpose.xlu0.b32.cont [12/16] %v4539, 128
        %4652 = vxpose.xlu0.b32.cont [13/16] %v4542, 128
        %4653 = vxpose.xlu0.b32.cont [14/16] %v4545, 128
        %4654 = vxpose.xlu0.b32.cont [15/16] %v4548, 128
        %4655 = vxpose.xlu0.b32.end [16/16] %v4551, 128
        %v4656 = vpop.trf.xlu0
        %v4657 = vpop.trf.xlu0
        %v4658 = vpop.trf.xlu0
        %v4659 = vpop.trf.xlu0
        %v4660 = vpop.trf.xlu0
        %v4661 = vpop.trf.xlu0
        %v4662 = vpop.trf.xlu0
        %v4663 = vpop.trf.xlu0
        %v4664 = vpop.trf.xlu0
        %v4665 = vpop.trf.xlu0
        %v4666 = vpop.trf.xlu0
        %v4667 = vpop.trf.xlu0
        %v4668 = vpop.trf.xlu0
        %v4669 = vpop.trf.xlu0
        %v4670 = vpop.trf.xlu0
        %v4671 = vpop.trf.xlu0
        %v4672 = vlaneseq
        %v4673 = vshrl.u32 %v4672, 7
        %v4674 = vsub.s32 0, %v4673
        %v4675 = vrot.slane %v4656, %v4674
        %v4676 = vadd.f32 %v4594, %v4675
        %v4677 = vadd.f32 %v4597, %v4675
        %v4678 = vadd.f32 %v4600, %v4675
        %v4679 = vadd.f32 %v4603, %v4675
        %v4680 = vadd.f32 %v4606, %v4675
        %v4681 = vadd.f32 %v4609, %v4675
        %v4682 = vadd.f32 %v4612, %v4675
        %v4683 = vadd.f32 %v4615, %v4675
        %v4684 = vadd.f32 %v4618, %v4675
        %v4685 = vadd.f32 %v4621, %v4675
        %v4686 = vadd.f32 %v4624, %v4675
        %v4687 = vadd.f32 %v4627, %v4675
        %v4688 = vadd.f32 %v4630, %v4675
        %v4689 = vadd.f32 %v4633, %v4675
        %v4690 = vadd.f32 %v4636, %v4675
        %v4691 = vadd.f32 %v4639, %v4675
        %v4692 = vadd.f32 %v4676, %v4231
        %v4693 = vadd.f32 %v4677, %v4232
        %v4694 = vadd.f32 %v4678, %v4233
        %v4695 = vadd.f32 %v4679, %v4234
        %v4696 = vadd.f32 %v4680, %v4235
        %v4697 = vadd.f32 %v4681, %v4236
        %v4698 = vadd.f32 %v4682, %v4237
        %v4699 = vadd.f32 %v4683, %v4238
        %v4700 = vadd.f32 %v4684, %v4239
        %v4701 = vadd.f32 %v4685, %v4240
        %v4702 = vadd.f32 %v4686, %v4241
        %v4703 = vadd.f32 %v4687, %v4242
        %v4704 = vadd.f32 %v4688, %v4243
        %v4705 = vadd.f32 %v4689, %v4244
        %v4706 = vadd.f32 %v4690, %v4245
        %v4707 = vadd.f32 %v4691, %v4246
        %v4708 = vmul.f32 %v4692, 0.2
        %v4709 = vmul.f32 %v4693, 0.2
        %v4710 = vmul.f32 %v4694, 0.2
        %v4711 = vmul.f32 %v4695, 0.2
        %v4712 = vmul.f32 %v4696, 0.2
        %v4713 = vmul.f32 %v4697, 0.2
        %v4714 = vmul.f32 %v4698, 0.2
        %v4715 = vmul.f32 %v4699, 0.2
        %v4716 = vmul.f32 %v4700, 0.2
        %v4717 = vmul.f32 %v4701, 0.2
        %v4718 = vmul.f32 %v4702, 0.2
        %v4719 = vmul.f32 %v4703, 0.2
        %v4720 = vmul.f32 %v4704, 0.2
        %v4721 = vmul.f32 %v4705, 0.2
        %v4722 = vmul.f32 %v4706, 0.2
        %v4723 = vmul.f32 %v4707, 0.2
        %v4724 = vmax.f32 %v4692, %v4708
        %v4725 = vmax.f32 %v4693, %v4709
        %v4726 = vmax.f32 %v4694, %v4710
        %v4727 = vmax.f32 %v4695, %v4711
        %v4728 = vmax.f32 %v4696, %v4712
        %v4729 = vmax.f32 %v4697, %v4713
        %v4730 = vmax.f32 %v4698, %v4714
        %v4731 = vmax.f32 %v4699, %v4715
        %v4732 = vmax.f32 %v4700, %v4716
        %v4733 = vmax.f32 %v4701, %v4717
        %v4734 = vmax.f32 %v4702, %v4718
        %v4735 = vmax.f32 %v4703, %v4719
        %v4736 = vmax.f32 %v4704, %v4720
        %v4737 = vmax.f32 %v4705, %v4721
        %v4738 = vmax.f32 %v4706, %v4722
        %v4739 = vmax.f32 %v4707, %v4723
        %4740 = vmax.xlane.f32.xlu0 %v4724
        %v4741 = vpop.xlane.xlu0 %4740
        %4742 = vmax.xlane.f32.xlu0 %v4725
        %v4743 = vpop.xlane.xlu0 %4742
        %4744 = vmax.xlane.f32.xlu0 %v4726
        %v4745 = vpop.xlane.xlu0 %4744
        %4746 = vmax.xlane.f32.xlu0 %v4727
        %v4747 = vpop.xlane.xlu0 %4746
        %4748 = vmax.xlane.f32.xlu0 %v4728
        %v4749 = vpop.xlane.xlu0 %4748
        %4750 = vmax.xlane.f32.xlu0 %v4729
        %v4751 = vpop.xlane.xlu0 %4750
        %4752 = vmax.xlane.f32.xlu0 %v4730
        %v4753 = vpop.xlane.xlu0 %4752
        %4754 = vmax.xlane.f32.xlu0 %v4731
        %v4755 = vpop.xlane.xlu0 %4754
        %4756 = vmax.xlane.f32.xlu0 %v4732
        %v4757 = vpop.xlane.xlu0 %4756
        %4758 = vmax.xlane.f32.xlu0 %v4733
        %v4759 = vpop.xlane.xlu0 %4758
        %4760 = vmax.xlane.f32.xlu0 %v4734
        %v4761 = vpop.xlane.xlu0 %4760
        %4762 = vmax.xlane.f32.xlu0 %v4735
        %v4763 = vpop.xlane.xlu0 %4762
        %4764 = vmax.xlane.f32.xlu0 %v4736
        %v4765 = vpop.xlane.xlu0 %4764
        %4766 = vmax.xlane.f32.xlu0 %v4737
        %v4767 = vpop.xlane.xlu0 %4766
        %4768 = vmax.xlane.f32.xlu0 %v4738
        %v4769 = vpop.xlane.xlu0 %4768
        %4770 = vmax.xlane.f32.xlu0 %v4739
        %v4771 = vpop.xlane.xlu0 %4770
        %v4772 = vsub.f32 %v4724, %v4741
        %v4773 = vsub.f32 %v4725, %v4743
        %v4774 = vsub.f32 %v4726, %v4745
        %v4775 = vsub.f32 %v4727, %v4747
        %v4776 = vsub.f32 %v4728, %v4749
        %v4777 = vsub.f32 %v4729, %v4751
        %v4778 = vsub.f32 %v4730, %v4753
        %v4779 = vsub.f32 %v4731, %v4755
        %v4780 = vsub.f32 %v4732, %v4757
        %v4781 = vsub.f32 %v4733, %v4759
        %v4782 = vsub.f32 %v4734, %v4761
        %v4783 = vsub.f32 %v4735, %v4763
        %v4784 = vsub.f32 %v4736, %v4765
        %v4785 = vsub.f32 %v4737, %v4767
        %v4786 = vsub.f32 %v4738, %v4769
        %v4787 = vsub.f32 %v4739, %v4771
        %v4788 = vmul.f32 %v4772, 1.442695
        %v4789 = vpow.pop %v4788
        %v4790 = vmul.f32 %v4773, 1.442695
        %v4791 = vpow.pop %v4790
        %v4792 = vmul.f32 %v4774, 1.442695
        %v4793 = vpow.pop %v4792
        %v4794 = vmul.f32 %v4775, 1.442695
        %v4795 = vpow.pop %v4794
        %v4796 = vmul.f32 %v4776, 1.442695
        %v4797 = vpow.pop %v4796
        %v4798 = vmul.f32 %v4777, 1.442695
        %v4799 = vpow.pop %v4798
        %v4800 = vmul.f32 %v4778, 1.442695
        %v4801 = vpow.pop %v4800
        %v4802 = vmul.f32 %v4779, 1.442695
        %v4803 = vpow.pop %v4802
        %v4804 = vmul.f32 %v4780, 1.442695
        %v4805 = vpow.pop %v4804
        %v4806 = vmul.f32 %v4781, 1.442695
        %v4807 = vpow.pop %v4806
        %v4808 = vmul.f32 %v4782, 1.442695
        %v4809 = vpow.pop %v4808
        %v4810 = vmul.f32 %v4783, 1.442695
        %v4811 = vpow.pop %v4810
        %v4812 = vmul.f32 %v4784, 1.442695
        %v4813 = vpow.pop %v4812
        %v4814 = vmul.f32 %v4785, 1.442695
        %v4815 = vpow.pop %v4814
        %v4816 = vmul.f32 %v4786, 1.442695
        %v4817 = vpow.pop %v4816
        %v4818 = vmul.f32 %v4787, 1.442695
        %v4819 = vpow.pop %v4818
        %4820 = vadd.xlane.f32.xlu0 %v4789
        %v4821 = vpop.xlane.xlu0 %4820
        %4822 = vadd.xlane.f32.xlu0 %v4791
        %v4823 = vpop.xlane.xlu0 %4822
        %4824 = vadd.xlane.f32.xlu0 %v4793
        %v4825 = vpop.xlane.xlu0 %4824
        %4826 = vadd.xlane.f32.xlu0 %v4795
        %v4827 = vpop.xlane.xlu0 %4826
        %4828 = vadd.xlane.f32.xlu0 %v4797
        %v4829 = vpop.xlane.xlu0 %4828
        %4830 = vadd.xlane.f32.xlu0 %v4799
        %v4831 = vpop.xlane.xlu0 %4830
        %4832 = vadd.xlane.f32.xlu0 %v4801
        %v4833 = vpop.xlane.xlu0 %4832
        %4834 = vadd.xlane.f32.xlu0 %v4803
        %v4835 = vpop.xlane.xlu0 %4834
        %4836 = vadd.xlane.f32.xlu0 %v4805
        %v4837 = vpop.xlane.xlu0 %4836
        %4838 = vadd.xlane.f32.xlu0 %v4807
        %v4839 = vpop.xlane.xlu0 %4838
        %4840 = vadd.xlane.f32.xlu0 %v4809
        %v4841 = vpop.xlane.xlu0 %4840
        %4842 = vadd.xlane.f32.xlu0 %v4811
        %v4843 = vpop.xlane.xlu0 %4842
        %4844 = vadd.xlane.f32.xlu0 %v4813
        %v4845 = vpop.xlane.xlu0 %4844
        %4846 = vadd.xlane.f32.xlu0 %v4815
        %v4847 = vpop.xlane.xlu0 %4846
        %4848 = vadd.xlane.f32.xlu0 %v4817
        %v4849 = vpop.xlane.xlu0 %4848
        %4850 = vadd.xlane.f32.xlu0 %v4819
        %v4851 = vpop.xlane.xlu0 %4850
        %v4852 = vrcp.pop %v4821
        %v4853 = vrcp.pop %v4823
        %v4854 = vrcp.pop %v4825
        %v4855 = vrcp.pop %v4827
        %v4856 = vrcp.pop %v4829
        %v4857 = vrcp.pop %v4831
        %v4858 = vrcp.pop %v4833
        %v4859 = vrcp.pop %v4835
        %v4860 = vrcp.pop %v4837
        %v4861 = vrcp.pop %v4839
        %v4862 = vrcp.pop %v4841
        %v4863 = vrcp.pop %v4843
        %v4864 = vrcp.pop %v4845
        %v4865 = vrcp.pop %v4847
        %v4866 = vrcp.pop %v4849
        %v4867 = vrcp.pop %v4851
        %v4868 = vmul.f32 %v4789, %v4852
        %v4869 = vmul.f32 %v4791, %v4853
        %v4870 = vmul.f32 %v4793, %v4854
        %v4871 = vmul.f32 %v4795, %v4855
        %v4872 = vmul.f32 %v4797, %v4856
        %v4873 = vmul.f32 %v4799, %v4857
        %v4874 = vmul.f32 %v4801, %v4858
        %v4875 = vmul.f32 %v4803, %v4859
        %v4876 = vmul.f32 %v4805, %v4860
        %v4877 = vmul.f32 %v4807, %v4861
        %v4878 = vmul.f32 %v4809, %v4862
        %v4879 = vmul.f32 %v4811, %v4863
        %v4880 = vmul.f32 %v4813, %v4864
        %v4881 = vmul.f32 %v4815, %v4865
        %v4882 = vmul.f32 %v4817, %v4866
        %v4883 = vmul.f32 %v4819, %v4867
        %v4884 = vpack.c.bf16 %v4869, %v4868
        %v4885 = vpack.c.bf16 %v4871, %v4870
        %v4886 = vpack.c.bf16 %v4873, %v4872
        %v4887 = vpack.c.bf16 %v4875, %v4874
        %v4888 = vpack.c.bf16 %v4877, %v4876
        %v4889 = vpack.c.bf16 %v4879, %v4878
        %v4890 = vpack.c.bf16 %v4881, %v4880
        %v4891 = vpack.c.bf16 %v4883, %v4882
        %v4892 = vpack.c.bf16 %v4390, %v4386
        %v4893 = vpack.c.bf16 %v4392, %v4388
        %v4894 = vpack.c.bf16 %v4400, %v4396
        %v4895 = vpack.c.bf16 %v4402, %v4398
        %v4896 = vpack.c.bf16 %v4410, %v4406
        %v4897 = vpack.c.bf16 %v4412, %v4408
        %v4898 = vpack.c.bf16 %v4420, %v4416
        %v4899 = vpack.c.bf16 %v4422, %v4418
        %v4900 = vpack.c.bf16 %v4430, %v4426
        %v4901 = vpack.c.bf16 %v4432, %v4428
        %v4902 = vpack.c.bf16 %v4440, %v4436
        %v4903 = vpack.c.bf16 %v4442, %v4438
        %v4904 = vpack.c.bf16 %v4450, %v4446
        %v4905 = vpack.c.bf16 %v4452, %v4448
        %v4906 = vpack.c.bf16 %v4460, %v4456
        %v4907 = vpack.c.bf16 %v4462, %v4458
        %v4908 = vlaneseq
        %v4909 = vshrl.u32 %v4908, 7
        %v4910 = vsub.s32 2, %v4909
        %v4911 = vrot.slane %v611, %v4910
        %v4912 = vlaneseq
        %v4913 = vshrl.u32 %v4912, 7
        %v4914 = vsub.s32 2, %v4913
        %v4915 = vrot.slane %v612, %v4914
        %4916 = vmatprep.subr.bf16.mxu0 %v4907
        %4917 = vmatpush1.bf16.msra.mxu0 %v4906
        %4918 = vmatprep.subr.bf16.mxu0 %v4905
        %4919 = vmatpush1.bf16.msra.mxu0 %v4904
        %4920 = vmatprep.subr.bf16.mxu0 %v4903
        %4921 = vmatpush1.bf16.msra.mxu0 %v4902
        %4922 = vmatprep.subr.bf16.mxu0 %v4901
        %4923 = vmatpush1.bf16.msra.mxu0 %v4900
        %4924 = vmatprep.subr.bf16.mxu0 %v4899
        %4925 = vmatpush1.bf16.msra.mxu0 %v4898
        %4926 = vmatprep.subr.bf16.mxu0 %v4897
        %4927 = vmatpush1.bf16.msra.mxu0 %v4896
        %4928 = vmatprep.subr.bf16.mxu0 %v4895
        %4929 = vmatpush1.bf16.msra.mxu0 %v4894
        %4930 = vmatprep.subr.bf16.mxu0 %v4893
        %4931 = vmatpush1.bf16.msra.mxu0 %v4892
        %4932 = vmatprep.subr.bf16.mxu0 0
        %4933 = vmatpush2.bf16.msra.mxu0 0
        %4934 = vmatprep.subr.bf16.mxu0 0
        %4935 = vmatpush2.bf16.msra.mxu0 0
        %4936 = vmatprep.subr.bf16.mxu0 0
        %4937 = vmatpush2.bf16.msra.mxu0 0
        %4938 = vmatprep.subr.bf16.mxu0 0
        %4939 = vmatpush2.bf16.msra.mxu0 0
        %4940 = vmatprep.subr.bf16.mxu0 0
        %4941 = vmatpush2.bf16.msra.mxu0 0
        %4942 = vmatprep.subr.bf16.mxu0 0
        %4943 = vmatpush2.bf16.msra.mxu0 0
        %4944 = vmatprep.subr.bf16.mxu0 0
        %4945 = vmatpush2.bf16.msra.mxu0 0
        %4946 = vmatprep.subr.bf16.mxu0 0
        %4947 = vmatpush2.bf16.msra.mxu0 0
        %4948 = vmatprep.mubr.bf16.mxu0 0
        %4949 = vmatmul.mubr.bf16.gmra.mxu0 %v4884
        %v4950 = vpop.f32.mrf.mxu0
        %v4951 = vadd.f32 %v4911, %v4950
        %v4952 = vpop.f32.mrf.mxu0
        %v4953 = vadd.f32 %v4915, %v4952
        %v4954 = vpop.f32.mrf.mxu0
        %v4955 = vadd.f32 %v4911, %v4954
        %v4956 = vpop.f32.mrf.mxu0
        %v4957 = vadd.f32 %v4915, %v4956
        %4958 = vmatprep.mubr.bf16.mxu0 0
        %4959 = vmatmul.mubr.bf16.gmra.mxu0 %v4885
        %v4960 = vpop.f32.mrf.mxu0
        %v4961 = vadd.f32 %v4911, %v4960
        %v4962 = vpop.f32.mrf.mxu0
        %v4963 = vadd.f32 %v4915, %v4962
        %v4964 = vpop.f32.mrf.mxu0
        %v4965 = vadd.f32 %v4911, %v4964
        %v4966 = vpop.f32.mrf.mxu0
        %v4967 = vadd.f32 %v4915, %v4966
        %4968 = vmatprep.mubr.bf16.mxu0 0
        %4969 = vmatmul.mubr.bf16.gmra.mxu0 %v4886
        %v4970 = vpop.f32.mrf.mxu0
        %v4971 = vadd.f32 %v4911, %v4970
        %v4972 = vpop.f32.mrf.mxu0
        %v4973 = vadd.f32 %v4915, %v4972
        %v4974 = vpop.f32.mrf.mxu0
        %v4975 = vadd.f32 %v4911, %v4974
        %v4976 = vpop.f32.mrf.mxu0
        %v4977 = vadd.f32 %v4915, %v4976
        %4978 = vmatprep.mubr.bf16.mxu0 0
        %4979 = vmatmul.mubr.bf16.gmra.mxu0 %v4887
        %v4980 = vpop.f32.mrf.mxu0
        %v4981 = vadd.f32 %v4911, %v4980
        %v4982 = vpop.f32.mrf.mxu0
        %v4983 = vadd.f32 %v4915, %v4982
        %v4984 = vpop.f32.mrf.mxu0
        %v4985 = vadd.f32 %v4911, %v4984
        %v4986 = vpop.f32.mrf.mxu0
        %v4987 = vadd.f32 %v4915, %v4986
        %4988 = vmatprep.mubr.bf16.mxu0 0
        %4989 = vmatmul.mubr.bf16.gmra.mxu0 %v4888
        %v4990 = vpop.f32.mrf.mxu0
        %v4991 = vadd.f32 %v4911, %v4990
        %v4992 = vpop.f32.mrf.mxu0
        %v4993 = vadd.f32 %v4915, %v4992
        %v4994 = vpop.f32.mrf.mxu0
        %v4995 = vadd.f32 %v4911, %v4994
        %v4996 = vpop.f32.mrf.mxu0
        %v4997 = vadd.f32 %v4915, %v4996
        %4998 = vmatprep.mubr.bf16.mxu0 0
        %4999 = vmatmul.mubr.bf16.gmra.mxu0 %v4889
        %v5000 = vpop.f32.mrf.mxu0
        %v5001 = vadd.f32 %v4911, %v5000
        %v5002 = vpop.f32.mrf.mxu0
        %v5003 = vadd.f32 %v4915, %v5002
        %v5004 = vpop.f32.mrf.mxu0
        %v5005 = vadd.f32 %v4911, %v5004
        %v5006 = vpop.f32.mrf.mxu0
        %v5007 = vadd.f32 %v4915, %v5006
        %5008 = vmatprep.mubr.bf16.mxu0 0
        %5009 = vmatmul.mubr.bf16.gmra.mxu0 %v4890
        %v5010 = vpop.f32.mrf.mxu0
        %v5011 = vadd.f32 %v4911, %v5010
        %v5012 = vpop.f32.mrf.mxu0
        %v5013 = vadd.f32 %v4915, %v5012
        %v5014 = vpop.f32.mrf.mxu0
        %v5015 = vadd.f32 %v4911, %v5014
        %v5016 = vpop.f32.mrf.mxu0
        %v5017 = vadd.f32 %v4915, %v5016
        %5018 = vmatprep.mubr.bf16.mxu0 0
        %5019 = vmatmul.mubr.bf16.gmra.mxu0 %v4891
        %v5020 = vpop.f32.mrf.mxu0
        %v5021 = vadd.f32 %v4911, %v5020
        %v5022 = vpop.f32.mrf.mxu0
        %v5023 = vadd.f32 %v4915, %v5022
        %v5024 = vpop.f32.mrf.mxu0
        %v5025 = vadd.f32 %v4911, %v5024
        %v5026 = vpop.f32.mrf.mxu0
        %v5027 = vadd.f32 %v4915, %v5026
        %5028 = vdwg.mxu0
        %v5029 = vmul.f32 %v4951, 0.01
        %v5030 = vmul.f32 %v4953, 0.01
        %v5031 = vmul.f32 %v4955, 0.01
        %v5032 = vmul.f32 %v4957, 0.01
        %v5033 = vmul.f32 %v4961, 0.01
        %v5034 = vmul.f32 %v4963, 0.01
        %v5035 = vmul.f32 %v4965, 0.01
        %v5036 = vmul.f32 %v4967, 0.01
        %v5037 = vmul.f32 %v4971, 0.01
        %v5038 = vmul.f32 %v4973, 0.01
        %v5039 = vmul.f32 %v4975, 0.01
        %v5040 = vmul.f32 %v4977, 0.01
        %v5041 = vmul.f32 %v4981, 0.01
        %v5042 = vmul.f32 %v4983, 0.01
        %v5043 = vmul.f32 %v4985, 0.01
        %v5044 = vmul.f32 %v4987, 0.01
        %v5045 = vmul.f32 %v4991, 0.01
        %v5046 = vmul.f32 %v4993, 0.01
        %v5047 = vmul.f32 %v4995, 0.01
        %v5048 = vmul.f32 %v4997, 0.01
        %v5049 = vmul.f32 %v5001, 0.01
        %v5050 = vmul.f32 %v5003, 0.01
        %v5051 = vmul.f32 %v5005, 0.01
        %v5052 = vmul.f32 %v5007, 0.01
        %v5053 = vmul.f32 %v5011, 0.01
        %v5054 = vmul.f32 %v5013, 0.01
        %v5055 = vmul.f32 %v5015, 0.01
        %v5056 = vmul.f32 %v5017, 0.01
        %v5057 = vmul.f32 %v5021, 0.01
        %v5058 = vmul.f32 %v5023, 0.01
        %v5059 = vmul.f32 %v5025, 0.01
        %v5060 = vmul.f32 %v5027, 0.01
        %v5061 = vmax.f32 %v4951, %v5029
        %v5062 = vmax.f32 %v4953, %v5030
        %v5063 = vmax.f32 %v4955, %v5031
        %v5064 = vmax.f32 %v4957, %v5032
        %v5065 = vmax.f32 %v4961, %v5033
        %v5066 = vmax.f32 %v4963, %v5034
        %v5067 = vmax.f32 %v4965, %v5035
        %v5068 = vmax.f32 %v4967, %v5036
        %v5069 = vmax.f32 %v4971, %v5037
        %v5070 = vmax.f32 %v4973, %v5038
        %v5071 = vmax.f32 %v4975, %v5039
        %v5072 = vmax.f32 %v4977, %v5040
        %v5073 = vmax.f32 %v4981, %v5041
        %v5074 = vmax.f32 %v4983, %v5042
        %v5075 = vmax.f32 %v4985, %v5043
        %v5076 = vmax.f32 %v4987, %v5044
        %v5077 = vmax.f32 %v4991, %v5045
        %v5078 = vmax.f32 %v4993, %v5046
        %v5079 = vmax.f32 %v4995, %v5047
        %v5080 = vmax.f32 %v4997, %v5048
        %v5081 = vmax.f32 %v5001, %v5049
        %v5082 = vmax.f32 %v5003, %v5050
        %v5083 = vmax.f32 %v5005, %v5051
        %v5084 = vmax.f32 %v5007, %v5052
        %v5085 = vmax.f32 %v5011, %v5053
        %v5086 = vmax.f32 %v5013, %v5054
        %v5087 = vmax.f32 %v5015, %v5055
        %v5088 = vmax.f32 %v5017, %v5056
        %v5089 = vmax.f32 %v5021, %v5057
        %v5090 = vmax.f32 %v5023, %v5058
        %v5091 = vmax.f32 %v5025, %v5059
        %v5092 = vmax.f32 %v5027, %v5060
        %v5093 = vlaneseq
        %v5094 = vshrl.u32 %v5093, 7
        %v5095 = vsub.s32 3, %v5094
        %v5096 = vrot.slane %v611, %v5095
        %v5097 = vlaneseq
        %v5098 = vshrl.u32 %v5097, 7
        %v5099 = vsub.s32 3, %v5098
        %v5100 = vrot.slane %v612, %v5099
        %v5101 = vmul.f32 %v5061, %v5096
        %v5102 = vmul.f32 %v5062, %v5100
        %v5103 = vmul.f32 %v5063, %v5096
        %v5104 = vmul.f32 %v5064, %v5100
        %v5105 = vmul.f32 %v5065, %v5096
        %v5106 = vmul.f32 %v5066, %v5100
        %v5107 = vmul.f32 %v5067, %v5096
        %v5108 = vmul.f32 %v5068, %v5100
        %v5109 = vmul.f32 %v5069, %v5096
        %v5110 = vmul.f32 %v5070, %v5100
        %v5111 = vmul.f32 %v5071, %v5096
        %v5112 = vmul.f32 %v5072, %v5100
        %v5113 = vmul.f32 %v5073, %v5096
        %v5114 = vmul.f32 %v5074, %v5100
        %v5115 = vmul.f32 %v5075, %v5096
        %v5116 = vmul.f32 %v5076, %v5100
        %v5117 = vmul.f32 %v5077, %v5096
        %v5118 = vmul.f32 %v5078, %v5100
        %v5119 = vmul.f32 %v5079, %v5096
        %v5120 = vmul.f32 %v5080, %v5100
        %v5121 = vmul.f32 %v5081, %v5096
        %v5122 = vmul.f32 %v5082, %v5100
        %v5123 = vmul.f32 %v5083, %v5096
        %v5124 = vmul.f32 %v5084, %v5100
        %v5125 = vmul.f32 %v5085, %v5096
        %v5126 = vmul.f32 %v5086, %v5100
        %v5127 = vmul.f32 %v5087, %v5096
        %v5128 = vmul.f32 %v5088, %v5100
        %v5129 = vmul.f32 %v5089, %v5096
        %v5130 = vmul.f32 %v5090, %v5100
        %v5131 = vmul.f32 %v5091, %v5096
        %v5132 = vmul.f32 %v5092, %v5100
        %v5133 = vlaneseq
        %v5134 = vshrl.u32 %v5133, 7
        %v5135 = vsub.s32 4, %v5134
        %v5136 = vrot.slane %v611, %v5135
        %v5137 = vlaneseq
        %v5138 = vshrl.u32 %v5137, 7
        %v5139 = vsub.s32 4, %v5138
        %v5140 = vrot.slane %v612, %v5139
        %v5141 = vadd.f32 %v5101, %v5136
        %v5142 = vadd.f32 %v5102, %v5140
        %v5143 = vadd.f32 %v5103, %v5136
        %v5144 = vadd.f32 %v5104, %v5140
        %v5145 = vadd.f32 %v5105, %v5136
        %v5146 = vadd.f32 %v5106, %v5140
        %v5147 = vadd.f32 %v5107, %v5136
        %v5148 = vadd.f32 %v5108, %v5140
        %v5149 = vadd.f32 %v5109, %v5136
        %v5150 = vadd.f32 %v5110, %v5140
        %v5151 = vadd.f32 %v5111, %v5136
        %v5152 = vadd.f32 %v5112, %v5140
        %v5153 = vadd.f32 %v5113, %v5136
        %v5154 = vadd.f32 %v5114, %v5140
        %v5155 = vadd.f32 %v5115, %v5136
        %v5156 = vadd.f32 %v5116, %v5140
        %v5157 = vadd.f32 %v5117, %v5136
        %v5158 = vadd.f32 %v5118, %v5140
        %v5159 = vadd.f32 %v5119, %v5136
        %v5160 = vadd.f32 %v5120, %v5140
        %v5161 = vadd.f32 %v5121, %v5136
        %v5162 = vadd.f32 %v5122, %v5140
        %v5163 = vadd.f32 %v5123, %v5136
        %v5164 = vadd.f32 %v5124, %v5140
        %v5165 = vadd.f32 %v5125, %v5136
        %v5166 = vadd.f32 %v5126, %v5140
        %v5167 = vadd.f32 %v5127, %v5136
        %v5168 = vadd.f32 %v5128, %v5140
        %v5169 = vadd.f32 %v5129, %v5136
        %v5170 = vadd.f32 %v5130, %v5140
        %v5171 = vadd.f32 %v5131, %v5136
        %v5172 = vadd.f32 %v5132, %v5140
        %s5173 = scalar_lea.vmem %s516, 512 [#allocation2]
        %v5174 = vld [vmem:[%s5173] sm:$0xff]
        %v5175 = vld [vmem:[%s5173 + $0x8] sm:$0xff]
        %v5176 = vld [vmem:[%s5173 + $0x10] sm:$0xff]
        %v5177 = vld [vmem:[%s5173 + $0x18] sm:$0xff]
        %v5178 = vld [vmem:[%s5173 + $0x20] sm:$0xff]
        %v5179 = vld [vmem:[%s5173 + $0x28] sm:$0xff]
        %v5180 = vld [vmem:[%s5173 + $0x30] sm:$0xff]
        %v5181 = vld [vmem:[%s5173 + $0x38] sm:$0xff]
        %v5182 = vld [vmem:[%s5173 + $0x40] sm:$0xff]
        %v5183 = vld [vmem:[%s5173 + $0x48] sm:$0xff]
        %v5184 = vld [vmem:[%s5173 + $0x50] sm:$0xff]
        %v5185 = vld [vmem:[%s5173 + $0x58] sm:$0xff]
        %v5186 = vld [vmem:[%s5173 + $0x60] sm:$0xff]
        %v5187 = vld [vmem:[%s5173 + $0x68] sm:$0xff]
        %v5188 = vld [vmem:[%s5173 + $0x70] sm:$0xff]
        %v5189 = vld [vmem:[%s5173 + $0x78] sm:$0xff]
        %v5190 = vpack.c.bf16 %v5143, %v5141
        %v5191 = vpack.c.bf16 %v5144, %v5142
        %v5192 = vpack.c.bf16 %v5147, %v5145
        %v5193 = vpack.c.bf16 %v5148, %v5146
        %v5194 = vpack.c.bf16 %v5151, %v5149
        %v5195 = vpack.c.bf16 %v5152, %v5150
        %v5196 = vpack.c.bf16 %v5155, %v5153
        %v5197 = vpack.c.bf16 %v5156, %v5154
        %v5198 = vpack.c.bf16 %v5159, %v5157
        %v5199 = vpack.c.bf16 %v5160, %v5158
        %v5200 = vpack.c.bf16 %v5163, %v5161
        %v5201 = vpack.c.bf16 %v5164, %v5162
        %v5202 = vpack.c.bf16 %v5167, %v5165
        %v5203 = vpack.c.bf16 %v5168, %v5166
        %v5204 = vpack.c.bf16 %v5171, %v5169
        %v5205 = vpack.c.bf16 %v5172, %v5170
        %v5206 = vld [vmem:[#allocation10] sm:$0xff]
        %v5207 = vld [vmem:[#allocation10 + $0x8] sm:$0xff]
        %v5208 = vld [vmem:[#allocation10 + $0x10] sm:$0xff]
        %v5209 = vld [vmem:[#allocation10 + $0x18] sm:$0xff]
        %v5210 = vld [vmem:[#allocation10 + $0x20] sm:$0xff]
        %v5211 = vld [vmem:[#allocation10 + $0x28] sm:$0xff]
        %v5212 = vld [vmem:[#allocation10 + $0x30] sm:$0xff]
        %v5213 = vld [vmem:[#allocation10 + $0x38] sm:$0xff]
        %v5214 = vld [vmem:[#allocation10 + $0x40] sm:$0xff]
        %v5215 = vld [vmem:[#allocation10 + $0x48] sm:$0xff]
        %v5216 = vld [vmem:[#allocation10 + $0x50] sm:$0xff]
        %v5217 = vld [vmem:[#allocation10 + $0x58] sm:$0xff]
        %v5218 = vld [vmem:[#allocation10 + $0x60] sm:$0xff]
        %v5219 = vld [vmem:[#allocation10 + $0x68] sm:$0xff]
        %v5220 = vld [vmem:[#allocation10 + $0x70] sm:$0xff]
        %v5221 = vld [vmem:[#allocation10 + $0x78] sm:$0xff]
        %v5222 = vld [vmem:[#allocation10 + $0x80] sm:$0xff]
        %v5223 = vld [vmem:[#allocation10 + $0x88] sm:$0xff]
        %v5224 = vld [vmem:[#allocation10 + $0x90] sm:$0xff]
        %v5225 = vld [vmem:[#allocation10 + $0x98] sm:$0xff]
        %v5226 = vld [vmem:[#allocation10 + $0xa0] sm:$0xff]
        %v5227 = vld [vmem:[#allocation10 + $0xa8] sm:$0xff]
        %v5228 = vld [vmem:[#allocation10 + $0xb0] sm:$0xff]
        %v5229 = vld [vmem:[#allocation10 + $0xb8] sm:$0xff]
        %v5230 = vld [vmem:[#allocation10 + $0xc0] sm:$0xff]
        %v5231 = vld [vmem:[#allocation10 + $0xc8] sm:$0xff]
        %v5232 = vld [vmem:[#allocation10 + $0xd0] sm:$0xff]
        %v5233 = vld [vmem:[#allocation10 + $0xd8] sm:$0xff]
        %v5234 = vld [vmem:[#allocation10 + $0xe0] sm:$0xff]
        %v5235 = vld [vmem:[#allocation10 + $0xe8] sm:$0xff]
        %v5236 = vld [vmem:[#allocation10 + $0xf0] sm:$0xff]
        %v5237 = vld [vmem:[#allocation10 + $0xf8] sm:$0xff]
        %v5238 = vld [vmem:[#allocation10 + $0x100] sm:$0xff]
        %v5239 = vld [vmem:[#allocation10 + $0x108] sm:$0xff]
        %v5240 = vld [vmem:[#allocation10 + $0x110] sm:$0xff]
        %v5241 = vld [vmem:[#allocation10 + $0x118] sm:$0xff]
        %v5242 = vld [vmem:[#allocation10 + $0x120] sm:$0xff]
        %v5243 = vld [vmem:[#allocation10 + $0x128] sm:$0xff]
        %v5244 = vld [vmem:[#allocation10 + $0x130] sm:$0xff]
        %v5245 = vld [vmem:[#allocation10 + $0x138] sm:$0xff]
        %v5246 = vld [vmem:[#allocation10 + $0x140] sm:$0xff]
        %v5247 = vld [vmem:[#allocation10 + $0x148] sm:$0xff]
        %v5248 = vld [vmem:[#allocation10 + $0x150] sm:$0xff]
        %v5249 = vld [vmem:[#allocation10 + $0x158] sm:$0xff]
        %v5250 = vld [vmem:[#allocation10 + $0x160] sm:$0xff]
        %v5251 = vld [vmem:[#allocation10 + $0x168] sm:$0xff]
        %v5252 = vld [vmem:[#allocation10 + $0x170] sm:$0xff]
        %v5253 = vld [vmem:[#allocation10 + $0x178] sm:$0xff]
        %v5254 = vld [vmem:[#allocation10 + $0x180] sm:$0xff]
        %v5255 = vld [vmem:[#allocation10 + $0x188] sm:$0xff]
        %v5256 = vld [vmem:[#allocation10 + $0x190] sm:$0xff]
        %v5257 = vld [vmem:[#allocation10 + $0x198] sm:$0xff]
        %v5258 = vld [vmem:[#allocation10 + $0x1a0] sm:$0xff]
        %v5259 = vld [vmem:[#allocation10 + $0x1a8] sm:$0xff]
        %v5260 = vld [vmem:[#allocation10 + $0x1b0] sm:$0xff]
        %v5261 = vld [vmem:[#allocation10 + $0x1b8] sm:$0xff]
        %v5262 = vld [vmem:[#allocation10 + $0x1c0] sm:$0xff]
        %v5263 = vld [vmem:[#allocation10 + $0x1c8] sm:$0xff]
        %v5264 = vld [vmem:[#allocation10 + $0x1d0] sm:$0xff]
        %v5265 = vld [vmem:[#allocation10 + $0x1d8] sm:$0xff]
        %v5266 = vld [vmem:[#allocation10 + $0x1e0] sm:$0xff]
        %v5267 = vld [vmem:[#allocation10 + $0x1e8] sm:$0xff]
        %v5268 = vld [vmem:[#allocation10 + $0x1f0] sm:$0xff]
        %v5269 = vld [vmem:[#allocation10 + $0x1f8] sm:$0xff]
        %v5334 = vunpack.c.l.b16 %v5206
        %v5335 = vunpack.c.h.b16 %v5206
        %v5336 = vunpack.c.l.b16 %v5207
        %v5337 = vunpack.c.h.b16 %v5207
        %v5338 = vunpack.c.l.b16 %v5208
        %v5339 = vunpack.c.h.b16 %v5208
        %v5340 = vunpack.c.l.b16 %v5209
        %v5341 = vunpack.c.h.b16 %v5209
        %v5342 = vunpack.c.l.b16 %v5210
        %v5343 = vunpack.c.h.b16 %v5210
        %v5344 = vunpack.c.l.b16 %v5211
        %v5345 = vunpack.c.h.b16 %v5211
        %v5346 = vunpack.c.l.b16 %v5212
        %v5347 = vunpack.c.h.b16 %v5212
        %v5348 = vunpack.c.l.b16 %v5213
        %v5349 = vunpack.c.h.b16 %v5213
        %v5350 = vunpack.c.l.b16 %v5214
        %v5351 = vunpack.c.h.b16 %v5214
        %v5352 = vunpack.c.l.b16 %v5215
        %v5353 = vunpack.c.h.b16 %v5215
        %v5354 = vunpack.c.l.b16 %v5216
        %v5355 = vunpack.c.h.b16 %v5216
        %v5356 = vunpack.c.l.b16 %v5217
        %v5357 = vunpack.c.h.b16 %v5217
        %v5358 = vunpack.c.l.b16 %v5218
        %v5359 = vunpack.c.h.b16 %v5218
        %v5360 = vunpack.c.l.b16 %v5219
        %v5361 = vunpack.c.h.b16 %v5219
        %v5362 = vunpack.c.l.b16 %v5220
        %v5363 = vunpack.c.h.b16 %v5220
        %v5364 = vunpack.c.l.b16 %v5221
        %v5365 = vunpack.c.h.b16 %v5221
        %v5366 = vunpack.c.l.b16 %v5222
        %v5367 = vunpack.c.h.b16 %v5222
        %v5368 = vunpack.c.l.b16 %v5223
        %v5369 = vunpack.c.h.b16 %v5223
        %v5370 = vunpack.c.l.b16 %v5224
        %v5371 = vunpack.c.h.b16 %v5224
        %v5372 = vunpack.c.l.b16 %v5225
        %v5373 = vunpack.c.h.b16 %v5225
        %v5374 = vunpack.c.l.b16 %v5226
        %v5375 = vunpack.c.h.b16 %v5226
        %v5376 = vunpack.c.l.b16 %v5227
        %v5377 = vunpack.c.h.b16 %v5227
        %v5378 = vunpack.c.l.b16 %v5228
        %v5379 = vunpack.c.h.b16 %v5228
        %v5380 = vunpack.c.l.b16 %v5229
        %v5381 = vunpack.c.h.b16 %v5229
        %v5382 = vunpack.c.l.b16 %v5230
        %v5383 = vunpack.c.h.b16 %v5230
        %v5384 = vunpack.c.l.b16 %v5231
        %v5385 = vunpack.c.h.b16 %v5231
        %v5386 = vunpack.c.l.b16 %v5232
        %v5387 = vunpack.c.h.b16 %v5232
        %v5388 = vunpack.c.l.b16 %v5233
        %v5389 = vunpack.c.h.b16 %v5233
        %v5390 = vunpack.c.l.b16 %v5234
        %v5391 = vunpack.c.h.b16 %v5234
        %v5392 = vunpack.c.l.b16 %v5235
        %v5393 = vunpack.c.h.b16 %v5235
        %v5394 = vunpack.c.l.b16 %v5236
        %v5395 = vunpack.c.h.b16 %v5236
        %v5396 = vunpack.c.l.b16 %v5237
        %v5397 = vunpack.c.h.b16 %v5237
        %v5398 = vunpack.c.l.b16 %v5238
        %v5399 = vunpack.c.h.b16 %v5238
        %v5400 = vunpack.c.l.b16 %v5239
        %v5401 = vunpack.c.h.b16 %v5239
        %v5402 = vunpack.c.l.b16 %v5240
        %v5403 = vunpack.c.h.b16 %v5240
        %v5404 = vunpack.c.l.b16 %v5241
        %v5405 = vunpack.c.h.b16 %v5241
        %v5406 = vunpack.c.l.b16 %v5242
        %v5407 = vunpack.c.h.b16 %v5242
        %v5408 = vunpack.c.l.b16 %v5243
        %v5409 = vunpack.c.h.b16 %v5243
        %v5410 = vunpack.c.l.b16 %v5244
        %v5411 = vunpack.c.h.b16 %v5244
        %v5412 = vunpack.c.l.b16 %v5245
        %v5413 = vunpack.c.h.b16 %v5245
        %v5414 = vunpack.c.l.b16 %v5246
        %v5415 = vunpack.c.h.b16 %v5246
        %v5416 = vunpack.c.l.b16 %v5247
        %v5417 = vunpack.c.h.b16 %v5247
        %v5418 = vunpack.c.l.b16 %v5248
        %v5419 = vunpack.c.h.b16 %v5248
        %v5420 = vunpack.c.l.b16 %v5249
        %v5421 = vunpack.c.h.b16 %v5249
        %v5422 = vunpack.c.l.b16 %v5250
        %v5423 = vunpack.c.h.b16 %v5250
        %v5424 = vunpack.c.l.b16 %v5251
        %v5425 = vunpack.c.h.b16 %v5251
        %v5426 = vunpack.c.l.b16 %v5252
        %v5427 = vunpack.c.h.b16 %v5252
        %v5428 = vunpack.c.l.b16 %v5253
        %v5429 = vunpack.c.h.b16 %v5253
        %v5430 = vunpack.c.l.b16 %v5254
        %v5431 = vunpack.c.h.b16 %v5254
        %v5432 = vunpack.c.l.b16 %v5255
        %v5433 = vunpack.c.h.b16 %v5255
        %v5434 = vunpack.c.l.b16 %v5256
        %v5435 = vunpack.c.h.b16 %v5256
        %v5436 = vunpack.c.l.b16 %v5257
        %v5437 = vunpack.c.h.b16 %v5257
        %v5438 = vunpack.c.l.b16 %v5258
        %v5439 = vunpack.c.h.b16 %v5258
        %v5440 = vunpack.c.l.b16 %v5259
        %v5441 = vunpack.c.h.b16 %v5259
        %v5442 = vunpack.c.l.b16 %v5260
        %v5443 = vunpack.c.h.b16 %v5260
        %v5444 = vunpack.c.l.b16 %v5261
        %v5445 = vunpack.c.h.b16 %v5261
        %v5446 = vunpack.c.l.b16 %v5262
        %v5447 = vunpack.c.h.b16 %v5262
        %v5448 = vunpack.c.l.b16 %v5263
        %v5449 = vunpack.c.h.b16 %v5263
        %v5450 = vunpack.c.l.b16 %v5264
        %v5451 = vunpack.c.h.b16 %v5264
        %v5452 = vunpack.c.l.b16 %v5265
        %v5453 = vunpack.c.h.b16 %v5265
        %v5454 = vunpack.c.l.b16 %v5266
        %v5455 = vunpack.c.h.b16 %v5266
        %v5456 = vunpack.c.l.b16 %v5267
        %v5457 = vunpack.c.h.b16 %v5267
        %v5458 = vunpack.c.l.b16 %v5268
        %v5459 = vunpack.c.h.b16 %v5268
        %v5460 = vunpack.c.l.b16 %v5269
        %v5461 = vunpack.c.h.b16 %v5269
        %v5462 = vpack.c.b16 %v5338, %v5334
        %v5463 = vpack.c.b16 %v5339, %v5335
        %v5464 = vpack.c.b16 %v5340, %v5336
        %v5465 = vpack.c.b16 %v5341, %v5337
        %v5466 = vpack.c.b16 %v5346, %v5342
        %v5467 = vpack.c.b16 %v5347, %v5343
        %v5468 = vpack.c.b16 %v5348, %v5344
        %v5469 = vpack.c.b16 %v5349, %v5345
        %v5470 = vpack.c.b16 %v5354, %v5350
        %v5471 = vpack.c.b16 %v5355, %v5351
        %v5472 = vpack.c.b16 %v5356, %v5352
        %v5473 = vpack.c.b16 %v5357, %v5353
        %v5474 = vpack.c.b16 %v5362, %v5358
        %v5475 = vpack.c.b16 %v5363, %v5359
        %v5476 = vpack.c.b16 %v5364, %v5360
        %v5477 = vpack.c.b16 %v5365, %v5361
        %v5478 = vpack.c.b16 %v5370, %v5366
        %v5479 = vpack.c.b16 %v5371, %v5367
        %v5480 = vpack.c.b16 %v5372, %v5368
        %v5481 = vpack.c.b16 %v5373, %v5369
        %v5482 = vpack.c.b16 %v5378, %v5374
        %v5483 = vpack.c.b16 %v5379, %v5375
        %v5484 = vpack.c.b16 %v5380, %v5376
        %v5485 = vpack.c.b16 %v5381, %v5377
        %v5486 = vpack.c.b16 %v5386, %v5382
        %v5487 = vpack.c.b16 %v5387, %v5383
        %v5488 = vpack.c.b16 %v5388, %v5384
        %v5489 = vpack.c.b16 %v5389, %v5385
        %v5490 = vpack.c.b16 %v5394, %v5390
        %v5491 = vpack.c.b16 %v5395, %v5391
        %v5492 = vpack.c.b16 %v5396, %v5392
        %v5493 = vpack.c.b16 %v5397, %v5393
        %v5494 = vpack.c.b16 %v5402, %v5398
        %v5495 = vpack.c.b16 %v5403, %v5399
        %v5496 = vpack.c.b16 %v5404, %v5400
        %v5497 = vpack.c.b16 %v5405, %v5401
        %v5498 = vpack.c.b16 %v5410, %v5406
        %v5499 = vpack.c.b16 %v5411, %v5407
        %v5500 = vpack.c.b16 %v5412, %v5408
        %v5501 = vpack.c.b16 %v5413, %v5409
        %v5502 = vpack.c.b16 %v5418, %v5414
        %v5503 = vpack.c.b16 %v5419, %v5415
        %v5504 = vpack.c.b16 %v5420, %v5416
        %v5505 = vpack.c.b16 %v5421, %v5417
        %v5506 = vpack.c.b16 %v5426, %v5422
        %v5507 = vpack.c.b16 %v5427, %v5423
        %v5508 = vpack.c.b16 %v5428, %v5424
        %v5509 = vpack.c.b16 %v5429, %v5425
        %v5510 = vpack.c.b16 %v5434, %v5430
        %v5511 = vpack.c.b16 %v5435, %v5431
        %v5512 = vpack.c.b16 %v5436, %v5432
        %v5513 = vpack.c.b16 %v5437, %v5433
        %v5514 = vpack.c.b16 %v5442, %v5438
        %v5515 = vpack.c.b16 %v5443, %v5439
        %v5516 = vpack.c.b16 %v5444, %v5440
        %v5517 = vpack.c.b16 %v5445, %v5441
        %v5518 = vpack.c.b16 %v5450, %v5446
        %v5519 = vpack.c.b16 %v5451, %v5447
        %v5520 = vpack.c.b16 %v5452, %v5448
        %v5521 = vpack.c.b16 %v5453, %v5449
        %v5522 = vpack.c.b16 %v5458, %v5454
        %v5523 = vpack.c.b16 %v5459, %v5455
        %v5524 = vpack.c.b16 %v5460, %v5456
        %v5525 = vpack.c.b16 %v5461, %v5457
        %5590 = vmatprep.subr.bf16.mxu0 %v5491
        %5591 = vmatpush1.bf16.msra.mxu0 %v5490
        %5592 = vmatprep.subr.bf16.mxu0 %v5487
        %5593 = vmatpush1.bf16.msra.mxu0 %v5486
        %5594 = vmatprep.subr.bf16.mxu0 %v5483
        %5595 = vmatpush1.bf16.msra.mxu0 %v5482
        %5596 = vmatprep.subr.bf16.mxu0 %v5479
        %5597 = vmatpush1.bf16.msra.mxu0 %v5478
        %5598 = vmatprep.subr.bf16.mxu0 %v5475
        %5599 = vmatpush1.bf16.msra.mxu0 %v5474
        %5600 = vmatprep.subr.bf16.mxu0 %v5471
        %5601 = vmatpush1.bf16.msra.mxu0 %v5470
        %5602 = vmatprep.subr.bf16.mxu0 %v5467
        %5603 = vmatpush1.bf16.msra.mxu0 %v5466
        %5604 = vmatprep.subr.bf16.mxu0 %v5463
        %5605 = vmatpush1.bf16.msra.mxu0 %v5462
        %5606 = vmatprep.subr.bf16.mxu0 %v5523
        %5607 = vmatpush2.bf16.msra.mxu0 %v5522
        %5608 = vmatprep.subr.bf16.mxu0 %v5519
        %5609 = vmatpush2.bf16.msra.mxu0 %v5518
        %5610 = vmatprep.subr.bf16.mxu0 %v5515
        %5611 = vmatpush2.bf16.msra.mxu0 %v5514
        %5612 = vmatprep.subr.bf16.mxu0 %v5511
        %5613 = vmatpush2.bf16.msra.mxu0 %v5510
        %5614 = vmatprep.subr.bf16.mxu0 %v5507
        %5615 = vmatpush2.bf16.msra.mxu0 %v5506
        %5616 = vmatprep.subr.bf16.mxu0 %v5503
        %5617 = vmatpush2.bf16.msra.mxu0 %v5502
        %5618 = vmatprep.subr.bf16.mxu0 %v5499
        %5619 = vmatpush2.bf16.msra.mxu0 %v5498
        %5620 = vmatprep.subr.bf16.mxu0 %v5495
        %5621 = vmatpush2.bf16.msra.mxu0 %v5494
        %5622 = vmatprep.mubr.bf16.mxu0 %v5191
        %5623 = vmatmul.mubr.bf16.gmra.mxu0 %v5190
        %v5624 = vpop.f32.mrf.mxu0
        %v5625 = vadd.f32 0.0, %v5624
        %v5626 = vpop.f32.mrf.mxu0
        %v5627 = vadd.f32 0.0, %v5626
        %v5628 = vpop.f32.mrf.mxu0
        %v5629 = vadd.f32 0.0, %v5628
        %v5630 = vpop.f32.mrf.mxu0
        %v5631 = vadd.f32 0.0, %v5630
        %5632 = vmatprep.mubr.bf16.mxu0 %v5193
        %5633 = vmatmul.mubr.bf16.gmra.mxu0 %v5192
        %v5634 = vpop.f32.mrf.mxu0
        %v5635 = vadd.f32 0.0, %v5634
        %v5636 = vpop.f32.mrf.mxu0
        %v5637 = vadd.f32 0.0, %v5636
        %v5638 = vpop.f32.mrf.mxu0
        %v5639 = vadd.f32 0.0, %v5638
        %v5640 = vpop.f32.mrf.mxu0
        %v5641 = vadd.f32 0.0, %v5640
        %5642 = vmatprep.mubr.bf16.mxu0 %v5195
        %5643 = vmatmul.mubr.bf16.gmra.mxu0 %v5194
        %v5644 = vpop.f32.mrf.mxu0
        %v5645 = vadd.f32 0.0, %v5644
        %v5646 = vpop.f32.mrf.mxu0
        %v5647 = vadd.f32 0.0, %v5646
        %v5648 = vpop.f32.mrf.mxu0
        %v5649 = vadd.f32 0.0, %v5648
        %v5650 = vpop.f32.mrf.mxu0
        %v5651 = vadd.f32 0.0, %v5650
        %5652 = vmatprep.mubr.bf16.mxu0 %v5197
        %5653 = vmatmul.mubr.bf16.gmra.mxu0 %v5196
        %v5654 = vpop.f32.mrf.mxu0
        %v5655 = vadd.f32 0.0, %v5654
        %v5656 = vpop.f32.mrf.mxu0
        %v5657 = vadd.f32 0.0, %v5656
        %v5658 = vpop.f32.mrf.mxu0
        %v5659 = vadd.f32 0.0, %v5658
        %v5660 = vpop.f32.mrf.mxu0
        %v5661 = vadd.f32 0.0, %v5660
        %5662 = vmatprep.mubr.bf16.mxu0 %v5199
        %5663 = vmatmul.mubr.bf16.gmra.mxu0 %v5198
        %v5664 = vpop.f32.mrf.mxu0
        %v5665 = vadd.f32 0.0, %v5664
        %v5666 = vpop.f32.mrf.mxu0
        %v5667 = vadd.f32 0.0, %v5666
        %v5668 = vpop.f32.mrf.mxu0
        %v5669 = vadd.f32 0.0, %v5668
        %v5670 = vpop.f32.mrf.mxu0
        %v5671 = vadd.f32 0.0, %v5670
        %5672 = vmatprep.mubr.bf16.mxu0 %v5201
        %5673 = vmatmul.mubr.bf16.gmra.mxu0 %v5200
        %v5674 = vpop.f32.mrf.mxu0
        %v5675 = vadd.f32 0.0, %v5674
        %v5676 = vpop.f32.mrf.mxu0
        %v5677 = vadd.f32 0.0, %v5676
        %v5678 = vpop.f32.mrf.mxu0
        %v5679 = vadd.f32 0.0, %v5678
        %v5680 = vpop.f32.mrf.mxu0
        %v5681 = vadd.f32 0.0, %v5680
        %5682 = vmatprep.mubr.bf16.mxu0 %v5203
        %5683 = vmatmul.mubr.bf16.gmra.mxu0 %v5202
        %v5684 = vpop.f32.mrf.mxu0
        %v5685 = vadd.f32 0.0, %v5684
        %v5686 = vpop.f32.mrf.mxu0
        %v5687 = vadd.f32 0.0, %v5686
        %v5688 = vpop.f32.mrf.mxu0
        %v5689 = vadd.f32 0.0, %v5688
        %v5690 = vpop.f32.mrf.mxu0
        %v5691 = vadd.f32 0.0, %v5690
        %5692 = vmatprep.mubr.bf16.mxu0 %v5205
        %5693 = vmatmul.mubr.bf16.gmra.mxu0 %v5204
        %v5694 = vpop.f32.mrf.mxu0
        %v5695 = vadd.f32 0.0, %v5694
        %v5696 = vpop.f32.mrf.mxu0
        %v5697 = vadd.f32 0.0, %v5696
        %v5698 = vpop.f32.mrf.mxu0
        %v5699 = vadd.f32 0.0, %v5698
        %v5700 = vpop.f32.mrf.mxu0
        %v5701 = vadd.f32 0.0, %v5700
        %5702 = vdwg.mxu0
        %5703 = vmatprep.subr.bf16.mxu0 %v5493
        %5704 = vmatpush1.bf16.msra.mxu0 %v5492
        %5705 = vmatprep.subr.bf16.mxu0 %v5489
        %5706 = vmatpush1.bf16.msra.mxu0 %v5488
        %5707 = vmatprep.subr.bf16.mxu0 %v5485
        %5708 = vmatpush1.bf16.msra.mxu0 %v5484
        %5709 = vmatprep.subr.bf16.mxu0 %v5481
        %5710 = vmatpush1.bf16.msra.mxu0 %v5480
        %5711 = vmatprep.subr.bf16.mxu0 %v5477
        %5712 = vmatpush1.bf16.msra.mxu0 %v5476
        %5713 = vmatprep.subr.bf16.mxu0 %v5473
        %5714 = vmatpush1.bf16.msra.mxu0 %v5472
        %5715 = vmatprep.subr.bf16.mxu0 %v5469
        %5716 = vmatpush1.bf16.msra.mxu0 %v5468
        %5717 = vmatprep.subr.bf16.mxu0 %v5465
        %5718 = vmatpush1.bf16.msra.mxu0 %v5464
        %5719 = vmatprep.subr.bf16.mxu0 %v5525
        %5720 = vmatpush2.bf16.msra.mxu0 %v5524
        %5721 = vmatprep.subr.bf16.mxu0 %v5521
        %5722 = vmatpush2.bf16.msra.mxu0 %v5520
        %5723 = vmatprep.subr.bf16.mxu0 %v5517
        %5724 = vmatpush2.bf16.msra.mxu0 %v5516
        %5725 = vmatprep.subr.bf16.mxu0 %v5513
        %5726 = vmatpush2.bf16.msra.mxu0 %v5512
        %5727 = vmatprep.subr.bf16.mxu0 %v5509
        %5728 = vmatpush2.bf16.msra.mxu0 %v5508
        %5729 = vmatprep.subr.bf16.mxu0 %v5505
        %5730 = vmatpush2.bf16.msra.mxu0 %v5504
        %5731 = vmatprep.subr.bf16.mxu0 %v5501
        %5732 = vmatpush2.bf16.msra.mxu0 %v5500
        %5733 = vmatprep.subr.bf16.mxu0 %v5497
        %5734 = vmatpush2.bf16.msra.mxu0 %v5496
        %5735 = vmatprep.mubr.bf16.mxu0 %v5191
        %5736 = vmatmul.mubr.bf16.gmra.mxu0 %v5190
        %v5737 = vpop.f32.mrf.mxu0
        %v5738 = vadd.f32 0.0, %v5737
        %v5739 = vpop.f32.mrf.mxu0
        %v5740 = vadd.f32 0.0, %v5739
        %v5741 = vpop.f32.mrf.mxu0
        %v5742 = vadd.f32 0.0, %v5741
        %v5743 = vpop.f32.mrf.mxu0
        %v5744 = vadd.f32 0.0, %v5743
        %5745 = vmatprep.mubr.bf16.mxu0 %v5193
        %5746 = vmatmul.mubr.bf16.gmra.mxu0 %v5192
        %v5747 = vpop.f32.mrf.mxu0
        %v5748 = vadd.f32 0.0, %v5747
        %v5749 = vpop.f32.mrf.mxu0
        %v5750 = vadd.f32 0.0, %v5749
        %v5751 = vpop.f32.mrf.mxu0
        %v5752 = vadd.f32 0.0, %v5751
        %v5753 = vpop.f32.mrf.mxu0
        %v5754 = vadd.f32 0.0, %v5753
        %5755 = vmatprep.mubr.bf16.mxu0 %v5195
        %5756 = vmatmul.mubr.bf16.gmra.mxu0 %v5194
        %v5757 = vpop.f32.mrf.mxu0
        %v5758 = vadd.f32 0.0, %v5757
        %v5759 = vpop.f32.mrf.mxu0
        %v5760 = vadd.f32 0.0, %v5759
        %v5761 = vpop.f32.mrf.mxu0
        %v5762 = vadd.f32 0.0, %v5761
        %v5763 = vpop.f32.mrf.mxu0
        %v5764 = vadd.f32 0.0, %v5763
        %5765 = vmatprep.mubr.bf16.mxu0 %v5197
        %5766 = vmatmul.mubr.bf16.gmra.mxu0 %v5196
        %v5767 = vpop.f32.mrf.mxu0
        %v5768 = vadd.f32 0.0, %v5767
        %v5769 = vpop.f32.mrf.mxu0
        %v5770 = vadd.f32 0.0, %v5769
        %v5771 = vpop.f32.mrf.mxu0
        %v5772 = vadd.f32 0.0, %v5771
        %v5773 = vpop.f32.mrf.mxu0
        %v5774 = vadd.f32 0.0, %v5773
        %5775 = vmatprep.mubr.bf16.mxu0 %v5199
        %5776 = vmatmul.mubr.bf16.gmra.mxu0 %v5198
        %v5777 = vpop.f32.mrf.mxu0
        %v5778 = vadd.f32 0.0, %v5777
        %v5779 = vpop.f32.mrf.mxu0
        %v5780 = vadd.f32 0.0, %v5779
        %v5781 = vpop.f32.mrf.mxu0
        %v5782 = vadd.f32 0.0, %v5781
        %v5783 = vpop.f32.mrf.mxu0
        %v5784 = vadd.f32 0.0, %v5783
        %5785 = vmatprep.mubr.bf16.mxu0 %v5201
        %5786 = vmatmul.mubr.bf16.gmra.mxu0 %v5200
        %v5787 = vpop.f32.mrf.mxu0
        %v5788 = vadd.f32 0.0, %v5787
        %v5789 = vpop.f32.mrf.mxu0
        %v5790 = vadd.f32 0.0, %v5789
        %v5791 = vpop.f32.mrf.mxu0
        %v5792 = vadd.f32 0.0, %v5791
        %v5793 = vpop.f32.mrf.mxu0
        %v5794 = vadd.f32 0.0, %v5793
        %5795 = vmatprep.mubr.bf16.mxu0 %v5203
        %5796 = vmatmul.mubr.bf16.gmra.mxu0 %v5202
        %v5797 = vpop.f32.mrf.mxu0
        %v5798 = vadd.f32 0.0, %v5797
        %v5799 = vpop.f32.mrf.mxu0
        %v5800 = vadd.f32 0.0, %v5799
        %v5801 = vpop.f32.mrf.mxu0
        %v5802 = vadd.f32 0.0, %v5801
        %v5803 = vpop.f32.mrf.mxu0
        %v5804 = vadd.f32 0.0, %v5803
        %5805 = vmatprep.mubr.bf16.mxu0 %v5205
        %5806 = vmatmul.mubr.bf16.gmra.mxu0 %v5204
        %v5807 = vpop.f32.mrf.mxu0
        %v5808 = vadd.f32 0.0, %v5807
        %v5809 = vpop.f32.mrf.mxu0
        %v5810 = vadd.f32 0.0, %v5809
        %v5811 = vpop.f32.mrf.mxu0
        %v5812 = vadd.f32 0.0, %v5811
        %v5813 = vpop.f32.mrf.mxu0
        %v5814 = vadd.f32 0.0, %v5813
        %5815 = vdwg.mxu0
        %v5816 = vlaneseq
        %v5817 = vshrl.u32 %v5816, 7
        %v5818 = vsub.s32 0, %v5817
        %v5819 = vrot.slane %v613, %v5818
        %v5820 = vlaneseq
        %v5821 = vshrl.u32 %v5820, 7
        %v5822 = vsub.s32 0, %v5821
        %v5823 = vrot.slane %v614, %v5822
        %v5824 = vlaneseq
        %v5825 = vshrl.u32 %v5824, 7
        %v5826 = vsub.s32 0, %v5825
        %v5827 = vrot.slane %v615, %v5826
        %v5828 = vlaneseq
        %v5829 = vshrl.u32 %v5828, 7
        %v5830 = vsub.s32 0, %v5829
        %v5831 = vrot.slane %v616, %v5830
        %v5832 = vmul.f32 %v5625, %v5819
        %v5833 = vmul.f32 %v5627, %v5823
        %v5834 = vmul.f32 %v5738, %v5827
        %v5835 = vmul.f32 %v5740, %v5831
        %v5836 = vmul.f32 %v5629, %v5819
        %v5837 = vmul.f32 %v5631, %v5823
        %v5838 = vmul.f32 %v5742, %v5827
        %v5839 = vmul.f32 %v5744, %v5831
        %v5840 = vmul.f32 %v5635, %v5819
        %v5841 = vmul.f32 %v5637, %v5823
        %v5842 = vmul.f32 %v5748, %v5827
        %v5843 = vmul.f32 %v5750, %v5831
        %v5844 = vmul.f32 %v5639, %v5819
        %v5845 = vmul.f32 %v5641, %v5823
        %v5846 = vmul.f32 %v5752, %v5827
        %v5847 = vmul.f32 %v5754, %v5831
        %v5848 = vmul.f32 %v5645, %v5819
        %v5849 = vmul.f32 %v5647, %v5823
        %v5850 = vmul.f32 %v5758, %v5827
        %v5851 = vmul.f32 %v5760, %v5831
        %v5852 = vmul.f32 %v5649, %v5819
        %v5853 = vmul.f32 %v5651, %v5823
        %v5854 = vmul.f32 %v5762, %v5827
        %v5855 = vmul.f32 %v5764, %v5831
        %v5856 = vmul.f32 %v5655, %v5819
        %v5857 = vmul.f32 %v5657, %v5823
        %v5858 = vmul.f32 %v5768, %v5827
        %v5859 = vmul.f32 %v5770, %v5831
        %v5860 = vmul.f32 %v5659, %v5819
        %v5861 = vmul.f32 %v5661, %v5823
        %v5862 = vmul.f32 %v5772, %v5827
        %v5863 = vmul.f32 %v5774, %v5831
        %v5864 = vmul.f32 %v5665, %v5819
        %v5865 = vmul.f32 %v5667, %v5823
        %v5866 = vmul.f32 %v5778, %v5827
        %v5867 = vmul.f32 %v5780, %v5831
        %v5868 = vmul.f32 %v5669, %v5819
        %v5869 = vmul.f32 %v5671, %v5823
        %v5870 = vmul.f32 %v5782, %v5827
        %v5871 = vmul.f32 %v5784, %v5831
        %v5872 = vmul.f32 %v5675, %v5819
        %v5873 = vmul.f32 %v5677, %v5823
        %v5874 = vmul.f32 %v5788, %v5827
        %v5875 = vmul.f32 %v5790, %v5831
        %v5876 = vmul.f32 %v5679, %v5819
        %v5877 = vmul.f32 %v5681, %v5823
        %v5878 = vmul.f32 %v5792, %v5827
        %v5879 = vmul.f32 %v5794, %v5831
        %v5880 = vmul.f32 %v5685, %v5819
        %v5881 = vmul.f32 %v5687, %v5823
        %v5882 = vmul.f32 %v5798, %v5827
        %v5883 = vmul.f32 %v5800, %v5831
        %v5884 = vmul.f32 %v5689, %v5819
        %v5885 = vmul.f32 %v5691, %v5823
        %v5886 = vmul.f32 %v5802, %v5827
        %v5887 = vmul.f32 %v5804, %v5831
        %v5888 = vmul.f32 %v5695, %v5819
        %v5889 = vmul.f32 %v5697, %v5823
        %v5890 = vmul.f32 %v5808, %v5827
        %v5891 = vmul.f32 %v5810, %v5831
        %v5892 = vmul.f32 %v5699, %v5819
        %v5893 = vmul.f32 %v5701, %v5823
        %v5894 = vmul.f32 %v5812, %v5827
        %v5895 = vmul.f32 %v5814, %v5831
        %v5896 = vadd.f32 %v5832, %v5833
        %v5897 = vadd.f32 %v5896, %v5834
        %v5898 = vadd.f32 %v5897, %v5835
        %5899 = vadd.xlane.f32.xlu0 %v5898
        %v5900 = vpop.xlane.xlu0 %5899
        %v5901 = vadd.f32 %v5836, %v5837
        %v5902 = vadd.f32 %v5901, %v5838
        %v5903 = vadd.f32 %v5902, %v5839
        %5904 = vadd.xlane.f32.xlu0 %v5903
        %v5905 = vpop.xlane.xlu0 %5904
        %v5906 = vadd.f32 %v5840, %v5841
        %v5907 = vadd.f32 %v5906, %v5842
        %v5908 = vadd.f32 %v5907, %v5843
        %5909 = vadd.xlane.f32.xlu0 %v5908
        %v5910 = vpop.xlane.xlu0 %5909
        %v5911 = vadd.f32 %v5844, %v5845
        %v5912 = vadd.f32 %v5911, %v5846
        %v5913 = vadd.f32 %v5912, %v5847
        %5914 = vadd.xlane.f32.xlu0 %v5913
        %v5915 = vpop.xlane.xlu0 %5914
        %v5916 = vadd.f32 %v5848, %v5849
        %v5917 = vadd.f32 %v5916, %v5850
        %v5918 = vadd.f32 %v5917, %v5851
        %5919 = vadd.xlane.f32.xlu0 %v5918
        %v5920 = vpop.xlane.xlu0 %5919
        %v5921 = vadd.f32 %v5852, %v5853
        %v5922 = vadd.f32 %v5921, %v5854
        %v5923 = vadd.f32 %v5922, %v5855
        %5924 = vadd.xlane.f32.xlu0 %v5923
        %v5925 = vpop.xlane.xlu0 %5924
        %v5926 = vadd.f32 %v5856, %v5857
        %v5927 = vadd.f32 %v5926, %v5858
        %v5928 = vadd.f32 %v5927, %v5859
        %5929 = vadd.xlane.f32.xlu0 %v5928
        %v5930 = vpop.xlane.xlu0 %5929
        %v5931 = vadd.f32 %v5860, %v5861
        %v5932 = vadd.f32 %v5931, %v5862
        %v5933 = vadd.f32 %v5932, %v5863
        %5934 = vadd.xlane.f32.xlu0 %v5933
        %v5935 = vpop.xlane.xlu0 %5934
        %v5936 = vadd.f32 %v5864, %v5865
        %v5937 = vadd.f32 %v5936, %v5866
        %v5938 = vadd.f32 %v5937, %v5867
        %5939 = vadd.xlane.f32.xlu0 %v5938
        %v5940 = vpop.xlane.xlu0 %5939
        %v5941 = vadd.f32 %v5868, %v5869
        %v5942 = vadd.f32 %v5941, %v5870
        %v5943 = vadd.f32 %v5942, %v5871
        %5944 = vadd.xlane.f32.xlu0 %v5943
        %v5945 = vpop.xlane.xlu0 %5944
        %v5946 = vadd.f32 %v5872, %v5873
        %v5947 = vadd.f32 %v5946, %v5874
        %v5948 = vadd.f32 %v5947, %v5875
        %5949 = vadd.xlane.f32.xlu0 %v5948
        %v5950 = vpop.xlane.xlu0 %5949
        %v5951 = vadd.f32 %v5876, %v5877
        %v5952 = vadd.f32 %v5951, %v5878
        %v5953 = vadd.f32 %v5952, %v5879
        %5954 = vadd.xlane.f32.xlu0 %v5953
        %v5955 = vpop.xlane.xlu0 %5954
        %v5956 = vadd.f32 %v5880, %v5881
        %v5957 = vadd.f32 %v5956, %v5882
        %v5958 = vadd.f32 %v5957, %v5883
        %5959 = vadd.xlane.f32.xlu0 %v5958
        %v5960 = vpop.xlane.xlu0 %5959
        %v5961 = vadd.f32 %v5884, %v5885
        %v5962 = vadd.f32 %v5961, %v5886
        %v5963 = vadd.f32 %v5962, %v5887
        %5964 = vadd.xlane.f32.xlu0 %v5963
        %v5965 = vpop.xlane.xlu0 %5964
        %v5966 = vadd.f32 %v5888, %v5889
        %v5967 = vadd.f32 %v5966, %v5890
        %v5968 = vadd.f32 %v5967, %v5891
        %5969 = vadd.xlane.f32.xlu0 %v5968
        %v5970 = vpop.xlane.xlu0 %5969
        %v5971 = vadd.f32 %v5892, %v5893
        %v5972 = vadd.f32 %v5971, %v5894
        %v5973 = vadd.f32 %v5972, %v5895
        %5974 = vadd.xlane.f32.xlu0 %v5973
        %v5975 = vpop.xlane.xlu0 %5974
        %v5976 = vlaneseq
        %v5977 = vshrl.u32 %v5976, 7
        %v5978 = vsub.s32 1, %v5977
        %v5979 = vrot.slane %v613, %v5978
        %v5980 = vlaneseq
        %v5981 = vshrl.u32 %v5980, 7
        %v5982 = vsub.s32 1, %v5981
        %v5983 = vrot.slane %v614, %v5982
        %v5984 = vlaneseq
        %v5985 = vshrl.u32 %v5984, 7
        %v5986 = vsub.s32 1, %v5985
        %v5987 = vrot.slane %v615, %v5986
        %v5988 = vlaneseq
        %v5989 = vshrl.u32 %v5988, 7
        %v5990 = vsub.s32 1, %v5989
        %v5991 = vrot.slane %v616, %v5990
        %v5992 = vmul.f32 %v5625, %v5979
        %v5993 = vmul.f32 %v5627, %v5983
        %v5994 = vmul.f32 %v5738, %v5987
        %v5995 = vmul.f32 %v5740, %v5991
        %v5996 = vmul.f32 %v5629, %v5979
        %v5997 = vmul.f32 %v5631, %v5983
        %v5998 = vmul.f32 %v5742, %v5987
        %v5999 = vmul.f32 %v5744, %v5991
        %v6000 = vmul.f32 %v5635, %v5979
        %v6001 = vmul.f32 %v5637, %v5983
        %v6002 = vmul.f32 %v5748, %v5987
        %v6003 = vmul.f32 %v5750, %v5991
        %v6004 = vmul.f32 %v5639, %v5979
        %v6005 = vmul.f32 %v5641, %v5983
        %v6006 = vmul.f32 %v5752, %v5987
        %v6007 = vmul.f32 %v5754, %v5991
        %v6008 = vmul.f32 %v5645, %v5979
        %v6009 = vmul.f32 %v5647, %v5983
        %v6010 = vmul.f32 %v5758, %v5987
        %v6011 = vmul.f32 %v5760, %v5991
        %v6012 = vmul.f32 %v5649, %v5979
        %v6013 = vmul.f32 %v5651, %v5983
        %v6014 = vmul.f32 %v5762, %v5987
        %v6015 = vmul.f32 %v5764, %v5991
        %v6016 = vmul.f32 %v5655, %v5979
        %v6017 = vmul.f32 %v5657, %v5983
        %v6018 = vmul.f32 %v5768, %v5987
        %v6019 = vmul.f32 %v5770, %v5991
        %v6020 = vmul.f32 %v5659, %v5979
        %v6021 = vmul.f32 %v5661, %v5983
        %v6022 = vmul.f32 %v5772, %v5987
        %v6023 = vmul.f32 %v5774, %v5991
        %v6024 = vmul.f32 %v5665, %v5979
        %v6025 = vmul.f32 %v5667, %v5983
        %v6026 = vmul.f32 %v5778, %v5987
        %v6027 = vmul.f32 %v5780, %v5991
        %v6028 = vmul.f32 %v5669, %v5979
        %v6029 = vmul.f32 %v5671, %v5983
        %v6030 = vmul.f32 %v5782, %v5987
        %v6031 = vmul.f32 %v5784, %v5991
        %v6032 = vmul.f32 %v5675, %v5979
        %v6033 = vmul.f32 %v5677, %v5983
        %v6034 = vmul.f32 %v5788, %v5987
        %v6035 = vmul.f32 %v5790, %v5991
        %v6036 = vmul.f32 %v5679, %v5979
        %v6037 = vmul.f32 %v5681, %v5983
        %v6038 = vmul.f32 %v5792, %v5987
        %v6039 = vmul.f32 %v5794, %v5991
        %v6040 = vmul.f32 %v5685, %v5979
        %v6041 = vmul.f32 %v5687, %v5983
        %v6042 = vmul.f32 %v5798, %v5987
        %v6043 = vmul.f32 %v5800, %v5991
        %v6044 = vmul.f32 %v5689, %v5979
        %v6045 = vmul.f32 %v5691, %v5983
        %v6046 = vmul.f32 %v5802, %v5987
        %v6047 = vmul.f32 %v5804, %v5991
        %v6048 = vmul.f32 %v5695, %v5979
        %v6049 = vmul.f32 %v5697, %v5983
        %v6050 = vmul.f32 %v5808, %v5987
        %v6051 = vmul.f32 %v5810, %v5991
        %v6052 = vmul.f32 %v5699, %v5979
        %v6053 = vmul.f32 %v5701, %v5983
        %v6054 = vmul.f32 %v5812, %v5987
        %v6055 = vmul.f32 %v5814, %v5991
        %v6056 = vadd.f32 %v5992, %v5993
        %v6057 = vadd.f32 %v6056, %v5994
        %v6058 = vadd.f32 %v6057, %v5995
        %6059 = vadd.xlane.f32.xlu0 %v6058
        %v6060 = vpop.xlane.xlu0 %6059
        %v6061 = vadd.f32 %v5996, %v5997
        %v6062 = vadd.f32 %v6061, %v5998
        %v6063 = vadd.f32 %v6062, %v5999
        %6064 = vadd.xlane.f32.xlu0 %v6063
        %v6065 = vpop.xlane.xlu0 %6064
        %v6066 = vadd.f32 %v6000, %v6001
        %v6067 = vadd.f32 %v6066, %v6002
        %v6068 = vadd.f32 %v6067, %v6003
        %6069 = vadd.xlane.f32.xlu0 %v6068
        %v6070 = vpop.xlane.xlu0 %6069
        %v6071 = vadd.f32 %v6004, %v6005
        %v6072 = vadd.f32 %v6071, %v6006
        %v6073 = vadd.f32 %v6072, %v6007
        %6074 = vadd.xlane.f32.xlu0 %v6073
        %v6075 = vpop.xlane.xlu0 %6074
        %v6076 = vadd.f32 %v6008, %v6009
        %v6077 = vadd.f32 %v6076, %v6010
        %v6078 = vadd.f32 %v6077, %v6011
        %6079 = vadd.xlane.f32.xlu0 %v6078
        %v6080 = vpop.xlane.xlu0 %6079
        %v6081 = vadd.f32 %v6012, %v6013
        %v6082 = vadd.f32 %v6081, %v6014
        %v6083 = vadd.f32 %v6082, %v6015
        %6084 = vadd.xlane.f32.xlu0 %v6083
        %v6085 = vpop.xlane.xlu0 %6084
        %v6086 = vadd.f32 %v6016, %v6017
        %v6087 = vadd.f32 %v6086, %v6018
        %v6088 = vadd.f32 %v6087, %v6019
        %6089 = vadd.xlane.f32.xlu0 %v6088
        %v6090 = vpop.xlane.xlu0 %6089
        %v6091 = vadd.f32 %v6020, %v6021
        %v6092 = vadd.f32 %v6091, %v6022
        %v6093 = vadd.f32 %v6092, %v6023
        %6094 = vadd.xlane.f32.xlu0 %v6093
        %v6095 = vpop.xlane.xlu0 %6094
        %v6096 = vadd.f32 %v6024, %v6025
        %v6097 = vadd.f32 %v6096, %v6026
        %v6098 = vadd.f32 %v6097, %v6027
        %6099 = vadd.xlane.f32.xlu0 %v6098
        %v6100 = vpop.xlane.xlu0 %6099
        %v6101 = vadd.f32 %v6028, %v6029
        %v6102 = vadd.f32 %v6101, %v6030
        %v6103 = vadd.f32 %v6102, %v6031
        %6104 = vadd.xlane.f32.xlu0 %v6103
        %v6105 = vpop.xlane.xlu0 %6104
        %v6106 = vadd.f32 %v6032, %v6033
        %v6107 = vadd.f32 %v6106, %v6034
        %v6108 = vadd.f32 %v6107, %v6035
        %6109 = vadd.xlane.f32.xlu0 %v6108
        %v6110 = vpop.xlane.xlu0 %6109
        %v6111 = vadd.f32 %v6036, %v6037
        %v6112 = vadd.f32 %v6111, %v6038
        %v6113 = vadd.f32 %v6112, %v6039
        %6114 = vadd.xlane.f32.xlu0 %v6113
        %v6115 = vpop.xlane.xlu0 %6114
        %v6116 = vadd.f32 %v6040, %v6041
        %v6117 = vadd.f32 %v6116, %v6042
        %v6118 = vadd.f32 %v6117, %v6043
        %6119 = vadd.xlane.f32.xlu0 %v6118
        %v6120 = vpop.xlane.xlu0 %6119
        %v6121 = vadd.f32 %v6044, %v6045
        %v6122 = vadd.f32 %v6121, %v6046
        %v6123 = vadd.f32 %v6122, %v6047
        %6124 = vadd.xlane.f32.xlu0 %v6123
        %v6125 = vpop.xlane.xlu0 %6124
        %v6126 = vadd.f32 %v6048, %v6049
        %v6127 = vadd.f32 %v6126, %v6050
        %v6128 = vadd.f32 %v6127, %v6051
        %6129 = vadd.xlane.f32.xlu0 %v6128
        %v6130 = vpop.xlane.xlu0 %6129
        %v6131 = vadd.f32 %v6052, %v6053
        %v6132 = vadd.f32 %v6131, %v6054
        %v6133 = vadd.f32 %v6132, %v6055
        %6134 = vadd.xlane.f32.xlu0 %v6133
        %v6135 = vpop.xlane.xlu0 %6134
        %6136 = vxpose.xlu0.b32.start [1/16] %v5900, 128
        %6137 = vxpose.xlu0.b32.cont [2/16] %v5905, 128
        %6138 = vxpose.xlu0.b32.cont [3/16] %v5910, 128
        %6139 = vxpose.xlu0.b32.cont [4/16] %v5915, 128
        %6140 = vxpose.xlu0.b32.cont [5/16] %v5920, 128
        %6141 = vxpose.xlu0.b32.cont [6/16] %v5925, 128
        %6142 = vxpose.xlu0.b32.cont [7/16] %v5930, 128
        %6143 = vxpose.xlu0.b32.cont [8/16] %v5935, 128
        %6144 = vxpose.xlu0.b32.cont [9/16] %v5940, 128
        %6145 = vxpose.xlu0.b32.cont [10/16] %v5945, 128
        %6146 = vxpose.xlu0.b32.cont [11/16] %v5950, 128
        %6147 = vxpose.xlu0.b32.cont [12/16] %v5955, 128
        %6148 = vxpose.xlu0.b32.cont [13/16] %v5960, 128
        %6149 = vxpose.xlu0.b32.cont [14/16] %v5965, 128
        %6150 = vxpose.xlu0.b32.cont [15/16] %v5970, 128
        %6151 = vxpose.xlu0.b32.end [16/16] %v5975, 128
        %v6152 = vpop.trf.xlu0
        %v6153 = vpop.trf.xlu0
        %v6154 = vpop.trf.xlu0
        %v6155 = vpop.trf.xlu0
        %v6156 = vpop.trf.xlu0
        %v6157 = vpop.trf.xlu0
        %v6158 = vpop.trf.xlu0
        %v6159 = vpop.trf.xlu0
        %v6160 = vpop.trf.xlu0
        %v6161 = vpop.trf.xlu0
        %v6162 = vpop.trf.xlu0
        %v6163 = vpop.trf.xlu0
        %v6164 = vpop.trf.xlu0
        %v6165 = vpop.trf.xlu0
        %v6166 = vpop.trf.xlu0
        %v6167 = vpop.trf.xlu0
        %v6168 = vlaneseq
        %v6169 = vshrl.u32 %v6168, 7
        %v6170 = vsub.s32 0, %v6169
        %v6171 = vrot.slane %v6152, %v6170
        %v6172 = vadd.f32 %v6060, %v6171
        %v6173 = vadd.f32 %v6065, %v6171
        %v6174 = vadd.f32 %v6070, %v6171
        %v6175 = vadd.f32 %v6075, %v6171
        %v6176 = vadd.f32 %v6080, %v6171
        %v6177 = vadd.f32 %v6085, %v6171
        %v6178 = vadd.f32 %v6090, %v6171
        %v6179 = vadd.f32 %v6095, %v6171
        %v6180 = vadd.f32 %v6100, %v6171
        %v6181 = vadd.f32 %v6105, %v6171
        %v6182 = vadd.f32 %v6110, %v6171
        %v6183 = vadd.f32 %v6115, %v6171
        %v6184 = vadd.f32 %v6120, %v6171
        %v6185 = vadd.f32 %v6125, %v6171
        %v6186 = vadd.f32 %v6130, %v6171
        %v6187 = vadd.f32 %v6135, %v6171
        %v6188 = vadd.f32 %v6172, %v5174
        %v6189 = vadd.f32 %v6173, %v5175
        %v6190 = vadd.f32 %v6174, %v5176
        %v6191 = vadd.f32 %v6175, %v5177
        %v6192 = vadd.f32 %v6176, %v5178
        %v6193 = vadd.f32 %v6177, %v5179
        %v6194 = vadd.f32 %v6178, %v5180
        %v6195 = vadd.f32 %v6179, %v5181
        %v6196 = vadd.f32 %v6180, %v5182
        %v6197 = vadd.f32 %v6181, %v5183
        %v6198 = vadd.f32 %v6182, %v5184
        %v6199 = vadd.f32 %v6183, %v5185
        %v6200 = vadd.f32 %v6184, %v5186
        %v6201 = vadd.f32 %v6185, %v5187
        %v6202 = vadd.f32 %v6186, %v5188
        %v6203 = vadd.f32 %v6187, %v5189
        %v6204 = vmul.f32 %v6188, 0.2
        %v6205 = vmul.f32 %v6189, 0.2
        %v6206 = vmul.f32 %v6190, 0.2
        %v6207 = vmul.f32 %v6191, 0.2
        %v6208 = vmul.f32 %v6192, 0.2
        %v6209 = vmul.f32 %v6193, 0.2
        %v6210 = vmul.f32 %v6194, 0.2
        %v6211 = vmul.f32 %v6195, 0.2
        %v6212 = vmul.f32 %v6196, 0.2
        %v6213 = vmul.f32 %v6197, 0.2
        %v6214 = vmul.f32 %v6198, 0.2
        %v6215 = vmul.f32 %v6199, 0.2
        %v6216 = vmul.f32 %v6200, 0.2
        %v6217 = vmul.f32 %v6201, 0.2
        %v6218 = vmul.f32 %v6202, 0.2
        %v6219 = vmul.f32 %v6203, 0.2
        %v6220 = vmax.f32 %v6188, %v6204
        %v6221 = vmax.f32 %v6189, %v6205
        %v6222 = vmax.f32 %v6190, %v6206
        %v6223 = vmax.f32 %v6191, %v6207
        %v6224 = vmax.f32 %v6192, %v6208
        %v6225 = vmax.f32 %v6193, %v6209
        %v6226 = vmax.f32 %v6194, %v6210
        %v6227 = vmax.f32 %v6195, %v6211
        %v6228 = vmax.f32 %v6196, %v6212
        %v6229 = vmax.f32 %v6197, %v6213
        %v6230 = vmax.f32 %v6198, %v6214
        %v6231 = vmax.f32 %v6199, %v6215
        %v6232 = vmax.f32 %v6200, %v6216
        %v6233 = vmax.f32 %v6201, %v6217
        %v6234 = vmax.f32 %v6202, %v6218
        %v6235 = vmax.f32 %v6203, %v6219
        %6236 = vmax.xlane.f32.xlu0 %v6220
        %v6237 = vpop.xlane.xlu0 %6236
        %6238 = vmax.xlane.f32.xlu0 %v6221
        %v6239 = vpop.xlane.xlu0 %6238
        %6240 = vmax.xlane.f32.xlu0 %v6222
        %v6241 = vpop.xlane.xlu0 %6240
        %6242 = vmax.xlane.f32.xlu0 %v6223
        %v6243 = vpop.xlane.xlu0 %6242
        %6244 = vmax.xlane.f32.xlu0 %v6224
        %v6245 = vpop.xlane.xlu0 %6244
        %6246 = vmax.xlane.f32.xlu0 %v6225
        %v6247 = vpop.xlane.xlu0 %6246
        %6248 = vmax.xlane.f32.xlu0 %v6226
        %v6249 = vpop.xlane.xlu0 %6248
        %6250 = vmax.xlane.f32.xlu0 %v6227
        %v6251 = vpop.xlane.xlu0 %6250
        %6252 = vmax.xlane.f32.xlu0 %v6228
        %v6253 = vpop.xlane.xlu0 %6252
        %6254 = vmax.xlane.f32.xlu0 %v6229
        %v6255 = vpop.xlane.xlu0 %6254
        %6256 = vmax.xlane.f32.xlu0 %v6230
        %v6257 = vpop.xlane.xlu0 %6256
        %6258 = vmax.xlane.f32.xlu0 %v6231
        %v6259 = vpop.xlane.xlu0 %6258
        %6260 = vmax.xlane.f32.xlu0 %v6232
        %v6261 = vpop.xlane.xlu0 %6260
        %6262 = vmax.xlane.f32.xlu0 %v6233
        %v6263 = vpop.xlane.xlu0 %6262
        %6264 = vmax.xlane.f32.xlu0 %v6234
        %v6265 = vpop.xlane.xlu0 %6264
        %6266 = vmax.xlane.f32.xlu0 %v6235
        %v6267 = vpop.xlane.xlu0 %6266
        %v6268 = vsub.f32 %v6220, %v6237
        %v6269 = vsub.f32 %v6221, %v6239
        %v6270 = vsub.f32 %v6222, %v6241
        %v6271 = vsub.f32 %v6223, %v6243
        %v6272 = vsub.f32 %v6224, %v6245
        %v6273 = vsub.f32 %v6225, %v6247
        %v6274 = vsub.f32 %v6226, %v6249
        %v6275 = vsub.f32 %v6227, %v6251
        %v6276 = vsub.f32 %v6228, %v6253
        %v6277 = vsub.f32 %v6229, %v6255
        %v6278 = vsub.f32 %v6230, %v6257
        %v6279 = vsub.f32 %v6231, %v6259
        %v6280 = vsub.f32 %v6232, %v6261
        %v6281 = vsub.f32 %v6233, %v6263
        %v6282 = vsub.f32 %v6234, %v6265
        %v6283 = vsub.f32 %v6235, %v6267
        %v6284 = vmul.f32 %v6268, 1.442695
        %v6285 = vpow.pop %v6284
        %v6286 = vmul.f32 %v6269, 1.442695
        %v6287 = vpow.pop %v6286
        %v6288 = vmul.f32 %v6270, 1.442695
        %v6289 = vpow.pop %v6288
        %v6290 = vmul.f32 %v6271, 1.442695
        %v6291 = vpow.pop %v6290
        %v6292 = vmul.f32 %v6272, 1.442695
        %v6293 = vpow.pop %v6292
        %v6294 = vmul.f32 %v6273, 1.442695
        %v6295 = vpow.pop %v6294
        %v6296 = vmul.f32 %v6274, 1.442695
        %v6297 = vpow.pop %v6296
        %v6298 = vmul.f32 %v6275, 1.442695
        %v6299 = vpow.pop %v6298
        %v6300 = vmul.f32 %v6276, 1.442695
        %v6301 = vpow.pop %v6300
        %v6302 = vmul.f32 %v6277, 1.442695
        %v6303 = vpow.pop %v6302
        %v6304 = vmul.f32 %v6278, 1.442695
        %v6305 = vpow.pop %v6304
        %v6306 = vmul.f32 %v6279, 1.442695
        %v6307 = vpow.pop %v6306
        %v6308 = vmul.f32 %v6280, 1.442695
        %v6309 = vpow.pop %v6308
        %v6310 = vmul.f32 %v6281, 1.442695
        %v6311 = vpow.pop %v6310
        %v6312 = vmul.f32 %v6282, 1.442695
        %v6313 = vpow.pop %v6312
        %v6314 = vmul.f32 %v6283, 1.442695
        %v6315 = vpow.pop %v6314
        %6316 = vadd.xlane.f32.xlu0 %v6285
        %v6317 = vpop.xlane.xlu0 %6316
        %6318 = vadd.xlane.f32.xlu0 %v6287
        %v6319 = vpop.xlane.xlu0 %6318
        %6320 = vadd.xlane.f32.xlu0 %v6289
        %v6321 = vpop.xlane.xlu0 %6320
        %6322 = vadd.xlane.f32.xlu0 %v6291
        %v6323 = vpop.xlane.xlu0 %6322
        %6324 = vadd.xlane.f32.xlu0 %v6293
        %v6325 = vpop.xlane.xlu0 %6324
        %6326 = vadd.xlane.f32.xlu0 %v6295
        %v6327 = vpop.xlane.xlu0 %6326
        %6328 = vadd.xlane.f32.xlu0 %v6297
        %v6329 = vpop.xlane.xlu0 %6328
        %6330 = vadd.xlane.f32.xlu0 %v6299
        %v6331 = vpop.xlane.xlu0 %6330
        %6332 = vadd.xlane.f32.xlu0 %v6301
        %v6333 = vpop.xlane.xlu0 %6332
        %6334 = vadd.xlane.f32.xlu0 %v6303
        %v6335 = vpop.xlane.xlu0 %6334
        %6336 = vadd.xlane.f32.xlu0 %v6305
        %v6337 = vpop.xlane.xlu0 %6336
        %6338 = vadd.xlane.f32.xlu0 %v6307
        %v6339 = vpop.xlane.xlu0 %6338
        %6340 = vadd.xlane.f32.xlu0 %v6309
        %v6341 = vpop.xlane.xlu0 %6340
        %6342 = vadd.xlane.f32.xlu0 %v6311
        %v6343 = vpop.xlane.xlu0 %6342
        %6344 = vadd.xlane.f32.xlu0 %v6313
        %v6345 = vpop.xlane.xlu0 %6344
        %6346 = vadd.xlane.f32.xlu0 %v6315
        %v6347 = vpop.xlane.xlu0 %6346
        %v6348 = vrcp.pop %v6317
        %v6349 = vrcp.pop %v6319
        %v6350 = vrcp.pop %v6321
        %v6351 = vrcp.pop %v6323
        %v6352 = vrcp.pop %v6325
        %v6353 = vrcp.pop %v6327
        %v6354 = vrcp.pop %v6329
        %v6355 = vrcp.pop %v6331
        %v6356 = vrcp.pop %v6333
        %v6357 = vrcp.pop %v6335
        %v6358 = vrcp.pop %v6337
        %v6359 = vrcp.pop %v6339
        %v6360 = vrcp.pop %v6341
        %v6361 = vrcp.pop %v6343
        %v6362 = vrcp.pop %v6345
        %v6363 = vrcp.pop %v6347
        %v6364 = vmul.f32 %v6285, %v6348
        %v6365 = vmul.f32 %v6287, %v6349
        %v6366 = vmul.f32 %v6289, %v6350
        %v6367 = vmul.f32 %v6291, %v6351
        %v6368 = vmul.f32 %v6293, %v6352
        %v6369 = vmul.f32 %v6295, %v6353
        %v6370 = vmul.f32 %v6297, %v6354
        %v6371 = vmul.f32 %v6299, %v6355
        %v6372 = vmul.f32 %v6301, %v6356
        %v6373 = vmul.f32 %v6303, %v6357
        %v6374 = vmul.f32 %v6305, %v6358
        %v6375 = vmul.f32 %v6307, %v6359
        %v6376 = vmul.f32 %v6309, %v6360
        %v6377 = vmul.f32 %v6311, %v6361
        %v6378 = vmul.f32 %v6313, %v6362
        %v6379 = vmul.f32 %v6315, %v6363
        %v6380 = vpack.c.bf16 %v6365, %v6364
        %v6381 = vpack.c.bf16 %v6367, %v6366
        %v6382 = vpack.c.bf16 %v6369, %v6368
        %v6383 = vpack.c.bf16 %v6371, %v6370
        %v6384 = vpack.c.bf16 %v6373, %v6372
        %v6385 = vpack.c.bf16 %v6375, %v6374
        %v6386 = vpack.c.bf16 %v6377, %v6376
        %v6387 = vpack.c.bf16 %v6379, %v6378
        %v6388 = vpack.c.bf16 %v5629, %v5625
        %v6389 = vpack.c.bf16 %v5631, %v5627
        %v6390 = vpack.c.bf16 %v5742, %v5738
        %v6391 = vpack.c.bf16 %v5744, %v5740
        %v6392 = vpack.c.bf16 %v5639, %v5635
        %v6393 = vpack.c.bf16 %v5641, %v5637
        %v6394 = vpack.c.bf16 %v5752, %v5748
        %v6395 = vpack.c.bf16 %v5754, %v5750
        %v6396 = vpack.c.bf16 %v5649, %v5645
        %v6397 = vpack.c.bf16 %v5651, %v5647
        %v6398 = vpack.c.bf16 %v5762, %v5758
        %v6399 = vpack.c.bf16 %v5764, %v5760
        %v6400 = vpack.c.bf16 %v5659, %v5655
        %v6401 = vpack.c.bf16 %v5661, %v5657
        %v6402 = vpack.c.bf16 %v5772, %v5768
        %v6403 = vpack.c.bf16 %v5774, %v5770
        %v6404 = vpack.c.bf16 %v5669, %v5665
        %v6405 = vpack.c.bf16 %v5671, %v5667
        %v6406 = vpack.c.bf16 %v5782, %v5778
        %v6407 = vpack.c.bf16 %v5784, %v5780
        %v6408 = vpack.c.bf16 %v5679, %v5675
        %v6409 = vpack.c.bf16 %v5681, %v5677
        %v6410 = vpack.c.bf16 %v5792, %v5788
        %v6411 = vpack.c.bf16 %v5794, %v5790
        %v6412 = vpack.c.bf16 %v5689, %v5685
        %v6413 = vpack.c.bf16 %v5691, %v5687
        %v6414 = vpack.c.bf16 %v5802, %v5798
        %v6415 = vpack.c.bf16 %v5804, %v5800
        %v6416 = vpack.c.bf16 %v5699, %v5695
        %v6417 = vpack.c.bf16 %v5701, %v5697
        %v6418 = vpack.c.bf16 %v5812, %v5808
        %v6419 = vpack.c.bf16 %v5814, %v5810
        %v6420 = vlaneseq
        %v6421 = vshrl.u32 %v6420, 7
        %v6422 = vsub.s32 2, %v6421
        %v6423 = vrot.slane %v613, %v6422
        %v6424 = vlaneseq
        %v6425 = vshrl.u32 %v6424, 7
        %v6426 = vsub.s32 2, %v6425
        %v6427 = vrot.slane %v614, %v6426
        %v6428 = vlaneseq
        %v6429 = vshrl.u32 %v6428, 7
        %v6430 = vsub.s32 2, %v6429
        %v6431 = vrot.slane %v615, %v6430
        %v6432 = vlaneseq
        %v6433 = vshrl.u32 %v6432, 7
        %v6434 = vsub.s32 2, %v6433
        %v6435 = vrot.slane %v616, %v6434
        %6436 = vmatprep.subr.bf16.mxu0 %v6417
        %6437 = vmatpush1.bf16.msra.mxu0 %v6416
        %6438 = vmatprep.subr.bf16.mxu0 %v6413
        %6439 = vmatpush1.bf16.msra.mxu0 %v6412
        %6440 = vmatprep.subr.bf16.mxu0 %v6409
        %6441 = vmatpush1.bf16.msra.mxu0 %v6408
        %6442 = vmatprep.subr.bf16.mxu0 %v6405
        %6443 = vmatpush1.bf16.msra.mxu0 %v6404
        %6444 = vmatprep.subr.bf16.mxu0 %v6401
        %6445 = vmatpush1.bf16.msra.mxu0 %v6400
        %6446 = vmatprep.subr.bf16.mxu0 %v6397
        %6447 = vmatpush1.bf16.msra.mxu0 %v6396
        %6448 = vmatprep.subr.bf16.mxu0 %v6393
        %6449 = vmatpush1.bf16.msra.mxu0 %v6392
        %6450 = vmatprep.subr.bf16.mxu0 %v6389
        %6451 = vmatpush1.bf16.msra.mxu0 %v6388
        %6452 = vmatprep.subr.bf16.mxu0 0
        %6453 = vmatpush2.bf16.msra.mxu0 0
        %6454 = vmatprep.subr.bf16.mxu0 0
        %6455 = vmatpush2.bf16.msra.mxu0 0
        %6456 = vmatprep.subr.bf16.mxu0 0
        %6457 = vmatpush2.bf16.msra.mxu0 0
        %6458 = vmatprep.subr.bf16.mxu0 0
        %6459 = vmatpush2.bf16.msra.mxu0 0
        %6460 = vmatprep.subr.bf16.mxu0 0
        %6461 = vmatpush2.bf16.msra.mxu0 0
        %6462 = vmatprep.subr.bf16.mxu0 0
        %6463 = vmatpush2.bf16.msra.mxu0 0
        %6464 = vmatprep.subr.bf16.mxu0 0
        %6465 = vmatpush2.bf16.msra.mxu0 0
        %6466 = vmatprep.subr.bf16.mxu0 0
        %6467 = vmatpush2.bf16.msra.mxu0 0
        %6468 = vmatprep.mubr.bf16.mxu0 0
        %6469 = vmatmul.mubr.bf16.gmra.mxu0 %v6380
        %v6470 = vpop.f32.mrf.mxu0
        %v6471 = vadd.f32 %v6423, %v6470
        %v6472 = vpop.f32.mrf.mxu0
        %v6473 = vadd.f32 %v6427, %v6472
        %v6474 = vpop.f32.mrf.mxu0
        %v6475 = vadd.f32 %v6423, %v6474
        %v6476 = vpop.f32.mrf.mxu0
        %v6477 = vadd.f32 %v6427, %v6476
        %6478 = vmatprep.mubr.bf16.mxu0 0
        %6479 = vmatmul.mubr.bf16.gmra.mxu0 %v6381
        %v6480 = vpop.f32.mrf.mxu0
        %v6481 = vadd.f32 %v6423, %v6480
        %v6482 = vpop.f32.mrf.mxu0
        %v6483 = vadd.f32 %v6427, %v6482
        %v6484 = vpop.f32.mrf.mxu0
        %v6485 = vadd.f32 %v6423, %v6484
        %v6486 = vpop.f32.mrf.mxu0
        %v6487 = vadd.f32 %v6427, %v6486
        %6488 = vmatprep.mubr.bf16.mxu0 0
        %6489 = vmatmul.mubr.bf16.gmra.mxu0 %v6382
        %v6490 = vpop.f32.mrf.mxu0
        %v6491 = vadd.f32 %v6423, %v6490
        %v6492 = vpop.f32.mrf.mxu0
        %v6493 = vadd.f32 %v6427, %v6492
        %v6494 = vpop.f32.mrf.mxu0
        %v6495 = vadd.f32 %v6423, %v6494
        %v6496 = vpop.f32.mrf.mxu0
        %v6497 = vadd.f32 %v6427, %v6496
        %6498 = vmatprep.mubr.bf16.mxu0 0
        %6499 = vmatmul.mubr.bf16.gmra.mxu0 %v6383
        %v6500 = vpop.f32.mrf.mxu0
        %v6501 = vadd.f32 %v6423, %v6500
        %v6502 = vpop.f32.mrf.mxu0
        %v6503 = vadd.f32 %v6427, %v6502
        %v6504 = vpop.f32.mrf.mxu0
        %v6505 = vadd.f32 %v6423, %v6504
        %v6506 = vpop.f32.mrf.mxu0
        %v6507 = vadd.f32 %v6427, %v6506
        %6508 = vmatprep.mubr.bf16.mxu0 0
        %6509 = vmatmul.mubr.bf16.gmra.mxu0 %v6384
        %v6510 = vpop.f32.mrf.mxu0
        %v6511 = vadd.f32 %v6423, %v6510
        %v6512 = vpop.f32.mrf.mxu0
        %v6513 = vadd.f32 %v6427, %v6512
        %v6514 = vpop.f32.mrf.mxu0
        %v6515 = vadd.f32 %v6423, %v6514
        %v6516 = vpop.f32.mrf.mxu0
        %v6517 = vadd.f32 %v6427, %v6516
        %6518 = vmatprep.mubr.bf16.mxu0 0
        %6519 = vmatmul.mubr.bf16.gmra.mxu0 %v6385
        %v6520 = vpop.f32.mrf.mxu0
        %v6521 = vadd.f32 %v6423, %v6520
        %v6522 = vpop.f32.mrf.mxu0
        %v6523 = vadd.f32 %v6427, %v6522
        %v6524 = vpop.f32.mrf.mxu0
        %v6525 = vadd.f32 %v6423, %v6524
        %v6526 = vpop.f32.mrf.mxu0
        %v6527 = vadd.f32 %v6427, %v6526
        %6528 = vmatprep.mubr.bf16.mxu0 0
        %6529 = vmatmul.mubr.bf16.gmra.mxu0 %v6386
        %v6530 = vpop.f32.mrf.mxu0
        %v6531 = vadd.f32 %v6423, %v6530
        %v6532 = vpop.f32.mrf.mxu0
        %v6533 = vadd.f32 %v6427, %v6532
        %v6534 = vpop.f32.mrf.mxu0
        %v6535 = vadd.f32 %v6423, %v6534
        %v6536 = vpop.f32.mrf.mxu0
        %v6537 = vadd.f32 %v6427, %v6536
        %6538 = vmatprep.mubr.bf16.mxu0 0
        %6539 = vmatmul.mubr.bf16.gmra.mxu0 %v6387
        %v6540 = vpop.f32.mrf.mxu0
        %v6541 = vadd.f32 %v6423, %v6540
        %v6542 = vpop.f32.mrf.mxu0
        %v6543 = vadd.f32 %v6427, %v6542
        %v6544 = vpop.f32.mrf.mxu0
        %v6545 = vadd.f32 %v6423, %v6544
        %v6546 = vpop.f32.mrf.mxu0
        %v6547 = vadd.f32 %v6427, %v6546
        %6548 = vdwg.mxu0
        %6549 = vmatprep.subr.bf16.mxu0 %v6419
        %6550 = vmatpush1.bf16.msra.mxu0 %v6418
        %6551 = vmatprep.subr.bf16.mxu0 %v6415
        %6552 = vmatpush1.bf16.msra.mxu0 %v6414
        %6553 = vmatprep.subr.bf16.mxu0 %v6411
        %6554 = vmatpush1.bf16.msra.mxu0 %v6410
        %6555 = vmatprep.subr.bf16.mxu0 %v6407
        %6556 = vmatpush1.bf16.msra.mxu0 %v6406
        %6557 = vmatprep.subr.bf16.mxu0 %v6403
        %6558 = vmatpush1.bf16.msra.mxu0 %v6402
        %6559 = vmatprep.subr.bf16.mxu0 %v6399
        %6560 = vmatpush1.bf16.msra.mxu0 %v6398
        %6561 = vmatprep.subr.bf16.mxu0 %v6395
        %6562 = vmatpush1.bf16.msra.mxu0 %v6394
        %6563 = vmatprep.subr.bf16.mxu0 %v6391
        %6564 = vmatpush1.bf16.msra.mxu0 %v6390
        %6565 = vmatprep.subr.bf16.mxu0 0
        %6566 = vmatpush2.bf16.msra.mxu0 0
        %6567 = vmatprep.subr.bf16.mxu0 0
        %6568 = vmatpush2.bf16.msra.mxu0 0
        %6569 = vmatprep.subr.bf16.mxu0 0
        %6570 = vmatpush2.bf16.msra.mxu0 0
        %6571 = vmatprep.subr.bf16.mxu0 0
        %6572 = vmatpush2.bf16.msra.mxu0 0
        %6573 = vmatprep.subr.bf16.mxu0 0
        %6574 = vmatpush2.bf16.msra.mxu0 0
        %6575 = vmatprep.subr.bf16.mxu0 0
        %6576 = vmatpush2.bf16.msra.mxu0 0
        %6577 = vmatprep.subr.bf16.mxu0 0
        %6578 = vmatpush2.bf16.msra.mxu0 0
        %6579 = vmatprep.subr.bf16.mxu0 0
        %6580 = vmatpush2.bf16.msra.mxu0 0
        %6581 = vmatprep.mubr.bf16.mxu0 0
        %6582 = vmatmul.mubr.bf16.gmra.mxu0 %v6380
        %v6583 = vpop.f32.mrf.mxu0
        %v6584 = vadd.f32 %v6431, %v6583
        %v6585 = vpop.f32.mrf.mxu0
        %v6586 = vadd.f32 %v6435, %v6585
        %v6587 = vpop.f32.mrf.mxu0
        %v6588 = vadd.f32 %v6431, %v6587
        %v6589 = vpop.f32.mrf.mxu0
        %v6590 = vadd.f32 %v6435, %v6589
        %6591 = vmatprep.mubr.bf16.mxu0 0
        %6592 = vmatmul.mubr.bf16.gmra.mxu0 %v6381
        %v6593 = vpop.f32.mrf.mxu0
        %v6594 = vadd.f32 %v6431, %v6593
        %v6595 = vpop.f32.mrf.mxu0
        %v6596 = vadd.f32 %v6435, %v6595
        %v6597 = vpop.f32.mrf.mxu0
        %v6598 = vadd.f32 %v6431, %v6597
        %v6599 = vpop.f32.mrf.mxu0
        %v6600 = vadd.f32 %v6435, %v6599
        %6601 = vmatprep.mubr.bf16.mxu0 0
        %6602 = vmatmul.mubr.bf16.gmra.mxu0 %v6382
        %v6603 = vpop.f32.mrf.mxu0
        %v6604 = vadd.f32 %v6431, %v6603
        %v6605 = vpop.f32.mrf.mxu0
        %v6606 = vadd.f32 %v6435, %v6605
        %v6607 = vpop.f32.mrf.mxu0
        %v6608 = vadd.f32 %v6431, %v6607
        %v6609 = vpop.f32.mrf.mxu0
        %v6610 = vadd.f32 %v6435, %v6609
        %6611 = vmatprep.mubr.bf16.mxu0 0
        %6612 = vmatmul.mubr.bf16.gmra.mxu0 %v6383
        %v6613 = vpop.f32.mrf.mxu0
        %v6614 = vadd.f32 %v6431, %v6613
        %v6615 = vpop.f32.mrf.mxu0
        %v6616 = vadd.f32 %v6435, %v6615
        %v6617 = vpop.f32.mrf.mxu0
        %v6618 = vadd.f32 %v6431, %v6617
        %v6619 = vpop.f32.mrf.mxu0
        %v6620 = vadd.f32 %v6435, %v6619
        %6621 = vmatprep.mubr.bf16.mxu0 0
        %6622 = vmatmul.mubr.bf16.gmra.mxu0 %v6384
        %v6623 = vpop.f32.mrf.mxu0
        %v6624 = vadd.f32 %v6431, %v6623
        %v6625 = vpop.f32.mrf.mxu0
        %v6626 = vadd.f32 %v6435, %v6625
        %v6627 = vpop.f32.mrf.mxu0
        %v6628 = vadd.f32 %v6431, %v6627
        %v6629 = vpop.f32.mrf.mxu0
        %v6630 = vadd.f32 %v6435, %v6629
        %6631 = vmatprep.mubr.bf16.mxu0 0
        %6632 = vmatmul.mubr.bf16.gmra.mxu0 %v6385
        %v6633 = vpop.f32.mrf.mxu0
        %v6634 = vadd.f32 %v6431, %v6633
        %v6635 = vpop.f32.mrf.mxu0
        %v6636 = vadd.f32 %v6435, %v6635
        %v6637 = vpop.f32.mrf.mxu0
        %v6638 = vadd.f32 %v6431, %v6637
        %v6639 = vpop.f32.mrf.mxu0
        %v6640 = vadd.f32 %v6435, %v6639
        %6641 = vmatprep.mubr.bf16.mxu0 0
        %6642 = vmatmul.mubr.bf16.gmra.mxu0 %v6386
        %v6643 = vpop.f32.mrf.mxu0
        %v6644 = vadd.f32 %v6431, %v6643
        %v6645 = vpop.f32.mrf.mxu0
        %v6646 = vadd.f32 %v6435, %v6645
        %v6647 = vpop.f32.mrf.mxu0
        %v6648 = vadd.f32 %v6431, %v6647
        %v6649 = vpop.f32.mrf.mxu0
        %v6650 = vadd.f32 %v6435, %v6649
        %6651 = vmatprep.mubr.bf16.mxu0 0
        %6652 = vmatmul.mubr.bf16.gmra.mxu0 %v6387
        %v6653 = vpop.f32.mrf.mxu0
        %v6654 = vadd.f32 %v6431, %v6653
        %v6655 = vpop.f32.mrf.mxu0
        %v6656 = vadd.f32 %v6435, %v6655
        %v6657 = vpop.f32.mrf.mxu0
        %v6658 = vadd.f32 %v6431, %v6657
        %v6659 = vpop.f32.mrf.mxu0
        %v6660 = vadd.f32 %v6435, %v6659
        %6661 = vdwg.mxu0
        %v6662 = vmul.f32 %v6471, 0.01
        %v6663 = vmul.f32 %v6473, 0.01
        %v6664 = vmul.f32 %v6584, 0.01
        %v6665 = vmul.f32 %v6586, 0.01
        %v6666 = vmul.f32 %v6475, 0.01
        %v6667 = vmul.f32 %v6477, 0.01
        %v6668 = vmul.f32 %v6588, 0.01
        %v6669 = vmul.f32 %v6590, 0.01
        %v6670 = vmul.f32 %v6481, 0.01
        %v6671 = vmul.f32 %v6483, 0.01
        %v6672 = vmul.f32 %v6594, 0.01
        %v6673 = vmul.f32 %v6596, 0.01
        %v6674 = vmul.f32 %v6485, 0.01
        %v6675 = vmul.f32 %v6487, 0.01
        %v6676 = vmul.f32 %v6598, 0.01
        %v6677 = vmul.f32 %v6600, 0.01
        %v6678 = vmul.f32 %v6491, 0.01
        %v6679 = vmul.f32 %v6493, 0.01
        %v6680 = vmul.f32 %v6604, 0.01
        %v6681 = vmul.f32 %v6606, 0.01
        %v6682 = vmul.f32 %v6495, 0.01
        %v6683 = vmul.f32 %v6497, 0.01
        %v6684 = vmul.f32 %v6608, 0.01
        %v6685 = vmul.f32 %v6610, 0.01
        %v6686 = vmul.f32 %v6501, 0.01
        %v6687 = vmul.f32 %v6503, 0.01
        %v6688 = vmul.f32 %v6614, 0.01
        %v6689 = vmul.f32 %v6616, 0.01
        %v6690 = vmul.f32 %v6505, 0.01
        %v6691 = vmul.f32 %v6507, 0.01
        %v6692 = vmul.f32 %v6618, 0.01
        %v6693 = vmul.f32 %v6620, 0.01
        %v6694 = vmul.f32 %v6511, 0.01
        %v6695 = vmul.f32 %v6513, 0.01
        %v6696 = vmul.f32 %v6624, 0.01
        %v6697 = vmul.f32 %v6626, 0.01
        %v6698 = vmul.f32 %v6515, 0.01
        %v6699 = vmul.f32 %v6517, 0.01
        %v6700 = vmul.f32 %v6628, 0.01
        %v6701 = vmul.f32 %v6630, 0.01
        %v6702 = vmul.f32 %v6521, 0.01
        %v6703 = vmul.f32 %v6523, 0.01
        %v6704 = vmul.f32 %v6634, 0.01
        %v6705 = vmul.f32 %v6636, 0.01
        %v6706 = vmul.f32 %v6525, 0.01
        %v6707 = vmul.f32 %v6527, 0.01
        %v6708 = vmul.f32 %v6638, 0.01
        %v6709 = vmul.f32 %v6640, 0.01
        %v6710 = vmul.f32 %v6531, 0.01
        %v6711 = vmul.f32 %v6533, 0.01
        %v6712 = vmul.f32 %v6644, 0.01
        %v6713 = vmul.f32 %v6646, 0.01
        %v6714 = vmul.f32 %v6535, 0.01
        %v6715 = vmul.f32 %v6537, 0.01
        %v6716 = vmul.f32 %v6648, 0.01
        %v6717 = vmul.f32 %v6650, 0.01
        %v6718 = vmul.f32 %v6541, 0.01
        %v6719 = vmul.f32 %v6543, 0.01
        %v6720 = vmul.f32 %v6654, 0.01
        %v6721 = vmul.f32 %v6656, 0.01
        %v6722 = vmul.f32 %v6545, 0.01
        %v6723 = vmul.f32 %v6547, 0.01
        %v6724 = vmul.f32 %v6658, 0.01
        %v6725 = vmul.f32 %v6660, 0.01
        %v6726 = vmax.f32 %v6471, %v6662
        %v6727 = vmax.f32 %v6473, %v6663
        %v6728 = vmax.f32 %v6584, %v6664
        %v6729 = vmax.f32 %v6586, %v6665
        %v6730 = vmax.f32 %v6475, %v6666
        %v6731 = vmax.f32 %v6477, %v6667
        %v6732 = vmax.f32 %v6588, %v6668
        %v6733 = vmax.f32 %v6590, %v6669
        %v6734 = vmax.f32 %v6481, %v6670
        %v6735 = vmax.f32 %v6483, %v6671
        %v6736 = vmax.f32 %v6594, %v6672
        %v6737 = vmax.f32 %v6596, %v6673
        %v6738 = vmax.f32 %v6485, %v6674
        %v6739 = vmax.f32 %v6487, %v6675
        %v6740 = vmax.f32 %v6598, %v6676
        %v6741 = vmax.f32 %v6600, %v6677
        %v6742 = vmax.f32 %v6491, %v6678
        %v6743 = vmax.f32 %v6493, %v6679
        %v6744 = vmax.f32 %v6604, %v6680
        %v6745 = vmax.f32 %v6606, %v6681
        %v6746 = vmax.f32 %v6495, %v6682
        %v6747 = vmax.f32 %v6497, %v6683
        %v6748 = vmax.f32 %v6608, %v6684
        %v6749 = vmax.f32 %v6610, %v6685
        %v6750 = vmax.f32 %v6501, %v6686
        %v6751 = vmax.f32 %v6503, %v6687
        %v6752 = vmax.f32 %v6614, %v6688
        %v6753 = vmax.f32 %v6616, %v6689
        %v6754 = vmax.f32 %v6505, %v6690
        %v6755 = vmax.f32 %v6507, %v6691
        %v6756 = vmax.f32 %v6618, %v6692
        %v6757 = vmax.f32 %v6620, %v6693
        %v6758 = vmax.f32 %v6511, %v6694
        %v6759 = vmax.f32 %v6513, %v6695
        %v6760 = vmax.f32 %v6624, %v6696
        %v6761 = vmax.f32 %v6626, %v6697
        %v6762 = vmax.f32 %v6515, %v6698
        %v6763 = vmax.f32 %v6517, %v6699
        %v6764 = vmax.f32 %v6628, %v6700
        %v6765 = vmax.f32 %v6630, %v6701
        %v6766 = vmax.f32 %v6521, %v6702
        %v6767 = vmax.f32 %v6523, %v6703
        %v6768 = vmax.f32 %v6634, %v6704
        %v6769 = vmax.f32 %v6636, %v6705
        %v6770 = vmax.f32 %v6525, %v6706
        %v6771 = vmax.f32 %v6527, %v6707
        %v6772 = vmax.f32 %v6638, %v6708
        %v6773 = vmax.f32 %v6640, %v6709
        %v6774 = vmax.f32 %v6531, %v6710
        %v6775 = vmax.f32 %v6533, %v6711
        %v6776 = vmax.f32 %v6644, %v6712
        %v6777 = vmax.f32 %v6646, %v6713
        %v6778 = vmax.f32 %v6535, %v6714
        %v6779 = vmax.f32 %v6537, %v6715
        %v6780 = vmax.f32 %v6648, %v6716
        %v6781 = vmax.f32 %v6650, %v6717
        %v6782 = vmax.f32 %v6541, %v6718
        %v6783 = vmax.f32 %v6543, %v6719
        %v6784 = vmax.f32 %v6654, %v6720
        %v6785 = vmax.f32 %v6656, %v6721
        %v6786 = vmax.f32 %v6545, %v6722
        %v6787 = vmax.f32 %v6547, %v6723
        %v6788 = vmax.f32 %v6658, %v6724
        %v6789 = vmax.f32 %v6660, %v6725
        %v6790 = vlaneseq
        %v6791 = vshrl.u32 %v6790, 7
        %v6792 = vsub.s32 3, %v6791
        %v6793 = vrot.slane %v613, %v6792
        %v6794 = vlaneseq
        %v6795 = vshrl.u32 %v6794, 7
        %v6796 = vsub.s32 3, %v6795
        %v6797 = vrot.slane %v614, %v6796
        %v6798 = vlaneseq
        %v6799 = vshrl.u32 %v6798, 7
        %v6800 = vsub.s32 3, %v6799
        %v6801 = vrot.slane %v615, %v6800
        %v6802 = vlaneseq
        %v6803 = vshrl.u32 %v6802, 7
        %v6804 = vsub.s32 3, %v6803
        %v6805 = vrot.slane %v616, %v6804
        %v6806 = vmul.f32 %v6726, %v6793
        %v6807 = vmul.f32 %v6727, %v6797
        %v6808 = vmul.f32 %v6728, %v6801
        %v6809 = vmul.f32 %v6729, %v6805
        %v6810 = vmul.f32 %v6730, %v6793
        %v6811 = vmul.f32 %v6731, %v6797
        %v6812 = vmul.f32 %v6732, %v6801
        %v6813 = vmul.f32 %v6733, %v6805
        %v6814 = vmul.f32 %v6734, %v6793
        %v6815 = vmul.f32 %v6735, %v6797
        %v6816 = vmul.f32 %v6736, %v6801
        %v6817 = vmul.f32 %v6737, %v6805
        %v6818 = vmul.f32 %v6738, %v6793
        %v6819 = vmul.f32 %v6739, %v6797
        %v6820 = vmul.f32 %v6740, %v6801
        %v6821 = vmul.f32 %v6741, %v6805
        %v6822 = vmul.f32 %v6742, %v6793
        %v6823 = vmul.f32 %v6743, %v6797
        %v6824 = vmul.f32 %v6744, %v6801
        %v6825 = vmul.f32 %v6745, %v6805
        %v6826 = vmul.f32 %v6746, %v6793
        %v6827 = vmul.f32 %v6747, %v6797
        %v6828 = vmul.f32 %v6748, %v6801
        %v6829 = vmul.f32 %v6749, %v6805
        %v6830 = vmul.f32 %v6750, %v6793
        %v6831 = vmul.f32 %v6751, %v6797
        %v6832 = vmul.f32 %v6752, %v6801
        %v6833 = vmul.f32 %v6753, %v6805
        %v6834 = vmul.f32 %v6754, %v6793
        %v6835 = vmul.f32 %v6755, %v6797
        %v6836 = vmul.f32 %v6756, %v6801
        %v6837 = vmul.f32 %v6757, %v6805
        %v6838 = vmul.f32 %v6758, %v6793
        %v6839 = vmul.f32 %v6759, %v6797
        %v6840 = vmul.f32 %v6760, %v6801
        %v6841 = vmul.f32 %v6761, %v6805
        %v6842 = vmul.f32 %v6762, %v6793
        %v6843 = vmul.f32 %v6763, %v6797
        %v6844 = vmul.f32 %v6764, %v6801
        %v6845 = vmul.f32 %v6765, %v6805
        %v6846 = vmul.f32 %v6766, %v6793
        %v6847 = vmul.f32 %v6767, %v6797
        %v6848 = vmul.f32 %v6768, %v6801
        %v6849 = vmul.f32 %v6769, %v6805
        %v6850 = vmul.f32 %v6770, %v6793
        %v6851 = vmul.f32 %v6771, %v6797
        %v6852 = vmul.f32 %v6772, %v6801
        %v6853 = vmul.f32 %v6773, %v6805
        %v6854 = vmul.f32 %v6774, %v6793
        %v6855 = vmul.f32 %v6775, %v6797
        %v6856 = vmul.f32 %v6776, %v6801
        %v6857 = vmul.f32 %v6777, %v6805
        %v6858 = vmul.f32 %v6778, %v6793
        %v6859 = vmul.f32 %v6779, %v6797
        %v6860 = vmul.f32 %v6780, %v6801
        %v6861 = vmul.f32 %v6781, %v6805
        %v6862 = vmul.f32 %v6782, %v6793
        %v6863 = vmul.f32 %v6783, %v6797
        %v6864 = vmul.f32 %v6784, %v6801
        %v6865 = vmul.f32 %v6785, %v6805
        %v6866 = vmul.f32 %v6786, %v6793
        %v6867 = vmul.f32 %v6787, %v6797
        %v6868 = vmul.f32 %v6788, %v6801
        %v6869 = vmul.f32 %v6789, %v6805
        %v6870 = vlaneseq
        %v6871 = vshrl.u32 %v6870, 7
        %v6872 = vsub.s32 4, %v6871
        %v6873 = vrot.slane %v613, %v6872
        %v6874 = vlaneseq
        %v6875 = vshrl.u32 %v6874, 7
        %v6876 = vsub.s32 4, %v6875
        %v6877 = vrot.slane %v614, %v6876
        %v6878 = vlaneseq
        %v6879 = vshrl.u32 %v6878, 7
        %v6880 = vsub.s32 4, %v6879
        %v6881 = vrot.slane %v615, %v6880
        %v6882 = vlaneseq
        %v6883 = vshrl.u32 %v6882, 7
        %v6884 = vsub.s32 4, %v6883
        %v6885 = vrot.slane %v616, %v6884
        %v6886 = vadd.f32 %v6806, %v6873
        %v6887 = vadd.f32 %v6807, %v6877
        %v6888 = vadd.f32 %v6808, %v6881
        %v6889 = vadd.f32 %v6809, %v6885
        %v6890 = vadd.f32 %v6810, %v6873
        %v6891 = vadd.f32 %v6811, %v6877
        %v6892 = vadd.f32 %v6812, %v6881
        %v6893 = vadd.f32 %v6813, %v6885
        %v6894 = vadd.f32 %v6814, %v6873
        %v6895 = vadd.f32 %v6815, %v6877
        %v6896 = vadd.f32 %v6816, %v6881
        %v6897 = vadd.f32 %v6817, %v6885
        %v6898 = vadd.f32 %v6818, %v6873
        %v6899 = vadd.f32 %v6819, %v6877
        %v6900 = vadd.f32 %v6820, %v6881
        %v6901 = vadd.f32 %v6821, %v6885
        %v6902 = vadd.f32 %v6822, %v6873
        %v6903 = vadd.f32 %v6823, %v6877
        %v6904 = vadd.f32 %v6824, %v6881
        %v6905 = vadd.f32 %v6825, %v6885
        %v6906 = vadd.f32 %v6826, %v6873
        %v6907 = vadd.f32 %v6827, %v6877
        %v6908 = vadd.f32 %v6828, %v6881
        %v6909 = vadd.f32 %v6829, %v6885
        %v6910 = vadd.f32 %v6830, %v6873
        %v6911 = vadd.f32 %v6831, %v6877
        %v6912 = vadd.f32 %v6832, %v6881
        %v6913 = vadd.f32 %v6833, %v6885
        %v6914 = vadd.f32 %v6834, %v6873
        %v6915 = vadd.f32 %v6835, %v6877
        %v6916 = vadd.f32 %v6836, %v6881
        %v6917 = vadd.f32 %v6837, %v6885
        %v6918 = vadd.f32 %v6838, %v6873
        %v6919 = vadd.f32 %v6839, %v6877
        %v6920 = vadd.f32 %v6840, %v6881
        %v6921 = vadd.f32 %v6841, %v6885
        %v6922 = vadd.f32 %v6842, %v6873
        %v6923 = vadd.f32 %v6843, %v6877
        %v6924 = vadd.f32 %v6844, %v6881
        %v6925 = vadd.f32 %v6845, %v6885
        %v6926 = vadd.f32 %v6846, %v6873
        %v6927 = vadd.f32 %v6847, %v6877
        %v6928 = vadd.f32 %v6848, %v6881
        %v6929 = vadd.f32 %v6849, %v6885
        %v6930 = vadd.f32 %v6850, %v6873
        %v6931 = vadd.f32 %v6851, %v6877
        %v6932 = vadd.f32 %v6852, %v6881
        %v6933 = vadd.f32 %v6853, %v6885
        %v6934 = vadd.f32 %v6854, %v6873
        %v6935 = vadd.f32 %v6855, %v6877
        %v6936 = vadd.f32 %v6856, %v6881
        %v6937 = vadd.f32 %v6857, %v6885
        %v6938 = vadd.f32 %v6858, %v6873
        %v6939 = vadd.f32 %v6859, %v6877
        %v6940 = vadd.f32 %v6860, %v6881
        %v6941 = vadd.f32 %v6861, %v6885
        %v6942 = vadd.f32 %v6862, %v6873
        %v6943 = vadd.f32 %v6863, %v6877
        %v6944 = vadd.f32 %v6864, %v6881
        %v6945 = vadd.f32 %v6865, %v6885
        %v6946 = vadd.f32 %v6866, %v6873
        %v6947 = vadd.f32 %v6867, %v6877
        %v6948 = vadd.f32 %v6868, %v6881
        %v6949 = vadd.f32 %v6869, %v6885
        %v6950 = vld [vmem:[%s600] sm:$0xf]
        %v6951 = vld [vmem:[%s600 + $0x4] sm:$0xf]
        %v6952 = vpack.c.bf16 %v6890, %v6886
        %v6953 = vpack.c.bf16 %v6891, %v6887
        %v6954 = vpack.c.bf16 %v6892, %v6888
        %v6955 = vpack.c.bf16 %v6893, %v6889
        %v6956 = vpack.c.bf16 %v6898, %v6894
        %v6957 = vpack.c.bf16 %v6899, %v6895
        %v6958 = vpack.c.bf16 %v6900, %v6896
        %v6959 = vpack.c.bf16 %v6901, %v6897
        %v6960 = vpack.c.bf16 %v6906, %v6902
        %v6961 = vpack.c.bf16 %v6907, %v6903
        %v6962 = vpack.c.bf16 %v6908, %v6904
        %v6963 = vpack.c.bf16 %v6909, %v6905
        %v6964 = vpack.c.bf16 %v6914, %v6910
        %v6965 = vpack.c.bf16 %v6915, %v6911
        %v6966 = vpack.c.bf16 %v6916, %v6912
        %v6967 = vpack.c.bf16 %v6917, %v6913
        %v6968 = vpack.c.bf16 %v6922, %v6918
        %v6969 = vpack.c.bf16 %v6923, %v6919
        %v6970 = vpack.c.bf16 %v6924, %v6920
        %v6971 = vpack.c.bf16 %v6925, %v6921
        %v6972 = vpack.c.bf16 %v6930, %v6926
        %v6973 = vpack.c.bf16 %v6931, %v6927
        %v6974 = vpack.c.bf16 %v6932, %v6928
        %v6975 = vpack.c.bf16 %v6933, %v6929
        %v6976 = vpack.c.bf16 %v6938, %v6934
        %v6977 = vpack.c.bf16 %v6939, %v6935
        %v6978 = vpack.c.bf16 %v6940, %v6936
        %v6979 = vpack.c.bf16 %v6941, %v6937
        %v6980 = vpack.c.bf16 %v6946, %v6942
        %v6981 = vpack.c.bf16 %v6947, %v6943
        %v6982 = vpack.c.bf16 %v6948, %v6944
        %v6983 = vpack.c.bf16 %v6949, %v6945
        %v6986 = vunpack.c.l.b16 %v6950
        %v6987 = vunpack.c.l.b16 %v6951
        %v6988 = vpack.c.b16 %v6987, %v6986
        %6990 = vmatprep.subr.bf16.mxu0 %v6981
        %6991 = vmatpush1.bf16.msra.mxu0 %v6980
        %6992 = vmatprep.subr.bf16.mxu0 %v6977
        %6993 = vmatpush1.bf16.msra.mxu0 %v6976
        %6994 = vmatprep.subr.bf16.mxu0 %v6973
        %6995 = vmatpush1.bf16.msra.mxu0 %v6972
        %6996 = vmatprep.subr.bf16.mxu0 %v6969
        %6997 = vmatpush1.bf16.msra.mxu0 %v6968
        %6998 = vmatprep.subr.bf16.mxu0 %v6965
        %6999 = vmatpush1.bf16.msra.mxu0 %v6964
        %7000 = vmatprep.subr.bf16.mxu0 %v6961
        %7001 = vmatpush1.bf16.msra.mxu0 %v6960
        %7002 = vmatprep.subr.bf16.mxu0 %v6957
        %7003 = vmatpush1.bf16.msra.mxu0 %v6956
        %7004 = vmatprep.subr.bf16.mxu0 %v6953
        %7005 = vmatpush1.bf16.msra.mxu0 %v6952
        %7006 = vmatprep.subr.bf16.mxu0 0
        %7007 = vmatpush2.bf16.msra.mxu0 0
        %7008 = vmatprep.subr.bf16.mxu0 0
        %7009 = vmatpush2.bf16.msra.mxu0 0
        %7010 = vmatprep.subr.bf16.mxu0 0
        %7011 = vmatpush2.bf16.msra.mxu0 0
        %7012 = vmatprep.subr.bf16.mxu0 0
        %7013 = vmatpush2.bf16.msra.mxu0 0
        %7014 = vmatprep.subr.bf16.mxu0 0
        %7015 = vmatpush2.bf16.msra.mxu0 0
        %7016 = vmatprep.subr.bf16.mxu0 0
        %7017 = vmatpush2.bf16.msra.mxu0 0
        %7018 = vmatprep.subr.bf16.mxu0 0
        %7019 = vmatpush2.bf16.msra.mxu0 0
        %7020 = vmatprep.subr.bf16.mxu0 0
        %7021 = vmatpush2.bf16.msra.mxu0 0
        %7022 = vmatprep.mubr.bf16.mxu0 0
        %7023 = vmatmul.mubr.bf16.gmra.mxu0 %v6988
        %v7024 = vpop.f32.mrf.mxu0
        %v7025 = vadd.f32 0.0, %v7024
        %v7026 = vpop.f32.mrf.mxu0
        %v7027 = vadd.f32 0.0, %v7026
        %v7028 = vpop.f32.mrf.mxu0
        %v7029 = vadd.f32 0.0, %v7028
        %v7030 = vpop.f32.mrf.mxu0
        %v7031 = vadd.f32 0.0, %v7030
        %7032 = vdwg.mxu0
        %7033 = vmatprep.subr.bf16.mxu0 %v6983
        %7034 = vmatpush1.bf16.msra.mxu0 %v6982
        %7035 = vmatprep.subr.bf16.mxu0 %v6979
        %7036 = vmatpush1.bf16.msra.mxu0 %v6978
        %7037 = vmatprep.subr.bf16.mxu0 %v6975
        %7038 = vmatpush1.bf16.msra.mxu0 %v6974
        %7039 = vmatprep.subr.bf16.mxu0 %v6971
        %7040 = vmatpush1.bf16.msra.mxu0 %v6970
        %7041 = vmatprep.subr.bf16.mxu0 %v6967
        %7042 = vmatpush1.bf16.msra.mxu0 %v6966
        %7043 = vmatprep.subr.bf16.mxu0 %v6963
        %7044 = vmatpush1.bf16.msra.mxu0 %v6962
        %7045 = vmatprep.subr.bf16.mxu0 %v6959
        %7046 = vmatpush1.bf16.msra.mxu0 %v6958
        %7047 = vmatprep.subr.bf16.mxu0 %v6955
        %7048 = vmatpush1.bf16.msra.mxu0 %v6954
        %7049 = vmatprep.subr.bf16.mxu0 0
        %7050 = vmatpush2.bf16.msra.mxu0 0
        %7051 = vmatprep.subr.bf16.mxu0 0
        %7052 = vmatpush2.bf16.msra.mxu0 0
        %7053 = vmatprep.subr.bf16.mxu0 0
        %7054 = vmatpush2.bf16.msra.mxu0 0
        %7055 = vmatprep.subr.bf16.mxu0 0
        %7056 = vmatpush2.bf16.msra.mxu0 0
        %7057 = vmatprep.subr.bf16.mxu0 0
        %7058 = vmatpush2.bf16.msra.mxu0 0
        %7059 = vmatprep.subr.bf16.mxu0 0
        %7060 = vmatpush2.bf16.msra.mxu0 0
        %7061 = vmatprep.subr.bf16.mxu0 0
        %7062 = vmatpush2.bf16.msra.mxu0 0
        %7063 = vmatprep.subr.bf16.mxu0 0
        %7064 = vmatpush2.bf16.msra.mxu0 0
        %7065 = vmatprep.mubr.bf16.mxu0 0
        %7066 = vmatmul.mubr.bf16.gmra.mxu0 %v6988
        %v7067 = vpop.f32.mrf.mxu0
        %v7068 = vadd.f32 0.0, %v7067
        %v7069 = vpop.f32.mrf.mxu0
        %v7070 = vadd.f32 0.0, %v7069
        %v7071 = vpop.f32.mrf.mxu0
        %v7072 = vadd.f32 0.0, %v7071
        %v7073 = vpop.f32.mrf.mxu0
        %v7074 = vadd.f32 0.0, %v7073
        %7075 = vdwg.mxu0
        %v7076 = vpack.c.bf16 %v7029, %v7025
        %v7077 = vpack.c.bf16 %v7031, %v7027
        %v7078 = vpack.c.bf16 %v7072, %v7068
        %v7079 = vpack.c.bf16 %v7074, %v7070
        %v7080 = vld [vmem:[%s9] sm:$0xf]
        %v7081 = vld [vmem:[%s9 + $0x4] sm:$0xf]
        %v7082 = vld [vmem:[%s9 + $0x8] sm:$0xf]
        %v7083 = vld [vmem:[%s9 + $0xc] sm:$0xf]
        %v7084 = vld [vmem:[%s9 + $0x10] sm:$0xf]
        %v7085 = vld [vmem:[%s9 + $0x14] sm:$0xf]
        %v7086 = vld [vmem:[%s9 + $0x18] sm:$0xf]
        %v7087 = vld [vmem:[%s9 + $0x1c] sm:$0xf]
        %v7088 = vld [vmem:[%s9 + $0x20] sm:$0xf]
        %v7089 = vld [vmem:[%s9 + $0x24] sm:$0xf]
        %v7090 = vld [vmem:[%s9 + $0x28] sm:$0xf]
        %v7091 = vld [vmem:[%s9 + $0x2c] sm:$0xf]
        %v7092 = vld [vmem:[%s9 + $0x30] sm:$0xf]
        %v7093 = vld [vmem:[%s9 + $0x34] sm:$0xf]
        %v7094 = vld [vmem:[%s9 + $0x38] sm:$0xf]
        %v7095 = vld [vmem:[%s9 + $0x3c] sm:$0xf]
        %v7096 = vld [vmem:[%s9 + $0x40] sm:$0xf]
        %v7097 = vld [vmem:[%s9 + $0x44] sm:$0xf]
        %v7098 = vld [vmem:[%s9 + $0x48] sm:$0xf]
        %v7099 = vld [vmem:[%s9 + $0x4c] sm:$0xf]
        %v7100 = vld [vmem:[%s9 + $0x50] sm:$0xf]
        %v7101 = vld [vmem:[%s9 + $0x54] sm:$0xf]
        %v7102 = vld [vmem:[%s9 + $0x58] sm:$0xf]
        %v7103 = vld [vmem:[%s9 + $0x5c] sm:$0xf]
        %v7104 = vld [vmem:[%s9 + $0x60] sm:$0xf]
        %v7105 = vld [vmem:[%s9 + $0x64] sm:$0xf]
        %v7106 = vld [vmem:[%s9 + $0x68] sm:$0xf]
        %v7107 = vld [vmem:[%s9 + $0x6c] sm:$0xf]
        %v7108 = vld [vmem:[%s9 + $0x70] sm:$0xf]
        %v7109 = vld [vmem:[%s9 + $0x74] sm:$0xf]
        %v7110 = vld [vmem:[%s9 + $0x78] sm:$0xf]
        %v7111 = vld [vmem:[%s9 + $0x7c] sm:$0xf]
        %v7112 = vld [vmem:[%s9 + $0x80] sm:$0xf]
        %v7113 = vld [vmem:[%s9 + $0x84] sm:$0xf]
        %v7114 = vld [vmem:[%s9 + $0x88] sm:$0xf]
        %v7115 = vld [vmem:[%s9 + $0x8c] sm:$0xf]
        %v7116 = vld [vmem:[%s9 + $0x90] sm:$0xf]
        %v7117 = vld [vmem:[%s9 + $0x94] sm:$0xf]
        %v7118 = vld [vmem:[%s9 + $0x98] sm:$0xf]
        %v7119 = vld [vmem:[%s9 + $0x9c] sm:$0xf]
        %v7120 = vld [vmem:[%s9 + $0xa0] sm:$0xf]
        %v7121 = vld [vmem:[%s9 + $0xa4] sm:$0xf]
        %v7122 = vld [vmem:[%s9 + $0xa8] sm:$0xf]
        %v7123 = vld [vmem:[%s9 + $0xac] sm:$0xf]
        %v7124 = vld [vmem:[%s9 + $0xb0] sm:$0xf]
        %v7125 = vld [vmem:[%s9 + $0xb4] sm:$0xf]
        %v7126 = vld [vmem:[%s9 + $0xb8] sm:$0xf]
        %v7127 = vld [vmem:[%s9 + $0xbc] sm:$0xf]
        %v7128 = vld [vmem:[%s9 + $0xc0] sm:$0xf]
        %v7129 = vld [vmem:[%s9 + $0xc4] sm:$0xf]
        %v7130 = vld [vmem:[%s9 + $0xc8] sm:$0xf]
        %v7131 = vld [vmem:[%s9 + $0xcc] sm:$0xf]
        %v7132 = vld [vmem:[%s9 + $0xd0] sm:$0xf]
        %v7133 = vld [vmem:[%s9 + $0xd4] sm:$0xf]
        %v7134 = vld [vmem:[%s9 + $0xd8] sm:$0xf]
        %v7135 = vld [vmem:[%s9 + $0xdc] sm:$0xf]
        %v7136 = vld [vmem:[%s9 + $0xe0] sm:$0xf]
        %v7137 = vld [vmem:[%s9 + $0xe4] sm:$0xf]
        %v7138 = vld [vmem:[%s9 + $0xe8] sm:$0xf]
        %v7139 = vld [vmem:[%s9 + $0xec] sm:$0xf]
        %v7140 = vld [vmem:[%s9 + $0xf0] sm:$0xf]
        %v7141 = vld [vmem:[%s9 + $0xf4] sm:$0xf]
        %v7142 = vld [vmem:[%s9 + $0xf8] sm:$0xf]
        %v7143 = vld [vmem:[%s9 + $0xfc] sm:$0xf]
        %v7144 = vlaneseq
        %v7145 = vshrl.u32 %v7144, 7
        %v7146 = vsub.s32 0, %v7145
        %v7147 = vrot.slane %v617, %v7146
        %v7212 = vunpack.c.l.b16 %v7080
        %v7213 = vunpack.c.l.b16 %v7081
        %v7214 = vunpack.c.l.b16 %v7082
        %v7215 = vunpack.c.l.b16 %v7083
        %v7216 = vunpack.c.l.b16 %v7084
        %v7217 = vunpack.c.l.b16 %v7085
        %v7218 = vunpack.c.l.b16 %v7086
        %v7219 = vunpack.c.l.b16 %v7087
        %v7220 = vunpack.c.l.b16 %v7088
        %v7221 = vunpack.c.l.b16 %v7089
        %v7222 = vunpack.c.l.b16 %v7090
        %v7223 = vunpack.c.l.b16 %v7091
        %v7224 = vunpack.c.l.b16 %v7092
        %v7225 = vunpack.c.l.b16 %v7093
        %v7226 = vunpack.c.l.b16 %v7094
        %v7227 = vunpack.c.l.b16 %v7095
        %v7228 = vunpack.c.l.b16 %v7096
        %v7229 = vunpack.c.l.b16 %v7097
        %v7230 = vunpack.c.l.b16 %v7098
        %v7231 = vunpack.c.l.b16 %v7099
        %v7232 = vunpack.c.l.b16 %v7100
        %v7233 = vunpack.c.l.b16 %v7101
        %v7234 = vunpack.c.l.b16 %v7102
        %v7235 = vunpack.c.l.b16 %v7103
        %v7236 = vunpack.c.l.b16 %v7104
        %v7237 = vunpack.c.l.b16 %v7105
        %v7238 = vunpack.c.l.b16 %v7106
        %v7239 = vunpack.c.l.b16 %v7107
        %v7240 = vunpack.c.l.b16 %v7108
        %v7241 = vunpack.c.l.b16 %v7109
        %v7242 = vunpack.c.l.b16 %v7110
        %v7243 = vunpack.c.l.b16 %v7111
        %v7244 = vunpack.c.l.b16 %v7112
        %v7245 = vunpack.c.l.b16 %v7113
        %v7246 = vunpack.c.l.b16 %v7114
        %v7247 = vunpack.c.l.b16 %v7115
        %v7248 = vunpack.c.l.b16 %v7116
        %v7249 = vunpack.c.l.b16 %v7117
        %v7250 = vunpack.c.l.b16 %v7118
        %v7251 = vunpack.c.l.b16 %v7119
        %v7252 = vunpack.c.l.b16 %v7120
        %v7253 = vunpack.c.l.b16 %v7121
        %v7254 = vunpack.c.l.b16 %v7122
        %v7255 = vunpack.c.l.b16 %v7123
        %v7256 = vunpack.c.l.b16 %v7124
        %v7257 = vunpack.c.l.b16 %v7125
        %v7258 = vunpack.c.l.b16 %v7126
        %v7259 = vunpack.c.l.b16 %v7127
        %v7260 = vunpack.c.l.b16 %v7128
        %v7261 = vunpack.c.l.b16 %v7129
        %v7262 = vunpack.c.l.b16 %v7130
        %v7263 = vunpack.c.l.b16 %v7131
        %v7264 = vunpack.c.l.b16 %v7132
        %v7265 = vunpack.c.l.b16 %v7133
        %v7266 = vunpack.c.l.b16 %v7134
        %v7267 = vunpack.c.l.b16 %v7135
        %v7268 = vunpack.c.l.b16 %v7136
        %v7269 = vunpack.c.l.b16 %v7137
        %v7270 = vunpack.c.l.b16 %v7138
        %v7271 = vunpack.c.l.b16 %v7139
        %v7272 = vunpack.c.l.b16 %v7140
        %v7273 = vunpack.c.l.b16 %v7141
        %v7274 = vunpack.c.l.b16 %v7142
        %v7275 = vunpack.c.l.b16 %v7143
        %v7276 = vpack.c.b16 %v7213, %v7212
        %v7277 = vpack.c.b16 %v7215, %v7214
        %v7278 = vpack.c.b16 %v7217, %v7216
        %v7279 = vpack.c.b16 %v7219, %v7218
        %v7280 = vpack.c.b16 %v7221, %v7220
        %v7281 = vpack.c.b16 %v7223, %v7222
        %v7282 = vpack.c.b16 %v7225, %v7224
        %v7283 = vpack.c.b16 %v7227, %v7226
        %v7284 = vpack.c.b16 %v7229, %v7228
        %v7285 = vpack.c.b16 %v7231, %v7230
        %v7286 = vpack.c.b16 %v7233, %v7232
        %v7287 = vpack.c.b16 %v7235, %v7234
        %v7288 = vpack.c.b16 %v7237, %v7236
        %v7289 = vpack.c.b16 %v7239, %v7238
        %v7290 = vpack.c.b16 %v7241, %v7240
        %v7291 = vpack.c.b16 %v7243, %v7242
        %v7292 = vpack.c.b16 %v7245, %v7244
        %v7293 = vpack.c.b16 %v7247, %v7246
        %v7294 = vpack.c.b16 %v7249, %v7248
        %v7295 = vpack.c.b16 %v7251, %v7250
        %v7296 = vpack.c.b16 %v7253, %v7252
        %v7297 = vpack.c.b16 %v7255, %v7254
        %v7298 = vpack.c.b16 %v7257, %v7256
        %v7299 = vpack.c.b16 %v7259, %v7258
        %v7300 = vpack.c.b16 %v7261, %v7260
        %v7301 = vpack.c.b16 %v7263, %v7262
        %v7302 = vpack.c.b16 %v7265, %v7264
        %v7303 = vpack.c.b16 %v7267, %v7266
        %v7304 = vpack.c.b16 %v7269, %v7268
        %v7305 = vpack.c.b16 %v7271, %v7270
        %v7306 = vpack.c.b16 %v7273, %v7272
        %v7307 = vpack.c.b16 %v7275, %v7274
        %7340 = vmatprep.subr.bf16.mxu0 0
        %7341 = vmatpush1.bf16.msra.mxu0 %v7283
        %7342 = vmatprep.subr.bf16.mxu0 0
        %7343 = vmatpush1.bf16.msra.mxu0 %v7282
        %7344 = vmatprep.subr.bf16.mxu0 0
        %7345 = vmatpush1.bf16.msra.mxu0 %v7281
        %7346 = vmatprep.subr.bf16.mxu0 0
        %7347 = vmatpush1.bf16.msra.mxu0 %v7280
        %7348 = vmatprep.subr.bf16.mxu0 0
        %7349 = vmatpush1.bf16.msra.mxu0 %v7279
        %7350 = vmatprep.subr.bf16.mxu0 0
        %7351 = vmatpush1.bf16.msra.mxu0 %v7278
        %7352 = vmatprep.subr.bf16.mxu0 0
        %7353 = vmatpush1.bf16.msra.mxu0 %v7277
        %7354 = vmatprep.subr.bf16.mxu0 0
        %7355 = vmatpush1.bf16.msra.mxu0 %v7276
        %7356 = vmatprep.subr.bf16.mxu0 0
        %7357 = vmatpush2.bf16.msra.mxu0 %v7291
        %7358 = vmatprep.subr.bf16.mxu0 0
        %7359 = vmatpush2.bf16.msra.mxu0 %v7290
        %7360 = vmatprep.subr.bf16.mxu0 0
        %7361 = vmatpush2.bf16.msra.mxu0 %v7289
        %7362 = vmatprep.subr.bf16.mxu0 0
        %7363 = vmatpush2.bf16.msra.mxu0 %v7288
        %7364 = vmatprep.subr.bf16.mxu0 0
        %7365 = vmatpush2.bf16.msra.mxu0 %v7287
        %7366 = vmatprep.subr.bf16.mxu0 0
        %7367 = vmatpush2.bf16.msra.mxu0 %v7286
        %7368 = vmatprep.subr.bf16.mxu0 0
        %7369 = vmatpush2.bf16.msra.mxu0 %v7285
        %7370 = vmatprep.subr.bf16.mxu0 0
        %7371 = vmatpush2.bf16.msra.mxu0 %v7284
        %7372 = vmatprep.mubr.bf16.mxu0 %v7077
        %7373 = vmatmul.mubr.bf16.gmra.mxu0 %v7076
        %v7374 = vpop.f32.mrf.mxu0
        %v7375 = vadd.f32 %v7147, %v7374
        %v7376 = vpop.f32.mrf.mxu0
        %v7377 = vpop.f32.mrf.mxu0
        %v7378 = vadd.f32 %v7147, %v7377
        %v7379 = vpop.f32.mrf.mxu0
        %7380 = vdwg.mxu0
        %7381 = vmatprep.subr.bf16.mxu0 0
        %7382 = vmatpush1.bf16.msra.mxu0 %v7299
        %7383 = vmatprep.subr.bf16.mxu0 0
        %7384 = vmatpush1.bf16.msra.mxu0 %v7298
        %7385 = vmatprep.subr.bf16.mxu0 0
        %7386 = vmatpush1.bf16.msra.mxu0 %v7297
        %7387 = vmatprep.subr.bf16.mxu0 0
        %7388 = vmatpush1.bf16.msra.mxu0 %v7296
        %7389 = vmatprep.subr.bf16.mxu0 0
        %7390 = vmatpush1.bf16.msra.mxu0 %v7295
        %7391 = vmatprep.subr.bf16.mxu0 0
        %7392 = vmatpush1.bf16.msra.mxu0 %v7294
        %7393 = vmatprep.subr.bf16.mxu0 0
        %7394 = vmatpush1.bf16.msra.mxu0 %v7293
        %7395 = vmatprep.subr.bf16.mxu0 0
        %7396 = vmatpush1.bf16.msra.mxu0 %v7292
        %7397 = vmatprep.subr.bf16.mxu0 0
        %7398 = vmatpush2.bf16.msra.mxu0 %v7307
        %7399 = vmatprep.subr.bf16.mxu0 0
        %7400 = vmatpush2.bf16.msra.mxu0 %v7306
        %7401 = vmatprep.subr.bf16.mxu0 0
        %7402 = vmatpush2.bf16.msra.mxu0 %v7305
        %7403 = vmatprep.subr.bf16.mxu0 0
        %7404 = vmatpush2.bf16.msra.mxu0 %v7304
        %7405 = vmatprep.subr.bf16.mxu0 0
        %7406 = vmatpush2.bf16.msra.mxu0 %v7303
        %7407 = vmatprep.subr.bf16.mxu0 0
        %7408 = vmatpush2.bf16.msra.mxu0 %v7302
        %7409 = vmatprep.subr.bf16.mxu0 0
        %7410 = vmatpush2.bf16.msra.mxu0 %v7301
        %7411 = vmatprep.subr.bf16.mxu0 0
        %7412 = vmatpush2.bf16.msra.mxu0 %v7300
        %7413 = vmatprep.mubr.bf16.mxu0 %v7079
        %7414 = vmatmul.mubr.bf16.gmra.mxu0 %v7078
        %v7415 = vpop.f32.mrf.mxu0
        %v7416 = vadd.f32 %v7375, %v7415
        %v7417 = vpop.f32.mrf.mxu0
        %v7418 = vpop.f32.mrf.mxu0
        %v7419 = vadd.f32 %v7378, %v7418
        %v7420 = vpop.f32.mrf.mxu0
        %7421 = vdwg.mxu0
        %v7422 = vmax.f32 %v7416, 0.0
        %v7423 = vmax.f32 %v7419, 0.0
        %v7424 = vpack.c.bf16 %v7423, %v7422
        %v7425 = vld [vmem:[%s10] sm:$0xf]
        %v7426 = vld [vmem:[%s10 + $0x4] sm:$0xf]
        %v7427 = vld [vmem:[%s10 + $0x8] sm:$0xf]
        %v7428 = vld [vmem:[%s10 + $0xc] sm:$0xf]
        %v7429 = vld [vmem:[%s10 + $0x10] sm:$0xf]
        %v7430 = vld [vmem:[%s10 + $0x14] sm:$0xf]
        %v7431 = vld [vmem:[%s10 + $0x18] sm:$0xf]
        %v7432 = vld [vmem:[%s10 + $0x1c] sm:$0xf]
        %v7433 = vld [vmem:[%s10 + $0x20] sm:$0xf]
        %v7434 = vld [vmem:[%s10 + $0x24] sm:$0xf]
        %v7435 = vld [vmem:[%s10 + $0x28] sm:$0xf]
        %v7436 = vld [vmem:[%s10 + $0x2c] sm:$0xf]
        %v7437 = vld [vmem:[%s10 + $0x30] sm:$0xf]
        %v7438 = vld [vmem:[%s10 + $0x34] sm:$0xf]
        %v7439 = vld [vmem:[%s10 + $0x38] sm:$0xf]
        %v7440 = vld [vmem:[%s10 + $0x3c] sm:$0xf]
        %v7441 = vlaneseq
        %v7442 = vshrl.u32 %v7441, 7
        %v7443 = vsub.s32 1, %v7442
        %v7444 = vrot.slane %v617, %v7443
        %v7461 = vunpack.c.l.b16 %v7425
        %v7462 = vunpack.c.l.b16 %v7426
        %v7463 = vunpack.c.l.b16 %v7427
        %v7464 = vunpack.c.l.b16 %v7428
        %v7465 = vunpack.c.l.b16 %v7429
        %v7466 = vunpack.c.l.b16 %v7430
        %v7467 = vunpack.c.l.b16 %v7431
        %v7468 = vunpack.c.l.b16 %v7432
        %v7469 = vunpack.c.l.b16 %v7433
        %v7470 = vunpack.c.l.b16 %v7434
        %v7471 = vunpack.c.l.b16 %v7435
        %v7472 = vunpack.c.l.b16 %v7436
        %v7473 = vunpack.c.l.b16 %v7437
        %v7474 = vunpack.c.l.b16 %v7438
        %v7475 = vunpack.c.l.b16 %v7439
        %v7476 = vunpack.c.l.b16 %v7440
        %v7477 = vpack.c.b16 %v7462, %v7461
        %v7478 = vpack.c.b16 %v7464, %v7463
        %v7479 = vpack.c.b16 %v7466, %v7465
        %v7480 = vpack.c.b16 %v7468, %v7467
        %v7481 = vpack.c.b16 %v7470, %v7469
        %v7482 = vpack.c.b16 %v7472, %v7471
        %v7483 = vpack.c.b16 %v7474, %v7473
        %v7484 = vpack.c.b16 %v7476, %v7475
        %7493 = vmatprep.subr.bf16.mxu0 0
        %7494 = vmatpush1.bf16.msra.mxu0 %v7484
        %7495 = vmatprep.subr.bf16.mxu0 0
        %7496 = vmatpush1.bf16.msra.mxu0 %v7483
        %7497 = vmatprep.subr.bf16.mxu0 0
        %7498 = vmatpush1.bf16.msra.mxu0 %v7482
        %7499 = vmatprep.subr.bf16.mxu0 0
        %7500 = vmatpush1.bf16.msra.mxu0 %v7481
        %7501 = vmatprep.subr.bf16.mxu0 0
        %7502 = vmatpush1.bf16.msra.mxu0 %v7480
        %7503 = vmatprep.subr.bf16.mxu0 0
        %7504 = vmatpush1.bf16.msra.mxu0 %v7479
        %7505 = vmatprep.subr.bf16.mxu0 0
        %7506 = vmatpush1.bf16.msra.mxu0 %v7478
        %7507 = vmatprep.subr.bf16.mxu0 0
        %7508 = vmatpush1.bf16.msra.mxu0 %v7477
        %7509 = vmatprep.subr.bf16.mxu0 0
        %7510 = vmatpush2.bf16.msra.mxu0 0
        %7511 = vmatprep.subr.bf16.mxu0 0
        %7512 = vmatpush2.bf16.msra.mxu0 0
        %7513 = vmatprep.subr.bf16.mxu0 0
        %7514 = vmatpush2.bf16.msra.mxu0 0
        %7515 = vmatprep.subr.bf16.mxu0 0
        %7516 = vmatpush2.bf16.msra.mxu0 0
        %7517 = vmatprep.subr.bf16.mxu0 0
        %7518 = vmatpush2.bf16.msra.mxu0 0
        %7519 = vmatprep.subr.bf16.mxu0 0
        %7520 = vmatpush2.bf16.msra.mxu0 0
        %7521 = vmatprep.subr.bf16.mxu0 0
        %7522 = vmatpush2.bf16.msra.mxu0 0
        %7523 = vmatprep.subr.bf16.mxu0 0
        %7524 = vmatpush2.bf16.msra.mxu0 0
        %7525 = vmatprep.mubr.bf16.mxu0 0
        %7526 = vmatmul.mubr.bf16.gmra.mxu0 %v7424
        %v7527 = vpop.f32.mrf.mxu0
        %v7528 = vadd.f32 %v7444, %v7527
        %v7529 = vpop.f32.mrf.mxu0
        %v7530 = vpop.f32.mrf.mxu0
        %v7531 = vadd.f32 %v7444, %v7530
        %v7532 = vpop.f32.mrf.mxu0
        %7533 = vdwg.mxu0
        %v7534 = vmax.f32 %v7528, 0.0
        %v7535 = vmax.f32 %v7531, 0.0
        %v7536 = vpack.c.bf16 %v7535, %v7534
        %v7537 = vld [vmem:[%s11] sm:$0xf]
        %v7538 = vld [vmem:[%s11 + $0x4] sm:$0xf]
        %v7539 = vlaneseq
        %v7540 = vshrl.u32 %v7539, 7
        %v7541 = vsub.s32 2, %v7540
        %v7542 = vrot.slane %v617, %v7541
        %v7545 = vunpack.c.l.b16 %v7537
        %v7546 = vunpack.c.l.b16 %v7538
        %v7547 = vpack.c.b16 %v7546, %v7545
        %v7550 = vsel %vm682, %v7536, 0
        %7552 = vmatprep.subr.bf16.mxu0 0
        %7553 = vmatpush1.bf16.msra.mxu0 0
        %7554 = vmatprep.subr.bf16.mxu0 0
        %7555 = vmatpush1.bf16.msra.mxu0 0
        %7556 = vmatprep.subr.bf16.mxu0 0
        %7557 = vmatpush1.bf16.msra.mxu0 0
        %7558 = vmatprep.subr.bf16.mxu0 0
        %7559 = vmatpush1.bf16.msra.mxu0 0
        %7560 = vmatprep.subr.bf16.mxu0 0
        %7561 = vmatpush1.bf16.msra.mxu0 0
        %7562 = vmatprep.subr.bf16.mxu0 0
        %7563 = vmatpush1.bf16.msra.mxu0 0
        %7564 = vmatprep.subr.bf16.mxu0 0
        %7565 = vmatpush1.bf16.msra.mxu0 0
        %7566 = vmatprep.subr.bf16.mxu0 0
        %7567 = vmatpush1.bf16.msra.mxu0 %v7547
        %7568 = vmatprep.subr.bf16.mxu0 0
        %7569 = vmatpush2.bf16.msra.mxu0 0
        %7570 = vmatprep.subr.bf16.mxu0 0
        %7571 = vmatpush2.bf16.msra.mxu0 0
        %7572 = vmatprep.subr.bf16.mxu0 0
        %7573 = vmatpush2.bf16.msra.mxu0 0
        %7574 = vmatprep.subr.bf16.mxu0 0
        %7575 = vmatpush2.bf16.msra.mxu0 0
        %7576 = vmatprep.subr.bf16.mxu0 0
        %7577 = vmatpush2.bf16.msra.mxu0 0
        %7578 = vmatprep.subr.bf16.mxu0 0
        %7579 = vmatpush2.bf16.msra.mxu0 0
        %7580 = vmatprep.subr.bf16.mxu0 0
        %7581 = vmatpush2.bf16.msra.mxu0 0
        %7582 = vmatprep.subr.bf16.mxu0 0
        %7583 = vmatpush2.bf16.msra.mxu0 0
        %7584 = vmatprep.mubr.bf16.mxu0 0
        %7585 = vmatmul.mubr.bf16.gmra.mxu0 %v7550
        %v7586 = vpop.f32.mrf.mxu0
        %v7587 = vadd.f32 %v7542, %v7586
        %v7588 = vpop.f32.mrf.mxu0
        %v7589 = vpop.f32.mrf.mxu0
        %v7590 = vadd.f32 %v7542, %v7589
        %v7591 = vpop.f32.mrf.mxu0
        %7592 = vdwg.mxu0
        %7593 = vst [vmem:[%s588] sm:$0xff] %v7587
        %7594 = vst [vmem:[%s588 + $0x8] sm:$0xff] %v7590
        %s7595 = sand.u32 %s329, 1
        %s7596 = scalar_lea.sflag [#allocation4], %s7595
        %s7597 = sand.u32 %s329, 1
        %s7598 = smul.addr %s7597, 16
        %s7599 = scalar_lea.vmem [#allocation13], %s7598
        // Predicated region
        $region97: #{tpu_custom_call.1} parent=71 // pred_check
          %p7600 = pneg %p339
        $region98: #{tpu_custom_call.1} parent=71 // pred_check_branch
          %7602 = sbr.rel (%p7600) target = $region100
        $region99: #{tpu_custom_call.1} parent=71 // pred_region
          %s7603 = smul.u32 2, %s33
          %s7605 = ssub.s32 256, 256
          %7606 = vsyncadd %s7596, %s7605
          %s7607 = smul.addr %s7603, 128
          %s7608 = scalar_lea.hbm %s13, %s7607
          %s7609 = sshll.u32 %s7599, 4
          %s7610 = int_to_ptr.vmem [resolvable:$true] %s7609
          %7615 = dma.vmem_to_hbm [thread:$0]  %s7610, 256, %s7608, %s7596, 128, 128, 8
        $region100: #{tpu_custom_call.1} parent=71 // pred_fallthru
          _
      $region72: #{tpu_custom_call.1} parent=5 // pred_fallthru
        _
      %p7616 = scmp.le.s32.totalorder 2, %s28
      // Predicated region
      $region101: #{tpu_custom_call.1} parent=5 // pred_check
        %p7617 = pneg %p7616
      $region102: #{tpu_custom_call.1} parent=5 // pred_check_branch
        %7619 = sbr.rel (%p7617) target = $region104
      $region103: #{tpu_custom_call.1} parent=5 // pred_region
        %s7620 = ssub.s32 %s28, 2
        // Predicated region
        $region105: #{tpu_custom_call.1} parent=103 // pred_check
          %p7621 = pneg %p345
        $region106: #{tpu_custom_call.1} parent=103 // pred_check_branch
          %7623 = sbr.rel (%p7621) target = $region108
        $region107: #{tpu_custom_call.1} parent=103 // pred_region
          %s7624 = sand.u32 %s330, 1
          %s7625 = scalar_lea.sflag [#allocation4], %s7624
          %s7626 = sand.u32 %s330, 1
          %s7627 = smul.addr %s7626, 16
          %s7628 = scalar_lea.vmem [#allocation13], %s7627
          %7629 = dma.done %s7625, 256
        $region108: #{tpu_custom_call.1} parent=103 // pred_fallthru
          _
      $region104: #{tpu_custom_call.1} parent=5 // pred_fallthru
        _
    $region6: #{tpu_custom_call.1} parent=1 // loop_footer
      %s32 = sadd.s32 1, %s28
    $region7: #{tpu_custom_call.1} parent=1 // loop_footer_branch
      %27 = sbr.rel target = $region3
    $region8: #{tpu_custom_call.1} parent=1 // loop_exit
      _
    %7630 = vsyncpa [#allocation3], 1
    %s7631 = scalar_lea.sflag [#allocation3], 1
    %7632 = vsyncpa %s7631, 1
    %7633 = vsyncpa [#allocation6], 1
    %7634 = vsyncpa [#allocation9], 1
    %7635 = vsyncpa [#allocation12], 1
    %7636 = vsyncpa [#allocation4], 1
    %s7637 = scalar_lea.sflag [#allocation4], 1
    %7638 = vsyncpa %s7637, 1

</llo_original>
